<compile_context>
chip_gen: v7x
topology: tpu7x:2x2x1
jax: 0.10.0
libtpu: 0.0.40
codegen_flags: <defaults>
</compile_context>

<pallas_src>
import functools

import numpy as np

import jax
import jax.numpy as jnp
from jax.experimental import pallas as pl
from jax.experimental.pallas import tpu as pltpu


# ---------------------------------------------------------------------------
# Fused forward kernel (one batch tile of TB images per grid step)
# ---------------------------------------------------------------------------
def _lenet_kernel(x_ref, wb1_ref, b1_ref, wb2_ref, b2_ref,
                  wf1_ref, bf1_ref, wf2_ref, bf2_ref, wf3_ref, bf3_ref,
                  o_ref, p1_scr, p2_scr, *, TB):
    f32 = jnp.float32
    R1 = TB * 32          # conv1 output rows   (valid rows: 32*b + i, i < 28)
    RH = TB * 16          # rows after pool1    (valid rows: 16*b + i, i < 14)
    R2 = RH - 4           # conv2 output rows   (valid rows: 16*b + i, i < 10)

    def conv_relu_wpool(lhs, band_ref, brow_ref, out_scr):
        # out_scr <- max over the two 128-wide column halves (= 2x2 pool along
        # W) of relu(sum_kh lhs(kh) @ band[half, kh] + bias[half]).
        for half in range(2):
            acc = jnp.dot(lhs(0), band_ref[half, 0],
                          preferred_element_type=f32)
            for kh in range(1, 5):
                acc = acc + jnp.dot(lhs(kh), band_ref[half, kh],
                                    preferred_element_type=f32)
            val = jnp.maximum(acc + brow_ref[half:half + 1, :], 0.0)
            if half == 0:
                out_scr[...] = val
            else:
                out_scr[...] = jnp.maximum(out_scr[...], val)

    # conv1 + ReLU + W-pool  -> p1_scr (R1, 128)
    conv_relu_wpool(lambda kh: x_ref[pl.ds(kh, R1), :],
                    wb1_ref, b1_ref, p1_scr)

    # pool1 H-direction: stride-2 row reads (compacts rows 2:1)
    s2 = jnp.maximum(p1_scr[pl.ds(0, RH, stride=2), :],
                     p1_scr[pl.ds(1, RH, stride=2), :])          # (RH, 128)

    # conv2 + ReLU + W-pool  -> p2_scr (R2, 128)
    conv_relu_wpool(lambda kh: s2[kh:kh + R2, :],
                    wb2_ref, b2_ref, p2_scr)

    # pool2 H-direction + flatten + fc1: 5 strided reads + 5 small matmuls
    h1 = None
    for i2 in range(5):                                          # pooled H pos
        rows = jnp.maximum(p2_scr[pl.ds(2 * i2, TB, stride=16), :],
                           p2_scr[pl.ds(2 * i2 + 1, TB, stride=16), :])
        part = jnp.dot(rows, wf1_ref[i2], preferred_element_type=f32)
        h1 = part if h1 is None else h1 + part
    h1 = jnp.maximum(h1 + bf1_ref[...], 0.0)                     # (TB, 120)

    h2 = jnp.maximum(jnp.dot(h1, wf2_ref[...], preferred_element_type=f32)
                     + bf2_ref[...], 0.0)                        # (TB, 84)
    o_ref[...] = (jnp.dot(h2, wf3_ref[...], preferred_element_type=f32)
                  + bf3_ref[...]).astype(o_ref.dtype)            # (TB, 10)


def _zero_index(*grid_idx, n):
    return (0,) * n


# ---------------------------------------------------------------------------
# Wrapper
# ---------------------------------------------------------------------------
def net_forward(prepped, x):
    """Fused LeNet forward. x: (N, 1, 32, 32) float32 -> (N, 10)."""
    N = x.shape[0]
    TB = 8 if N % 8 == 0 else N            # batch tile per grid step
    assert N % TB == 0, "batch must be divisible by the batch tile"
    G = N // TB
    RB = TB * 32 + 8                       # +8 pad rows absorb the conv row shift

    # Stack the TB images of each tile as rows: (G*RB, 32), image b at rows
    # [32*b, 32*b+32) of its tile, last 8 rows of each tile are zero padding.
    xr = jnp.pad(x.reshape(G, TB * 32, 32), ((0, 0), (0, 8), (0, 0)))
    x_rows = xr.reshape(G * RB, 32)

    wargs = (prepped["band1"], prepped["b1row"], prepped["band2"],
             prepped["b2row"], prepped["wfc1"], prepped["bfc1"],
             prepped["wfc2t"], prepped["bfc2"], prepped["wfc3t"],
             prepped["bfc3"])

    in_specs = [pl.BlockSpec((RB, 32), lambda g: (g, 0))]
    for a in wargs:      # weights: whole-array block, constant index -> resident
        in_specs.append(
            pl.BlockSpec(a.shape, functools.partial(_zero_index, n=a.ndim)))

    grid_spec = pltpu.PrefetchScalarGridSpec(
        num_scalar_prefetch=0,
        grid=(G,),
        in_specs=in_specs,
        out_specs=pl.BlockSpec((TB, 10), lambda g: (g, 0)),
        scratch_shapes=[pltpu.VMEM((TB * 32, 128), jnp.float32),
                        pltpu.VMEM((TB * 16 - 4, 128), jnp.float32)],
    )
    return pl.pallas_call(
        functools.partial(_lenet_kernel, TB=TB),
        out_shape=jax.ShapeDtypeStruct((N, 10), x.dtype),
        grid_spec=grid_spec,
        compiler_params=pltpu.CompilerParams(
            dimension_semantics=("parallel",)),
    )(x_rows, *wargs)


# ---------------------------------------------------------------------------
# One-time weight preprocessing (banded conv matrices, fc rearrangement)
# ---------------------------------------------------------------------------
def preprocess_params(params):
    w1 = np.asarray(params["conv1_w"], np.float32)   # (6, 1, 5, 5)
    b1 = np.asarray(params["conv1_b"], np.float32)
    w2 = np.asarray(params["conv2_w"], np.float32)   # (16, 6, 5, 5)
    b2 = np.asarray(params["conv2_b"], np.float32)
    f1w = np.asarray(params["fc1_w"], np.float32)    # (120, 400)
    f1b = np.asarray(params["fc1_b"], np.float32)
    f2w = np.asarray(params["fc2_w"], np.float32)    # (84, 120)
    f2b = np.asarray(params["fc2_b"], np.float32)
    f3w = np.asarray(params["fc3_w"], np.float32)    # (10, 84)
    f3b = np.asarray(params["fc3_b"], np.float32)

    K = 5
    # conv1 banded weights: in col = w (of 32); out col (half=j%2) = co*14+j//2.
    band1 = np.zeros((2, K, 32, 128), np.float32)
    b1row = np.zeros((2, 128), np.float32)
    for co in range(6):
        for j in range(28):
            half, oc = j % 2, co * 14 + j // 2
            b1row[half, oc] = b1[co]
            for kh in range(K):
                for kw in range(K):
                    band1[half, kh, j + kw, oc] = w1[co, 0, kh, kw]

    # conv2 banded weights: in col = ci*14 + w; out col (half=j%2) = co*5+j//2.
    band2 = np.zeros((2, K, 128, 128), np.float32)
    b2row = np.zeros((2, 128), np.float32)
    for co in range(16):
        for j in range(10):
            half, oc = j % 2, co * 5 + j // 2
            b2row[half, oc] = b2[co]
            for ci in range(6):
                for kh in range(K):
                    for kw in range(K):
                        band2[half, kh, ci * 14 + j + kw, oc] = \
                            w2[co, ci, kh, kw]

    # fc1: s4 physical column co*5 + j'' at pooled-H offset i'' corresponds to
    # the PyTorch flattened feature co*25 + i''*5 + j''.
    wfc1 = np.zeros((5, 128, 120), np.float32)
    for i2 in range(5):
        for co in range(16):
            for j2 in range(5):
                wfc1[i2, co * 5 + j2, :] = f1w[:, co * 25 + i2 * 5 + j2]

    return {
        "band1": jnp.asarray(band1), "b1row": jnp.asarray(b1row),
        "band2": jnp.asarray(band2), "b2row": jnp.asarray(b2row),
        "wfc1": jnp.asarray(wfc1), "bfc1": jnp.asarray(f1b.reshape(1, -1)),
        "wfc2t": jnp.asarray(np.ascontiguousarray(f2w.T)),
        "bfc2": jnp.asarray(f2b.reshape(1, -1)),
        "wfc3t": jnp.asarray(np.ascontiguousarray(f3w.T)),
        "bfc3": jnp.asarray(f3b.reshape(1, -1)),
    }


# ---------------------------------------------------------------------------
# Parameter init (PyTorch default-style uniform) and pure-JAX reference
# ---------------------------------------------------------------------------
def init_params(key):
    keys = jax.random.split(key, 10)

    def uinit(k, shape, fan_in):
        bound = 1.0 / (fan_in ** 0.5)
        return jax.random.uniform(k, shape, jnp.float32, -bound, bound)

    return {
        "conv1_w": uinit(keys[0], (6, 1, 5, 5), 1 * 5 * 5),
        "conv1_b": uinit(keys[1], (6,), 1 * 5 * 5),
        "conv2_w": uinit(keys[2], (16, 6, 5, 5), 6 * 5 * 5),
        "conv2_b": uinit(keys[3], (16,), 6 * 5 * 5),
        "fc1_w": uinit(keys[4], (120, 400), 400),
        "fc1_b": uinit(keys[5], (120,), 400),
        "fc2_w": uinit(keys[6], (84, 120), 120),
        "fc2_b": uinit(keys[7], (84,), 120),
        "fc3_w": uinit(keys[8], (10, 84), 84),
        "fc3_b": uinit(keys[9], (10,), 84),
    }


def net_reference(params, x):
    def conv(x, w, b):
        y = jax.lax.conv_general_dilated(
            x, w, (1, 1), "VALID",
            dimension_numbers=("NCHW", "OIHW", "NCHW"))
        return jax.nn.relu(y + b[None, :, None, None])

    def pool(x):
        return jax.lax.reduce_window(
            x, -jnp.inf, jax.lax.max, (1, 1, 2, 2), (1, 1, 2, 2), "VALID")

    c1 = conv(x, params["conv1_w"], params["conv1_b"])
    s2 = pool(c1)
    c3 = conv(s2, params["conv2_w"], params["conv2_b"])
    s4 = pool(c3)
    flat = s4.reshape(x.shape[0], -1)
    h1 = jax.nn.relu(flat @ params["fc1_w"].T + params["fc1_b"])
    h2 = jax.nn.relu(h1 @ params["fc2_w"].T + params["fc2_b"])
    return h2 @ params["fc3_w"].T + params["fc3_b"]


if __name__ == "__main__":
    key = jax.random.PRNGKey(0)
    k_params, k_x = jax.random.split(key)
    params = init_params(k_params)
    prepped = preprocess_params(params)

    N = 16                                  # two batch tiles of 8 -> grid=(2,)
    x = jax.random.normal(k_x, (N, 1, 32, 32), dtype=jnp.float32)

    fwd = jax.jit(net_forward)
    out = jax.block_until_ready(fwd(prepped, x))
    ref = jax.block_until_ready(net_reference(params, x))

    assert out.shape == (N, 10), out.shape
    max_err = float(jnp.max(jnp.abs(out - ref)))
    assert jnp.allclose(out, ref, atol=1e-3, rtol=1e-3), (
        f"mismatch vs reference, max abs err = {max_err}")
    print("KERNEL_OK")
</pallas_src>

<mosaic_0001>
module attributes {stable_mosaic.version = 11 : i64} {
  func.func @_lenet_kernel(%arg0: i32, %arg1: memref<264x32xf32, #tpu.memory_space<vmem>>, %arg2: memref<2x5x32x128xf32, #tpu.memory_space<vmem>>, %arg3: memref<2x128xf32, #tpu.memory_space<vmem>>, %arg4: memref<2x5x128x128xf32, #tpu.memory_space<vmem>>, %arg5: memref<2x128xf32, #tpu.memory_space<vmem>>, %arg6: memref<5x128x120xf32, #tpu.memory_space<vmem>>, %arg7: memref<1x120xf32, #tpu.memory_space<vmem>>, %arg8: memref<120x84xf32, #tpu.memory_space<vmem>>, %arg9: memref<1x84xf32, #tpu.memory_space<vmem>>, %arg10: memref<84x10xf32, #tpu.memory_space<vmem>>, %arg11: memref<1x10xf32, #tpu.memory_space<vmem>>, %arg12: memref<8x10xf32, #tpu.memory_space<vmem>>, %arg13: memref<256x128xf32, #tpu.memory_space<vmem>>, %arg14: memref<124x128xf32, #tpu.memory_space<vmem>>) attributes {dimension_semantics = [#tpu.dimension_semantics<parallel>], iteration_bounds = array<i64: 2>, scalar_prefetch = 0 : i64, scratch_operands = 2 : i64, tpu.core_type = #tpu.core_type<tc>, window_params = [{transform_indices = @transform_0, window_bounds = array<i64: 264, 32>}, {pipeline_mode = #tpu.pipeline_mode<synchronous>, transform_indices = @transform_1, window_bounds = array<i64: 2, 5, 32, 128>}, {pipeline_mode = #tpu.pipeline_mode<synchronous>, transform_indices = @transform_2, window_bounds = array<i64: 2, 128>}, {pipeline_mode = #tpu.pipeline_mode<synchronous>, transform_indices = @transform_3, window_bounds = array<i64: 2, 5, 128, 128>}, {pipeline_mode = #tpu.pipeline_mode<synchronous>, transform_indices = @transform_4, window_bounds = array<i64: 2, 128>}, {pipeline_mode = #tpu.pipeline_mode<synchronous>, transform_indices = @transform_5, window_bounds = array<i64: 5, 128, 120>}, {pipeline_mode = #tpu.pipeline_mode<synchronous>, transform_indices = @transform_6, window_bounds = array<i64: 1, 120>}, {pipeline_mode = #tpu.pipeline_mode<synchronous>, transform_indices = @transform_7, window_bounds = array<i64: 120, 84>}, {pipeline_mode = #tpu.pipeline_mode<synchronous>, transform_indices = @transform_8, window_bounds = array<i64: 1, 84>}, {pipeline_mode = #tpu.pipeline_mode<synchronous>, transform_indices = @transform_9, window_bounds = array<i64: 84, 10>}, {pipeline_mode = #tpu.pipeline_mode<synchronous>, transform_indices = @transform_10, window_bounds = array<i64: 1, 10>}, {transform_indices = @transform_11, window_bounds = array<i64: 8, 10>}]} {
    %c0 = arith.constant 0 : index
    %c0_0 = arith.constant 0 : index
    %0 = vector.load %arg1[%c0, %c0_0] : memref<264x32xf32, #tpu.memory_space<vmem>>, vector<256x32xf32>
    %c0_1 = arith.constant 0 : index
    %c0_2 = arith.constant 0 : index
    %c0_3 = arith.constant 0 : index
    %c0_4 = arith.constant 0 : index
    %1 = vector.load %arg2[%c0_1, %c0_2, %c0_3, %c0_4] : memref<2x5x32x128xf32, #tpu.memory_space<vmem>>, vector<1x1x32x128xf32>
    %2 = vector.shape_cast %1 : vector<1x1x32x128xf32> to vector<32x128xf32>
    %cst = arith.constant dense<0.000000e+00> : vector<256x128xf32>
    %3 = tpu.matmul %0, %2, %cst {dimension_numbers = #tpu.dot_dimension_numbers<[1], [0], [0], [1], [0, 0, 1, 1], [], []>} : vector<256x32xf32>, vector<32x128xf32>, vector<256x128xf32> -> vector<256x128xf32>
    %c1 = arith.constant 1 : index
    %c0_5 = arith.constant 0 : index
    %4 = vector.load %arg1[%c1, %c0_5] : memref<264x32xf32, #tpu.memory_space<vmem>>, vector<256x32xf32>
    %c0_6 = arith.constant 0 : index
    %c1_7 = arith.constant 1 : index
    %c0_8 = arith.constant 0 : index
    %c0_9 = arith.constant 0 : index
    %5 = vector.load %arg2[%c0_6, %c1_7, %c0_8, %c0_9] : memref<2x5x32x128xf32, #tpu.memory_space<vmem>>, vector<1x1x32x128xf32>
    %6 = vector.shape_cast %5 : vector<1x1x32x128xf32> to vector<32x128xf32>
    %cst_10 = arith.constant dense<0.000000e+00> : vector<256x128xf32>
    %7 = tpu.matmul %4, %6, %cst_10 {dimension_numbers = #tpu.dot_dimension_numbers<[1], [0], [0], [1], [0, 0, 1, 1], [], []>} : vector<256x32xf32>, vector<32x128xf32>, vector<256x128xf32> -> vector<256x128xf32>
    %8 = arith.addf %3, %7 : vector<256x128xf32>
    %c2 = arith.constant 2 : index
    %c0_11 = arith.constant 0 : index
    %9 = vector.load %arg1[%c2, %c0_11] : memref<264x32xf32, #tpu.memory_space<vmem>>, vector<256x32xf32>
    %c0_12 = arith.constant 0 : index
    %c2_13 = arith.constant 2 : index
    %c0_14 = arith.constant 0 : index
    %c0_15 = arith.constant 0 : index
    %10 = vector.load %arg2[%c0_12, %c2_13, %c0_14, %c0_15] : memref<2x5x32x128xf32, #tpu.memory_space<vmem>>, vector<1x1x32x128xf32>
    %11 = vector.shape_cast %10 : vector<1x1x32x128xf32> to vector<32x128xf32>
    %cst_16 = arith.constant dense<0.000000e+00> : vector<256x128xf32>
    %12 = tpu.matmul %9, %11, %cst_16 {dimension_numbers = #tpu.dot_dimension_numbers<[1], [0], [0], [1], [0, 0, 1, 1], [], []>} : vector<256x32xf32>, vector<32x128xf32>, vector<256x128xf32> -> vector<256x128xf32>
    %13 = arith.addf %8, %12 : vector<256x128xf32>
    %c3 = arith.constant 3 : index
    %c0_17 = arith.constant 0 : index
    %14 = vector.load %arg1[%c3, %c0_17] : memref<264x32xf32, #tpu.memory_space<vmem>>, vector<256x32xf32>
    %c0_18 = arith.constant 0 : index
    %c3_19 = arith.constant 3 : index
    %c0_20 = arith.constant 0 : index
    %c0_21 = arith.constant 0 : index
    %15 = vector.load %arg2[%c0_18, %c3_19, %c0_20, %c0_21] : memref<2x5x32x128xf32, #tpu.memory_space<vmem>>, vector<1x1x32x128xf32>
    %16 = vector.shape_cast %15 : vector<1x1x32x128xf32> to vector<32x128xf32>
    %cst_22 = arith.constant dense<0.000000e+00> : vector<256x128xf32>
    %17 = tpu.matmul %14, %16, %cst_22 {dimension_numbers = #tpu.dot_dimension_numbers<[1], [0], [0], [1], [0, 0, 1, 1], [], []>} : vector<256x32xf32>, vector<32x128xf32>, vector<256x128xf32> -> vector<256x128xf32>
    %18 = arith.addf %13, %17 : vector<256x128xf32>
    %c4 = arith.constant 4 : index
    %c0_23 = arith.constant 0 : index
    %19 = vector.load %arg1[%c4, %c0_23] : memref<264x32xf32, #tpu.memory_space<vmem>>, vector<256x32xf32>
    %c0_24 = arith.constant 0 : index
    %c4_25 = arith.constant 4 : index
    %c0_26 = arith.constant 0 : index
    %c0_27 = arith.constant 0 : index
    %20 = vector.load %arg2[%c0_24, %c4_25, %c0_26, %c0_27] : memref<2x5x32x128xf32, #tpu.memory_space<vmem>>, vector<1x1x32x128xf32>
    %21 = vector.shape_cast %20 : vector<1x1x32x128xf32> to vector<32x128xf32>
    %cst_28 = arith.constant dense<0.000000e+00> : vector<256x128xf32>
    %22 = tpu.matmul %19, %21, %cst_28 {dimension_numbers = #tpu.dot_dimension_numbers<[1], [0], [0], [1], [0, 0, 1, 1], [], []>} : vector<256x32xf32>, vector<32x128xf32>, vector<256x128xf32> -> vector<256x128xf32>
    %23 = arith.addf %18, %22 : vector<256x128xf32>
    %c0_29 = arith.constant 0 : index
    %c0_30 = arith.constant 0 : index
    %24 = vector.load %arg3[%c0_29, %c0_30] : memref<2x128xf32, #tpu.memory_space<vmem>>, vector<1x128xf32>
    %25 = vector.broadcast %24 : vector<1x128xf32> to vector<256x128xf32>
    %26 = arith.addf %23, %25 : vector<256x128xf32>
    %cst_31 = arith.constant 0.000000e+00 : f32
    %27 = vector.broadcast %cst_31 : f32 to vector<256x128xf32>
    %28 = arith.maximumf %26, %27 : vector<256x128xf32>
    %c0_32 = arith.constant 0 : index
    %c0_33 = arith.constant 0 : index
    %29 = vector.load %arg13[%c0_32, %c0_33] : memref<256x128xf32, #tpu.memory_space<vmem>>, vector<256x128xf32>
    tpu.vector_store %arg13[%c0_32, %c0_33], %28 {strides = array<i32>} : memref<256x128xf32, #tpu.memory_space<vmem>>, vector<256x128xf32>,
    %c0_34 = arith.constant 0 : index
    %c0_35 = arith.constant 0 : index
    %30 = vector.load %arg1[%c0_34, %c0_35] : memref<264x32xf32, #tpu.memory_space<vmem>>, vector<256x32xf32>
    %c1_36 = arith.constant 1 : index
    %c0_37 = arith.constant 0 : index
    %c0_38 = arith.constant 0 : index
    %c0_39 = arith.constant 0 : index
    %31 = vector.load %arg2[%c1_36, %c0_37, %c0_38, %c0_39] : memref<2x5x32x128xf32, #tpu.memory_space<vmem>>, vector<1x1x32x128xf32>
    %32 = vector.shape_cast %31 : vector<1x1x32x128xf32> to vector<32x128xf32>
    %cst_40 = arith.constant dense<0.000000e+00> : vector<256x128xf32>
    %33 = tpu.matmul %30, %32, %cst_40 {dimension_numbers = #tpu.dot_dimension_numbers<[1], [0], [0], [1], [0, 0, 1, 1], [], []>} : vector<256x32xf32>, vector<32x128xf32>, vector<256x128xf32> -> vector<256x128xf32>
    %c1_41 = arith.constant 1 : index
    %c0_42 = arith.constant 0 : index
    %34 = vector.load %arg1[%c1_41, %c0_42] : memref<264x32xf32, #tpu.memory_space<vmem>>, vector<256x32xf32>
    %c1_43 = arith.constant 1 : index
    %c1_44 = arith.constant 1 : index
    %c0_45 = arith.constant 0 : index
    %c0_46 = arith.constant 0 : index
    %35 = vector.load %arg2[%c1_43, %c1_44, %c0_45, %c0_46] : memref<2x5x32x128xf32, #tpu.memory_space<vmem>>, vector<1x1x32x128xf32>
    %36 = vector.shape_cast %35 : vector<1x1x32x128xf32> to vector<32x128xf32>
    %cst_47 = arith.constant dense<0.000000e+00> : vector<256x128xf32>
    %37 = tpu.matmul %34, %36, %cst_47 {dimension_numbers = #tpu.dot_dimension_numbers<[1], [0], [0], [1], [0, 0, 1, 1], [], []>} : vector<256x32xf32>, vector<32x128xf32>, vector<256x128xf32> -> vector<256x128xf32>
    %38 = arith.addf %33, %37 : vector<256x128xf32>
    %c2_48 = arith.constant 2 : index
    %c0_49 = arith.constant 0 : index
    %39 = vector.load %arg1[%c2_48, %c0_49] : memref<264x32xf32, #tpu.memory_space<vmem>>, vector<256x32xf32>
    %c1_50 = arith.constant 1 : index
    %c2_51 = arith.constant 2 : index
    %c0_52 = arith.constant 0 : index
    %c0_53 = arith.constant 0 : index
    %40 = vector.load %arg2[%c1_50, %c2_51, %c0_52, %c0_53] : memref<2x5x32x128xf32, #tpu.memory_space<vmem>>, vector<1x1x32x128xf32>
    %41 = vector.shape_cast %40 : vector<1x1x32x128xf32> to vector<32x128xf32>
    %cst_54 = arith.constant dense<0.000000e+00> : vector<256x128xf32>
    %42 = tpu.matmul %39, %41, %cst_54 {dimension_numbers = #tpu.dot_dimension_numbers<[1], [0], [0], [1], [0, 0, 1, 1], [], []>} : vector<256x32xf32>, vector<32x128xf32>, vector<256x128xf32> -> vector<256x128xf32>
    %43 = arith.addf %38, %42 : vector<256x128xf32>
    %c3_55 = arith.constant 3 : index
    %c0_56 = arith.constant 0 : index
    %44 = vector.load %arg1[%c3_55, %c0_56] : memref<264x32xf32, #tpu.memory_space<vmem>>, vector<256x32xf32>
    %c1_57 = arith.constant 1 : index
    %c3_58 = arith.constant 3 : index
    %c0_59 = arith.constant 0 : index
    %c0_60 = arith.constant 0 : index
    %45 = vector.load %arg2[%c1_57, %c3_58, %c0_59, %c0_60] : memref<2x5x32x128xf32, #tpu.memory_space<vmem>>, vector<1x1x32x128xf32>
    %46 = vector.shape_cast %45 : vector<1x1x32x128xf32> to vector<32x128xf32>
    %cst_61 = arith.constant dense<0.000000e+00> : vector<256x128xf32>
    %47 = tpu.matmul %44, %46, %cst_61 {dimension_numbers = #tpu.dot_dimension_numbers<[1], [0], [0], [1], [0, 0, 1, 1], [], []>} : vector<256x32xf32>, vector<32x128xf32>, vector<256x128xf32> -> vector<256x128xf32>
    %48 = arith.addf %43, %47 : vector<256x128xf32>
    %c4_62 = arith.constant 4 : index
    %c0_63 = arith.constant 0 : index
    %49 = vector.load %arg1[%c4_62, %c0_63] : memref<264x32xf32, #tpu.memory_space<vmem>>, vector<256x32xf32>
    %c1_64 = arith.constant 1 : index
    %c4_65 = arith.constant 4 : index
    %c0_66 = arith.constant 0 : index
    %c0_67 = arith.constant 0 : index
    %50 = vector.load %arg2[%c1_64, %c4_65, %c0_66, %c0_67] : memref<2x5x32x128xf32, #tpu.memory_space<vmem>>, vector<1x1x32x128xf32>
    %51 = vector.shape_cast %50 : vector<1x1x32x128xf32> to vector<32x128xf32>
    %cst_68 = arith.constant dense<0.000000e+00> : vector<256x128xf32>
    %52 = tpu.matmul %49, %51, %cst_68 {dimension_numbers = #tpu.dot_dimension_numbers<[1], [0], [0], [1], [0, 0, 1, 1], [], []>} : vector<256x32xf32>, vector<32x128xf32>, vector<256x128xf32> -> vector<256x128xf32>
    %53 = arith.addf %48, %52 : vector<256x128xf32>
    %c1_69 = arith.constant 1 : index
    %c0_70 = arith.constant 0 : index
    %54 = vector.load %arg3[%c1_69, %c0_70] : memref<2x128xf32, #tpu.memory_space<vmem>>, vector<1x128xf32>
    %55 = vector.broadcast %54 : vector<1x128xf32> to vector<256x128xf32>
    %56 = arith.addf %53, %55 : vector<256x128xf32>
    %cst_71 = arith.constant 0.000000e+00 : f32
    %57 = vector.broadcast %cst_71 : f32 to vector<256x128xf32>
    %58 = arith.maximumf %56, %57 : vector<256x128xf32>
    %c0_72 = arith.constant 0 : index
    %c0_73 = arith.constant 0 : index
    %59 = vector.load %arg13[%c0_72, %c0_73] : memref<256x128xf32, #tpu.memory_space<vmem>>, vector<256x128xf32>
    %60 = arith.maximumf %59, %58 : vector<256x128xf32>
    %c0_74 = arith.constant 0 : index
    %c0_75 = arith.constant 0 : index
    %61 = vector.load %arg13[%c0_74, %c0_75] : memref<256x128xf32, #tpu.memory_space<vmem>>, vector<256x128xf32>
    tpu.vector_store %arg13[%c0_74, %c0_75], %60 {strides = array<i32>} : memref<256x128xf32, #tpu.memory_space<vmem>>, vector<256x128xf32>,
    %c0_76 = arith.constant 0 : index
    %c0_77 = arith.constant 0 : index
    %62 = tpu.strided_load %arg13[%c0_76, %c0_77] {strides = array<i32: 2, 1>} : memref<256x128xf32, #tpu.memory_space<vmem>>, vector<128x128xf32>
    %c1_78 = arith.constant 1 : index
    %c0_79 = arith.constant 0 : index
    %63 = tpu.strided_load %arg13[%c1_78, %c0_79] {strides = array<i32: 2, 1>} : memref<256x128xf32, #tpu.memory_space<vmem>>, vector<128x128xf32>
    %64 = arith.maximumf %62, %63 : vector<128x128xf32>
    %65 = vector.extract_strided_slice %64 {offsets = [0, 0], sizes = [124, 128], strides = [1, 1]} : vector<128x128xf32> to vector<124x128xf32>
    %c0_80 = arith.constant 0 : index
    %c0_81 = arith.constant 0 : index
    %c0_82 = arith.constant 0 : index
    %c0_83 = arith.constant 0 : index
    %66 = vector.load %arg4[%c0_80, %c0_81, %c0_82, %c0_83] : memref<2x5x128x128xf32, #tpu.memory_space<vmem>>, vector<1x1x128x128xf32>
    %67 = vector.shape_cast %66 : vector<1x1x128x128xf32> to vector<128x128xf32>
    %cst_84 = arith.constant dense<0.000000e+00> : vector<124x128xf32>
    %68 = tpu.matmul %65, %67, %cst_84 {dimension_numbers = #tpu.dot_dimension_numbers<[1], [0], [0], [1], [0, 0, 1, 1], [], []>} : vector<124x128xf32>, vector<128x128xf32>, vector<124x128xf32> -> vector<124x128xf32>
    %69 = vector.extract_strided_slice %64 {offsets = [1, 0], sizes = [124, 128], strides = [1, 1]} : vector<128x128xf32> to vector<124x128xf32>
    %c0_85 = arith.constant 0 : index
    %c1_86 = arith.constant 1 : index
    %c0_87 = arith.constant 0 : index
    %c0_88 = arith.constant 0 : index
    %70 = vector.load %arg4[%c0_85, %c1_86, %c0_87, %c0_88] : memref<2x5x128x128xf32, #tpu.memory_space<vmem>>, vector<1x1x128x128xf32>
    %71 = vector.shape_cast %70 : vector<1x1x128x128xf32> to vector<128x128xf32>
    %cst_89 = arith.constant dense<0.000000e+00> : vector<124x128xf32>
    %72 = tpu.matmul %69, %71, %cst_89 {dimension_numbers = #tpu.dot_dimension_numbers<[1], [0], [0], [1], [0, 0, 1, 1], [], []>} : vector<124x128xf32>, vector<128x128xf32>, vector<124x128xf32> -> vector<124x128xf32>
    %73 = arith.addf %68, %72 : vector<124x128xf32>
    %74 = vector.extract_strided_slice %64 {offsets = [2, 0], sizes = [124, 128], strides = [1, 1]} : vector<128x128xf32> to vector<124x128xf32>
    %c0_90 = arith.constant 0 : index
    %c2_91 = arith.constant 2 : index
    %c0_92 = arith.constant 0 : index
    %c0_93 = arith.constant 0 : index
    %75 = vector.load %arg4[%c0_90, %c2_91, %c0_92, %c0_93] : memref<2x5x128x128xf32, #tpu.memory_space<vmem>>, vector<1x1x128x128xf32>
    %76 = vector.shape_cast %75 : vector<1x1x128x128xf32> to vector<128x128xf32>
    %cst_94 = arith.constant dense<0.000000e+00> : vector<124x128xf32>
    %77 = tpu.matmul %74, %76, %cst_94 {dimension_numbers = #tpu.dot_dimension_numbers<[1], [0], [0], [1], [0, 0, 1, 1], [], []>} : vector<124x128xf32>, vector<128x128xf32>, vector<124x128xf32> -> vector<124x128xf32>
    %78 = arith.addf %73, %77 : vector<124x128xf32>
    %79 = vector.extract_strided_slice %64 {offsets = [3, 0], sizes = [124, 128], strides = [1, 1]} : vector<128x128xf32> to vector<124x128xf32>
    %c0_95 = arith.constant 0 : index
    %c3_96 = arith.constant 3 : index
    %c0_97 = arith.constant 0 : index
    %c0_98 = arith.constant 0 : index
    %80 = vector.load %arg4[%c0_95, %c3_96, %c0_97, %c0_98] : memref<2x5x128x128xf32, #tpu.memory_space<vmem>>, vector<1x1x128x128xf32>
    %81 = vector.shape_cast %80 : vector<1x1x128x128xf32> to vector<128x128xf32>
    %cst_99 = arith.constant dense<0.000000e+00> : vector<124x128xf32>
    %82 = tpu.matmul %79, %81, %cst_99 {dimension_numbers = #tpu.dot_dimension_numbers<[1], [0], [0], [1], [0, 0, 1, 1], [], []>} : vector<124x128xf32>, vector<128x128xf32>, vector<124x128xf32> -> vector<124x128xf32>
    %83 = arith.addf %78, %82 : vector<124x128xf32>
    %84 = vector.extract_strided_slice %64 {offsets = [4, 0], sizes = [124, 128], strides = [1, 1]} : vector<128x128xf32> to vector<124x128xf32>
    %c0_100 = arith.constant 0 : index
    %c4_101 = arith.constant 4 : index
    %c0_102 = arith.constant 0 : index
    %c0_103 = arith.constant 0 : index
    %85 = vector.load %arg4[%c0_100, %c4_101, %c0_102, %c0_103] : memref<2x5x128x128xf32, #tpu.memory_space<vmem>>, vector<1x1x128x128xf32>
    %86 = vector.shape_cast %85 : vector<1x1x128x128xf32> to vector<128x128xf32>
    %cst_104 = arith.constant dense<0.000000e+00> : vector<124x128xf32>
    %87 = tpu.matmul %84, %86, %cst_104 {dimension_numbers = #tpu.dot_dimension_numbers<[1], [0], [0], [1], [0, 0, 1, 1], [], []>} : vector<124x128xf32>, vector<128x128xf32>, vector<124x128xf32> -> vector<124x128xf32>
    %88 = arith.addf %83, %87 : vector<124x128xf32>
    %c0_105 = arith.constant 0 : index
    %c0_106 = arith.constant 0 : index
    %89 = vector.load %arg5[%c0_105, %c0_106] : memref<2x128xf32, #tpu.memory_space<vmem>>, vector<1x128xf32>
    %90 = vector.broadcast %89 : vector<1x128xf32> to vector<124x128xf32>
    %91 = arith.addf %88, %90 : vector<124x128xf32>
    %cst_107 = arith.constant 0.000000e+00 : f32
    %92 = vector.broadcast %cst_107 : f32 to vector<124x128xf32>
    %93 = arith.maximumf %91, %92 : vector<124x128xf32>
    %c0_108 = arith.constant 0 : index
    %c0_109 = arith.constant 0 : index
    %94 = vector.load %arg14[%c0_108, %c0_109] : memref<124x128xf32, #tpu.memory_space<vmem>>, vector<124x128xf32>
    tpu.vector_store %arg14[%c0_108, %c0_109], %93 {strides = array<i32>} : memref<124x128xf32, #tpu.memory_space<vmem>>, vector<124x128xf32>,
    %95 = vector.extract_strided_slice %64 {offsets = [0, 0], sizes = [124, 128], strides = [1, 1]} : vector<128x128xf32> to vector<124x128xf32>
    %c1_110 = arith.constant 1 : index
    %c0_111 = arith.constant 0 : index
    %c0_112 = arith.constant 0 : index
    %c0_113 = arith.constant 0 : index
    %96 = vector.load %arg4[%c1_110, %c0_111, %c0_112, %c0_113] : memref<2x5x128x128xf32, #tpu.memory_space<vmem>>, vector<1x1x128x128xf32>
    %97 = vector.shape_cast %96 : vector<1x1x128x128xf32> to vector<128x128xf32>
    %cst_114 = arith.constant dense<0.000000e+00> : vector<124x128xf32>
    %98 = tpu.matmul %95, %97, %cst_114 {dimension_numbers = #tpu.dot_dimension_numbers<[1], [0], [0], [1], [0, 0, 1, 1], [], []>} : vector<124x128xf32>, vector<128x128xf32>, vector<124x128xf32> -> vector<124x128xf32>
    %99 = vector.extract_strided_slice %64 {offsets = [1, 0], sizes = [124, 128], strides = [1, 1]} : vector<128x128xf32> to vector<124x128xf32>
    %c1_115 = arith.constant 1 : index
    %c1_116 = arith.constant 1 : index
    %c0_117 = arith.constant 0 : index
    %c0_118 = arith.constant 0 : index
    %100 = vector.load %arg4[%c1_115, %c1_116, %c0_117, %c0_118] : memref<2x5x128x128xf32, #tpu.memory_space<vmem>>, vector<1x1x128x128xf32>
    %101 = vector.shape_cast %100 : vector<1x1x128x128xf32> to vector<128x128xf32>
    %cst_119 = arith.constant dense<0.000000e+00> : vector<124x128xf32>
    %102 = tpu.matmul %99, %101, %cst_119 {dimension_numbers = #tpu.dot_dimension_numbers<[1], [0], [0], [1], [0, 0, 1, 1], [], []>} : vector<124x128xf32>, vector<128x128xf32>, vector<124x128xf32> -> vector<124x128xf32>
    %103 = arith.addf %98, %102 : vector<124x128xf32>
    %104 = vector.extract_strided_slice %64 {offsets = [2, 0], sizes = [124, 128], strides = [1, 1]} : vector<128x128xf32> to vector<124x128xf32>
    %c1_120 = arith.constant 1 : index
    %c2_121 = arith.constant 2 : index
    %c0_122 = arith.constant 0 : index
    %c0_123 = arith.constant 0 : index
    %105 = vector.load %arg4[%c1_120, %c2_121, %c0_122, %c0_123] : memref<2x5x128x128xf32, #tpu.memory_space<vmem>>, vector<1x1x128x128xf32>
    %106 = vector.shape_cast %105 : vector<1x1x128x128xf32> to vector<128x128xf32>
    %cst_124 = arith.constant dense<0.000000e+00> : vector<124x128xf32>
    %107 = tpu.matmul %104, %106, %cst_124 {dimension_numbers = #tpu.dot_dimension_numbers<[1], [0], [0], [1], [0, 0, 1, 1], [], []>} : vector<124x128xf32>, vector<128x128xf32>, vector<124x128xf32> -> vector<124x128xf32>
    %108 = arith.addf %103, %107 : vector<124x128xf32>
    %109 = vector.extract_strided_slice %64 {offsets = [3, 0], sizes = [124, 128], strides = [1, 1]} : vector<128x128xf32> to vector<124x128xf32>
    %c1_125 = arith.constant 1 : index
    %c3_126 = arith.constant 3 : index
    %c0_127 = arith.constant 0 : index
    %c0_128 = arith.constant 0 : index
    %110 = vector.load %arg4[%c1_125, %c3_126, %c0_127, %c0_128] : memref<2x5x128x128xf32, #tpu.memory_space<vmem>>, vector<1x1x128x128xf32>
    %111 = vector.shape_cast %110 : vector<1x1x128x128xf32> to vector<128x128xf32>
    %cst_129 = arith.constant dense<0.000000e+00> : vector<124x128xf32>
    %112 = tpu.matmul %109, %111, %cst_129 {dimension_numbers = #tpu.dot_dimension_numbers<[1], [0], [0], [1], [0, 0, 1, 1], [], []>} : vector<124x128xf32>, vector<128x128xf32>, vector<124x128xf32> -> vector<124x128xf32>
    %113 = arith.addf %108, %112 : vector<124x128xf32>
    %114 = vector.extract_strided_slice %64 {offsets = [4, 0], sizes = [124, 128], strides = [1, 1]} : vector<128x128xf32> to vector<124x128xf32>
    %c1_130 = arith.constant 1 : index
    %c4_131 = arith.constant 4 : index
    %c0_132 = arith.constant 0 : index
    %c0_133 = arith.constant 0 : index
    %115 = vector.load %arg4[%c1_130, %c4_131, %c0_132, %c0_133] : memref<2x5x128x128xf32, #tpu.memory_space<vmem>>, vector<1x1x128x128xf32>
    %116 = vector.shape_cast %115 : vector<1x1x128x128xf32> to vector<128x128xf32>
    %cst_134 = arith.constant dense<0.000000e+00> : vector<124x128xf32>
    %117 = tpu.matmul %114, %116, %cst_134 {dimension_numbers = #tpu.dot_dimension_numbers<[1], [0], [0], [1], [0, 0, 1, 1], [], []>} : vector<124x128xf32>, vector<128x128xf32>, vector<124x128xf32> -> vector<124x128xf32>
    %118 = arith.addf %113, %117 : vector<124x128xf32>
    %c1_135 = arith.constant 1 : index
    %c0_136 = arith.constant 0 : index
    %119 = vector.load %arg5[%c1_135, %c0_136] : memref<2x128xf32, #tpu.memory_space<vmem>>, vector<1x128xf32>
    %120 = vector.broadcast %119 : vector<1x128xf32> to vector<124x128xf32>
    %121 = arith.addf %118, %120 : vector<124x128xf32>
    %cst_137 = arith.constant 0.000000e+00 : f32
    %122 = vector.broadcast %cst_137 : f32 to vector<124x128xf32>
    %123 = arith.maximumf %121, %122 : vector<124x128xf32>
    %c0_138 = arith.constant 0 : index
    %c0_139 = arith.constant 0 : index
    %124 = vector.load %arg14[%c0_138, %c0_139] : memref<124x128xf32, #tpu.memory_space<vmem>>, vector<124x128xf32>
    %125 = arith.maximumf %124, %123 : vector<124x128xf32>
    %c0_140 = arith.constant 0 : index
    %c0_141 = arith.constant 0 : index
    %126 = vector.load %arg14[%c0_140, %c0_141] : memref<124x128xf32, #tpu.memory_space<vmem>>, vector<124x128xf32>
    tpu.vector_store %arg14[%c0_140, %c0_141], %125 {strides = array<i32>} : memref<124x128xf32, #tpu.memory_space<vmem>>, vector<124x128xf32>,
    %c0_142 = arith.constant 0 : index
    %c0_143 = arith.constant 0 : index
    %127 = tpu.strided_load %arg14[%c0_142, %c0_143] {strides = array<i32: 16, 1>} : memref<124x128xf32, #tpu.memory_space<vmem>>, vector<8x128xf32>
    %c1_144 = arith.constant 1 : index
    %c0_145 = arith.constant 0 : index
    %128 = tpu.strided_load %arg14[%c1_144, %c0_145] {strides = array<i32: 16, 1>} : memref<124x128xf32, #tpu.memory_space<vmem>>, vector<8x128xf32>
    %129 = arith.maximumf %127, %128 : vector<8x128xf32>
    %c0_146 = arith.constant 0 : index
    %c0_147 = arith.constant 0 : index
    %c0_148 = arith.constant 0 : index
    %130 = vector.load %arg6[%c0_146, %c0_147, %c0_148] : memref<5x128x120xf32, #tpu.memory_space<vmem>>, vector<1x128x120xf32>
    %131 = vector.shape_cast %130 : vector<1x128x120xf32> to vector<128x120xf32>
    %cst_149 = arith.constant dense<0.000000e+00> : vector<8x120xf32>
    %132 = tpu.matmul %129, %131, %cst_149 {dimension_numbers = #tpu.dot_dimension_numbers<[1], [0], [0], [1], [0, 0, 1, 1], [], []>} : vector<8x128xf32>, vector<128x120xf32>, vector<8x120xf32> -> vector<8x120xf32>
    %c2_150 = arith.constant 2 : index
    %c0_151 = arith.constant 0 : index
    %133 = tpu.strided_load %arg14[%c2_150, %c0_151] {strides = array<i32: 16, 1>} : memref<124x128xf32, #tpu.memory_space<vmem>>, vector<8x128xf32>
    %c3_152 = arith.constant 3 : index
    %c0_153 = arith.constant 0 : index
    %134 = tpu.strided_load %arg14[%c3_152, %c0_153] {strides = array<i32: 16, 1>} : memref<124x128xf32, #tpu.memory_space<vmem>>, vector<8x128xf32>
    %135 = arith.maximumf %133, %134 : vector<8x128xf32>
    %c1_154 = arith.constant 1 : index
    %c0_155 = arith.constant 0 : index
    %c0_156 = arith.constant 0 : index
    %136 = vector.load %arg6[%c1_154, %c0_155, %c0_156] : memref<5x128x120xf32, #tpu.memory_space<vmem>>, vector<1x128x120xf32>
    %137 = vector.shape_cast %136 : vector<1x128x120xf32> to vector<128x120xf32>
    %cst_157 = arith.constant dense<0.000000e+00> : vector<8x120xf32>
    %138 = tpu.matmul %135, %137, %cst_157 {dimension_numbers = #tpu.dot_dimension_numbers<[1], [0], [0], [1], [0, 0, 1, 1], [], []>} : vector<8x128xf32>, vector<128x120xf32>, vector<8x120xf32> -> vector<8x120xf32>
    %139 = arith.addf %132, %138 : vector<8x120xf32>
    %c4_158 = arith.constant 4 : index
    %c0_159 = arith.constant 0 : index
    %140 = tpu.strided_load %arg14[%c4_158, %c0_159] {strides = array<i32: 16, 1>} : memref<124x128xf32, #tpu.memory_space<vmem>>, vector<8x128xf32>
    %c5 = arith.constant 5 : index
    %c0_160 = arith.constant 0 : index
    %141 = tpu.strided_load %arg14[%c5, %c0_160] {strides = array<i32: 16, 1>} : memref<124x128xf32, #tpu.memory_space<vmem>>, vector<8x128xf32>
    %142 = arith.maximumf %140, %141 : vector<8x128xf32>
    %c2_161 = arith.constant 2 : index
    %c0_162 = arith.constant 0 : index
    %c0_163 = arith.constant 0 : index
    %143 = vector.load %arg6[%c2_161, %c0_162, %c0_163] : memref<5x128x120xf32, #tpu.memory_space<vmem>>, vector<1x128x120xf32>
    %144 = vector.shape_cast %143 : vector<1x128x120xf32> to vector<128x120xf32>
    %cst_164 = arith.constant dense<0.000000e+00> : vector<8x120xf32>
    %145 = tpu.matmul %142, %144, %cst_164 {dimension_numbers = #tpu.dot_dimension_numbers<[1], [0], [0], [1], [0, 0, 1, 1], [], []>} : vector<8x128xf32>, vector<128x120xf32>, vector<8x120xf32> -> vector<8x120xf32>
    %146 = arith.addf %139, %145 : vector<8x120xf32>
    %c6 = arith.constant 6 : index
    %c0_165 = arith.constant 0 : index
    %147 = tpu.strided_load %arg14[%c6, %c0_165] {strides = array<i32: 16, 1>} : memref<124x128xf32, #tpu.memory_space<vmem>>, vector<8x128xf32>
    %c7 = arith.constant 7 : index
    %c0_166 = arith.constant 0 : index
    %148 = tpu.strided_load %arg14[%c7, %c0_166] {strides = array<i32: 16, 1>} : memref<124x128xf32, #tpu.memory_space<vmem>>, vector<8x128xf32>
    %149 = arith.maximumf %147, %148 : vector<8x128xf32>
    %c3_167 = arith.constant 3 : index
    %c0_168 = arith.constant 0 : index
    %c0_169 = arith.constant 0 : index
    %150 = vector.load %arg6[%c3_167, %c0_168, %c0_169] : memref<5x128x120xf32, #tpu.memory_space<vmem>>, vector<1x128x120xf32>
    %151 = vector.shape_cast %150 : vector<1x128x120xf32> to vector<128x120xf32>
    %cst_170 = arith.constant dense<0.000000e+00> : vector<8x120xf32>
    %152 = tpu.matmul %149, %151, %cst_170 {dimension_numbers = #tpu.dot_dimension_numbers<[1], [0], [0], [1], [0, 0, 1, 1], [], []>} : vector<8x128xf32>, vector<128x120xf32>, vector<8x120xf32> -> vector<8x120xf32>
    %153 = arith.addf %146, %152 : vector<8x120xf32>
    %c8 = arith.constant 8 : index
    %c0_171 = arith.constant 0 : index
    %154 = tpu.strided_load %arg14[%c8, %c0_171] {strides = array<i32: 16, 1>} : memref<124x128xf32, #tpu.memory_space<vmem>>, vector<8x128xf32>
    %c9 = arith.constant 9 : index
    %c0_172 = arith.constant 0 : index
    %155 = tpu.strided_load %arg14[%c9, %c0_172] {strides = array<i32: 16, 1>} : memref<124x128xf32, #tpu.memory_space<vmem>>, vector<8x128xf32>
    %156 = arith.maximumf %154, %155 : vector<8x128xf32>
    %c4_173 = arith.constant 4 : index
    %c0_174 = arith.constant 0 : index
    %c0_175 = arith.constant 0 : index
    %157 = vector.load %arg6[%c4_173, %c0_174, %c0_175] : memref<5x128x120xf32, #tpu.memory_space<vmem>>, vector<1x128x120xf32>
    %158 = vector.shape_cast %157 : vector<1x128x120xf32> to vector<128x120xf32>
    %cst_176 = arith.constant dense<0.000000e+00> : vector<8x120xf32>
    %159 = tpu.matmul %156, %158, %cst_176 {dimension_numbers = #tpu.dot_dimension_numbers<[1], [0], [0], [1], [0, 0, 1, 1], [], []>} : vector<8x128xf32>, vector<128x120xf32>, vector<8x120xf32> -> vector<8x120xf32>
    %160 = arith.addf %153, %159 : vector<8x120xf32>
    %c0_177 = arith.constant 0 : index
    %c0_178 = arith.constant 0 : index
    %161 = vector.load %arg7[%c0_177, %c0_178] : memref<1x120xf32, #tpu.memory_space<vmem>>, vector<1x120xf32>
    %162 = vector.broadcast %161 : vector<1x120xf32> to vector<8x120xf32>
    %163 = arith.addf %160, %162 : vector<8x120xf32>
    %cst_179 = arith.constant 0.000000e+00 : f32
    %164 = vector.broadcast %cst_179 : f32 to vector<8x120xf32>
    %165 = arith.maximumf %163, %164 : vector<8x120xf32>
    %c0_180 = arith.constant 0 : index
    %c0_181 = arith.constant 0 : index
    %166 = vector.load %arg8[%c0_180, %c0_181] : memref<120x84xf32, #tpu.memory_space<vmem>>, vector<120x84xf32>
    %cst_182 = arith.constant dense<0.000000e+00> : vector<8x84xf32>
    %167 = tpu.matmul %165, %166, %cst_182 {dimension_numbers = #tpu.dot_dimension_numbers<[1], [0], [0], [1], [0, 0, 1, 1], [], []>} : vector<8x120xf32>, vector<120x84xf32>, vector<8x84xf32> -> vector<8x84xf32>
    %c0_183 = arith.constant 0 : index
    %c0_184 = arith.constant 0 : index
    %168 = vector.load %arg9[%c0_183, %c0_184] : memref<1x84xf32, #tpu.memory_space<vmem>>, vector<1x84xf32>
    %169 = vector.broadcast %168 : vector<1x84xf32> to vector<8x84xf32>
    %170 = arith.addf %167, %169 : vector<8x84xf32>
    %cst_185 = arith.constant 0.000000e+00 : f32
    %171 = vector.broadcast %cst_185 : f32 to vector<8x84xf32>
    %172 = arith.maximumf %170, %171 : vector<8x84xf32>
    %c0_186 = arith.constant 0 : index
    %c0_187 = arith.constant 0 : index
    %173 = vector.load %arg10[%c0_186, %c0_187] : memref<84x10xf32, #tpu.memory_space<vmem>>, vector<84x10xf32>
    %cst_188 = arith.constant dense<0.000000e+00> : vector<8x10xf32>
    %174 = tpu.matmul %172, %173, %cst_188 {dimension_numbers = #tpu.dot_dimension_numbers<[1], [0], [0], [1], [0, 0, 1, 1], [], []>} : vector<8x84xf32>, vector<84x10xf32>, vector<8x10xf32> -> vector<8x10xf32>
    %c0_189 = arith.constant 0 : index
    %c0_190 = arith.constant 0 : index
    %175 = vector.load %arg11[%c0_189, %c0_190] : memref<1x10xf32, #tpu.memory_space<vmem>>, vector<1x10xf32>
    %176 = vector.broadcast %175 : vector<1x10xf32> to vector<8x10xf32>
    %177 = arith.addf %174, %176 : vector<8x10xf32>
    %c0_191 = arith.constant 0 : index
    %c0_192 = arith.constant 0 : index
    %178 = vector.load %arg12[%c0_191, %c0_192] : memref<8x10xf32, #tpu.memory_space<vmem>>, vector<8x10xf32>
    tpu.vector_store %arg12[%c0_191, %c0_192], %177 {strides = array<i32>} : memref<8x10xf32, #tpu.memory_space<vmem>>, vector<8x10xf32>,
    return
  }
  func.func @transform_0(%arg0: i32) -> (i32, i32) {
    %c0_i32 = arith.constant 0 : i32
    %c0_i32_0 = arith.constant 0 : i32
    return %arg0, %c0_i32 : i32, i32
  }
  func.func @transform_1(%arg0: i32) -> (i32, i32, i32, i32) {
    %c0_i32 = arith.constant 0 : i32
    %c0_i32_0 = arith.constant 0 : i32
    %c0_i32_1 = arith.constant 0 : i32
    %c0_i32_2 = arith.constant 0 : i32
    %c0_i32_3 = arith.constant 0 : i32
    return %c0_i32, %c0_i32_0, %c0_i32_1, %c0_i32_2 : i32, i32, i32, i32
  }
  func.func @transform_2(%arg0: i32) -> (i32, i32) {
    %c0_i32 = arith.constant 0 : i32
    %c0_i32_0 = arith.constant 0 : i32
    %c0_i32_1 = arith.constant 0 : i32
    return %c0_i32, %c0_i32_0 : i32, i32
  }
  func.func @transform_3(%arg0: i32) -> (i32, i32, i32, i32) {
    %c0_i32 = arith.constant 0 : i32
    %c0_i32_0 = arith.constant 0 : i32
    %c0_i32_1 = arith.constant 0 : i32
    %c0_i32_2 = arith.constant 0 : i32
    %c0_i32_3 = arith.constant 0 : i32
    return %c0_i32, %c0_i32_0, %c0_i32_1, %c0_i32_2 : i32, i32, i32, i32
  }
  func.func @transform_4(%arg0: i32) -> (i32, i32) {
    %c0_i32 = arith.constant 0 : i32
    %c0_i32_0 = arith.constant 0 : i32
    %c0_i32_1 = arith.constant 0 : i32
    return %c0_i32, %c0_i32_0 : i32, i32
  }
  func.func @transform_5(%arg0: i32) -> (i32, i32, i32) {
    %c0_i32 = arith.constant 0 : i32
    %c0_i32_0 = arith.constant 0 : i32
    %c0_i32_1 = arith.constant 0 : i32
    %c0_i32_2 = arith.constant 0 : i32
    return %c0_i32, %c0_i32_0, %c0_i32_1 : i32, i32, i32
  }
  func.func @transform_6(%arg0: i32) -> (i32, i32) {
    %c0_i32 = arith.constant 0 : i32
    %c0_i32_0 = arith.constant 0 : i32
    %c0_i32_1 = arith.constant 0 : i32
    return %c0_i32, %c0_i32_0 : i32, i32
  }
  func.func @transform_7(%arg0: i32) -> (i32, i32) {
    %c0_i32 = arith.constant 0 : i32
    %c0_i32_0 = arith.constant 0 : i32
    %c0_i32_1 = arith.constant 0 : i32
    return %c0_i32, %c0_i32_0 : i32, i32
  }
  func.func @transform_8(%arg0: i32) -> (i32, i32) {
    %c0_i32 = arith.constant 0 : i32
    %c0_i32_0 = arith.constant 0 : i32
    %c0_i32_1 = arith.constant 0 : i32
    return %c0_i32, %c0_i32_0 : i32, i32
  }
  func.func @transform_9(%arg0: i32) -> (i32, i32) {
    %c0_i32 = arith.constant 0 : i32
    %c0_i32_0 = arith.constant 0 : i32
    %c0_i32_1 = arith.constant 0 : i32
    return %c0_i32, %c0_i32_0 : i32, i32
  }
  func.func @transform_10(%arg0: i32) -> (i32, i32) {
    %c0_i32 = arith.constant 0 : i32
    %c0_i32_0 = arith.constant 0 : i32
    %c0_i32_1 = arith.constant 0 : i32
    return %c0_i32, %c0_i32_0 : i32, i32
  }
  func.func @transform_11(%arg0: i32) -> (i32, i32) {
    %c0_i32 = arith.constant 0 : i32
    %c0_i32_0 = arith.constant 0 : i32
    return %arg0, %c0_i32 : i32, i32
  }
}

</mosaic_0001>

<llo_original>
// kernel: net_forward.1
$region0: #{net_forward.1}
  #allocation0 [shape = 'u32[]', space=smem, size = 0x4, offset = 0x4, fixed_abs, tag = 'smem constant byte address 0x4 - core index']
  #allocation1 [shape = 'u32[144,128]{1,0:T(1,128)}', space=vmem, size = 0x12000, scoped, tag = 'internal scratch']
  #allocation2 [shape = 'f32[256,128]{1,0:T(8,128)}', space=vmem, size = 0x20000, scoped, tag = 'scratch operand']
  #allocation3 [shape = 'f32[124,128]{1,0:T(8,128)}', space=vmem, size = 0x10000, scoped, tag = 'scratch operand']
  %s0 = inlined_call_operand.vmem [shape: f32[528,32], index: 0, kind: input, shape index: {}]
  %s1 = inlined_call_operand.vmem [shape: f32[2,5,32,128], index: 1, kind: input, shape index: {}]
  %s2 = inlined_call_operand.vmem [shape: f32[2,128], index: 2, kind: input, shape index: {}]
  %s3 = inlined_call_operand.vmem [shape: f32[2,5,128,128], index: 3, kind: input, shape index: {}]
  %s4 = inlined_call_operand.vmem [shape: f32[2,128], index: 4, kind: input, shape index: {}]
  %s5 = inlined_call_operand.vmem [shape: f32[5,128,120], index: 5, kind: input, shape index: {}]
  %s6 = inlined_call_operand.vmem [shape: f32[1,120], index: 6, kind: input, shape index: {}]
  %s7 = inlined_call_operand.vmem [shape: f32[120,84], index: 7, kind: input, shape index: {}]
  %s8 = inlined_call_operand.vmem [shape: f32[1,84], index: 8, kind: input, shape index: {}]
  %s9 = inlined_call_operand.vmem [shape: f32[84,10], index: 9, kind: input, shape index: {}]
  %s10 = inlined_call_operand.vmem [shape: f32[1,10], index: 10, kind: input, shape index: {}]
  %s11 = inlined_call_operand.hbm [shape: f32[16,10], index: 11, kind: output, shape index: {}]
  %s12 = sld [smem:[#allocation0]]
  $region77: #{net_forward.1} parent=0
    _
  %s14 = ssub.s32 1, %s12
  %s15 = scalar_select 0, %s14, %s12
  $region1: #{net_forward.1} parent=0
    #allocation4 [shape = 'u8[8192]{0}', space=vmem, size = 0x2000, scoped, tag = 'output window, operand 0']
    #allocation5 [shape = 's32[2]{0}', space=sflag, size = 0x8, scoped, tag = 'scoped memory for net_forward.1']
    %16 = vsyncpa [#allocation5], 0
    %s17 = scalar_lea.sflag [#allocation5], 1
    %18 = vsyncpa %s17, 0
    loop: start=0, step=1, limit=4
    $region2: #{net_forward.1} parent=1 // loop_pre_header
      _
    $region3: #{net_forward.1} parent=1 // loop_header
      %s20 = sphi 0, %s24
      %p21 = scmp.ge.s32.totalorder %s20, 4
      %s30 = sphi 0, %s32
      %s33 = sphi 0, %s30
      %s34 = sphi 0, %s33
      %s50 = sphi 0, %s34
      %s54 = sphi 0, %s54
      %s56 = sphi 0, %s54
      %s57 = sphi 0, %s56
      %s71 = sphi 0, %s57
      %s75 = sphi 0, %s75
      %s77 = sphi 0, %s75
      %s78 = sphi 0, %s77
      %s92 = sphi 0, %s78
      %s96 = sphi 0, %s96
      %s98 = sphi 0, %s96
      %s99 = sphi 0, %s98
      %s113 = sphi 0, %s99
      %s117 = sphi 0, %s117
      %s119 = sphi 0, %s117
      %s120 = sphi 0, %s119
      %s134 = sphi 0, %s120
      %s138 = sphi 0, %s138
      %s140 = sphi 0, %s138
      %s141 = sphi 0, %s140
      %s155 = sphi 0, %s141
      %s159 = sphi 0, %s159
      %s161 = sphi 0, %s159
      %s162 = sphi 0, %s161
      %s176 = sphi 0, %s162
      %s180 = sphi 0, %s180
      %s182 = sphi 0, %s180
      %s183 = sphi 0, %s182
      %s197 = sphi 0, %s183
      %s201 = sphi 0, %s201
      %s203 = sphi 0, %s201
      %s204 = sphi 0, %s203
      %s218 = sphi 0, %s204
      %s222 = sphi 0, %s222
      %s224 = sphi 0, %s222
      %s225 = sphi 0, %s224
      %s239 = sphi 0, %s225
      %s243 = sphi 0, %s243
      %s245 = sphi 0, %s243
      %s246 = sphi 0, %s245
      %s260 = sphi 0, %s246
      %s266 = sphi 0, %s268
      %s269 = sphi 0, %s266
      %s270 = sphi 0, %s269
      %s286 = sphi 0, %s270
    $region4: #{net_forward.1} parent=1 // loop_header_branch
      %23 = sbr.rel (%p21) target = $region8
    $region5: #{net_forward.1} parent=1 // loop_body
      %s25 = ssub.s32 %s20, 1
      %s26 = ssub.s32 %s20, 2
      %s27 = sadd.s32 %s20, 1
      %s28 = ssub.s32 %s20, %s27
      %p29 = scmp.eq.s32.totalorder %s28, 0
      %s31 = sadd.s32 %s30, 1
      %s32 = scalar_select %p29, %s30, %s31
      %p35 = pneg %p29
      %p36 = scmp.eq.s32.totalorder %s20, 1
      %p37 = por %p35, %p36
      %p38 = scmp.ne.s32.totalorder %s30, %s33
      %p39 = scmp.eq.s32.totalorder %s20, 0
      %p40 = por %p38, %p39
      %p41 = scmp.ne.s32.totalorder %s30, %s33
      %p42 = scmp.eq.s32.totalorder %s25, 1
      %p43 = por %p41, %p42
      %p44 = scmp.ne.s32.totalorder %s33, %s34
      %p45 = scmp.eq.s32.totalorder %s25, 0
      %p46 = por %p44, %p45
      %p47 = scmp.ne.s32.totalorder %s33, %s34
      %p48 = scmp.eq.s32.totalorder %s26, 1
      %p49 = por %p47, %p48
      %p51 = scmp.ne.s32.totalorder %s34, %s50
      %p52 = scmp.eq.s32.totalorder %s26, 0
      %p53 = por %p51, %p52
      %s55 = sadd.s32 %s54, 1
      %p58 = scmp.eq.s32.totalorder %s20, 1
      %p59 = scmp.ne.s32.totalorder %s54, %s56
      %p60 = scmp.eq.s32.totalorder %s20, 0
      %p61 = por %p59, %p60
      %p62 = scmp.ne.s32.totalorder %s54, %s56
      %p63 = scmp.eq.s32.totalorder %s25, 1
      %p64 = por %p62, %p63
      %p65 = scmp.ne.s32.totalorder %s56, %s57
      %p66 = scmp.eq.s32.totalorder %s25, 0
      %p67 = por %p65, %p66
      %p68 = scmp.ne.s32.totalorder %s56, %s57
      %p69 = scmp.eq.s32.totalorder %s26, 1
      %p70 = por %p68, %p69
      %p72 = scmp.ne.s32.totalorder %s57, %s71
      %p73 = scmp.eq.s32.totalorder %s26, 0
      %p74 = por %p72, %p73
      %s76 = sadd.s32 %s75, 1
      %p79 = scmp.eq.s32.totalorder %s20, 1
      %p80 = scmp.ne.s32.totalorder %s75, %s77
      %p81 = scmp.eq.s32.totalorder %s20, 0
      %p82 = por %p80, %p81
      %p83 = scmp.ne.s32.totalorder %s75, %s77
      %p84 = scmp.eq.s32.totalorder %s25, 1
      %p85 = por %p83, %p84
      %p86 = scmp.ne.s32.totalorder %s77, %s78
      %p87 = scmp.eq.s32.totalorder %s25, 0
      %p88 = por %p86, %p87
      %p89 = scmp.ne.s32.totalorder %s77, %s78
      %p90 = scmp.eq.s32.totalorder %s26, 1
      %p91 = por %p89, %p90
      %p93 = scmp.ne.s32.totalorder %s78, %s92
      %p94 = scmp.eq.s32.totalorder %s26, 0
      %p95 = por %p93, %p94
      %s97 = sadd.s32 %s96, 1
      %p100 = scmp.eq.s32.totalorder %s20, 1
      %p101 = scmp.ne.s32.totalorder %s96, %s98
      %p102 = scmp.eq.s32.totalorder %s20, 0
      %p103 = por %p101, %p102
      %p104 = scmp.ne.s32.totalorder %s96, %s98
      %p105 = scmp.eq.s32.totalorder %s25, 1
      %p106 = por %p104, %p105
      %p107 = scmp.ne.s32.totalorder %s98, %s99
      %p108 = scmp.eq.s32.totalorder %s25, 0
      %p109 = por %p107, %p108
      %p110 = scmp.ne.s32.totalorder %s98, %s99
      %p111 = scmp.eq.s32.totalorder %s26, 1
      %p112 = por %p110, %p111
      %p114 = scmp.ne.s32.totalorder %s99, %s113
      %p115 = scmp.eq.s32.totalorder %s26, 0
      %p116 = por %p114, %p115
      %s118 = sadd.s32 %s117, 1
      %p121 = scmp.eq.s32.totalorder %s20, 1
      %p122 = scmp.ne.s32.totalorder %s117, %s119
      %p123 = scmp.eq.s32.totalorder %s20, 0
      %p124 = por %p122, %p123
      %p125 = scmp.ne.s32.totalorder %s117, %s119
      %p126 = scmp.eq.s32.totalorder %s25, 1
      %p127 = por %p125, %p126
      %p128 = scmp.ne.s32.totalorder %s119, %s120
      %p129 = scmp.eq.s32.totalorder %s25, 0
      %p130 = por %p128, %p129
      %p131 = scmp.ne.s32.totalorder %s119, %s120
      %p132 = scmp.eq.s32.totalorder %s26, 1
      %p133 = por %p131, %p132
      %p135 = scmp.ne.s32.totalorder %s120, %s134
      %p136 = scmp.eq.s32.totalorder %s26, 0
      %p137 = por %p135, %p136
      %s139 = sadd.s32 %s138, 1
      %p142 = scmp.eq.s32.totalorder %s20, 1
      %p143 = scmp.ne.s32.totalorder %s138, %s140
      %p144 = scmp.eq.s32.totalorder %s20, 0
      %p145 = por %p143, %p144
      %p146 = scmp.ne.s32.totalorder %s138, %s140
      %p147 = scmp.eq.s32.totalorder %s25, 1
      %p148 = por %p146, %p147
      %p149 = scmp.ne.s32.totalorder %s140, %s141
      %p150 = scmp.eq.s32.totalorder %s25, 0
      %p151 = por %p149, %p150
      %p152 = scmp.ne.s32.totalorder %s140, %s141
      %p153 = scmp.eq.s32.totalorder %s26, 1
      %p154 = por %p152, %p153
      %p156 = scmp.ne.s32.totalorder %s141, %s155
      %p157 = scmp.eq.s32.totalorder %s26, 0
      %p158 = por %p156, %p157
      %s160 = sadd.s32 %s159, 1
      %p163 = scmp.eq.s32.totalorder %s20, 1
      %p164 = scmp.ne.s32.totalorder %s159, %s161
      %p165 = scmp.eq.s32.totalorder %s20, 0
      %p166 = por %p164, %p165
      %p167 = scmp.ne.s32.totalorder %s159, %s161
      %p168 = scmp.eq.s32.totalorder %s25, 1
      %p169 = por %p167, %p168
      %p170 = scmp.ne.s32.totalorder %s161, %s162
      %p171 = scmp.eq.s32.totalorder %s25, 0
      %p172 = por %p170, %p171
      %p173 = scmp.ne.s32.totalorder %s161, %s162
      %p174 = scmp.eq.s32.totalorder %s26, 1
      %p175 = por %p173, %p174
      %p177 = scmp.ne.s32.totalorder %s162, %s176
      %p178 = scmp.eq.s32.totalorder %s26, 0
      %p179 = por %p177, %p178
      %s181 = sadd.s32 %s180, 1
      %p184 = scmp.eq.s32.totalorder %s20, 1
      %p185 = scmp.ne.s32.totalorder %s180, %s182
      %p186 = scmp.eq.s32.totalorder %s20, 0
      %p187 = por %p185, %p186
      %p188 = scmp.ne.s32.totalorder %s180, %s182
      %p189 = scmp.eq.s32.totalorder %s25, 1
      %p190 = por %p188, %p189
      %p191 = scmp.ne.s32.totalorder %s182, %s183
      %p192 = scmp.eq.s32.totalorder %s25, 0
      %p193 = por %p191, %p192
      %p194 = scmp.ne.s32.totalorder %s182, %s183
      %p195 = scmp.eq.s32.totalorder %s26, 1
      %p196 = por %p194, %p195
      %p198 = scmp.ne.s32.totalorder %s183, %s197
      %p199 = scmp.eq.s32.totalorder %s26, 0
      %p200 = por %p198, %p199
      %s202 = sadd.s32 %s201, 1
      %p205 = scmp.eq.s32.totalorder %s20, 1
      %p206 = scmp.ne.s32.totalorder %s201, %s203
      %p207 = scmp.eq.s32.totalorder %s20, 0
      %p208 = por %p206, %p207
      %p209 = scmp.ne.s32.totalorder %s201, %s203
      %p210 = scmp.eq.s32.totalorder %s25, 1
      %p211 = por %p209, %p210
      %p212 = scmp.ne.s32.totalorder %s203, %s204
      %p213 = scmp.eq.s32.totalorder %s25, 0
      %p214 = por %p212, %p213
      %p215 = scmp.ne.s32.totalorder %s203, %s204
      %p216 = scmp.eq.s32.totalorder %s26, 1
      %p217 = por %p215, %p216
      %p219 = scmp.ne.s32.totalorder %s204, %s218
      %p220 = scmp.eq.s32.totalorder %s26, 0
      %p221 = por %p219, %p220
      %s223 = sadd.s32 %s222, 1
      %p226 = scmp.eq.s32.totalorder %s20, 1
      %p227 = scmp.ne.s32.totalorder %s222, %s224
      %p228 = scmp.eq.s32.totalorder %s20, 0
      %p229 = por %p227, %p228
      %p230 = scmp.ne.s32.totalorder %s222, %s224
      %p231 = scmp.eq.s32.totalorder %s25, 1
      %p232 = por %p230, %p231
      %p233 = scmp.ne.s32.totalorder %s224, %s225
      %p234 = scmp.eq.s32.totalorder %s25, 0
      %p235 = por %p233, %p234
      %p236 = scmp.ne.s32.totalorder %s224, %s225
      %p237 = scmp.eq.s32.totalorder %s26, 1
      %p238 = por %p236, %p237
      %p240 = scmp.ne.s32.totalorder %s225, %s239
      %p241 = scmp.eq.s32.totalorder %s26, 0
      %p242 = por %p240, %p241
      %s244 = sadd.s32 %s243, 1
      %p247 = scmp.eq.s32.totalorder %s20, 1
      %p248 = scmp.ne.s32.totalorder %s243, %s245
      %p249 = scmp.eq.s32.totalorder %s20, 0
      %p250 = por %p248, %p249
      %p251 = scmp.ne.s32.totalorder %s243, %s245
      %p252 = scmp.eq.s32.totalorder %s25, 1
      %p253 = por %p251, %p252
      %p254 = scmp.ne.s32.totalorder %s245, %s246
      %p255 = scmp.eq.s32.totalorder %s25, 0
      %p256 = por %p254, %p255
      %p257 = scmp.ne.s32.totalorder %s245, %s246
      %p258 = scmp.eq.s32.totalorder %s26, 1
      %p259 = por %p257, %p258
      %p261 = scmp.ne.s32.totalorder %s246, %s260
      %p262 = scmp.eq.s32.totalorder %s26, 0
      %p263 = por %p261, %p262
      %s264 = ssub.s32 %s20, %s27
      %p265 = scmp.eq.s32.totalorder %s264, 0
      %s267 = sadd.s32 %s266, 1
      %s268 = scalar_select %p265, %s266, %s267
      %p271 = pneg %p265
      %p272 = scmp.eq.s32.totalorder %s20, 1
      %p273 = por %p271, %p272
      %p274 = scmp.ne.s32.totalorder %s266, %s269
      %p275 = scmp.eq.s32.totalorder %s20, 0
      %p276 = por %p274, %p275
      %p277 = scmp.ne.s32.totalorder %s266, %s269
      %p278 = scmp.eq.s32.totalorder %s25, 1
      %p279 = por %p277, %p278
      %p280 = scmp.ne.s32.totalorder %s269, %s270
      %p281 = scmp.eq.s32.totalorder %s25, 0
      %p282 = por %p280, %p281
      %p283 = scmp.ne.s32.totalorder %s269, %s270
      %p284 = scmp.eq.s32.totalorder %s26, 1
      %p285 = por %p283, %p284
      %p287 = scmp.ne.s32.totalorder %s270, %s286
      %p288 = scmp.eq.s32.totalorder %s26, 0
      %p289 = por %p287, %p288
      %p290 = scmp.le.s32.totalorder 1, %s20
      %p291 = scmp.lt.s32.totalorder %s20, 3
      %p292 = pnand %p290, %p291
      %p293 = pneg %p292
      // Predicated region
      $region9: #{net_forward.1} parent=5 // pred_check
        _
      $region10: #{net_forward.1} parent=5 // pred_check_branch
        %295 = sbr.rel (%p292) target = $region12
      $region11: #{net_forward.1} parent=5 // pred_region
        %s296 = ssub.s32 %s20, 1
        // Predicated region
        $region13: #{net_forward.1} parent=11 // pred_check
          %p297 = pneg %p67
        $region14: #{net_forward.1} parent=11 // pred_check_branch
          %299 = sbr.rel (%p297) target = $region16
        $region15: #{net_forward.1} parent=11 // pred_region
          _
        $region16: #{net_forward.1} parent=11 // pred_fallthru
          _
        // Predicated region
        $region17: #{net_forward.1} parent=11 // pred_check
          %p300 = pneg %p88
        $region18: #{net_forward.1} parent=11 // pred_check_branch
          %302 = sbr.rel (%p300) target = $region20
        $region19: #{net_forward.1} parent=11 // pred_region
          _
        $region20: #{net_forward.1} parent=11 // pred_fallthru
          _
        // Predicated region
        $region21: #{net_forward.1} parent=11 // pred_check
          %p303 = pneg %p109
        $region22: #{net_forward.1} parent=11 // pred_check_branch
          %305 = sbr.rel (%p303) target = $region24
        $region23: #{net_forward.1} parent=11 // pred_region
          _
        $region24: #{net_forward.1} parent=11 // pred_fallthru
          _
        // Predicated region
        $region25: #{net_forward.1} parent=11 // pred_check
          %p306 = pneg %p130
        $region26: #{net_forward.1} parent=11 // pred_check_branch
          %308 = sbr.rel (%p306) target = $region28
        $region27: #{net_forward.1} parent=11 // pred_region
          _
        $region28: #{net_forward.1} parent=11 // pred_fallthru
          _
        // Predicated region
        $region29: #{net_forward.1} parent=11 // pred_check
          %p309 = pneg %p151
        $region30: #{net_forward.1} parent=11 // pred_check_branch
          %311 = sbr.rel (%p309) target = $region32
        $region31: #{net_forward.1} parent=11 // pred_region
          _
        $region32: #{net_forward.1} parent=11 // pred_fallthru
          _
        // Predicated region
        $region33: #{net_forward.1} parent=11 // pred_check
          %p312 = pneg %p172
        $region34: #{net_forward.1} parent=11 // pred_check_branch
          %314 = sbr.rel (%p312) target = $region36
        $region35: #{net_forward.1} parent=11 // pred_region
          _
        $region36: #{net_forward.1} parent=11 // pred_fallthru
          _
        // Predicated region
        $region37: #{net_forward.1} parent=11 // pred_check
          %p315 = pneg %p193
        $region38: #{net_forward.1} parent=11 // pred_check_branch
          %317 = sbr.rel (%p315) target = $region40
        $region39: #{net_forward.1} parent=11 // pred_region
          _
        $region40: #{net_forward.1} parent=11 // pred_fallthru
          _
        // Predicated region
        $region41: #{net_forward.1} parent=11 // pred_check
          %p318 = pneg %p214
        $region42: #{net_forward.1} parent=11 // pred_check_branch
          %320 = sbr.rel (%p318) target = $region44
        $region43: #{net_forward.1} parent=11 // pred_region
          _
        $region44: #{net_forward.1} parent=11 // pred_fallthru
          _
        // Predicated region
        $region45: #{net_forward.1} parent=11 // pred_check
          %p321 = pneg %p235
        $region46: #{net_forward.1} parent=11 // pred_check_branch
          %323 = sbr.rel (%p321) target = $region48
        $region47: #{net_forward.1} parent=11 // pred_region
          _
        $region48: #{net_forward.1} parent=11 // pred_fallthru
          _
        // Predicated region
        $region49: #{net_forward.1} parent=11 // pred_check
          %p324 = pneg %p256
        $region50: #{net_forward.1} parent=11 // pred_check_branch
          %326 = sbr.rel (%p324) target = $region52
        $region51: #{net_forward.1} parent=11 // pred_region
          _
        $region52: #{net_forward.1} parent=11 // pred_fallthru
          _
      $region12: #{net_forward.1} parent=5 // pred_fallthru
        _
      %p327 = scmp.lt.s32.totalorder %s20, 2
      // Predicated region
      $region53: #{net_forward.1} parent=5 // pred_check
        %p328 = pneg %p327
      $region54: #{net_forward.1} parent=5 // pred_check_branch
        %330 = sbr.rel (%p328) target = $region56
      $region55: #{net_forward.1} parent=5 // pred_region
        // Predicated region
        $region57: #{net_forward.1} parent=55 // pred_check
          %p331 = pneg %p40
        $region58: #{net_forward.1} parent=55 // pred_check_branch
          %333 = sbr.rel (%p331) target = $region60
        $region59: #{net_forward.1} parent=55 // pred_region
          %s334 = smul.u32 33, %s20
          %p335 = scmp.lt.s32.totalorder %s334, 65
          %s336 = scalar_select %p335, %s334, 65
          %s337 = smul.addr %s336, 8
          %s338 = scalar_lea.vmem %s0, %s337
          %s339 = smul.u32 33, %s20
        $region60: #{net_forward.1} parent=55 // pred_fallthru
          _
      $region56: #{net_forward.1} parent=5 // pred_fallthru
        _
      %p340 = scmp.le.s32.totalorder 1, %s20
      %p341 = scmp.lt.s32.totalorder %s20, 3
      %p342 = pnand %p340, %p341
      %p343 = pneg %p342
      // Predicated region
      $region61: #{net_forward.1} parent=5 // pred_check
        _
      $region62: #{net_forward.1} parent=5 // pred_check_branch
        %345 = sbr.rel (%p342) target = $region64
      $region63: #{net_forward.1} parent=5 // pred_region
        %s346 = ssub.s32 %s20, 1
        %s347 = smul.u32 33, %s25
        %p348 = scmp.lt.s32.totalorder %s347, 65
        %s349 = scalar_select %p348, %s347, 65
        %s350 = smul.addr %s349, 8
        %s351 = scalar_lea.vmem %s0, %s350
        %p352 = pneg %p46
        %p353 = pneg %p43
        %p354 = pneg %p67
        %p355 = pneg %p64
        %p356 = pneg %p88
        %p357 = pneg %p85
        %p358 = pneg %p109
        %p359 = pneg %p106
        %p360 = pneg %p130
        %p361 = pneg %p127
        %p362 = pneg %p151
        %p363 = pneg %p148
        %p364 = pneg %p172
        %p365 = pneg %p169
        %p366 = pneg %p193
        %p367 = pneg %p190
        %p368 = pneg %p214
        %p369 = pneg %p211
        %p370 = pneg %p235
        %p371 = pneg %p232
        %p372 = pneg %p256
        %p373 = pneg %p253
        %p374 = pneg %p282
        %p375 = pneg %p279
        %s376 = sand.u32 %s269, 1
        %s377 = scalar_lea.sflag [#allocation5], %s376
        %s378 = sand.u32 %s269, 1
        %s379 = smul.addr %s378, 8
        %s380 = scalar_lea.vmem [#allocation4], %s379
        %s381 = smul.u32 33, %s25
        %p382 = scmp.lt.s32.totalorder %s381, 65
        %s383 = scalar_select %p382, %s381, 65
        %s384 = smul.addr %s383, 8
        %s385 = scalar_lea.vmem %s0, %s384
        %s386 = smul.u32 33, %s25
        %v387 = vld [vmem:[%s385] sm:$0xff]
        %v388 = vld [vmem:[%s385 + $0x8] sm:$0xff]
        %v389 = vld [vmem:[%s385 + $0x10] sm:$0xff]
        %v390 = vld [vmem:[%s385 + $0x18] sm:$0xff]
        %v391 = vld [vmem:[%s385 + $0x20] sm:$0xff]
        %v392 = vld [vmem:[%s385 + $0x28] sm:$0xff]
        %v393 = vld [vmem:[%s385 + $0x30] sm:$0xff]
        %v394 = vld [vmem:[%s385 + $0x38] sm:$0xff]
        %v395 = vld [vmem:[%s385 + $0x40] sm:$0xff]
        %v396 = vld [vmem:[%s385 + $0x48] sm:$0xff]
        %v397 = vld [vmem:[%s385 + $0x50] sm:$0xff]
        %v398 = vld [vmem:[%s385 + $0x58] sm:$0xff]
        %v399 = vld [vmem:[%s385 + $0x60] sm:$0xff]
        %v400 = vld [vmem:[%s385 + $0x68] sm:$0xff]
        %v401 = vld [vmem:[%s385 + $0x70] sm:$0xff]
        %v402 = vld [vmem:[%s385 + $0x78] sm:$0xff]
        %v403 = vld [vmem:[%s385 + $0x80] sm:$0xff]
        %v404 = vld [vmem:[%s385 + $0x88] sm:$0xff]
        %v405 = vld [vmem:[%s385 + $0x90] sm:$0xff]
        %v406 = vld [vmem:[%s385 + $0x98] sm:$0xff]
        %v407 = vld [vmem:[%s385 + $0xa0] sm:$0xff]
        %v408 = vld [vmem:[%s385 + $0xa8] sm:$0xff]
        %v409 = vld [vmem:[%s385 + $0xb0] sm:$0xff]
        %v410 = vld [vmem:[%s385 + $0xb8] sm:$0xff]
        %v411 = vld [vmem:[%s385 + $0xc0] sm:$0xff]
        %v412 = vld [vmem:[%s385 + $0xc8] sm:$0xff]
        %v413 = vld [vmem:[%s385 + $0xd0] sm:$0xff]
        %v414 = vld [vmem:[%s385 + $0xd8] sm:$0xff]
        %v415 = vld [vmem:[%s385 + $0xe0] sm:$0xff]
        %v416 = vld [vmem:[%s385 + $0xe8] sm:$0xff]
        %v417 = vld [vmem:[%s385 + $0xf0] sm:$0xff]
        %v418 = vld [vmem:[%s385 + $0xf8] sm:$0xff]
        %v419 = vld [vmem:[%s1] sm:$0xff]
        %v420 = vld [vmem:[%s1 + $0x8] sm:$0xff]
        %v421 = vld [vmem:[%s1 + $0x10] sm:$0xff]
        %v422 = vld [vmem:[%s1 + $0x18] sm:$0xff]
        %v423 = vld [vmem:[%s385 + $0x1] sm:$0xff]
        %v424 = vld [vmem:[%s385 + $0x9] sm:$0xff]
        %v425 = vld [vmem:[%s385 + $0x11] sm:$0xff]
        %v426 = vld [vmem:[%s385 + $0x19] sm:$0xff]
        %v427 = vld [vmem:[%s385 + $0x21] sm:$0xff]
        %v428 = vld [vmem:[%s385 + $0x29] sm:$0xff]
        %v429 = vld [vmem:[%s385 + $0x31] sm:$0xff]
        %v430 = vld [vmem:[%s385 + $0x39] sm:$0xff]
        %v431 = vld [vmem:[%s385 + $0x41] sm:$0xff]
        %v432 = vld [vmem:[%s385 + $0x49] sm:$0xff]
        %v433 = vld [vmem:[%s385 + $0x51] sm:$0xff]
        %v434 = vld [vmem:[%s385 + $0x59] sm:$0xff]
        %v435 = vld [vmem:[%s385 + $0x61] sm:$0xff]
        %v436 = vld [vmem:[%s385 + $0x69] sm:$0xff]
        %v437 = vld [vmem:[%s385 + $0x71] sm:$0xff]
        %v438 = vld [vmem:[%s385 + $0x79] sm:$0xff]
        %v439 = vld [vmem:[%s385 + $0x81] sm:$0xff]
        %v440 = vld [vmem:[%s385 + $0x89] sm:$0xff]
        %v441 = vld [vmem:[%s385 + $0x91] sm:$0xff]
        %v442 = vld [vmem:[%s385 + $0x99] sm:$0xff]
        %v443 = vld [vmem:[%s385 + $0xa1] sm:$0xff]
        %v444 = vld [vmem:[%s385 + $0xa9] sm:$0xff]
        %v445 = vld [vmem:[%s385 + $0xb1] sm:$0xff]
        %v446 = vld [vmem:[%s385 + $0xb9] sm:$0xff]
        %v447 = vld [vmem:[%s385 + $0xc1] sm:$0xff]
        %v448 = vld [vmem:[%s385 + $0xc9] sm:$0xff]
        %v449 = vld [vmem:[%s385 + $0xd1] sm:$0xff]
        %v450 = vld [vmem:[%s385 + $0xd9] sm:$0xff]
        %v451 = vld [vmem:[%s385 + $0xe1] sm:$0xff]
        %v452 = vld [vmem:[%s385 + $0xe9] sm:$0xff]
        %v453 = vld [vmem:[%s385 + $0xf1] sm:$0xff]
        %v454 = vld [vmem:[%s385 + $0xf9] sm:$0xff]
        %s455 = scalar_lea.vmem %s1, 32
        %v456 = vld [vmem:[%s455] sm:$0xff]
        %v457 = vld [vmem:[%s455 + $0x8] sm:$0xff]
        %v458 = vld [vmem:[%s455 + $0x10] sm:$0xff]
        %v459 = vld [vmem:[%s455 + $0x18] sm:$0xff]
        %vm460 = vcmask 261120
        %v462 = vsel %vm460, %v423, 0
        %v465 = vsel %vm460, %v424, 0
        %v468 = vsel %vm460, %v425, 0
        %v471 = vsel %vm460, %v426, 0
        %v474 = vsel %vm460, %v427, 0
        %v477 = vsel %vm460, %v428, 0
        %v480 = vsel %vm460, %v429, 0
        %v483 = vsel %vm460, %v430, 0
        %v486 = vsel %vm460, %v431, 0
        %v489 = vsel %vm460, %v432, 0
        %v492 = vsel %vm460, %v433, 0
        %v495 = vsel %vm460, %v434, 0
        %v498 = vsel %vm460, %v435, 0
        %v501 = vsel %vm460, %v436, 0
        %v504 = vsel %vm460, %v437, 0
        %v507 = vsel %vm460, %v438, 0
        %v510 = vsel %vm460, %v439, 0
        %v513 = vsel %vm460, %v440, 0
        %v516 = vsel %vm460, %v441, 0
        %v519 = vsel %vm460, %v442, 0
        %v522 = vsel %vm460, %v443, 0
        %v525 = vsel %vm460, %v444, 0
        %v528 = vsel %vm460, %v445, 0
        %v531 = vsel %vm460, %v446, 0
        %v534 = vsel %vm460, %v447, 0
        %v537 = vsel %vm460, %v448, 0
        %v540 = vsel %vm460, %v449, 0
        %v543 = vsel %vm460, %v450, 0
        %v546 = vsel %vm460, %v451, 0
        %v549 = vsel %vm460, %v452, 0
        %v552 = vsel %vm460, %v453, 0
        %v555 = vsel %vm460, %v454, 0
        %557 = vmatprep.subr.mxu0 0.0
        %558 = vmatpush1.msra.mxu0 %v456
        %559 = vmatprep.subr.mxu0 0.0
        %560 = vmatpush1.msra.mxu0 %v457
        %561 = vmatprep.subr.mxu0 0.0
        %562 = vmatpush1.msra.mxu0 %v458
        %563 = vmatprep.subr.mxu0 0.0
        %564 = vmatpush1.msra.mxu0 %v459
        %565 = vmatprep.subr.mxu0 0.0
        %566 = vmatpush1.msra.mxu0 0.0
        %567 = vmatprep.subr.mxu0 0.0
        %568 = vmatpush1.msra.mxu0 0.0
        %569 = vmatprep.subr.mxu0 0.0
        %570 = vmatpush1.msra.mxu0 0.0
        %571 = vmatprep.subr.mxu0 0.0
        %572 = vmatpush1.msra.mxu0 0.0
        %573 = vmatprep.subr.mxu0 0.0
        %574 = vmatpush1.msra.mxu0 0.0
        %575 = vmatprep.subr.mxu0 0.0
        %576 = vmatpush1.msra.mxu0 0.0
        %577 = vmatprep.subr.mxu0 0.0
        %578 = vmatpush1.msra.mxu0 0.0
        %579 = vmatprep.subr.mxu0 0.0
        %580 = vmatpush1.msra.mxu0 0.0
        %581 = vmatprep.subr.mxu0 0.0
        %582 = vmatpush1.msra.mxu0 0.0
        %583 = vmatprep.subr.mxu0 0.0
        %584 = vmatpush1.msra.mxu0 0.0
        %585 = vmatprep.subr.mxu0 0.0
        %586 = vmatpush1.msra.mxu0 0.0
        %587 = vmatprep.subr.mxu0 0.0
        %588 = vmatpush1.msra.mxu0 0.0
        %589 = vmatprep.subr.mxu0 0.0
        %590 = vmatpush1.msra.mxu0 0.0
        %591 = vmatprep.subr.mxu0 0.0
        %592 = vmatpush1.msra.mxu0 0.0
        %593 = vmatprep.subr.mxu0 0.0
        %594 = vmatpush1.msra.mxu0 0.0
        %595 = vmatprep.subr.mxu0 0.0
        %596 = vmatpush1.msra.mxu0 0.0
        %597 = vmatprep.subr.mxu0 0.0
        %598 = vmatpush1.msra.mxu0 0.0
        %599 = vmatprep.subr.mxu0 0.0
        %600 = vmatpush1.msra.mxu0 0.0
        %601 = vmatprep.subr.mxu0 0.0
        %602 = vmatpush1.msra.mxu0 0.0
        %603 = vmatprep.subr.mxu0 0.0
        %604 = vmatpush1.msra.mxu0 0.0
        %605 = vmatprep.subr.mxu0 0.0
        %606 = vmatpush1.msra.mxu0 0.0
        %607 = vmatprep.subr.mxu0 0.0
        %608 = vmatpush1.msra.mxu0 0.0
        %609 = vmatprep.subr.mxu0 0.0
        %610 = vmatpush1.msra.mxu0 0.0
        %611 = vmatprep.subr.mxu0 0.0
        %612 = vmatpush1.msra.mxu0 0.0
        %613 = vmatprep.subr.mxu0 0.0
        %614 = vmatpush1.msra.mxu0 0.0
        %615 = vmatprep.subr.mxu0 0.0
        %616 = vmatpush1.msra.mxu0 0.0
        %617 = vmatprep.subr.mxu0 0.0
        %618 = vmatpush1.msra.mxu0 0.0
        %619 = vmatprep.subr.mxu0 0.0
        %620 = vmatpush1.msra.mxu0 0.0
        %621 = vmatprep.mubr.f32.mxu0 0.0
        %622 = vmatmul.mubr.f32.gmra.mrb[0].mxu0 %v462
        %v623 = vpop.f32.mrb[0].mxu0
        %v624 = vadd.f32 0.0, %v623
        %v625 = vpop.f32.mrb[0].mxu0
        %626 = vmatprep.mubr.f32.mxu0 0.0
        %627 = vmatmul.mubr.f32.gmra.mrb[0].mxu0 %v465
        %v628 = vpop.f32.mrb[0].mxu0
        %v629 = vadd.f32 0.0, %v628
        %v630 = vpop.f32.mrb[0].mxu0
        %631 = vmatprep.mubr.f32.mxu0 0.0
        %632 = vmatmul.mubr.f32.gmra.mrb[0].mxu0 %v468
        %v633 = vpop.f32.mrb[0].mxu0
        %v634 = vadd.f32 0.0, %v633
        %v635 = vpop.f32.mrb[0].mxu0
        %636 = vmatprep.mubr.f32.mxu0 0.0
        %637 = vmatmul.mubr.f32.gmra.mrb[0].mxu0 %v471
        %v638 = vpop.f32.mrb[0].mxu0
        %v639 = vadd.f32 0.0, %v638
        %v640 = vpop.f32.mrb[0].mxu0
        %641 = vmatprep.mubr.f32.mxu0 0.0
        %642 = vmatmul.mubr.f32.gmra.mrb[0].mxu0 %v474
        %v643 = vpop.f32.mrb[0].mxu0
        %v644 = vadd.f32 0.0, %v643
        %v645 = vpop.f32.mrb[0].mxu0
        %646 = vmatprep.mubr.f32.mxu0 0.0
        %647 = vmatmul.mubr.f32.gmra.mrb[0].mxu0 %v477
        %v648 = vpop.f32.mrb[0].mxu0
        %v649 = vadd.f32 0.0, %v648
        %v650 = vpop.f32.mrb[0].mxu0
        %651 = vmatprep.mubr.f32.mxu0 0.0
        %652 = vmatmul.mubr.f32.gmra.mrb[0].mxu0 %v480
        %v653 = vpop.f32.mrb[0].mxu0
        %v654 = vadd.f32 0.0, %v653
        %v655 = vpop.f32.mrb[0].mxu0
        %656 = vmatprep.mubr.f32.mxu0 0.0
        %657 = vmatmul.mubr.f32.gmra.mrb[0].mxu0 %v483
        %v658 = vpop.f32.mrb[0].mxu0
        %v659 = vadd.f32 0.0, %v658
        %v660 = vpop.f32.mrb[0].mxu0
        %661 = vmatprep.mubr.f32.mxu0 0.0
        %662 = vmatmul.mubr.f32.gmra.mrb[0].mxu0 %v486
        %v663 = vpop.f32.mrb[0].mxu0
        %v664 = vadd.f32 0.0, %v663
        %v665 = vpop.f32.mrb[0].mxu0
        %666 = vmatprep.mubr.f32.mxu0 0.0
        %667 = vmatmul.mubr.f32.gmra.mrb[0].mxu0 %v489
        %v668 = vpop.f32.mrb[0].mxu0
        %v669 = vadd.f32 0.0, %v668
        %v670 = vpop.f32.mrb[0].mxu0
        %671 = vmatprep.mubr.f32.mxu0 0.0
        %672 = vmatmul.mubr.f32.gmra.mrb[0].mxu0 %v492
        %v673 = vpop.f32.mrb[0].mxu0
        %v674 = vadd.f32 0.0, %v673
        %v675 = vpop.f32.mrb[0].mxu0
        %676 = vmatprep.mubr.f32.mxu0 0.0
        %677 = vmatmul.mubr.f32.gmra.mrb[0].mxu0 %v495
        %v678 = vpop.f32.mrb[0].mxu0
        %v679 = vadd.f32 0.0, %v678
        %v680 = vpop.f32.mrb[0].mxu0
        %681 = vmatprep.mubr.f32.mxu0 0.0
        %682 = vmatmul.mubr.f32.gmra.mrb[0].mxu0 %v498
        %v683 = vpop.f32.mrb[0].mxu0
        %v684 = vadd.f32 0.0, %v683
        %v685 = vpop.f32.mrb[0].mxu0
        %686 = vmatprep.mubr.f32.mxu0 0.0
        %687 = vmatmul.mubr.f32.gmra.mrb[0].mxu0 %v501
        %v688 = vpop.f32.mrb[0].mxu0
        %v689 = vadd.f32 0.0, %v688
        %v690 = vpop.f32.mrb[0].mxu0
        %691 = vmatprep.mubr.f32.mxu0 0.0
        %692 = vmatmul.mubr.f32.gmra.mrb[0].mxu0 %v504
        %v693 = vpop.f32.mrb[0].mxu0
        %v694 = vadd.f32 0.0, %v693
        %v695 = vpop.f32.mrb[0].mxu0
        %696 = vmatprep.mubr.f32.mxu0 0.0
        %697 = vmatmul.mubr.f32.gmra.mrb[0].mxu0 %v507
        %v698 = vpop.f32.mrb[0].mxu0
        %v699 = vadd.f32 0.0, %v698
        %v700 = vpop.f32.mrb[0].mxu0
        %701 = vmatprep.mubr.f32.mxu0 0.0
        %702 = vmatmul.mubr.f32.gmra.mrb[0].mxu0 %v510
        %v703 = vpop.f32.mrb[0].mxu0
        %v704 = vadd.f32 0.0, %v703
        %v705 = vpop.f32.mrb[0].mxu0
        %706 = vmatprep.mubr.f32.mxu0 0.0
        %707 = vmatmul.mubr.f32.gmra.mrb[0].mxu0 %v513
        %v708 = vpop.f32.mrb[0].mxu0
        %v709 = vadd.f32 0.0, %v708
        %v710 = vpop.f32.mrb[0].mxu0
        %711 = vmatprep.mubr.f32.mxu0 0.0
        %712 = vmatmul.mubr.f32.gmra.mrb[0].mxu0 %v516
        %v713 = vpop.f32.mrb[0].mxu0
        %v714 = vadd.f32 0.0, %v713
        %v715 = vpop.f32.mrb[0].mxu0
        %716 = vmatprep.mubr.f32.mxu0 0.0
        %717 = vmatmul.mubr.f32.gmra.mrb[0].mxu0 %v519
        %v718 = vpop.f32.mrb[0].mxu0
        %v719 = vadd.f32 0.0, %v718
        %v720 = vpop.f32.mrb[0].mxu0
        %721 = vmatprep.mubr.f32.mxu0 0.0
        %722 = vmatmul.mubr.f32.gmra.mrb[0].mxu0 %v522
        %v723 = vpop.f32.mrb[0].mxu0
        %v724 = vadd.f32 0.0, %v723
        %v725 = vpop.f32.mrb[0].mxu0
        %726 = vmatprep.mubr.f32.mxu0 0.0
        %727 = vmatmul.mubr.f32.gmra.mrb[0].mxu0 %v525
        %v728 = vpop.f32.mrb[0].mxu0
        %v729 = vadd.f32 0.0, %v728
        %v730 = vpop.f32.mrb[0].mxu0
        %731 = vmatprep.mubr.f32.mxu0 0.0
        %732 = vmatmul.mubr.f32.gmra.mrb[0].mxu0 %v528
        %v733 = vpop.f32.mrb[0].mxu0
        %v734 = vadd.f32 0.0, %v733
        %v735 = vpop.f32.mrb[0].mxu0
        %736 = vmatprep.mubr.f32.mxu0 0.0
        %737 = vmatmul.mubr.f32.gmra.mrb[0].mxu0 %v531
        %v738 = vpop.f32.mrb[0].mxu0
        %v739 = vadd.f32 0.0, %v738
        %v740 = vpop.f32.mrb[0].mxu0
        %741 = vmatprep.mubr.f32.mxu0 0.0
        %742 = vmatmul.mubr.f32.gmra.mrb[0].mxu0 %v534
        %v743 = vpop.f32.mrb[0].mxu0
        %v744 = vadd.f32 0.0, %v743
        %v745 = vpop.f32.mrb[0].mxu0
        %746 = vmatprep.mubr.f32.mxu0 0.0
        %747 = vmatmul.mubr.f32.gmra.mrb[0].mxu0 %v537
        %v748 = vpop.f32.mrb[0].mxu0
        %v749 = vadd.f32 0.0, %v748
        %v750 = vpop.f32.mrb[0].mxu0
        %751 = vmatprep.mubr.f32.mxu0 0.0
        %752 = vmatmul.mubr.f32.gmra.mrb[0].mxu0 %v540
        %v753 = vpop.f32.mrb[0].mxu0
        %v754 = vadd.f32 0.0, %v753
        %v755 = vpop.f32.mrb[0].mxu0
        %756 = vmatprep.mubr.f32.mxu0 0.0
        %757 = vmatmul.mubr.f32.gmra.mrb[0].mxu0 %v543
        %v758 = vpop.f32.mrb[0].mxu0
        %v759 = vadd.f32 0.0, %v758
        %v760 = vpop.f32.mrb[0].mxu0
        %761 = vmatprep.mubr.f32.mxu0 0.0
        %762 = vmatmul.mubr.f32.gmra.mrb[0].mxu0 %v546
        %v763 = vpop.f32.mrb[0].mxu0
        %v764 = vadd.f32 0.0, %v763
        %v765 = vpop.f32.mrb[0].mxu0
        %766 = vmatprep.mubr.f32.mxu0 0.0
        %767 = vmatmul.mubr.f32.gmra.mrb[0].mxu0 %v549
        %v768 = vpop.f32.mrb[0].mxu0
        %v769 = vadd.f32 0.0, %v768
        %v770 = vpop.f32.mrb[0].mxu0
        %771 = vmatprep.mubr.f32.mxu0 0.0
        %772 = vmatmul.mubr.f32.gmra.mrb[0].mxu0 %v552
        %v773 = vpop.f32.mrb[0].mxu0
        %v774 = vadd.f32 0.0, %v773
        %v775 = vpop.f32.mrb[0].mxu0
        %776 = vmatprep.mubr.f32.mxu0 0.0
        %777 = vmatmul.mubr.f32.gmra.mrb[0].mxu0 %v555
        %v778 = vpop.f32.mrb[0].mxu0
        %v779 = vadd.f32 0.0, %v778
        %v780 = vpop.f32.mrb[0].mxu0
        %781 = vdwg.mxu0
        %v783 = vsel %vm460, %v387, 0
        %v786 = vsel %vm460, %v388, 0
        %v789 = vsel %vm460, %v389, 0
        %v792 = vsel %vm460, %v390, 0
        %v795 = vsel %vm460, %v391, 0
        %v798 = vsel %vm460, %v392, 0
        %v801 = vsel %vm460, %v393, 0
        %v804 = vsel %vm460, %v394, 0
        %v807 = vsel %vm460, %v395, 0
        %v810 = vsel %vm460, %v396, 0
        %v813 = vsel %vm460, %v397, 0
        %v816 = vsel %vm460, %v398, 0
        %v819 = vsel %vm460, %v399, 0
        %v822 = vsel %vm460, %v400, 0
        %v825 = vsel %vm460, %v401, 0
        %v828 = vsel %vm460, %v402, 0
        %v831 = vsel %vm460, %v403, 0
        %v834 = vsel %vm460, %v404, 0
        %v837 = vsel %vm460, %v405, 0
        %v840 = vsel %vm460, %v406, 0
        %v843 = vsel %vm460, %v407, 0
        %v846 = vsel %vm460, %v408, 0
        %v849 = vsel %vm460, %v409, 0
        %v852 = vsel %vm460, %v410, 0
        %v855 = vsel %vm460, %v411, 0
        %v858 = vsel %vm460, %v412, 0
        %v861 = vsel %vm460, %v413, 0
        %v864 = vsel %vm460, %v414, 0
        %v867 = vsel %vm460, %v415, 0
        %v870 = vsel %vm460, %v416, 0
        %v873 = vsel %vm460, %v417, 0
        %v876 = vsel %vm460, %v418, 0
        %878 = vmatprep.subr.mxu0 0.0
        %879 = vmatpush1.msra.mxu0 %v419
        %880 = vmatprep.subr.mxu0 0.0
        %881 = vmatpush1.msra.mxu0 %v420
        %882 = vmatprep.subr.mxu0 0.0
        %883 = vmatpush1.msra.mxu0 %v421
        %884 = vmatprep.subr.mxu0 0.0
        %885 = vmatpush1.msra.mxu0 %v422
        %886 = vmatprep.subr.mxu0 0.0
        %887 = vmatpush1.msra.mxu0 0.0
        %888 = vmatprep.subr.mxu0 0.0
        %889 = vmatpush1.msra.mxu0 0.0
        %890 = vmatprep.subr.mxu0 0.0
        %891 = vmatpush1.msra.mxu0 0.0
        %892 = vmatprep.subr.mxu0 0.0
        %893 = vmatpush1.msra.mxu0 0.0
        %894 = vmatprep.subr.mxu0 0.0
        %895 = vmatpush1.msra.mxu0 0.0
        %896 = vmatprep.subr.mxu0 0.0
        %897 = vmatpush1.msra.mxu0 0.0
        %898 = vmatprep.subr.mxu0 0.0
        %899 = vmatpush1.msra.mxu0 0.0
        %900 = vmatprep.subr.mxu0 0.0
        %901 = vmatpush1.msra.mxu0 0.0
        %902 = vmatprep.subr.mxu0 0.0
        %903 = vmatpush1.msra.mxu0 0.0
        %904 = vmatprep.subr.mxu0 0.0
        %905 = vmatpush1.msra.mxu0 0.0
        %906 = vmatprep.subr.mxu0 0.0
        %907 = vmatpush1.msra.mxu0 0.0
        %908 = vmatprep.subr.mxu0 0.0
        %909 = vmatpush1.msra.mxu0 0.0
        %910 = vmatprep.subr.mxu0 0.0
        %911 = vmatpush1.msra.mxu0 0.0
        %912 = vmatprep.subr.mxu0 0.0
        %913 = vmatpush1.msra.mxu0 0.0
        %914 = vmatprep.subr.mxu0 0.0
        %915 = vmatpush1.msra.mxu0 0.0
        %916 = vmatprep.subr.mxu0 0.0
        %917 = vmatpush1.msra.mxu0 0.0
        %918 = vmatprep.subr.mxu0 0.0
        %919 = vmatpush1.msra.mxu0 0.0
        %920 = vmatprep.subr.mxu0 0.0
        %921 = vmatpush1.msra.mxu0 0.0
        %922 = vmatprep.subr.mxu0 0.0
        %923 = vmatpush1.msra.mxu0 0.0
        %924 = vmatprep.subr.mxu0 0.0
        %925 = vmatpush1.msra.mxu0 0.0
        %926 = vmatprep.subr.mxu0 0.0
        %927 = vmatpush1.msra.mxu0 0.0
        %928 = vmatprep.subr.mxu0 0.0
        %929 = vmatpush1.msra.mxu0 0.0
        %930 = vmatprep.subr.mxu0 0.0
        %931 = vmatpush1.msra.mxu0 0.0
        %932 = vmatprep.subr.mxu0 0.0
        %933 = vmatpush1.msra.mxu0 0.0
        %934 = vmatprep.subr.mxu0 0.0
        %935 = vmatpush1.msra.mxu0 0.0
        %936 = vmatprep.subr.mxu0 0.0
        %937 = vmatpush1.msra.mxu0 0.0
        %938 = vmatprep.subr.mxu0 0.0
        %939 = vmatpush1.msra.mxu0 0.0
        %940 = vmatprep.subr.mxu0 0.0
        %941 = vmatpush1.msra.mxu0 0.0
        %942 = vmatprep.mubr.f32.mxu0 0.0
        %943 = vmatmul.mubr.f32.gmra.mrb[0].mxu0 %v783
        %v944 = vpop.f32.mrb[0].mxu0
        %v945 = vadd.f32 %v624, %v944
        %v946 = vpop.f32.mrb[0].mxu0
        %947 = vmatprep.mubr.f32.mxu0 0.0
        %948 = vmatmul.mubr.f32.gmra.mrb[0].mxu0 %v786
        %v949 = vpop.f32.mrb[0].mxu0
        %v950 = vadd.f32 %v629, %v949
        %v951 = vpop.f32.mrb[0].mxu0
        %952 = vmatprep.mubr.f32.mxu0 0.0
        %953 = vmatmul.mubr.f32.gmra.mrb[0].mxu0 %v789
        %v954 = vpop.f32.mrb[0].mxu0
        %v955 = vadd.f32 %v634, %v954
        %v956 = vpop.f32.mrb[0].mxu0
        %957 = vmatprep.mubr.f32.mxu0 0.0
        %958 = vmatmul.mubr.f32.gmra.mrb[0].mxu0 %v792
        %v959 = vpop.f32.mrb[0].mxu0
        %v960 = vadd.f32 %v639, %v959
        %v961 = vpop.f32.mrb[0].mxu0
        %962 = vmatprep.mubr.f32.mxu0 0.0
        %963 = vmatmul.mubr.f32.gmra.mrb[0].mxu0 %v795
        %v964 = vpop.f32.mrb[0].mxu0
        %v965 = vadd.f32 %v644, %v964
        %v966 = vpop.f32.mrb[0].mxu0
        %967 = vmatprep.mubr.f32.mxu0 0.0
        %968 = vmatmul.mubr.f32.gmra.mrb[0].mxu0 %v798
        %v969 = vpop.f32.mrb[0].mxu0
        %v970 = vadd.f32 %v649, %v969
        %v971 = vpop.f32.mrb[0].mxu0
        %972 = vmatprep.mubr.f32.mxu0 0.0
        %973 = vmatmul.mubr.f32.gmra.mrb[0].mxu0 %v801
        %v974 = vpop.f32.mrb[0].mxu0
        %v975 = vadd.f32 %v654, %v974
        %v976 = vpop.f32.mrb[0].mxu0
        %977 = vmatprep.mubr.f32.mxu0 0.0
        %978 = vmatmul.mubr.f32.gmra.mrb[0].mxu0 %v804
        %v979 = vpop.f32.mrb[0].mxu0
        %v980 = vadd.f32 %v659, %v979
        %v981 = vpop.f32.mrb[0].mxu0
        %982 = vmatprep.mubr.f32.mxu0 0.0
        %983 = vmatmul.mubr.f32.gmra.mrb[0].mxu0 %v807
        %v984 = vpop.f32.mrb[0].mxu0
        %v985 = vadd.f32 %v664, %v984
        %v986 = vpop.f32.mrb[0].mxu0
        %987 = vmatprep.mubr.f32.mxu0 0.0
        %988 = vmatmul.mubr.f32.gmra.mrb[0].mxu0 %v810
        %v989 = vpop.f32.mrb[0].mxu0
        %v990 = vadd.f32 %v669, %v989
        %v991 = vpop.f32.mrb[0].mxu0
        %992 = vmatprep.mubr.f32.mxu0 0.0
        %993 = vmatmul.mubr.f32.gmra.mrb[0].mxu0 %v813
        %v994 = vpop.f32.mrb[0].mxu0
        %v995 = vadd.f32 %v674, %v994
        %v996 = vpop.f32.mrb[0].mxu0
        %997 = vmatprep.mubr.f32.mxu0 0.0
        %998 = vmatmul.mubr.f32.gmra.mrb[0].mxu0 %v816
        %v999 = vpop.f32.mrb[0].mxu0
        %v1000 = vadd.f32 %v679, %v999
        %v1001 = vpop.f32.mrb[0].mxu0
        %1002 = vmatprep.mubr.f32.mxu0 0.0
        %1003 = vmatmul.mubr.f32.gmra.mrb[0].mxu0 %v819
        %v1004 = vpop.f32.mrb[0].mxu0
        %v1005 = vadd.f32 %v684, %v1004
        %v1006 = vpop.f32.mrb[0].mxu0
        %1007 = vmatprep.mubr.f32.mxu0 0.0
        %1008 = vmatmul.mubr.f32.gmra.mrb[0].mxu0 %v822
        %v1009 = vpop.f32.mrb[0].mxu0
        %v1010 = vadd.f32 %v689, %v1009
        %v1011 = vpop.f32.mrb[0].mxu0
        %1012 = vmatprep.mubr.f32.mxu0 0.0
        %1013 = vmatmul.mubr.f32.gmra.mrb[0].mxu0 %v825
        %v1014 = vpop.f32.mrb[0].mxu0
        %v1015 = vadd.f32 %v694, %v1014
        %v1016 = vpop.f32.mrb[0].mxu0
        %1017 = vmatprep.mubr.f32.mxu0 0.0
        %1018 = vmatmul.mubr.f32.gmra.mrb[0].mxu0 %v828
        %v1019 = vpop.f32.mrb[0].mxu0
        %v1020 = vadd.f32 %v699, %v1019
        %v1021 = vpop.f32.mrb[0].mxu0
        %1022 = vmatprep.mubr.f32.mxu0 0.0
        %1023 = vmatmul.mubr.f32.gmra.mrb[0].mxu0 %v831
        %v1024 = vpop.f32.mrb[0].mxu0
        %v1025 = vadd.f32 %v704, %v1024
        %v1026 = vpop.f32.mrb[0].mxu0
        %1027 = vmatprep.mubr.f32.mxu0 0.0
        %1028 = vmatmul.mubr.f32.gmra.mrb[0].mxu0 %v834
        %v1029 = vpop.f32.mrb[0].mxu0
        %v1030 = vadd.f32 %v709, %v1029
        %v1031 = vpop.f32.mrb[0].mxu0
        %1032 = vmatprep.mubr.f32.mxu0 0.0
        %1033 = vmatmul.mubr.f32.gmra.mrb[0].mxu0 %v837
        %v1034 = vpop.f32.mrb[0].mxu0
        %v1035 = vadd.f32 %v714, %v1034
        %v1036 = vpop.f32.mrb[0].mxu0
        %1037 = vmatprep.mubr.f32.mxu0 0.0
        %1038 = vmatmul.mubr.f32.gmra.mrb[0].mxu0 %v840
        %v1039 = vpop.f32.mrb[0].mxu0
        %v1040 = vadd.f32 %v719, %v1039
        %v1041 = vpop.f32.mrb[0].mxu0
        %1042 = vmatprep.mubr.f32.mxu0 0.0
        %1043 = vmatmul.mubr.f32.gmra.mrb[0].mxu0 %v843
        %v1044 = vpop.f32.mrb[0].mxu0
        %v1045 = vadd.f32 %v724, %v1044
        %v1046 = vpop.f32.mrb[0].mxu0
        %1047 = vmatprep.mubr.f32.mxu0 0.0
        %1048 = vmatmul.mubr.f32.gmra.mrb[0].mxu0 %v846
        %v1049 = vpop.f32.mrb[0].mxu0
        %v1050 = vadd.f32 %v729, %v1049
        %v1051 = vpop.f32.mrb[0].mxu0
        %1052 = vmatprep.mubr.f32.mxu0 0.0
        %1053 = vmatmul.mubr.f32.gmra.mrb[0].mxu0 %v849
        %v1054 = vpop.f32.mrb[0].mxu0
        %v1055 = vadd.f32 %v734, %v1054
        %v1056 = vpop.f32.mrb[0].mxu0
        %1057 = vmatprep.mubr.f32.mxu0 0.0
        %1058 = vmatmul.mubr.f32.gmra.mrb[0].mxu0 %v852
        %v1059 = vpop.f32.mrb[0].mxu0
        %v1060 = vadd.f32 %v739, %v1059
        %v1061 = vpop.f32.mrb[0].mxu0
        %1062 = vmatprep.mubr.f32.mxu0 0.0
        %1063 = vmatmul.mubr.f32.gmra.mrb[0].mxu0 %v855
        %v1064 = vpop.f32.mrb[0].mxu0
        %v1065 = vadd.f32 %v744, %v1064
        %v1066 = vpop.f32.mrb[0].mxu0
        %1067 = vmatprep.mubr.f32.mxu0 0.0
        %1068 = vmatmul.mubr.f32.gmra.mrb[0].mxu0 %v858
        %v1069 = vpop.f32.mrb[0].mxu0
        %v1070 = vadd.f32 %v749, %v1069
        %v1071 = vpop.f32.mrb[0].mxu0
        %1072 = vmatprep.mubr.f32.mxu0 0.0
        %1073 = vmatmul.mubr.f32.gmra.mrb[0].mxu0 %v861
        %v1074 = vpop.f32.mrb[0].mxu0
        %v1075 = vadd.f32 %v754, %v1074
        %v1076 = vpop.f32.mrb[0].mxu0
        %1077 = vmatprep.mubr.f32.mxu0 0.0
        %1078 = vmatmul.mubr.f32.gmra.mrb[0].mxu0 %v864
        %v1079 = vpop.f32.mrb[0].mxu0
        %v1080 = vadd.f32 %v759, %v1079
        %v1081 = vpop.f32.mrb[0].mxu0
        %1082 = vmatprep.mubr.f32.mxu0 0.0
        %1083 = vmatmul.mubr.f32.gmra.mrb[0].mxu0 %v867
        %v1084 = vpop.f32.mrb[0].mxu0
        %v1085 = vadd.f32 %v764, %v1084
        %v1086 = vpop.f32.mrb[0].mxu0
        %1087 = vmatprep.mubr.f32.mxu0 0.0
        %1088 = vmatmul.mubr.f32.gmra.mrb[0].mxu0 %v870
        %v1089 = vpop.f32.mrb[0].mxu0
        %v1090 = vadd.f32 %v769, %v1089
        %v1091 = vpop.f32.mrb[0].mxu0
        %1092 = vmatprep.mubr.f32.mxu0 0.0
        %1093 = vmatmul.mubr.f32.gmra.mrb[0].mxu0 %v873
        %v1094 = vpop.f32.mrb[0].mxu0
        %v1095 = vadd.f32 %v774, %v1094
        %v1096 = vpop.f32.mrb[0].mxu0
        %1097 = vmatprep.mubr.f32.mxu0 0.0
        %1098 = vmatmul.mubr.f32.gmra.mrb[0].mxu0 %v876
        %v1099 = vpop.f32.mrb[0].mxu0
        %v1100 = vadd.f32 %v779, %v1099
        %v1101 = vpop.f32.mrb[0].mxu0
        %1102 = vdwg.mxu0
        %v1103 = vld [vmem:[%s385 + $0x2] sm:$0xff]
        %v1104 = vld [vmem:[%s385 + $0xa] sm:$0xff]
        %v1105 = vld [vmem:[%s385 + $0x12] sm:$0xff]
        %v1106 = vld [vmem:[%s385 + $0x1a] sm:$0xff]
        %v1107 = vld [vmem:[%s385 + $0x22] sm:$0xff]
        %v1108 = vld [vmem:[%s385 + $0x2a] sm:$0xff]
        %v1109 = vld [vmem:[%s385 + $0x32] sm:$0xff]
        %v1110 = vld [vmem:[%s385 + $0x3a] sm:$0xff]
        %v1111 = vld [vmem:[%s385 + $0x42] sm:$0xff]
        %v1112 = vld [vmem:[%s385 + $0x4a] sm:$0xff]
        %v1113 = vld [vmem:[%s385 + $0x52] sm:$0xff]
        %v1114 = vld [vmem:[%s385 + $0x5a] sm:$0xff]
        %v1115 = vld [vmem:[%s385 + $0x62] sm:$0xff]
        %v1116 = vld [vmem:[%s385 + $0x6a] sm:$0xff]
        %v1117 = vld [vmem:[%s385 + $0x72] sm:$0xff]
        %v1118 = vld [vmem:[%s385 + $0x7a] sm:$0xff]
        %v1119 = vld [vmem:[%s385 + $0x82] sm:$0xff]
        %v1120 = vld [vmem:[%s385 + $0x8a] sm:$0xff]
        %v1121 = vld [vmem:[%s385 + $0x92] sm:$0xff]
        %v1122 = vld [vmem:[%s385 + $0x9a] sm:$0xff]
        %v1123 = vld [vmem:[%s385 + $0xa2] sm:$0xff]
        %v1124 = vld [vmem:[%s385 + $0xaa] sm:$0xff]
        %v1125 = vld [vmem:[%s385 + $0xb2] sm:$0xff]
        %v1126 = vld [vmem:[%s385 + $0xba] sm:$0xff]
        %v1127 = vld [vmem:[%s385 + $0xc2] sm:$0xff]
        %v1128 = vld [vmem:[%s385 + $0xca] sm:$0xff]
        %v1129 = vld [vmem:[%s385 + $0xd2] sm:$0xff]
        %v1130 = vld [vmem:[%s385 + $0xda] sm:$0xff]
        %v1131 = vld [vmem:[%s385 + $0xe2] sm:$0xff]
        %v1132 = vld [vmem:[%s385 + $0xea] sm:$0xff]
        %v1133 = vld [vmem:[%s385 + $0xf2] sm:$0xff]
        %v1134 = vld [vmem:[%s385 + $0xfa] sm:$0xff]
        %s1135 = scalar_lea.vmem %s1, 64
        %v1136 = vld [vmem:[%s1135] sm:$0xff]
        %v1137 = vld [vmem:[%s1135 + $0x8] sm:$0xff]
        %v1138 = vld [vmem:[%s1135 + $0x10] sm:$0xff]
        %v1139 = vld [vmem:[%s1135 + $0x18] sm:$0xff]
        %v1141 = vsel %vm460, %v1103, 0
        %v1144 = vsel %vm460, %v1104, 0
        %v1147 = vsel %vm460, %v1105, 0
        %v1150 = vsel %vm460, %v1106, 0
        %v1153 = vsel %vm460, %v1107, 0
        %v1156 = vsel %vm460, %v1108, 0
        %v1159 = vsel %vm460, %v1109, 0
        %v1162 = vsel %vm460, %v1110, 0
        %v1165 = vsel %vm460, %v1111, 0
        %v1168 = vsel %vm460, %v1112, 0
        %v1171 = vsel %vm460, %v1113, 0
        %v1174 = vsel %vm460, %v1114, 0
        %v1177 = vsel %vm460, %v1115, 0
        %v1180 = vsel %vm460, %v1116, 0
        %v1183 = vsel %vm460, %v1117, 0
        %v1186 = vsel %vm460, %v1118, 0
        %v1189 = vsel %vm460, %v1119, 0
        %v1192 = vsel %vm460, %v1120, 0
        %v1195 = vsel %vm460, %v1121, 0
        %v1198 = vsel %vm460, %v1122, 0
        %v1201 = vsel %vm460, %v1123, 0
        %v1204 = vsel %vm460, %v1124, 0
        %v1207 = vsel %vm460, %v1125, 0
        %v1210 = vsel %vm460, %v1126, 0
        %v1213 = vsel %vm460, %v1127, 0
        %v1216 = vsel %vm460, %v1128, 0
        %v1219 = vsel %vm460, %v1129, 0
        %v1222 = vsel %vm460, %v1130, 0
        %v1225 = vsel %vm460, %v1131, 0
        %v1228 = vsel %vm460, %v1132, 0
        %v1231 = vsel %vm460, %v1133, 0
        %v1234 = vsel %vm460, %v1134, 0
        %1236 = vmatprep.subr.mxu0 0.0
        %1237 = vmatpush1.msra.mxu0 %v1136
        %1238 = vmatprep.subr.mxu0 0.0
        %1239 = vmatpush1.msra.mxu0 %v1137
        %1240 = vmatprep.subr.mxu0 0.0
        %1241 = vmatpush1.msra.mxu0 %v1138
        %1242 = vmatprep.subr.mxu0 0.0
        %1243 = vmatpush1.msra.mxu0 %v1139
        %1244 = vmatprep.subr.mxu0 0.0
        %1245 = vmatpush1.msra.mxu0 0.0
        %1246 = vmatprep.subr.mxu0 0.0
        %1247 = vmatpush1.msra.mxu0 0.0
        %1248 = vmatprep.subr.mxu0 0.0
        %1249 = vmatpush1.msra.mxu0 0.0
        %1250 = vmatprep.subr.mxu0 0.0
        %1251 = vmatpush1.msra.mxu0 0.0
        %1252 = vmatprep.subr.mxu0 0.0
        %1253 = vmatpush1.msra.mxu0 0.0
        %1254 = vmatprep.subr.mxu0 0.0
        %1255 = vmatpush1.msra.mxu0 0.0
        %1256 = vmatprep.subr.mxu0 0.0
        %1257 = vmatpush1.msra.mxu0 0.0
        %1258 = vmatprep.subr.mxu0 0.0
        %1259 = vmatpush1.msra.mxu0 0.0
        %1260 = vmatprep.subr.mxu0 0.0
        %1261 = vmatpush1.msra.mxu0 0.0
        %1262 = vmatprep.subr.mxu0 0.0
        %1263 = vmatpush1.msra.mxu0 0.0
        %1264 = vmatprep.subr.mxu0 0.0
        %1265 = vmatpush1.msra.mxu0 0.0
        %1266 = vmatprep.subr.mxu0 0.0
        %1267 = vmatpush1.msra.mxu0 0.0
        %1268 = vmatprep.subr.mxu0 0.0
        %1269 = vmatpush1.msra.mxu0 0.0
        %1270 = vmatprep.subr.mxu0 0.0
        %1271 = vmatpush1.msra.mxu0 0.0
        %1272 = vmatprep.subr.mxu0 0.0
        %1273 = vmatpush1.msra.mxu0 0.0
        %1274 = vmatprep.subr.mxu0 0.0
        %1275 = vmatpush1.msra.mxu0 0.0
        %1276 = vmatprep.subr.mxu0 0.0
        %1277 = vmatpush1.msra.mxu0 0.0
        %1278 = vmatprep.subr.mxu0 0.0
        %1279 = vmatpush1.msra.mxu0 0.0
        %1280 = vmatprep.subr.mxu0 0.0
        %1281 = vmatpush1.msra.mxu0 0.0
        %1282 = vmatprep.subr.mxu0 0.0
        %1283 = vmatpush1.msra.mxu0 0.0
        %1284 = vmatprep.subr.mxu0 0.0
        %1285 = vmatpush1.msra.mxu0 0.0
        %1286 = vmatprep.subr.mxu0 0.0
        %1287 = vmatpush1.msra.mxu0 0.0
        %1288 = vmatprep.subr.mxu0 0.0
        %1289 = vmatpush1.msra.mxu0 0.0
        %1290 = vmatprep.subr.mxu0 0.0
        %1291 = vmatpush1.msra.mxu0 0.0
        %1292 = vmatprep.subr.mxu0 0.0
        %1293 = vmatpush1.msra.mxu0 0.0
        %1294 = vmatprep.subr.mxu0 0.0
        %1295 = vmatpush1.msra.mxu0 0.0
        %1296 = vmatprep.subr.mxu0 0.0
        %1297 = vmatpush1.msra.mxu0 0.0
        %1298 = vmatprep.subr.mxu0 0.0
        %1299 = vmatpush1.msra.mxu0 0.0
        %1300 = vmatprep.mubr.f32.mxu0 0.0
        %1301 = vmatmul.mubr.f32.gmra.mrb[0].mxu0 %v1141
        %v1302 = vpop.f32.mrb[0].mxu0
        %v1303 = vadd.f32 0.0, %v1302
        %v1304 = vpop.f32.mrb[0].mxu0
        %1305 = vmatprep.mubr.f32.mxu0 0.0
        %1306 = vmatmul.mubr.f32.gmra.mrb[0].mxu0 %v1144
        %v1307 = vpop.f32.mrb[0].mxu0
        %v1308 = vadd.f32 0.0, %v1307
        %v1309 = vpop.f32.mrb[0].mxu0
        %1310 = vmatprep.mubr.f32.mxu0 0.0
        %1311 = vmatmul.mubr.f32.gmra.mrb[0].mxu0 %v1147
        %v1312 = vpop.f32.mrb[0].mxu0
        %v1313 = vadd.f32 0.0, %v1312
        %v1314 = vpop.f32.mrb[0].mxu0
        %1315 = vmatprep.mubr.f32.mxu0 0.0
        %1316 = vmatmul.mubr.f32.gmra.mrb[0].mxu0 %v1150
        %v1317 = vpop.f32.mrb[0].mxu0
        %v1318 = vadd.f32 0.0, %v1317
        %v1319 = vpop.f32.mrb[0].mxu0
        %1320 = vmatprep.mubr.f32.mxu0 0.0
        %1321 = vmatmul.mubr.f32.gmra.mrb[0].mxu0 %v1153
        %v1322 = vpop.f32.mrb[0].mxu0
        %v1323 = vadd.f32 0.0, %v1322
        %v1324 = vpop.f32.mrb[0].mxu0
        %1325 = vmatprep.mubr.f32.mxu0 0.0
        %1326 = vmatmul.mubr.f32.gmra.mrb[0].mxu0 %v1156
        %v1327 = vpop.f32.mrb[0].mxu0
        %v1328 = vadd.f32 0.0, %v1327
        %v1329 = vpop.f32.mrb[0].mxu0
        %1330 = vmatprep.mubr.f32.mxu0 0.0
        %1331 = vmatmul.mubr.f32.gmra.mrb[0].mxu0 %v1159
        %v1332 = vpop.f32.mrb[0].mxu0
        %v1333 = vadd.f32 0.0, %v1332
        %v1334 = vpop.f32.mrb[0].mxu0
        %1335 = vmatprep.mubr.f32.mxu0 0.0
        %1336 = vmatmul.mubr.f32.gmra.mrb[0].mxu0 %v1162
        %v1337 = vpop.f32.mrb[0].mxu0
        %v1338 = vadd.f32 0.0, %v1337
        %v1339 = vpop.f32.mrb[0].mxu0
        %1340 = vmatprep.mubr.f32.mxu0 0.0
        %1341 = vmatmul.mubr.f32.gmra.mrb[0].mxu0 %v1165
        %v1342 = vpop.f32.mrb[0].mxu0
        %v1343 = vadd.f32 0.0, %v1342
        %v1344 = vpop.f32.mrb[0].mxu0
        %1345 = vmatprep.mubr.f32.mxu0 0.0
        %1346 = vmatmul.mubr.f32.gmra.mrb[0].mxu0 %v1168
        %v1347 = vpop.f32.mrb[0].mxu0
        %v1348 = vadd.f32 0.0, %v1347
        %v1349 = vpop.f32.mrb[0].mxu0
        %1350 = vmatprep.mubr.f32.mxu0 0.0
        %1351 = vmatmul.mubr.f32.gmra.mrb[0].mxu0 %v1171
        %v1352 = vpop.f32.mrb[0].mxu0
        %v1353 = vadd.f32 0.0, %v1352
        %v1354 = vpop.f32.mrb[0].mxu0
        %1355 = vmatprep.mubr.f32.mxu0 0.0
        %1356 = vmatmul.mubr.f32.gmra.mrb[0].mxu0 %v1174
        %v1357 = vpop.f32.mrb[0].mxu0
        %v1358 = vadd.f32 0.0, %v1357
        %v1359 = vpop.f32.mrb[0].mxu0
        %1360 = vmatprep.mubr.f32.mxu0 0.0
        %1361 = vmatmul.mubr.f32.gmra.mrb[0].mxu0 %v1177
        %v1362 = vpop.f32.mrb[0].mxu0
        %v1363 = vadd.f32 0.0, %v1362
        %v1364 = vpop.f32.mrb[0].mxu0
        %1365 = vmatprep.mubr.f32.mxu0 0.0
        %1366 = vmatmul.mubr.f32.gmra.mrb[0].mxu0 %v1180
        %v1367 = vpop.f32.mrb[0].mxu0
        %v1368 = vadd.f32 0.0, %v1367
        %v1369 = vpop.f32.mrb[0].mxu0
        %1370 = vmatprep.mubr.f32.mxu0 0.0
        %1371 = vmatmul.mubr.f32.gmra.mrb[0].mxu0 %v1183
        %v1372 = vpop.f32.mrb[0].mxu0
        %v1373 = vadd.f32 0.0, %v1372
        %v1374 = vpop.f32.mrb[0].mxu0
        %1375 = vmatprep.mubr.f32.mxu0 0.0
        %1376 = vmatmul.mubr.f32.gmra.mrb[0].mxu0 %v1186
        %v1377 = vpop.f32.mrb[0].mxu0
        %v1378 = vadd.f32 0.0, %v1377
        %v1379 = vpop.f32.mrb[0].mxu0
        %1380 = vmatprep.mubr.f32.mxu0 0.0
        %1381 = vmatmul.mubr.f32.gmra.mrb[0].mxu0 %v1189
        %v1382 = vpop.f32.mrb[0].mxu0
        %v1383 = vadd.f32 0.0, %v1382
        %v1384 = vpop.f32.mrb[0].mxu0
        %1385 = vmatprep.mubr.f32.mxu0 0.0
        %1386 = vmatmul.mubr.f32.gmra.mrb[0].mxu0 %v1192
        %v1387 = vpop.f32.mrb[0].mxu0
        %v1388 = vadd.f32 0.0, %v1387
        %v1389 = vpop.f32.mrb[0].mxu0
        %1390 = vmatprep.mubr.f32.mxu0 0.0
        %1391 = vmatmul.mubr.f32.gmra.mrb[0].mxu0 %v1195
        %v1392 = vpop.f32.mrb[0].mxu0
        %v1393 = vadd.f32 0.0, %v1392
        %v1394 = vpop.f32.mrb[0].mxu0
        %1395 = vmatprep.mubr.f32.mxu0 0.0
        %1396 = vmatmul.mubr.f32.gmra.mrb[0].mxu0 %v1198
        %v1397 = vpop.f32.mrb[0].mxu0
        %v1398 = vadd.f32 0.0, %v1397
        %v1399 = vpop.f32.mrb[0].mxu0
        %1400 = vmatprep.mubr.f32.mxu0 0.0
        %1401 = vmatmul.mubr.f32.gmra.mrb[0].mxu0 %v1201
        %v1402 = vpop.f32.mrb[0].mxu0
        %v1403 = vadd.f32 0.0, %v1402
        %v1404 = vpop.f32.mrb[0].mxu0
        %1405 = vmatprep.mubr.f32.mxu0 0.0
        %1406 = vmatmul.mubr.f32.gmra.mrb[0].mxu0 %v1204
        %v1407 = vpop.f32.mrb[0].mxu0
        %v1408 = vadd.f32 0.0, %v1407
        %v1409 = vpop.f32.mrb[0].mxu0
        %1410 = vmatprep.mubr.f32.mxu0 0.0
        %1411 = vmatmul.mubr.f32.gmra.mrb[0].mxu0 %v1207
        %v1412 = vpop.f32.mrb[0].mxu0
        %v1413 = vadd.f32 0.0, %v1412
        %v1414 = vpop.f32.mrb[0].mxu0
        %1415 = vmatprep.mubr.f32.mxu0 0.0
        %1416 = vmatmul.mubr.f32.gmra.mrb[0].mxu0 %v1210
        %v1417 = vpop.f32.mrb[0].mxu0
        %v1418 = vadd.f32 0.0, %v1417
        %v1419 = vpop.f32.mrb[0].mxu0
        %1420 = vmatprep.mubr.f32.mxu0 0.0
        %1421 = vmatmul.mubr.f32.gmra.mrb[0].mxu0 %v1213
        %v1422 = vpop.f32.mrb[0].mxu0
        %v1423 = vadd.f32 0.0, %v1422
        %v1424 = vpop.f32.mrb[0].mxu0
        %1425 = vmatprep.mubr.f32.mxu0 0.0
        %1426 = vmatmul.mubr.f32.gmra.mrb[0].mxu0 %v1216
        %v1427 = vpop.f32.mrb[0].mxu0
        %v1428 = vadd.f32 0.0, %v1427
        %v1429 = vpop.f32.mrb[0].mxu0
        %1430 = vmatprep.mubr.f32.mxu0 0.0
        %1431 = vmatmul.mubr.f32.gmra.mrb[0].mxu0 %v1219
        %v1432 = vpop.f32.mrb[0].mxu0
        %v1433 = vadd.f32 0.0, %v1432
        %v1434 = vpop.f32.mrb[0].mxu0
        %1435 = vmatprep.mubr.f32.mxu0 0.0
        %1436 = vmatmul.mubr.f32.gmra.mrb[0].mxu0 %v1222
        %v1437 = vpop.f32.mrb[0].mxu0
        %v1438 = vadd.f32 0.0, %v1437
        %v1439 = vpop.f32.mrb[0].mxu0
        %1440 = vmatprep.mubr.f32.mxu0 0.0
        %1441 = vmatmul.mubr.f32.gmra.mrb[0].mxu0 %v1225
        %v1442 = vpop.f32.mrb[0].mxu0
        %v1443 = vadd.f32 0.0, %v1442
        %v1444 = vpop.f32.mrb[0].mxu0
        %1445 = vmatprep.mubr.f32.mxu0 0.0
        %1446 = vmatmul.mubr.f32.gmra.mrb[0].mxu0 %v1228
        %v1447 = vpop.f32.mrb[0].mxu0
        %v1448 = vadd.f32 0.0, %v1447
        %v1449 = vpop.f32.mrb[0].mxu0
        %1450 = vmatprep.mubr.f32.mxu0 0.0
        %1451 = vmatmul.mubr.f32.gmra.mrb[0].mxu0 %v1231
        %v1452 = vpop.f32.mrb[0].mxu0
        %v1453 = vadd.f32 0.0, %v1452
        %v1454 = vpop.f32.mrb[0].mxu0
        %1455 = vmatprep.mubr.f32.mxu0 0.0
        %1456 = vmatmul.mubr.f32.gmra.mrb[0].mxu0 %v1234
        %v1457 = vpop.f32.mrb[0].mxu0
        %v1458 = vadd.f32 0.0, %v1457
        %v1459 = vpop.f32.mrb[0].mxu0
        %1460 = vdwg.mxu0
        %v1461 = vadd.f32 %v945, %v1303
        %v1462 = vadd.f32 %v950, %v1308
        %v1463 = vadd.f32 %v955, %v1313
        %v1464 = vadd.f32 %v960, %v1318
        %v1465 = vadd.f32 %v965, %v1323
        %v1466 = vadd.f32 %v970, %v1328
        %v1467 = vadd.f32 %v975, %v1333
        %v1468 = vadd.f32 %v980, %v1338
        %v1469 = vadd.f32 %v985, %v1343
        %v1470 = vadd.f32 %v990, %v1348
        %v1471 = vadd.f32 %v995, %v1353
        %v1472 = vadd.f32 %v1000, %v1358
        %v1473 = vadd.f32 %v1005, %v1363
        %v1474 = vadd.f32 %v1010, %v1368
        %v1475 = vadd.f32 %v1015, %v1373
        %v1476 = vadd.f32 %v1020, %v1378
        %v1477 = vadd.f32 %v1025, %v1383
        %v1478 = vadd.f32 %v1030, %v1388
        %v1479 = vadd.f32 %v1035, %v1393
        %v1480 = vadd.f32 %v1040, %v1398
        %v1481 = vadd.f32 %v1045, %v1403
        %v1482 = vadd.f32 %v1050, %v1408
        %v1483 = vadd.f32 %v1055, %v1413
        %v1484 = vadd.f32 %v1060, %v1418
        %v1485 = vadd.f32 %v1065, %v1423
        %v1486 = vadd.f32 %v1070, %v1428
        %v1487 = vadd.f32 %v1075, %v1433
        %v1488 = vadd.f32 %v1080, %v1438
        %v1489 = vadd.f32 %v1085, %v1443
        %v1490 = vadd.f32 %v1090, %v1448
        %v1491 = vadd.f32 %v1095, %v1453
        %v1492 = vadd.f32 %v1100, %v1458
        %v1493 = vld [vmem:[%s385 + $0x3] sm:$0xff]
        %v1494 = vld [vmem:[%s385 + $0xb] sm:$0xff]
        %v1495 = vld [vmem:[%s385 + $0x13] sm:$0xff]
        %v1496 = vld [vmem:[%s385 + $0x1b] sm:$0xff]
        %v1497 = vld [vmem:[%s385 + $0x23] sm:$0xff]
        %v1498 = vld [vmem:[%s385 + $0x2b] sm:$0xff]
        %v1499 = vld [vmem:[%s385 + $0x33] sm:$0xff]
        %v1500 = vld [vmem:[%s385 + $0x3b] sm:$0xff]
        %v1501 = vld [vmem:[%s385 + $0x43] sm:$0xff]
        %v1502 = vld [vmem:[%s385 + $0x4b] sm:$0xff]
        %v1503 = vld [vmem:[%s385 + $0x53] sm:$0xff]
        %v1504 = vld [vmem:[%s385 + $0x5b] sm:$0xff]
        %v1505 = vld [vmem:[%s385 + $0x63] sm:$0xff]
        %v1506 = vld [vmem:[%s385 + $0x6b] sm:$0xff]
        %v1507 = vld [vmem:[%s385 + $0x73] sm:$0xff]
        %v1508 = vld [vmem:[%s385 + $0x7b] sm:$0xff]
        %v1509 = vld [vmem:[%s385 + $0x83] sm:$0xff]
        %v1510 = vld [vmem:[%s385 + $0x8b] sm:$0xff]
        %v1511 = vld [vmem:[%s385 + $0x93] sm:$0xff]
        %v1512 = vld [vmem:[%s385 + $0x9b] sm:$0xff]
        %v1513 = vld [vmem:[%s385 + $0xa3] sm:$0xff]
        %v1514 = vld [vmem:[%s385 + $0xab] sm:$0xff]
        %v1515 = vld [vmem:[%s385 + $0xb3] sm:$0xff]
        %v1516 = vld [vmem:[%s385 + $0xbb] sm:$0xff]
        %v1517 = vld [vmem:[%s385 + $0xc3] sm:$0xff]
        %v1518 = vld [vmem:[%s385 + $0xcb] sm:$0xff]
        %v1519 = vld [vmem:[%s385 + $0xd3] sm:$0xff]
        %v1520 = vld [vmem:[%s385 + $0xdb] sm:$0xff]
        %v1521 = vld [vmem:[%s385 + $0xe3] sm:$0xff]
        %v1522 = vld [vmem:[%s385 + $0xeb] sm:$0xff]
        %v1523 = vld [vmem:[%s385 + $0xf3] sm:$0xff]
        %v1524 = vld [vmem:[%s385 + $0xfb] sm:$0xff]
        %s1525 = scalar_lea.vmem %s1, 96
        %v1526 = vld [vmem:[%s1525] sm:$0xff]
        %v1527 = vld [vmem:[%s1525 + $0x8] sm:$0xff]
        %v1528 = vld [vmem:[%s1525 + $0x10] sm:$0xff]
        %v1529 = vld [vmem:[%s1525 + $0x18] sm:$0xff]
        %v1531 = vsel %vm460, %v1493, 0
        %v1534 = vsel %vm460, %v1494, 0
        %v1537 = vsel %vm460, %v1495, 0
        %v1540 = vsel %vm460, %v1496, 0
        %v1543 = vsel %vm460, %v1497, 0
        %v1546 = vsel %vm460, %v1498, 0
        %v1549 = vsel %vm460, %v1499, 0
        %v1552 = vsel %vm460, %v1500, 0
        %v1555 = vsel %vm460, %v1501, 0
        %v1558 = vsel %vm460, %v1502, 0
        %v1561 = vsel %vm460, %v1503, 0
        %v1564 = vsel %vm460, %v1504, 0
        %v1567 = vsel %vm460, %v1505, 0
        %v1570 = vsel %vm460, %v1506, 0
        %v1573 = vsel %vm460, %v1507, 0
        %v1576 = vsel %vm460, %v1508, 0
        %v1579 = vsel %vm460, %v1509, 0
        %v1582 = vsel %vm460, %v1510, 0
        %v1585 = vsel %vm460, %v1511, 0
        %v1588 = vsel %vm460, %v1512, 0
        %v1591 = vsel %vm460, %v1513, 0
        %v1594 = vsel %vm460, %v1514, 0
        %v1597 = vsel %vm460, %v1515, 0
        %v1600 = vsel %vm460, %v1516, 0
        %v1603 = vsel %vm460, %v1517, 0
        %v1606 = vsel %vm460, %v1518, 0
        %v1609 = vsel %vm460, %v1519, 0
        %v1612 = vsel %vm460, %v1520, 0
        %v1615 = vsel %vm460, %v1521, 0
        %v1618 = vsel %vm460, %v1522, 0
        %v1621 = vsel %vm460, %v1523, 0
        %v1624 = vsel %vm460, %v1524, 0
        %1626 = vmatprep.subr.mxu0 0.0
        %1627 = vmatpush1.msra.mxu0 %v1526
        %1628 = vmatprep.subr.mxu0 0.0
        %1629 = vmatpush1.msra.mxu0 %v1527
        %1630 = vmatprep.subr.mxu0 0.0
        %1631 = vmatpush1.msra.mxu0 %v1528
        %1632 = vmatprep.subr.mxu0 0.0
        %1633 = vmatpush1.msra.mxu0 %v1529
        %1634 = vmatprep.subr.mxu0 0.0
        %1635 = vmatpush1.msra.mxu0 0.0
        %1636 = vmatprep.subr.mxu0 0.0
        %1637 = vmatpush1.msra.mxu0 0.0
        %1638 = vmatprep.subr.mxu0 0.0
        %1639 = vmatpush1.msra.mxu0 0.0
        %1640 = vmatprep.subr.mxu0 0.0
        %1641 = vmatpush1.msra.mxu0 0.0
        %1642 = vmatprep.subr.mxu0 0.0
        %1643 = vmatpush1.msra.mxu0 0.0
        %1644 = vmatprep.subr.mxu0 0.0
        %1645 = vmatpush1.msra.mxu0 0.0
        %1646 = vmatprep.subr.mxu0 0.0
        %1647 = vmatpush1.msra.mxu0 0.0
        %1648 = vmatprep.subr.mxu0 0.0
        %1649 = vmatpush1.msra.mxu0 0.0
        %1650 = vmatprep.subr.mxu0 0.0
        %1651 = vmatpush1.msra.mxu0 0.0
        %1652 = vmatprep.subr.mxu0 0.0
        %1653 = vmatpush1.msra.mxu0 0.0
        %1654 = vmatprep.subr.mxu0 0.0
        %1655 = vmatpush1.msra.mxu0 0.0
        %1656 = vmatprep.subr.mxu0 0.0
        %1657 = vmatpush1.msra.mxu0 0.0
        %1658 = vmatprep.subr.mxu0 0.0
        %1659 = vmatpush1.msra.mxu0 0.0
        %1660 = vmatprep.subr.mxu0 0.0
        %1661 = vmatpush1.msra.mxu0 0.0
        %1662 = vmatprep.subr.mxu0 0.0
        %1663 = vmatpush1.msra.mxu0 0.0
        %1664 = vmatprep.subr.mxu0 0.0
        %1665 = vmatpush1.msra.mxu0 0.0
        %1666 = vmatprep.subr.mxu0 0.0
        %1667 = vmatpush1.msra.mxu0 0.0
        %1668 = vmatprep.subr.mxu0 0.0
        %1669 = vmatpush1.msra.mxu0 0.0
        %1670 = vmatprep.subr.mxu0 0.0
        %1671 = vmatpush1.msra.mxu0 0.0
        %1672 = vmatprep.subr.mxu0 0.0
        %1673 = vmatpush1.msra.mxu0 0.0
        %1674 = vmatprep.subr.mxu0 0.0
        %1675 = vmatpush1.msra.mxu0 0.0
        %1676 = vmatprep.subr.mxu0 0.0
        %1677 = vmatpush1.msra.mxu0 0.0
        %1678 = vmatprep.subr.mxu0 0.0
        %1679 = vmatpush1.msra.mxu0 0.0
        %1680 = vmatprep.subr.mxu0 0.0
        %1681 = vmatpush1.msra.mxu0 0.0
        %1682 = vmatprep.subr.mxu0 0.0
        %1683 = vmatpush1.msra.mxu0 0.0
        %1684 = vmatprep.subr.mxu0 0.0
        %1685 = vmatpush1.msra.mxu0 0.0
        %1686 = vmatprep.subr.mxu0 0.0
        %1687 = vmatpush1.msra.mxu0 0.0
        %1688 = vmatprep.subr.mxu0 0.0
        %1689 = vmatpush1.msra.mxu0 0.0
        %1690 = vmatprep.mubr.f32.mxu0 0.0
        %1691 = vmatmul.mubr.f32.gmra.mrb[0].mxu0 %v1531
        %v1692 = vpop.f32.mrb[0].mxu0
        %v1693 = vadd.f32 0.0, %v1692
        %v1694 = vpop.f32.mrb[0].mxu0
        %1695 = vmatprep.mubr.f32.mxu0 0.0
        %1696 = vmatmul.mubr.f32.gmra.mrb[0].mxu0 %v1534
        %v1697 = vpop.f32.mrb[0].mxu0
        %v1698 = vadd.f32 0.0, %v1697
        %v1699 = vpop.f32.mrb[0].mxu0
        %1700 = vmatprep.mubr.f32.mxu0 0.0
        %1701 = vmatmul.mubr.f32.gmra.mrb[0].mxu0 %v1537
        %v1702 = vpop.f32.mrb[0].mxu0
        %v1703 = vadd.f32 0.0, %v1702
        %v1704 = vpop.f32.mrb[0].mxu0
        %1705 = vmatprep.mubr.f32.mxu0 0.0
        %1706 = vmatmul.mubr.f32.gmra.mrb[0].mxu0 %v1540
        %v1707 = vpop.f32.mrb[0].mxu0
        %v1708 = vadd.f32 0.0, %v1707
        %v1709 = vpop.f32.mrb[0].mxu0
        %1710 = vmatprep.mubr.f32.mxu0 0.0
        %1711 = vmatmul.mubr.f32.gmra.mrb[0].mxu0 %v1543
        %v1712 = vpop.f32.mrb[0].mxu0
        %v1713 = vadd.f32 0.0, %v1712
        %v1714 = vpop.f32.mrb[0].mxu0
        %1715 = vmatprep.mubr.f32.mxu0 0.0
        %1716 = vmatmul.mubr.f32.gmra.mrb[0].mxu0 %v1546
        %v1717 = vpop.f32.mrb[0].mxu0
        %v1718 = vadd.f32 0.0, %v1717
        %v1719 = vpop.f32.mrb[0].mxu0
        %1720 = vmatprep.mubr.f32.mxu0 0.0
        %1721 = vmatmul.mubr.f32.gmra.mrb[0].mxu0 %v1549
        %v1722 = vpop.f32.mrb[0].mxu0
        %v1723 = vadd.f32 0.0, %v1722
        %v1724 = vpop.f32.mrb[0].mxu0
        %1725 = vmatprep.mubr.f32.mxu0 0.0
        %1726 = vmatmul.mubr.f32.gmra.mrb[0].mxu0 %v1552
        %v1727 = vpop.f32.mrb[0].mxu0
        %v1728 = vadd.f32 0.0, %v1727
        %v1729 = vpop.f32.mrb[0].mxu0
        %1730 = vmatprep.mubr.f32.mxu0 0.0
        %1731 = vmatmul.mubr.f32.gmra.mrb[0].mxu0 %v1555
        %v1732 = vpop.f32.mrb[0].mxu0
        %v1733 = vadd.f32 0.0, %v1732
        %v1734 = vpop.f32.mrb[0].mxu0
        %1735 = vmatprep.mubr.f32.mxu0 0.0
        %1736 = vmatmul.mubr.f32.gmra.mrb[0].mxu0 %v1558
        %v1737 = vpop.f32.mrb[0].mxu0
        %v1738 = vadd.f32 0.0, %v1737
        %v1739 = vpop.f32.mrb[0].mxu0
        %1740 = vmatprep.mubr.f32.mxu0 0.0
        %1741 = vmatmul.mubr.f32.gmra.mrb[0].mxu0 %v1561
        %v1742 = vpop.f32.mrb[0].mxu0
        %v1743 = vadd.f32 0.0, %v1742
        %v1744 = vpop.f32.mrb[0].mxu0
        %1745 = vmatprep.mubr.f32.mxu0 0.0
        %1746 = vmatmul.mubr.f32.gmra.mrb[0].mxu0 %v1564
        %v1747 = vpop.f32.mrb[0].mxu0
        %v1748 = vadd.f32 0.0, %v1747
        %v1749 = vpop.f32.mrb[0].mxu0
        %1750 = vmatprep.mubr.f32.mxu0 0.0
        %1751 = vmatmul.mubr.f32.gmra.mrb[0].mxu0 %v1567
        %v1752 = vpop.f32.mrb[0].mxu0
        %v1753 = vadd.f32 0.0, %v1752
        %v1754 = vpop.f32.mrb[0].mxu0
        %1755 = vmatprep.mubr.f32.mxu0 0.0
        %1756 = vmatmul.mubr.f32.gmra.mrb[0].mxu0 %v1570
        %v1757 = vpop.f32.mrb[0].mxu0
        %v1758 = vadd.f32 0.0, %v1757
        %v1759 = vpop.f32.mrb[0].mxu0
        %1760 = vmatprep.mubr.f32.mxu0 0.0
        %1761 = vmatmul.mubr.f32.gmra.mrb[0].mxu0 %v1573
        %v1762 = vpop.f32.mrb[0].mxu0
        %v1763 = vadd.f32 0.0, %v1762
        %v1764 = vpop.f32.mrb[0].mxu0
        %1765 = vmatprep.mubr.f32.mxu0 0.0
        %1766 = vmatmul.mubr.f32.gmra.mrb[0].mxu0 %v1576
        %v1767 = vpop.f32.mrb[0].mxu0
        %v1768 = vadd.f32 0.0, %v1767
        %v1769 = vpop.f32.mrb[0].mxu0
        %1770 = vmatprep.mubr.f32.mxu0 0.0
        %1771 = vmatmul.mubr.f32.gmra.mrb[0].mxu0 %v1579
        %v1772 = vpop.f32.mrb[0].mxu0
        %v1773 = vadd.f32 0.0, %v1772
        %v1774 = vpop.f32.mrb[0].mxu0
        %1775 = vmatprep.mubr.f32.mxu0 0.0
        %1776 = vmatmul.mubr.f32.gmra.mrb[0].mxu0 %v1582
        %v1777 = vpop.f32.mrb[0].mxu0
        %v1778 = vadd.f32 0.0, %v1777
        %v1779 = vpop.f32.mrb[0].mxu0
        %1780 = vmatprep.mubr.f32.mxu0 0.0
        %1781 = vmatmul.mubr.f32.gmra.mrb[0].mxu0 %v1585
        %v1782 = vpop.f32.mrb[0].mxu0
        %v1783 = vadd.f32 0.0, %v1782
        %v1784 = vpop.f32.mrb[0].mxu0
        %1785 = vmatprep.mubr.f32.mxu0 0.0
        %1786 = vmatmul.mubr.f32.gmra.mrb[0].mxu0 %v1588
        %v1787 = vpop.f32.mrb[0].mxu0
        %v1788 = vadd.f32 0.0, %v1787
        %v1789 = vpop.f32.mrb[0].mxu0
        %1790 = vmatprep.mubr.f32.mxu0 0.0
        %1791 = vmatmul.mubr.f32.gmra.mrb[0].mxu0 %v1591
        %v1792 = vpop.f32.mrb[0].mxu0
        %v1793 = vadd.f32 0.0, %v1792
        %v1794 = vpop.f32.mrb[0].mxu0
        %1795 = vmatprep.mubr.f32.mxu0 0.0
        %1796 = vmatmul.mubr.f32.gmra.mrb[0].mxu0 %v1594
        %v1797 = vpop.f32.mrb[0].mxu0
        %v1798 = vadd.f32 0.0, %v1797
        %v1799 = vpop.f32.mrb[0].mxu0
        %1800 = vmatprep.mubr.f32.mxu0 0.0
        %1801 = vmatmul.mubr.f32.gmra.mrb[0].mxu0 %v1597
        %v1802 = vpop.f32.mrb[0].mxu0
        %v1803 = vadd.f32 0.0, %v1802
        %v1804 = vpop.f32.mrb[0].mxu0
        %1805 = vmatprep.mubr.f32.mxu0 0.0
        %1806 = vmatmul.mubr.f32.gmra.mrb[0].mxu0 %v1600
        %v1807 = vpop.f32.mrb[0].mxu0
        %v1808 = vadd.f32 0.0, %v1807
        %v1809 = vpop.f32.mrb[0].mxu0
        %1810 = vmatprep.mubr.f32.mxu0 0.0
        %1811 = vmatmul.mubr.f32.gmra.mrb[0].mxu0 %v1603
        %v1812 = vpop.f32.mrb[0].mxu0
        %v1813 = vadd.f32 0.0, %v1812
        %v1814 = vpop.f32.mrb[0].mxu0
        %1815 = vmatprep.mubr.f32.mxu0 0.0
        %1816 = vmatmul.mubr.f32.gmra.mrb[0].mxu0 %v1606
        %v1817 = vpop.f32.mrb[0].mxu0
        %v1818 = vadd.f32 0.0, %v1817
        %v1819 = vpop.f32.mrb[0].mxu0
        %1820 = vmatprep.mubr.f32.mxu0 0.0
        %1821 = vmatmul.mubr.f32.gmra.mrb[0].mxu0 %v1609
        %v1822 = vpop.f32.mrb[0].mxu0
        %v1823 = vadd.f32 0.0, %v1822
        %v1824 = vpop.f32.mrb[0].mxu0
        %1825 = vmatprep.mubr.f32.mxu0 0.0
        %1826 = vmatmul.mubr.f32.gmra.mrb[0].mxu0 %v1612
        %v1827 = vpop.f32.mrb[0].mxu0
        %v1828 = vadd.f32 0.0, %v1827
        %v1829 = vpop.f32.mrb[0].mxu0
        %1830 = vmatprep.mubr.f32.mxu0 0.0
        %1831 = vmatmul.mubr.f32.gmra.mrb[0].mxu0 %v1615
        %v1832 = vpop.f32.mrb[0].mxu0
        %v1833 = vadd.f32 0.0, %v1832
        %v1834 = vpop.f32.mrb[0].mxu0
        %1835 = vmatprep.mubr.f32.mxu0 0.0
        %1836 = vmatmul.mubr.f32.gmra.mrb[0].mxu0 %v1618
        %v1837 = vpop.f32.mrb[0].mxu0
        %v1838 = vadd.f32 0.0, %v1837
        %v1839 = vpop.f32.mrb[0].mxu0
        %1840 = vmatprep.mubr.f32.mxu0 0.0
        %1841 = vmatmul.mubr.f32.gmra.mrb[0].mxu0 %v1621
        %v1842 = vpop.f32.mrb[0].mxu0
        %v1843 = vadd.f32 0.0, %v1842
        %v1844 = vpop.f32.mrb[0].mxu0
        %1845 = vmatprep.mubr.f32.mxu0 0.0
        %1846 = vmatmul.mubr.f32.gmra.mrb[0].mxu0 %v1624
        %v1847 = vpop.f32.mrb[0].mxu0
        %v1848 = vadd.f32 0.0, %v1847
        %v1849 = vpop.f32.mrb[0].mxu0
        %1850 = vdwg.mxu0
        %v1851 = vadd.f32 %v1461, %v1693
        %v1852 = vadd.f32 %v1462, %v1698
        %v1853 = vadd.f32 %v1463, %v1703
        %v1854 = vadd.f32 %v1464, %v1708
        %v1855 = vadd.f32 %v1465, %v1713
        %v1856 = vadd.f32 %v1466, %v1718
        %v1857 = vadd.f32 %v1467, %v1723
        %v1858 = vadd.f32 %v1468, %v1728
        %v1859 = vadd.f32 %v1469, %v1733
        %v1860 = vadd.f32 %v1470, %v1738
        %v1861 = vadd.f32 %v1471, %v1743
        %v1862 = vadd.f32 %v1472, %v1748
        %v1863 = vadd.f32 %v1473, %v1753
        %v1864 = vadd.f32 %v1474, %v1758
        %v1865 = vadd.f32 %v1475, %v1763
        %v1866 = vadd.f32 %v1476, %v1768
        %v1867 = vadd.f32 %v1477, %v1773
        %v1868 = vadd.f32 %v1478, %v1778
        %v1869 = vadd.f32 %v1479, %v1783
        %v1870 = vadd.f32 %v1480, %v1788
        %v1871 = vadd.f32 %v1481, %v1793
        %v1872 = vadd.f32 %v1482, %v1798
        %v1873 = vadd.f32 %v1483, %v1803
        %v1874 = vadd.f32 %v1484, %v1808
        %v1875 = vadd.f32 %v1485, %v1813
        %v1876 = vadd.f32 %v1486, %v1818
        %v1877 = vadd.f32 %v1487, %v1823
        %v1878 = vadd.f32 %v1488, %v1828
        %v1879 = vadd.f32 %v1489, %v1833
        %v1880 = vadd.f32 %v1490, %v1838
        %v1881 = vadd.f32 %v1491, %v1843
        %v1882 = vadd.f32 %v1492, %v1848
        %v1883 = vld [vmem:[%s385 + $0x4] sm:$0xff]
        %v1884 = vld [vmem:[%s385 + $0xc] sm:$0xff]
        %v1885 = vld [vmem:[%s385 + $0x14] sm:$0xff]
        %v1886 = vld [vmem:[%s385 + $0x1c] sm:$0xff]
        %v1887 = vld [vmem:[%s385 + $0x24] sm:$0xff]
        %v1888 = vld [vmem:[%s385 + $0x2c] sm:$0xff]
        %v1889 = vld [vmem:[%s385 + $0x34] sm:$0xff]
        %v1890 = vld [vmem:[%s385 + $0x3c] sm:$0xff]
        %v1891 = vld [vmem:[%s385 + $0x44] sm:$0xff]
        %v1892 = vld [vmem:[%s385 + $0x4c] sm:$0xff]
        %v1893 = vld [vmem:[%s385 + $0x54] sm:$0xff]
        %v1894 = vld [vmem:[%s385 + $0x5c] sm:$0xff]
        %v1895 = vld [vmem:[%s385 + $0x64] sm:$0xff]
        %v1896 = vld [vmem:[%s385 + $0x6c] sm:$0xff]
        %v1897 = vld [vmem:[%s385 + $0x74] sm:$0xff]
        %v1898 = vld [vmem:[%s385 + $0x7c] sm:$0xff]
        %v1899 = vld [vmem:[%s385 + $0x84] sm:$0xff]
        %v1900 = vld [vmem:[%s385 + $0x8c] sm:$0xff]
        %v1901 = vld [vmem:[%s385 + $0x94] sm:$0xff]
        %v1902 = vld [vmem:[%s385 + $0x9c] sm:$0xff]
        %v1903 = vld [vmem:[%s385 + $0xa4] sm:$0xff]
        %v1904 = vld [vmem:[%s385 + $0xac] sm:$0xff]
        %v1905 = vld [vmem:[%s385 + $0xb4] sm:$0xff]
        %v1906 = vld [vmem:[%s385 + $0xbc] sm:$0xff]
        %v1907 = vld [vmem:[%s385 + $0xc4] sm:$0xff]
        %v1908 = vld [vmem:[%s385 + $0xcc] sm:$0xff]
        %v1909 = vld [vmem:[%s385 + $0xd4] sm:$0xff]
        %v1910 = vld [vmem:[%s385 + $0xdc] sm:$0xff]
        %v1911 = vld [vmem:[%s385 + $0xe4] sm:$0xff]
        %v1912 = vld [vmem:[%s385 + $0xec] sm:$0xff]
        %v1913 = vld [vmem:[%s385 + $0xf4] sm:$0xff]
        %v1914 = vld [vmem:[%s385 + $0xfc] sm:$0xff]
        %s1915 = scalar_lea.vmem %s1, 128
        %v1916 = vld [vmem:[%s1915] sm:$0xff]
        %v1917 = vld [vmem:[%s1915 + $0x8] sm:$0xff]
        %v1918 = vld [vmem:[%s1915 + $0x10] sm:$0xff]
        %v1919 = vld [vmem:[%s1915 + $0x18] sm:$0xff]
        %v1921 = vsel %vm460, %v1883, 0
        %v1924 = vsel %vm460, %v1884, 0
        %v1927 = vsel %vm460, %v1885, 0
        %v1930 = vsel %vm460, %v1886, 0
        %v1933 = vsel %vm460, %v1887, 0
        %v1936 = vsel %vm460, %v1888, 0
        %v1939 = vsel %vm460, %v1889, 0
        %v1942 = vsel %vm460, %v1890, 0
        %v1945 = vsel %vm460, %v1891, 0
        %v1948 = vsel %vm460, %v1892, 0
        %v1951 = vsel %vm460, %v1893, 0
        %v1954 = vsel %vm460, %v1894, 0
        %v1957 = vsel %vm460, %v1895, 0
        %v1960 = vsel %vm460, %v1896, 0
        %v1963 = vsel %vm460, %v1897, 0
        %v1966 = vsel %vm460, %v1898, 0
        %v1969 = vsel %vm460, %v1899, 0
        %v1972 = vsel %vm460, %v1900, 0
        %v1975 = vsel %vm460, %v1901, 0
        %v1978 = vsel %vm460, %v1902, 0
        %v1981 = vsel %vm460, %v1903, 0
        %v1984 = vsel %vm460, %v1904, 0
        %v1987 = vsel %vm460, %v1905, 0
        %v1990 = vsel %vm460, %v1906, 0
        %v1993 = vsel %vm460, %v1907, 0
        %v1996 = vsel %vm460, %v1908, 0
        %v1999 = vsel %vm460, %v1909, 0
        %v2002 = vsel %vm460, %v1910, 0
        %v2005 = vsel %vm460, %v1911, 0
        %v2008 = vsel %vm460, %v1912, 0
        %v2011 = vsel %vm460, %v1913, 0
        %v2014 = vsel %vm460, %v1914, 0
        %2016 = vmatprep.subr.mxu0 0.0
        %2017 = vmatpush1.msra.mxu0 %v1916
        %2018 = vmatprep.subr.mxu0 0.0
        %2019 = vmatpush1.msra.mxu0 %v1917
        %2020 = vmatprep.subr.mxu0 0.0
        %2021 = vmatpush1.msra.mxu0 %v1918
        %2022 = vmatprep.subr.mxu0 0.0
        %2023 = vmatpush1.msra.mxu0 %v1919
        %2024 = vmatprep.subr.mxu0 0.0
        %2025 = vmatpush1.msra.mxu0 0.0
        %2026 = vmatprep.subr.mxu0 0.0
        %2027 = vmatpush1.msra.mxu0 0.0
        %2028 = vmatprep.subr.mxu0 0.0
        %2029 = vmatpush1.msra.mxu0 0.0
        %2030 = vmatprep.subr.mxu0 0.0
        %2031 = vmatpush1.msra.mxu0 0.0
        %2032 = vmatprep.subr.mxu0 0.0
        %2033 = vmatpush1.msra.mxu0 0.0
        %2034 = vmatprep.subr.mxu0 0.0
        %2035 = vmatpush1.msra.mxu0 0.0
        %2036 = vmatprep.subr.mxu0 0.0
        %2037 = vmatpush1.msra.mxu0 0.0
        %2038 = vmatprep.subr.mxu0 0.0
        %2039 = vmatpush1.msra.mxu0 0.0
        %2040 = vmatprep.subr.mxu0 0.0
        %2041 = vmatpush1.msra.mxu0 0.0
        %2042 = vmatprep.subr.mxu0 0.0
        %2043 = vmatpush1.msra.mxu0 0.0
        %2044 = vmatprep.subr.mxu0 0.0
        %2045 = vmatpush1.msra.mxu0 0.0
        %2046 = vmatprep.subr.mxu0 0.0
        %2047 = vmatpush1.msra.mxu0 0.0
        %2048 = vmatprep.subr.mxu0 0.0
        %2049 = vmatpush1.msra.mxu0 0.0
        %2050 = vmatprep.subr.mxu0 0.0
        %2051 = vmatpush1.msra.mxu0 0.0
        %2052 = vmatprep.subr.mxu0 0.0
        %2053 = vmatpush1.msra.mxu0 0.0
        %2054 = vmatprep.subr.mxu0 0.0
        %2055 = vmatpush1.msra.mxu0 0.0
        %2056 = vmatprep.subr.mxu0 0.0
        %2057 = vmatpush1.msra.mxu0 0.0
        %2058 = vmatprep.subr.mxu0 0.0
        %2059 = vmatpush1.msra.mxu0 0.0
        %2060 = vmatprep.subr.mxu0 0.0
        %2061 = vmatpush1.msra.mxu0 0.0
        %2062 = vmatprep.subr.mxu0 0.0
        %2063 = vmatpush1.msra.mxu0 0.0
        %2064 = vmatprep.subr.mxu0 0.0
        %2065 = vmatpush1.msra.mxu0 0.0
        %2066 = vmatprep.subr.mxu0 0.0
        %2067 = vmatpush1.msra.mxu0 0.0
        %2068 = vmatprep.subr.mxu0 0.0
        %2069 = vmatpush1.msra.mxu0 0.0
        %2070 = vmatprep.subr.mxu0 0.0
        %2071 = vmatpush1.msra.mxu0 0.0
        %2072 = vmatprep.subr.mxu0 0.0
        %2073 = vmatpush1.msra.mxu0 0.0
        %2074 = vmatprep.subr.mxu0 0.0
        %2075 = vmatpush1.msra.mxu0 0.0
        %2076 = vmatprep.subr.mxu0 0.0
        %2077 = vmatpush1.msra.mxu0 0.0
        %2078 = vmatprep.subr.mxu0 0.0
        %2079 = vmatpush1.msra.mxu0 0.0
        %2080 = vmatprep.mubr.f32.mxu0 0.0
        %2081 = vmatmul.mubr.f32.gmra.mrb[0].mxu0 %v1921
        %v2082 = vpop.f32.mrb[0].mxu0
        %v2083 = vadd.f32 0.0, %v2082
        %v2084 = vpop.f32.mrb[0].mxu0
        %2085 = vmatprep.mubr.f32.mxu0 0.0
        %2086 = vmatmul.mubr.f32.gmra.mrb[0].mxu0 %v1924
        %v2087 = vpop.f32.mrb[0].mxu0
        %v2088 = vadd.f32 0.0, %v2087
        %v2089 = vpop.f32.mrb[0].mxu0
        %2090 = vmatprep.mubr.f32.mxu0 0.0
        %2091 = vmatmul.mubr.f32.gmra.mrb[0].mxu0 %v1927
        %v2092 = vpop.f32.mrb[0].mxu0
        %v2093 = vadd.f32 0.0, %v2092
        %v2094 = vpop.f32.mrb[0].mxu0
        %2095 = vmatprep.mubr.f32.mxu0 0.0
        %2096 = vmatmul.mubr.f32.gmra.mrb[0].mxu0 %v1930
        %v2097 = vpop.f32.mrb[0].mxu0
        %v2098 = vadd.f32 0.0, %v2097
        %v2099 = vpop.f32.mrb[0].mxu0
        %2100 = vmatprep.mubr.f32.mxu0 0.0
        %2101 = vmatmul.mubr.f32.gmra.mrb[0].mxu0 %v1933
        %v2102 = vpop.f32.mrb[0].mxu0
        %v2103 = vadd.f32 0.0, %v2102
        %v2104 = vpop.f32.mrb[0].mxu0
        %2105 = vmatprep.mubr.f32.mxu0 0.0
        %2106 = vmatmul.mubr.f32.gmra.mrb[0].mxu0 %v1936
        %v2107 = vpop.f32.mrb[0].mxu0
        %v2108 = vadd.f32 0.0, %v2107
        %v2109 = vpop.f32.mrb[0].mxu0
        %2110 = vmatprep.mubr.f32.mxu0 0.0
        %2111 = vmatmul.mubr.f32.gmra.mrb[0].mxu0 %v1939
        %v2112 = vpop.f32.mrb[0].mxu0
        %v2113 = vadd.f32 0.0, %v2112
        %v2114 = vpop.f32.mrb[0].mxu0
        %2115 = vmatprep.mubr.f32.mxu0 0.0
        %2116 = vmatmul.mubr.f32.gmra.mrb[0].mxu0 %v1942
        %v2117 = vpop.f32.mrb[0].mxu0
        %v2118 = vadd.f32 0.0, %v2117
        %v2119 = vpop.f32.mrb[0].mxu0
        %2120 = vmatprep.mubr.f32.mxu0 0.0
        %2121 = vmatmul.mubr.f32.gmra.mrb[0].mxu0 %v1945
        %v2122 = vpop.f32.mrb[0].mxu0
        %v2123 = vadd.f32 0.0, %v2122
        %v2124 = vpop.f32.mrb[0].mxu0
        %2125 = vmatprep.mubr.f32.mxu0 0.0
        %2126 = vmatmul.mubr.f32.gmra.mrb[0].mxu0 %v1948
        %v2127 = vpop.f32.mrb[0].mxu0
        %v2128 = vadd.f32 0.0, %v2127
        %v2129 = vpop.f32.mrb[0].mxu0
        %2130 = vmatprep.mubr.f32.mxu0 0.0
        %2131 = vmatmul.mubr.f32.gmra.mrb[0].mxu0 %v1951
        %v2132 = vpop.f32.mrb[0].mxu0
        %v2133 = vadd.f32 0.0, %v2132
        %v2134 = vpop.f32.mrb[0].mxu0
        %2135 = vmatprep.mubr.f32.mxu0 0.0
        %2136 = vmatmul.mubr.f32.gmra.mrb[0].mxu0 %v1954
        %v2137 = vpop.f32.mrb[0].mxu0
        %v2138 = vadd.f32 0.0, %v2137
        %v2139 = vpop.f32.mrb[0].mxu0
        %2140 = vmatprep.mubr.f32.mxu0 0.0
        %2141 = vmatmul.mubr.f32.gmra.mrb[0].mxu0 %v1957
        %v2142 = vpop.f32.mrb[0].mxu0
        %v2143 = vadd.f32 0.0, %v2142
        %v2144 = vpop.f32.mrb[0].mxu0
        %2145 = vmatprep.mubr.f32.mxu0 0.0
        %2146 = vmatmul.mubr.f32.gmra.mrb[0].mxu0 %v1960
        %v2147 = vpop.f32.mrb[0].mxu0
        %v2148 = vadd.f32 0.0, %v2147
        %v2149 = vpop.f32.mrb[0].mxu0
        %2150 = vmatprep.mubr.f32.mxu0 0.0
        %2151 = vmatmul.mubr.f32.gmra.mrb[0].mxu0 %v1963
        %v2152 = vpop.f32.mrb[0].mxu0
        %v2153 = vadd.f32 0.0, %v2152
        %v2154 = vpop.f32.mrb[0].mxu0
        %2155 = vmatprep.mubr.f32.mxu0 0.0
        %2156 = vmatmul.mubr.f32.gmra.mrb[0].mxu0 %v1966
        %v2157 = vpop.f32.mrb[0].mxu0
        %v2158 = vadd.f32 0.0, %v2157
        %v2159 = vpop.f32.mrb[0].mxu0
        %2160 = vmatprep.mubr.f32.mxu0 0.0
        %2161 = vmatmul.mubr.f32.gmra.mrb[0].mxu0 %v1969
        %v2162 = vpop.f32.mrb[0].mxu0
        %v2163 = vadd.f32 0.0, %v2162
        %v2164 = vpop.f32.mrb[0].mxu0
        %2165 = vmatprep.mubr.f32.mxu0 0.0
        %2166 = vmatmul.mubr.f32.gmra.mrb[0].mxu0 %v1972
        %v2167 = vpop.f32.mrb[0].mxu0
        %v2168 = vadd.f32 0.0, %v2167
        %v2169 = vpop.f32.mrb[0].mxu0
        %2170 = vmatprep.mubr.f32.mxu0 0.0
        %2171 = vmatmul.mubr.f32.gmra.mrb[0].mxu0 %v1975
        %v2172 = vpop.f32.mrb[0].mxu0
        %v2173 = vadd.f32 0.0, %v2172
        %v2174 = vpop.f32.mrb[0].mxu0
        %2175 = vmatprep.mubr.f32.mxu0 0.0
        %2176 = vmatmul.mubr.f32.gmra.mrb[0].mxu0 %v1978
        %v2177 = vpop.f32.mrb[0].mxu0
        %v2178 = vadd.f32 0.0, %v2177
        %v2179 = vpop.f32.mrb[0].mxu0
        %2180 = vmatprep.mubr.f32.mxu0 0.0
        %2181 = vmatmul.mubr.f32.gmra.mrb[0].mxu0 %v1981
        %v2182 = vpop.f32.mrb[0].mxu0
        %v2183 = vadd.f32 0.0, %v2182
        %v2184 = vpop.f32.mrb[0].mxu0
        %2185 = vmatprep.mubr.f32.mxu0 0.0
        %2186 = vmatmul.mubr.f32.gmra.mrb[0].mxu0 %v1984
        %v2187 = vpop.f32.mrb[0].mxu0
        %v2188 = vadd.f32 0.0, %v2187
        %v2189 = vpop.f32.mrb[0].mxu0
        %2190 = vmatprep.mubr.f32.mxu0 0.0
        %2191 = vmatmul.mubr.f32.gmra.mrb[0].mxu0 %v1987
        %v2192 = vpop.f32.mrb[0].mxu0
        %v2193 = vadd.f32 0.0, %v2192
        %v2194 = vpop.f32.mrb[0].mxu0
        %2195 = vmatprep.mubr.f32.mxu0 0.0
        %2196 = vmatmul.mubr.f32.gmra.mrb[0].mxu0 %v1990
        %v2197 = vpop.f32.mrb[0].mxu0
        %v2198 = vadd.f32 0.0, %v2197
        %v2199 = vpop.f32.mrb[0].mxu0
        %2200 = vmatprep.mubr.f32.mxu0 0.0
        %2201 = vmatmul.mubr.f32.gmra.mrb[0].mxu0 %v1993
        %v2202 = vpop.f32.mrb[0].mxu0
        %v2203 = vadd.f32 0.0, %v2202
        %v2204 = vpop.f32.mrb[0].mxu0
        %2205 = vmatprep.mubr.f32.mxu0 0.0
        %2206 = vmatmul.mubr.f32.gmra.mrb[0].mxu0 %v1996
        %v2207 = vpop.f32.mrb[0].mxu0
        %v2208 = vadd.f32 0.0, %v2207
        %v2209 = vpop.f32.mrb[0].mxu0
        %2210 = vmatprep.mubr.f32.mxu0 0.0
        %2211 = vmatmul.mubr.f32.gmra.mrb[0].mxu0 %v1999
        %v2212 = vpop.f32.mrb[0].mxu0
        %v2213 = vadd.f32 0.0, %v2212
        %v2214 = vpop.f32.mrb[0].mxu0
        %2215 = vmatprep.mubr.f32.mxu0 0.0
        %2216 = vmatmul.mubr.f32.gmra.mrb[0].mxu0 %v2002
        %v2217 = vpop.f32.mrb[0].mxu0
        %v2218 = vadd.f32 0.0, %v2217
        %v2219 = vpop.f32.mrb[0].mxu0
        %2220 = vmatprep.mubr.f32.mxu0 0.0
        %2221 = vmatmul.mubr.f32.gmra.mrb[0].mxu0 %v2005
        %v2222 = vpop.f32.mrb[0].mxu0
        %v2223 = vadd.f32 0.0, %v2222
        %v2224 = vpop.f32.mrb[0].mxu0
        %2225 = vmatprep.mubr.f32.mxu0 0.0
        %2226 = vmatmul.mubr.f32.gmra.mrb[0].mxu0 %v2008
        %v2227 = vpop.f32.mrb[0].mxu0
        %v2228 = vadd.f32 0.0, %v2227
        %v2229 = vpop.f32.mrb[0].mxu0
        %2230 = vmatprep.mubr.f32.mxu0 0.0
        %2231 = vmatmul.mubr.f32.gmra.mrb[0].mxu0 %v2011
        %v2232 = vpop.f32.mrb[0].mxu0
        %v2233 = vadd.f32 0.0, %v2232
        %v2234 = vpop.f32.mrb[0].mxu0
        %2235 = vmatprep.mubr.f32.mxu0 0.0
        %2236 = vmatmul.mubr.f32.gmra.mrb[0].mxu0 %v2014
        %v2237 = vpop.f32.mrb[0].mxu0
        %v2238 = vadd.f32 0.0, %v2237
        %v2239 = vpop.f32.mrb[0].mxu0
        %2240 = vdwg.mxu0
        %v2241 = vadd.f32 %v1851, %v2083
        %v2242 = vadd.f32 %v1852, %v2088
        %v2243 = vadd.f32 %v1853, %v2093
        %v2244 = vadd.f32 %v1854, %v2098
        %v2245 = vadd.f32 %v1855, %v2103
        %v2246 = vadd.f32 %v1856, %v2108
        %v2247 = vadd.f32 %v1857, %v2113
        %v2248 = vadd.f32 %v1858, %v2118
        %v2249 = vadd.f32 %v1859, %v2123
        %v2250 = vadd.f32 %v1860, %v2128
        %v2251 = vadd.f32 %v1861, %v2133
        %v2252 = vadd.f32 %v1862, %v2138
        %v2253 = vadd.f32 %v1863, %v2143
        %v2254 = vadd.f32 %v1864, %v2148
        %v2255 = vadd.f32 %v1865, %v2153
        %v2256 = vadd.f32 %v1866, %v2158
        %v2257 = vadd.f32 %v1867, %v2163
        %v2258 = vadd.f32 %v1868, %v2168
        %v2259 = vadd.f32 %v1869, %v2173
        %v2260 = vadd.f32 %v1870, %v2178
        %v2261 = vadd.f32 %v1871, %v2183
        %v2262 = vadd.f32 %v1872, %v2188
        %v2263 = vadd.f32 %v1873, %v2193
        %v2264 = vadd.f32 %v1874, %v2198
        %v2265 = vadd.f32 %v1875, %v2203
        %v2266 = vadd.f32 %v1876, %v2208
        %v2267 = vadd.f32 %v1877, %v2213
        %v2268 = vadd.f32 %v1878, %v2218
        %v2269 = vadd.f32 %v1879, %v2223
        %v2270 = vadd.f32 %v1880, %v2228
        %v2271 = vadd.f32 %v1881, %v2233
        %v2272 = vadd.f32 %v1882, %v2238
        %v2273 = vld [vmem:[%s2] sm:$0x1]
        %v2274 = vlaneseq
        %v2275 = vshrl.u32 %v2274, 7
        %v2276 = vsub.s32 0, %v2275
        %v2277 = vrot.slane %v2273, %v2276
        %v2278 = vadd.f32 %v2241, %v2277
        %v2279 = vadd.f32 %v2242, %v2277
        %v2280 = vadd.f32 %v2243, %v2277
        %v2281 = vadd.f32 %v2244, %v2277
        %v2282 = vadd.f32 %v2245, %v2277
        %v2283 = vadd.f32 %v2246, %v2277
        %v2284 = vadd.f32 %v2247, %v2277
        %v2285 = vadd.f32 %v2248, %v2277
        %v2286 = vadd.f32 %v2249, %v2277
        %v2287 = vadd.f32 %v2250, %v2277
        %v2288 = vadd.f32 %v2251, %v2277
        %v2289 = vadd.f32 %v2252, %v2277
        %v2290 = vadd.f32 %v2253, %v2277
        %v2291 = vadd.f32 %v2254, %v2277
        %v2292 = vadd.f32 %v2255, %v2277
        %v2293 = vadd.f32 %v2256, %v2277
        %v2294 = vadd.f32 %v2257, %v2277
        %v2295 = vadd.f32 %v2258, %v2277
        %v2296 = vadd.f32 %v2259, %v2277
        %v2297 = vadd.f32 %v2260, %v2277
        %v2298 = vadd.f32 %v2261, %v2277
        %v2299 = vadd.f32 %v2262, %v2277
        %v2300 = vadd.f32 %v2263, %v2277
        %v2301 = vadd.f32 %v2264, %v2277
        %v2302 = vadd.f32 %v2265, %v2277
        %v2303 = vadd.f32 %v2266, %v2277
        %v2304 = vadd.f32 %v2267, %v2277
        %v2305 = vadd.f32 %v2268, %v2277
        %v2306 = vadd.f32 %v2269, %v2277
        %v2307 = vadd.f32 %v2270, %v2277
        %v2308 = vadd.f32 %v2271, %v2277
        %v2309 = vadd.f32 %v2272, %v2277
        %v2310 = vmax.f32 %v2278, 0.0
        %v2311 = vmax.f32 %v2279, 0.0
        %v2312 = vmax.f32 %v2280, 0.0
        %v2313 = vmax.f32 %v2281, 0.0
        %v2314 = vmax.f32 %v2282, 0.0
        %v2315 = vmax.f32 %v2283, 0.0
        %v2316 = vmax.f32 %v2284, 0.0
        %v2317 = vmax.f32 %v2285, 0.0
        %v2318 = vmax.f32 %v2286, 0.0
        %v2319 = vmax.f32 %v2287, 0.0
        %v2320 = vmax.f32 %v2288, 0.0
        %v2321 = vmax.f32 %v2289, 0.0
        %v2322 = vmax.f32 %v2290, 0.0
        %v2323 = vmax.f32 %v2291, 0.0
        %v2324 = vmax.f32 %v2292, 0.0
        %v2325 = vmax.f32 %v2293, 0.0
        %v2326 = vmax.f32 %v2294, 0.0
        %v2327 = vmax.f32 %v2295, 0.0
        %v2328 = vmax.f32 %v2296, 0.0
        %v2329 = vmax.f32 %v2297, 0.0
        %v2330 = vmax.f32 %v2298, 0.0
        %v2331 = vmax.f32 %v2299, 0.0
        %v2332 = vmax.f32 %v2300, 0.0
        %v2333 = vmax.f32 %v2301, 0.0
        %v2334 = vmax.f32 %v2302, 0.0
        %v2335 = vmax.f32 %v2303, 0.0
        %v2336 = vmax.f32 %v2304, 0.0
        %v2337 = vmax.f32 %v2305, 0.0
        %v2338 = vmax.f32 %v2306, 0.0
        %v2339 = vmax.f32 %v2307, 0.0
        %v2340 = vmax.f32 %v2308, 0.0
        %v2341 = vmax.f32 %v2309, 0.0
        %2342 = vst [vmem:[#allocation2] sm:$0xff] %v2310
        %2343 = vst [vmem:[#allocation2 + $0x8] sm:$0xff] %v2311
        %2344 = vst [vmem:[#allocation2 + $0x10] sm:$0xff] %v2312
        %2345 = vst [vmem:[#allocation2 + $0x18] sm:$0xff] %v2313
        %2346 = vst [vmem:[#allocation2 + $0x20] sm:$0xff] %v2314
        %2347 = vst [vmem:[#allocation2 + $0x28] sm:$0xff] %v2315
        %2348 = vst [vmem:[#allocation2 + $0x30] sm:$0xff] %v2316
        %2349 = vst [vmem:[#allocation2 + $0x38] sm:$0xff] %v2317
        %2350 = vst [vmem:[#allocation2 + $0x40] sm:$0xff] %v2318
        %2351 = vst [vmem:[#allocation2 + $0x48] sm:$0xff] %v2319
        %2352 = vst [vmem:[#allocation2 + $0x50] sm:$0xff] %v2320
        %2353 = vst [vmem:[#allocation2 + $0x58] sm:$0xff] %v2321
        %2354 = vst [vmem:[#allocation2 + $0x60] sm:$0xff] %v2322
        %2355 = vst [vmem:[#allocation2 + $0x68] sm:$0xff] %v2323
        %2356 = vst [vmem:[#allocation2 + $0x70] sm:$0xff] %v2324
        %2357 = vst [vmem:[#allocation2 + $0x78] sm:$0xff] %v2325
        %2358 = vst [vmem:[#allocation2 + $0x80] sm:$0xff] %v2326
        %2359 = vst [vmem:[#allocation2 + $0x88] sm:$0xff] %v2327
        %2360 = vst [vmem:[#allocation2 + $0x90] sm:$0xff] %v2328
        %2361 = vst [vmem:[#allocation2 + $0x98] sm:$0xff] %v2329
        %2362 = vst [vmem:[#allocation2 + $0xa0] sm:$0xff] %v2330
        %2363 = vst [vmem:[#allocation2 + $0xa8] sm:$0xff] %v2331
        %2364 = vst [vmem:[#allocation2 + $0xb0] sm:$0xff] %v2332
        %2365 = vst [vmem:[#allocation2 + $0xb8] sm:$0xff] %v2333
        %2366 = vst [vmem:[#allocation2 + $0xc0] sm:$0xff] %v2334
        %2367 = vst [vmem:[#allocation2 + $0xc8] sm:$0xff] %v2335
        %2368 = vst [vmem:[#allocation2 + $0xd0] sm:$0xff] %v2336
        %2369 = vst [vmem:[#allocation2 + $0xd8] sm:$0xff] %v2337
        %2370 = vst [vmem:[#allocation2 + $0xe0] sm:$0xff] %v2338
        %2371 = vst [vmem:[#allocation2 + $0xe8] sm:$0xff] %v2339
        %2372 = vst [vmem:[#allocation2 + $0xf0] sm:$0xff] %v2340
        %2373 = vst [vmem:[#allocation2 + $0xf8] sm:$0xff] %v2341
        %v2374 = vld [vmem:[%s385] sm:$0xff]
        %v2375 = vld [vmem:[%s385 + $0x8] sm:$0xff]
        %v2376 = vld [vmem:[%s385 + $0x10] sm:$0xff]
        %v2377 = vld [vmem:[%s385 + $0x18] sm:$0xff]
        %v2378 = vld [vmem:[%s385 + $0x20] sm:$0xff]
        %v2379 = vld [vmem:[%s385 + $0x28] sm:$0xff]
        %v2380 = vld [vmem:[%s385 + $0x30] sm:$0xff]
        %v2381 = vld [vmem:[%s385 + $0x38] sm:$0xff]
        %v2382 = vld [vmem:[%s385 + $0x40] sm:$0xff]
        %v2383 = vld [vmem:[%s385 + $0x48] sm:$0xff]
        %v2384 = vld [vmem:[%s385 + $0x50] sm:$0xff]
        %v2385 = vld [vmem:[%s385 + $0x58] sm:$0xff]
        %v2386 = vld [vmem:[%s385 + $0x60] sm:$0xff]
        %v2387 = vld [vmem:[%s385 + $0x68] sm:$0xff]
        %v2388 = vld [vmem:[%s385 + $0x70] sm:$0xff]
        %v2389 = vld [vmem:[%s385 + $0x78] sm:$0xff]
        %v2390 = vld [vmem:[%s385 + $0x80] sm:$0xff]
        %v2391 = vld [vmem:[%s385 + $0x88] sm:$0xff]
        %v2392 = vld [vmem:[%s385 + $0x90] sm:$0xff]
        %v2393 = vld [vmem:[%s385 + $0x98] sm:$0xff]
        %v2394 = vld [vmem:[%s385 + $0xa0] sm:$0xff]
        %v2395 = vld [vmem:[%s385 + $0xa8] sm:$0xff]
        %v2396 = vld [vmem:[%s385 + $0xb0] sm:$0xff]
        %v2397 = vld [vmem:[%s385 + $0xb8] sm:$0xff]
        %v2398 = vld [vmem:[%s385 + $0xc0] sm:$0xff]
        %v2399 = vld [vmem:[%s385 + $0xc8] sm:$0xff]
        %v2400 = vld [vmem:[%s385 + $0xd0] sm:$0xff]
        %v2401 = vld [vmem:[%s385 + $0xd8] sm:$0xff]
        %v2402 = vld [vmem:[%s385 + $0xe0] sm:$0xff]
        %v2403 = vld [vmem:[%s385 + $0xe8] sm:$0xff]
        %v2404 = vld [vmem:[%s385 + $0xf0] sm:$0xff]
        %v2405 = vld [vmem:[%s385 + $0xf8] sm:$0xff]
        %s2406 = scalar_lea.vmem %s1, 160
        %v2407 = vld [vmem:[%s2406] sm:$0xff]
        %v2408 = vld [vmem:[%s2406 + $0x8] sm:$0xff]
        %v2409 = vld [vmem:[%s2406 + $0x10] sm:$0xff]
        %v2410 = vld [vmem:[%s2406 + $0x18] sm:$0xff]
        %v2411 = vld [vmem:[%s385 + $0x1] sm:$0xff]
        %v2412 = vld [vmem:[%s385 + $0x9] sm:$0xff]
        %v2413 = vld [vmem:[%s385 + $0x11] sm:$0xff]
        %v2414 = vld [vmem:[%s385 + $0x19] sm:$0xff]
        %v2415 = vld [vmem:[%s385 + $0x21] sm:$0xff]
        %v2416 = vld [vmem:[%s385 + $0x29] sm:$0xff]
        %v2417 = vld [vmem:[%s385 + $0x31] sm:$0xff]
        %v2418 = vld [vmem:[%s385 + $0x39] sm:$0xff]
        %v2419 = vld [vmem:[%s385 + $0x41] sm:$0xff]
        %v2420 = vld [vmem:[%s385 + $0x49] sm:$0xff]
        %v2421 = vld [vmem:[%s385 + $0x51] sm:$0xff]
        %v2422 = vld [vmem:[%s385 + $0x59] sm:$0xff]
        %v2423 = vld [vmem:[%s385 + $0x61] sm:$0xff]
        %v2424 = vld [vmem:[%s385 + $0x69] sm:$0xff]
        %v2425 = vld [vmem:[%s385 + $0x71] sm:$0xff]
        %v2426 = vld [vmem:[%s385 + $0x79] sm:$0xff]
        %v2427 = vld [vmem:[%s385 + $0x81] sm:$0xff]
        %v2428 = vld [vmem:[%s385 + $0x89] sm:$0xff]
        %v2429 = vld [vmem:[%s385 + $0x91] sm:$0xff]
        %v2430 = vld [vmem:[%s385 + $0x99] sm:$0xff]
        %v2431 = vld [vmem:[%s385 + $0xa1] sm:$0xff]
        %v2432 = vld [vmem:[%s385 + $0xa9] sm:$0xff]
        %v2433 = vld [vmem:[%s385 + $0xb1] sm:$0xff]
        %v2434 = vld [vmem:[%s385 + $0xb9] sm:$0xff]
        %v2435 = vld [vmem:[%s385 + $0xc1] sm:$0xff]
        %v2436 = vld [vmem:[%s385 + $0xc9] sm:$0xff]
        %v2437 = vld [vmem:[%s385 + $0xd1] sm:$0xff]
        %v2438 = vld [vmem:[%s385 + $0xd9] sm:$0xff]
        %v2439 = vld [vmem:[%s385 + $0xe1] sm:$0xff]
        %v2440 = vld [vmem:[%s385 + $0xe9] sm:$0xff]
        %v2441 = vld [vmem:[%s385 + $0xf1] sm:$0xff]
        %v2442 = vld [vmem:[%s385 + $0xf9] sm:$0xff]
        %s2443 = scalar_lea.vmem %s1, 192
        %v2444 = vld [vmem:[%s2443] sm:$0xff]
        %v2445 = vld [vmem:[%s2443 + $0x8] sm:$0xff]
        %v2446 = vld [vmem:[%s2443 + $0x10] sm:$0xff]
        %v2447 = vld [vmem:[%s2443 + $0x18] sm:$0xff]
        %v2449 = vsel %vm460, %v2411, 0
        %v2452 = vsel %vm460, %v2412, 0
        %v2455 = vsel %vm460, %v2413, 0
        %v2458 = vsel %vm460, %v2414, 0
        %v2461 = vsel %vm460, %v2415, 0
        %v2464 = vsel %vm460, %v2416, 0
        %v2467 = vsel %vm460, %v2417, 0
        %v2470 = vsel %vm460, %v2418, 0
        %v2473 = vsel %vm460, %v2419, 0
        %v2476 = vsel %vm460, %v2420, 0
        %v2479 = vsel %vm460, %v2421, 0
        %v2482 = vsel %vm460, %v2422, 0
        %v2485 = vsel %vm460, %v2423, 0
        %v2488 = vsel %vm460, %v2424, 0
        %v2491 = vsel %vm460, %v2425, 0
        %v2494 = vsel %vm460, %v2426, 0
        %v2497 = vsel %vm460, %v2427, 0
        %v2500 = vsel %vm460, %v2428, 0
        %v2503 = vsel %vm460, %v2429, 0
        %v2506 = vsel %vm460, %v2430, 0
        %v2509 = vsel %vm460, %v2431, 0
        %v2512 = vsel %vm460, %v2432, 0
        %v2515 = vsel %vm460, %v2433, 0
        %v2518 = vsel %vm460, %v2434, 0
        %v2521 = vsel %vm460, %v2435, 0
        %v2524 = vsel %vm460, %v2436, 0
        %v2527 = vsel %vm460, %v2437, 0
        %v2530 = vsel %vm460, %v2438, 0
        %v2533 = vsel %vm460, %v2439, 0
        %v2536 = vsel %vm460, %v2440, 0
        %v2539 = vsel %vm460, %v2441, 0
        %v2542 = vsel %vm460, %v2442, 0
        %2544 = vmatprep.subr.mxu0 0.0
        %2545 = vmatpush1.msra.mxu0 %v2444
        %2546 = vmatprep.subr.mxu0 0.0
        %2547 = vmatpush1.msra.mxu0 %v2445
        %2548 = vmatprep.subr.mxu0 0.0
        %2549 = vmatpush1.msra.mxu0 %v2446
        %2550 = vmatprep.subr.mxu0 0.0
        %2551 = vmatpush1.msra.mxu0 %v2447
        %2552 = vmatprep.subr.mxu0 0.0
        %2553 = vmatpush1.msra.mxu0 0.0
        %2554 = vmatprep.subr.mxu0 0.0
        %2555 = vmatpush1.msra.mxu0 0.0
        %2556 = vmatprep.subr.mxu0 0.0
        %2557 = vmatpush1.msra.mxu0 0.0
        %2558 = vmatprep.subr.mxu0 0.0
        %2559 = vmatpush1.msra.mxu0 0.0
        %2560 = vmatprep.subr.mxu0 0.0
        %2561 = vmatpush1.msra.mxu0 0.0
        %2562 = vmatprep.subr.mxu0 0.0
        %2563 = vmatpush1.msra.mxu0 0.0
        %2564 = vmatprep.subr.mxu0 0.0
        %2565 = vmatpush1.msra.mxu0 0.0
        %2566 = vmatprep.subr.mxu0 0.0
        %2567 = vmatpush1.msra.mxu0 0.0
        %2568 = vmatprep.subr.mxu0 0.0
        %2569 = vmatpush1.msra.mxu0 0.0
        %2570 = vmatprep.subr.mxu0 0.0
        %2571 = vmatpush1.msra.mxu0 0.0
        %2572 = vmatprep.subr.mxu0 0.0
        %2573 = vmatpush1.msra.mxu0 0.0
        %2574 = vmatprep.subr.mxu0 0.0
        %2575 = vmatpush1.msra.mxu0 0.0
        %2576 = vmatprep.subr.mxu0 0.0
        %2577 = vmatpush1.msra.mxu0 0.0
        %2578 = vmatprep.subr.mxu0 0.0
        %2579 = vmatpush1.msra.mxu0 0.0
        %2580 = vmatprep.subr.mxu0 0.0
        %2581 = vmatpush1.msra.mxu0 0.0
        %2582 = vmatprep.subr.mxu0 0.0
        %2583 = vmatpush1.msra.mxu0 0.0
        %2584 = vmatprep.subr.mxu0 0.0
        %2585 = vmatpush1.msra.mxu0 0.0
        %2586 = vmatprep.subr.mxu0 0.0
        %2587 = vmatpush1.msra.mxu0 0.0
        %2588 = vmatprep.subr.mxu0 0.0
        %2589 = vmatpush1.msra.mxu0 0.0
        %2590 = vmatprep.subr.mxu0 0.0
        %2591 = vmatpush1.msra.mxu0 0.0
        %2592 = vmatprep.subr.mxu0 0.0
        %2593 = vmatpush1.msra.mxu0 0.0
        %2594 = vmatprep.subr.mxu0 0.0
        %2595 = vmatpush1.msra.mxu0 0.0
        %2596 = vmatprep.subr.mxu0 0.0
        %2597 = vmatpush1.msra.mxu0 0.0
        %2598 = vmatprep.subr.mxu0 0.0
        %2599 = vmatpush1.msra.mxu0 0.0
        %2600 = vmatprep.subr.mxu0 0.0
        %2601 = vmatpush1.msra.mxu0 0.0
        %2602 = vmatprep.subr.mxu0 0.0
        %2603 = vmatpush1.msra.mxu0 0.0
        %2604 = vmatprep.subr.mxu0 0.0
        %2605 = vmatpush1.msra.mxu0 0.0
        %2606 = vmatprep.subr.mxu0 0.0
        %2607 = vmatpush1.msra.mxu0 0.0
        %2608 = vmatprep.mubr.f32.mxu0 0.0
        %2609 = vmatmul.mubr.f32.gmra.mrb[0].mxu0 %v2449
        %v2610 = vpop.f32.mrb[0].mxu0
        %v2611 = vadd.f32 0.0, %v2610
        %v2612 = vpop.f32.mrb[0].mxu0
        %2613 = vmatprep.mubr.f32.mxu0 0.0
        %2614 = vmatmul.mubr.f32.gmra.mrb[0].mxu0 %v2452
        %v2615 = vpop.f32.mrb[0].mxu0
        %v2616 = vadd.f32 0.0, %v2615
        %v2617 = vpop.f32.mrb[0].mxu0
        %2618 = vmatprep.mubr.f32.mxu0 0.0
        %2619 = vmatmul.mubr.f32.gmra.mrb[0].mxu0 %v2455
        %v2620 = vpop.f32.mrb[0].mxu0
        %v2621 = vadd.f32 0.0, %v2620
        %v2622 = vpop.f32.mrb[0].mxu0
        %2623 = vmatprep.mubr.f32.mxu0 0.0
        %2624 = vmatmul.mubr.f32.gmra.mrb[0].mxu0 %v2458
        %v2625 = vpop.f32.mrb[0].mxu0
        %v2626 = vadd.f32 0.0, %v2625
        %v2627 = vpop.f32.mrb[0].mxu0
        %2628 = vmatprep.mubr.f32.mxu0 0.0
        %2629 = vmatmul.mubr.f32.gmra.mrb[0].mxu0 %v2461
        %v2630 = vpop.f32.mrb[0].mxu0
        %v2631 = vadd.f32 0.0, %v2630
        %v2632 = vpop.f32.mrb[0].mxu0
        %2633 = vmatprep.mubr.f32.mxu0 0.0
        %2634 = vmatmul.mubr.f32.gmra.mrb[0].mxu0 %v2464
        %v2635 = vpop.f32.mrb[0].mxu0
        %v2636 = vadd.f32 0.0, %v2635
        %v2637 = vpop.f32.mrb[0].mxu0
        %2638 = vmatprep.mubr.f32.mxu0 0.0
        %2639 = vmatmul.mubr.f32.gmra.mrb[0].mxu0 %v2467
        %v2640 = vpop.f32.mrb[0].mxu0
        %v2641 = vadd.f32 0.0, %v2640
        %v2642 = vpop.f32.mrb[0].mxu0
        %2643 = vmatprep.mubr.f32.mxu0 0.0
        %2644 = vmatmul.mubr.f32.gmra.mrb[0].mxu0 %v2470
        %v2645 = vpop.f32.mrb[0].mxu0
        %v2646 = vadd.f32 0.0, %v2645
        %v2647 = vpop.f32.mrb[0].mxu0
        %2648 = vmatprep.mubr.f32.mxu0 0.0
        %2649 = vmatmul.mubr.f32.gmra.mrb[0].mxu0 %v2473
        %v2650 = vpop.f32.mrb[0].mxu0
        %v2651 = vadd.f32 0.0, %v2650
        %v2652 = vpop.f32.mrb[0].mxu0
        %2653 = vmatprep.mubr.f32.mxu0 0.0
        %2654 = vmatmul.mubr.f32.gmra.mrb[0].mxu0 %v2476
        %v2655 = vpop.f32.mrb[0].mxu0
        %v2656 = vadd.f32 0.0, %v2655
        %v2657 = vpop.f32.mrb[0].mxu0
        %2658 = vmatprep.mubr.f32.mxu0 0.0
        %2659 = vmatmul.mubr.f32.gmra.mrb[0].mxu0 %v2479
        %v2660 = vpop.f32.mrb[0].mxu0
        %v2661 = vadd.f32 0.0, %v2660
        %v2662 = vpop.f32.mrb[0].mxu0
        %2663 = vmatprep.mubr.f32.mxu0 0.0
        %2664 = vmatmul.mubr.f32.gmra.mrb[0].mxu0 %v2482
        %v2665 = vpop.f32.mrb[0].mxu0
        %v2666 = vadd.f32 0.0, %v2665
        %v2667 = vpop.f32.mrb[0].mxu0
        %2668 = vmatprep.mubr.f32.mxu0 0.0
        %2669 = vmatmul.mubr.f32.gmra.mrb[0].mxu0 %v2485
        %v2670 = vpop.f32.mrb[0].mxu0
        %v2671 = vadd.f32 0.0, %v2670
        %v2672 = vpop.f32.mrb[0].mxu0
        %2673 = vmatprep.mubr.f32.mxu0 0.0
        %2674 = vmatmul.mubr.f32.gmra.mrb[0].mxu0 %v2488
        %v2675 = vpop.f32.mrb[0].mxu0
        %v2676 = vadd.f32 0.0, %v2675
        %v2677 = vpop.f32.mrb[0].mxu0
        %2678 = vmatprep.mubr.f32.mxu0 0.0
        %2679 = vmatmul.mubr.f32.gmra.mrb[0].mxu0 %v2491
        %v2680 = vpop.f32.mrb[0].mxu0
        %v2681 = vadd.f32 0.0, %v2680
        %v2682 = vpop.f32.mrb[0].mxu0
        %2683 = vmatprep.mubr.f32.mxu0 0.0
        %2684 = vmatmul.mubr.f32.gmra.mrb[0].mxu0 %v2494
        %v2685 = vpop.f32.mrb[0].mxu0
        %v2686 = vadd.f32 0.0, %v2685
        %v2687 = vpop.f32.mrb[0].mxu0
        %2688 = vmatprep.mubr.f32.mxu0 0.0
        %2689 = vmatmul.mubr.f32.gmra.mrb[0].mxu0 %v2497
        %v2690 = vpop.f32.mrb[0].mxu0
        %v2691 = vadd.f32 0.0, %v2690
        %v2692 = vpop.f32.mrb[0].mxu0
        %2693 = vmatprep.mubr.f32.mxu0 0.0
        %2694 = vmatmul.mubr.f32.gmra.mrb[0].mxu0 %v2500
        %v2695 = vpop.f32.mrb[0].mxu0
        %v2696 = vadd.f32 0.0, %v2695
        %v2697 = vpop.f32.mrb[0].mxu0
        %2698 = vmatprep.mubr.f32.mxu0 0.0
        %2699 = vmatmul.mubr.f32.gmra.mrb[0].mxu0 %v2503
        %v2700 = vpop.f32.mrb[0].mxu0
        %v2701 = vadd.f32 0.0, %v2700
        %v2702 = vpop.f32.mrb[0].mxu0
        %2703 = vmatprep.mubr.f32.mxu0 0.0
        %2704 = vmatmul.mubr.f32.gmra.mrb[0].mxu0 %v2506
        %v2705 = vpop.f32.mrb[0].mxu0
        %v2706 = vadd.f32 0.0, %v2705
        %v2707 = vpop.f32.mrb[0].mxu0
        %2708 = vmatprep.mubr.f32.mxu0 0.0
        %2709 = vmatmul.mubr.f32.gmra.mrb[0].mxu0 %v2509
        %v2710 = vpop.f32.mrb[0].mxu0
        %v2711 = vadd.f32 0.0, %v2710
        %v2712 = vpop.f32.mrb[0].mxu0
        %2713 = vmatprep.mubr.f32.mxu0 0.0
        %2714 = vmatmul.mubr.f32.gmra.mrb[0].mxu0 %v2512
        %v2715 = vpop.f32.mrb[0].mxu0
        %v2716 = vadd.f32 0.0, %v2715
        %v2717 = vpop.f32.mrb[0].mxu0
        %2718 = vmatprep.mubr.f32.mxu0 0.0
        %2719 = vmatmul.mubr.f32.gmra.mrb[0].mxu0 %v2515
        %v2720 = vpop.f32.mrb[0].mxu0
        %v2721 = vadd.f32 0.0, %v2720
        %v2722 = vpop.f32.mrb[0].mxu0
        %2723 = vmatprep.mubr.f32.mxu0 0.0
        %2724 = vmatmul.mubr.f32.gmra.mrb[0].mxu0 %v2518
        %v2725 = vpop.f32.mrb[0].mxu0
        %v2726 = vadd.f32 0.0, %v2725
        %v2727 = vpop.f32.mrb[0].mxu0
        %2728 = vmatprep.mubr.f32.mxu0 0.0
        %2729 = vmatmul.mubr.f32.gmra.mrb[0].mxu0 %v2521
        %v2730 = vpop.f32.mrb[0].mxu0
        %v2731 = vadd.f32 0.0, %v2730
        %v2732 = vpop.f32.mrb[0].mxu0
        %2733 = vmatprep.mubr.f32.mxu0 0.0
        %2734 = vmatmul.mubr.f32.gmra.mrb[0].mxu0 %v2524
        %v2735 = vpop.f32.mrb[0].mxu0
        %v2736 = vadd.f32 0.0, %v2735
        %v2737 = vpop.f32.mrb[0].mxu0
        %2738 = vmatprep.mubr.f32.mxu0 0.0
        %2739 = vmatmul.mubr.f32.gmra.mrb[0].mxu0 %v2527
        %v2740 = vpop.f32.mrb[0].mxu0
        %v2741 = vadd.f32 0.0, %v2740
        %v2742 = vpop.f32.mrb[0].mxu0
        %2743 = vmatprep.mubr.f32.mxu0 0.0
        %2744 = vmatmul.mubr.f32.gmra.mrb[0].mxu0 %v2530
        %v2745 = vpop.f32.mrb[0].mxu0
        %v2746 = vadd.f32 0.0, %v2745
        %v2747 = vpop.f32.mrb[0].mxu0
        %2748 = vmatprep.mubr.f32.mxu0 0.0
        %2749 = vmatmul.mubr.f32.gmra.mrb[0].mxu0 %v2533
        %v2750 = vpop.f32.mrb[0].mxu0
        %v2751 = vadd.f32 0.0, %v2750
        %v2752 = vpop.f32.mrb[0].mxu0
        %2753 = vmatprep.mubr.f32.mxu0 0.0
        %2754 = vmatmul.mubr.f32.gmra.mrb[0].mxu0 %v2536
        %v2755 = vpop.f32.mrb[0].mxu0
        %v2756 = vadd.f32 0.0, %v2755
        %v2757 = vpop.f32.mrb[0].mxu0
        %2758 = vmatprep.mubr.f32.mxu0 0.0
        %2759 = vmatmul.mubr.f32.gmra.mrb[0].mxu0 %v2539
        %v2760 = vpop.f32.mrb[0].mxu0
        %v2761 = vadd.f32 0.0, %v2760
        %v2762 = vpop.f32.mrb[0].mxu0
        %2763 = vmatprep.mubr.f32.mxu0 0.0
        %2764 = vmatmul.mubr.f32.gmra.mrb[0].mxu0 %v2542
        %v2765 = vpop.f32.mrb[0].mxu0
        %v2766 = vadd.f32 0.0, %v2765
        %v2767 = vpop.f32.mrb[0].mxu0
        %2768 = vdwg.mxu0
        %v2770 = vsel %vm460, %v2374, 0
        %v2773 = vsel %vm460, %v2375, 0
        %v2776 = vsel %vm460, %v2376, 0
        %v2779 = vsel %vm460, %v2377, 0
        %v2782 = vsel %vm460, %v2378, 0
        %v2785 = vsel %vm460, %v2379, 0
        %v2788 = vsel %vm460, %v2380, 0
        %v2791 = vsel %vm460, %v2381, 0
        %v2794 = vsel %vm460, %v2382, 0
        %v2797 = vsel %vm460, %v2383, 0
        %v2800 = vsel %vm460, %v2384, 0
        %v2803 = vsel %vm460, %v2385, 0
        %v2806 = vsel %vm460, %v2386, 0
        %v2809 = vsel %vm460, %v2387, 0
        %v2812 = vsel %vm460, %v2388, 0
        %v2815 = vsel %vm460, %v2389, 0
        %v2818 = vsel %vm460, %v2390, 0
        %v2821 = vsel %vm460, %v2391, 0
        %v2824 = vsel %vm460, %v2392, 0
        %v2827 = vsel %vm460, %v2393, 0
        %v2830 = vsel %vm460, %v2394, 0
        %v2833 = vsel %vm460, %v2395, 0
        %v2836 = vsel %vm460, %v2396, 0
        %v2839 = vsel %vm460, %v2397, 0
        %v2842 = vsel %vm460, %v2398, 0
        %v2845 = vsel %vm460, %v2399, 0
        %v2848 = vsel %vm460, %v2400, 0
        %v2851 = vsel %vm460, %v2401, 0
        %v2854 = vsel %vm460, %v2402, 0
        %v2857 = vsel %vm460, %v2403, 0
        %v2860 = vsel %vm460, %v2404, 0
        %v2863 = vsel %vm460, %v2405, 0
        %2865 = vmatprep.subr.mxu0 0.0
        %2866 = vmatpush1.msra.mxu0 %v2407
        %2867 = vmatprep.subr.mxu0 0.0
        %2868 = vmatpush1.msra.mxu0 %v2408
        %2869 = vmatprep.subr.mxu0 0.0
        %2870 = vmatpush1.msra.mxu0 %v2409
        %2871 = vmatprep.subr.mxu0 0.0
        %2872 = vmatpush1.msra.mxu0 %v2410
        %2873 = vmatprep.subr.mxu0 0.0
        %2874 = vmatpush1.msra.mxu0 0.0
        %2875 = vmatprep.subr.mxu0 0.0
        %2876 = vmatpush1.msra.mxu0 0.0
        %2877 = vmatprep.subr.mxu0 0.0
        %2878 = vmatpush1.msra.mxu0 0.0
        %2879 = vmatprep.subr.mxu0 0.0
        %2880 = vmatpush1.msra.mxu0 0.0
        %2881 = vmatprep.subr.mxu0 0.0
        %2882 = vmatpush1.msra.mxu0 0.0
        %2883 = vmatprep.subr.mxu0 0.0
        %2884 = vmatpush1.msra.mxu0 0.0
        %2885 = vmatprep.subr.mxu0 0.0
        %2886 = vmatpush1.msra.mxu0 0.0
        %2887 = vmatprep.subr.mxu0 0.0
        %2888 = vmatpush1.msra.mxu0 0.0
        %2889 = vmatprep.subr.mxu0 0.0
        %2890 = vmatpush1.msra.mxu0 0.0
        %2891 = vmatprep.subr.mxu0 0.0
        %2892 = vmatpush1.msra.mxu0 0.0
        %2893 = vmatprep.subr.mxu0 0.0
        %2894 = vmatpush1.msra.mxu0 0.0
        %2895 = vmatprep.subr.mxu0 0.0
        %2896 = vmatpush1.msra.mxu0 0.0
        %2897 = vmatprep.subr.mxu0 0.0
        %2898 = vmatpush1.msra.mxu0 0.0
        %2899 = vmatprep.subr.mxu0 0.0
        %2900 = vmatpush1.msra.mxu0 0.0
        %2901 = vmatprep.subr.mxu0 0.0
        %2902 = vmatpush1.msra.mxu0 0.0
        %2903 = vmatprep.subr.mxu0 0.0
        %2904 = vmatpush1.msra.mxu0 0.0
        %2905 = vmatprep.subr.mxu0 0.0
        %2906 = vmatpush1.msra.mxu0 0.0
        %2907 = vmatprep.subr.mxu0 0.0
        %2908 = vmatpush1.msra.mxu0 0.0
        %2909 = vmatprep.subr.mxu0 0.0
        %2910 = vmatpush1.msra.mxu0 0.0
        %2911 = vmatprep.subr.mxu0 0.0
        %2912 = vmatpush1.msra.mxu0 0.0
        %2913 = vmatprep.subr.mxu0 0.0
        %2914 = vmatpush1.msra.mxu0 0.0
        %2915 = vmatprep.subr.mxu0 0.0
        %2916 = vmatpush1.msra.mxu0 0.0
        %2917 = vmatprep.subr.mxu0 0.0
        %2918 = vmatpush1.msra.mxu0 0.0
        %2919 = vmatprep.subr.mxu0 0.0
        %2920 = vmatpush1.msra.mxu0 0.0
        %2921 = vmatprep.subr.mxu0 0.0
        %2922 = vmatpush1.msra.mxu0 0.0
        %2923 = vmatprep.subr.mxu0 0.0
        %2924 = vmatpush1.msra.mxu0 0.0
        %2925 = vmatprep.subr.mxu0 0.0
        %2926 = vmatpush1.msra.mxu0 0.0
        %2927 = vmatprep.subr.mxu0 0.0
        %2928 = vmatpush1.msra.mxu0 0.0
        %2929 = vmatprep.mubr.f32.mxu0 0.0
        %2930 = vmatmul.mubr.f32.gmra.mrb[0].mxu0 %v2770
        %v2931 = vpop.f32.mrb[0].mxu0
        %v2932 = vadd.f32 %v2611, %v2931
        %v2933 = vpop.f32.mrb[0].mxu0
        %2934 = vmatprep.mubr.f32.mxu0 0.0
        %2935 = vmatmul.mubr.f32.gmra.mrb[0].mxu0 %v2773
        %v2936 = vpop.f32.mrb[0].mxu0
        %v2937 = vadd.f32 %v2616, %v2936
        %v2938 = vpop.f32.mrb[0].mxu0
        %2939 = vmatprep.mubr.f32.mxu0 0.0
        %2940 = vmatmul.mubr.f32.gmra.mrb[0].mxu0 %v2776
        %v2941 = vpop.f32.mrb[0].mxu0
        %v2942 = vadd.f32 %v2621, %v2941
        %v2943 = vpop.f32.mrb[0].mxu0
        %2944 = vmatprep.mubr.f32.mxu0 0.0
        %2945 = vmatmul.mubr.f32.gmra.mrb[0].mxu0 %v2779
        %v2946 = vpop.f32.mrb[0].mxu0
        %v2947 = vadd.f32 %v2626, %v2946
        %v2948 = vpop.f32.mrb[0].mxu0
        %2949 = vmatprep.mubr.f32.mxu0 0.0
        %2950 = vmatmul.mubr.f32.gmra.mrb[0].mxu0 %v2782
        %v2951 = vpop.f32.mrb[0].mxu0
        %v2952 = vadd.f32 %v2631, %v2951
        %v2953 = vpop.f32.mrb[0].mxu0
        %2954 = vmatprep.mubr.f32.mxu0 0.0
        %2955 = vmatmul.mubr.f32.gmra.mrb[0].mxu0 %v2785
        %v2956 = vpop.f32.mrb[0].mxu0
        %v2957 = vadd.f32 %v2636, %v2956
        %v2958 = vpop.f32.mrb[0].mxu0
        %2959 = vmatprep.mubr.f32.mxu0 0.0
        %2960 = vmatmul.mubr.f32.gmra.mrb[0].mxu0 %v2788
        %v2961 = vpop.f32.mrb[0].mxu0
        %v2962 = vadd.f32 %v2641, %v2961
        %v2963 = vpop.f32.mrb[0].mxu0
        %2964 = vmatprep.mubr.f32.mxu0 0.0
        %2965 = vmatmul.mubr.f32.gmra.mrb[0].mxu0 %v2791
        %v2966 = vpop.f32.mrb[0].mxu0
        %v2967 = vadd.f32 %v2646, %v2966
        %v2968 = vpop.f32.mrb[0].mxu0
        %2969 = vmatprep.mubr.f32.mxu0 0.0
        %2970 = vmatmul.mubr.f32.gmra.mrb[0].mxu0 %v2794
        %v2971 = vpop.f32.mrb[0].mxu0
        %v2972 = vadd.f32 %v2651, %v2971
        %v2973 = vpop.f32.mrb[0].mxu0
        %2974 = vmatprep.mubr.f32.mxu0 0.0
        %2975 = vmatmul.mubr.f32.gmra.mrb[0].mxu0 %v2797
        %v2976 = vpop.f32.mrb[0].mxu0
        %v2977 = vadd.f32 %v2656, %v2976
        %v2978 = vpop.f32.mrb[0].mxu0
        %2979 = vmatprep.mubr.f32.mxu0 0.0
        %2980 = vmatmul.mubr.f32.gmra.mrb[0].mxu0 %v2800
        %v2981 = vpop.f32.mrb[0].mxu0
        %v2982 = vadd.f32 %v2661, %v2981
        %v2983 = vpop.f32.mrb[0].mxu0
        %2984 = vmatprep.mubr.f32.mxu0 0.0
        %2985 = vmatmul.mubr.f32.gmra.mrb[0].mxu0 %v2803
        %v2986 = vpop.f32.mrb[0].mxu0
        %v2987 = vadd.f32 %v2666, %v2986
        %v2988 = vpop.f32.mrb[0].mxu0
        %2989 = vmatprep.mubr.f32.mxu0 0.0
        %2990 = vmatmul.mubr.f32.gmra.mrb[0].mxu0 %v2806
        %v2991 = vpop.f32.mrb[0].mxu0
        %v2992 = vadd.f32 %v2671, %v2991
        %v2993 = vpop.f32.mrb[0].mxu0
        %2994 = vmatprep.mubr.f32.mxu0 0.0
        %2995 = vmatmul.mubr.f32.gmra.mrb[0].mxu0 %v2809
        %v2996 = vpop.f32.mrb[0].mxu0
        %v2997 = vadd.f32 %v2676, %v2996
        %v2998 = vpop.f32.mrb[0].mxu0
        %2999 = vmatprep.mubr.f32.mxu0 0.0
        %3000 = vmatmul.mubr.f32.gmra.mrb[0].mxu0 %v2812
        %v3001 = vpop.f32.mrb[0].mxu0
        %v3002 = vadd.f32 %v2681, %v3001
        %v3003 = vpop.f32.mrb[0].mxu0
        %3004 = vmatprep.mubr.f32.mxu0 0.0
        %3005 = vmatmul.mubr.f32.gmra.mrb[0].mxu0 %v2815
        %v3006 = vpop.f32.mrb[0].mxu0
        %v3007 = vadd.f32 %v2686, %v3006
        %v3008 = vpop.f32.mrb[0].mxu0
        %3009 = vmatprep.mubr.f32.mxu0 0.0
        %3010 = vmatmul.mubr.f32.gmra.mrb[0].mxu0 %v2818
        %v3011 = vpop.f32.mrb[0].mxu0
        %v3012 = vadd.f32 %v2691, %v3011
        %v3013 = vpop.f32.mrb[0].mxu0
        %3014 = vmatprep.mubr.f32.mxu0 0.0
        %3015 = vmatmul.mubr.f32.gmra.mrb[0].mxu0 %v2821
        %v3016 = vpop.f32.mrb[0].mxu0
        %v3017 = vadd.f32 %v2696, %v3016
        %v3018 = vpop.f32.mrb[0].mxu0
        %3019 = vmatprep.mubr.f32.mxu0 0.0
        %3020 = vmatmul.mubr.f32.gmra.mrb[0].mxu0 %v2824
        %v3021 = vpop.f32.mrb[0].mxu0
        %v3022 = vadd.f32 %v2701, %v3021
        %v3023 = vpop.f32.mrb[0].mxu0
        %3024 = vmatprep.mubr.f32.mxu0 0.0
        %3025 = vmatmul.mubr.f32.gmra.mrb[0].mxu0 %v2827
        %v3026 = vpop.f32.mrb[0].mxu0
        %v3027 = vadd.f32 %v2706, %v3026
        %v3028 = vpop.f32.mrb[0].mxu0
        %3029 = vmatprep.mubr.f32.mxu0 0.0
        %3030 = vmatmul.mubr.f32.gmra.mrb[0].mxu0 %v2830
        %v3031 = vpop.f32.mrb[0].mxu0
        %v3032 = vadd.f32 %v2711, %v3031
        %v3033 = vpop.f32.mrb[0].mxu0
        %3034 = vmatprep.mubr.f32.mxu0 0.0
        %3035 = vmatmul.mubr.f32.gmra.mrb[0].mxu0 %v2833
        %v3036 = vpop.f32.mrb[0].mxu0
        %v3037 = vadd.f32 %v2716, %v3036
        %v3038 = vpop.f32.mrb[0].mxu0
        %3039 = vmatprep.mubr.f32.mxu0 0.0
        %3040 = vmatmul.mubr.f32.gmra.mrb[0].mxu0 %v2836
        %v3041 = vpop.f32.mrb[0].mxu0
        %v3042 = vadd.f32 %v2721, %v3041
        %v3043 = vpop.f32.mrb[0].mxu0
        %3044 = vmatprep.mubr.f32.mxu0 0.0
        %3045 = vmatmul.mubr.f32.gmra.mrb[0].mxu0 %v2839
        %v3046 = vpop.f32.mrb[0].mxu0
        %v3047 = vadd.f32 %v2726, %v3046
        %v3048 = vpop.f32.mrb[0].mxu0
        %3049 = vmatprep.mubr.f32.mxu0 0.0
        %3050 = vmatmul.mubr.f32.gmra.mrb[0].mxu0 %v2842
        %v3051 = vpop.f32.mrb[0].mxu0
        %v3052 = vadd.f32 %v2731, %v3051
        %v3053 = vpop.f32.mrb[0].mxu0
        %3054 = vmatprep.mubr.f32.mxu0 0.0
        %3055 = vmatmul.mubr.f32.gmra.mrb[0].mxu0 %v2845
        %v3056 = vpop.f32.mrb[0].mxu0
        %v3057 = vadd.f32 %v2736, %v3056
        %v3058 = vpop.f32.mrb[0].mxu0
        %3059 = vmatprep.mubr.f32.mxu0 0.0
        %3060 = vmatmul.mubr.f32.gmra.mrb[0].mxu0 %v2848
        %v3061 = vpop.f32.mrb[0].mxu0
        %v3062 = vadd.f32 %v2741, %v3061
        %v3063 = vpop.f32.mrb[0].mxu0
        %3064 = vmatprep.mubr.f32.mxu0 0.0
        %3065 = vmatmul.mubr.f32.gmra.mrb[0].mxu0 %v2851
        %v3066 = vpop.f32.mrb[0].mxu0
        %v3067 = vadd.f32 %v2746, %v3066
        %v3068 = vpop.f32.mrb[0].mxu0
        %3069 = vmatprep.mubr.f32.mxu0 0.0
        %3070 = vmatmul.mubr.f32.gmra.mrb[0].mxu0 %v2854
        %v3071 = vpop.f32.mrb[0].mxu0
        %v3072 = vadd.f32 %v2751, %v3071
        %v3073 = vpop.f32.mrb[0].mxu0
        %3074 = vmatprep.mubr.f32.mxu0 0.0
        %3075 = vmatmul.mubr.f32.gmra.mrb[0].mxu0 %v2857
        %v3076 = vpop.f32.mrb[0].mxu0
        %v3077 = vadd.f32 %v2756, %v3076
        %v3078 = vpop.f32.mrb[0].mxu0
        %3079 = vmatprep.mubr.f32.mxu0 0.0
        %3080 = vmatmul.mubr.f32.gmra.mrb[0].mxu0 %v2860
        %v3081 = vpop.f32.mrb[0].mxu0
        %v3082 = vadd.f32 %v2761, %v3081
        %v3083 = vpop.f32.mrb[0].mxu0
        %3084 = vmatprep.mubr.f32.mxu0 0.0
        %3085 = vmatmul.mubr.f32.gmra.mrb[0].mxu0 %v2863
        %v3086 = vpop.f32.mrb[0].mxu0
        %v3087 = vadd.f32 %v2766, %v3086
        %v3088 = vpop.f32.mrb[0].mxu0
        %3089 = vdwg.mxu0
        %v3090 = vld [vmem:[%s385 + $0x2] sm:$0xff]
        %v3091 = vld [vmem:[%s385 + $0xa] sm:$0xff]
        %v3092 = vld [vmem:[%s385 + $0x12] sm:$0xff]
        %v3093 = vld [vmem:[%s385 + $0x1a] sm:$0xff]
        %v3094 = vld [vmem:[%s385 + $0x22] sm:$0xff]
        %v3095 = vld [vmem:[%s385 + $0x2a] sm:$0xff]
        %v3096 = vld [vmem:[%s385 + $0x32] sm:$0xff]
        %v3097 = vld [vmem:[%s385 + $0x3a] sm:$0xff]
        %v3098 = vld [vmem:[%s385 + $0x42] sm:$0xff]
        %v3099 = vld [vmem:[%s385 + $0x4a] sm:$0xff]
        %v3100 = vld [vmem:[%s385 + $0x52] sm:$0xff]
        %v3101 = vld [vmem:[%s385 + $0x5a] sm:$0xff]
        %v3102 = vld [vmem:[%s385 + $0x62] sm:$0xff]
        %v3103 = vld [vmem:[%s385 + $0x6a] sm:$0xff]
        %v3104 = vld [vmem:[%s385 + $0x72] sm:$0xff]
        %v3105 = vld [vmem:[%s385 + $0x7a] sm:$0xff]
        %v3106 = vld [vmem:[%s385 + $0x82] sm:$0xff]
        %v3107 = vld [vmem:[%s385 + $0x8a] sm:$0xff]
        %v3108 = vld [vmem:[%s385 + $0x92] sm:$0xff]
        %v3109 = vld [vmem:[%s385 + $0x9a] sm:$0xff]
        %v3110 = vld [vmem:[%s385 + $0xa2] sm:$0xff]
        %v3111 = vld [vmem:[%s385 + $0xaa] sm:$0xff]
        %v3112 = vld [vmem:[%s385 + $0xb2] sm:$0xff]
        %v3113 = vld [vmem:[%s385 + $0xba] sm:$0xff]
        %v3114 = vld [vmem:[%s385 + $0xc2] sm:$0xff]
        %v3115 = vld [vmem:[%s385 + $0xca] sm:$0xff]
        %v3116 = vld [vmem:[%s385 + $0xd2] sm:$0xff]
        %v3117 = vld [vmem:[%s385 + $0xda] sm:$0xff]
        %v3118 = vld [vmem:[%s385 + $0xe2] sm:$0xff]
        %v3119 = vld [vmem:[%s385 + $0xea] sm:$0xff]
        %v3120 = vld [vmem:[%s385 + $0xf2] sm:$0xff]
        %v3121 = vld [vmem:[%s385 + $0xfa] sm:$0xff]
        %s3122 = scalar_lea.vmem %s1, 224
        %v3123 = vld [vmem:[%s3122] sm:$0xff]
        %v3124 = vld [vmem:[%s3122 + $0x8] sm:$0xff]
        %v3125 = vld [vmem:[%s3122 + $0x10] sm:$0xff]
        %v3126 = vld [vmem:[%s3122 + $0x18] sm:$0xff]
        %v3128 = vsel %vm460, %v3090, 0
        %v3131 = vsel %vm460, %v3091, 0
        %v3134 = vsel %vm460, %v3092, 0
        %v3137 = vsel %vm460, %v3093, 0
        %v3140 = vsel %vm460, %v3094, 0
        %v3143 = vsel %vm460, %v3095, 0
        %v3146 = vsel %vm460, %v3096, 0
        %v3149 = vsel %vm460, %v3097, 0
        %v3152 = vsel %vm460, %v3098, 0
        %v3155 = vsel %vm460, %v3099, 0
        %v3158 = vsel %vm460, %v3100, 0
        %v3161 = vsel %vm460, %v3101, 0
        %v3164 = vsel %vm460, %v3102, 0
        %v3167 = vsel %vm460, %v3103, 0
        %v3170 = vsel %vm460, %v3104, 0
        %v3173 = vsel %vm460, %v3105, 0
        %v3176 = vsel %vm460, %v3106, 0
        %v3179 = vsel %vm460, %v3107, 0
        %v3182 = vsel %vm460, %v3108, 0
        %v3185 = vsel %vm460, %v3109, 0
        %v3188 = vsel %vm460, %v3110, 0
        %v3191 = vsel %vm460, %v3111, 0
        %v3194 = vsel %vm460, %v3112, 0
        %v3197 = vsel %vm460, %v3113, 0
        %v3200 = vsel %vm460, %v3114, 0
        %v3203 = vsel %vm460, %v3115, 0
        %v3206 = vsel %vm460, %v3116, 0
        %v3209 = vsel %vm460, %v3117, 0
        %v3212 = vsel %vm460, %v3118, 0
        %v3215 = vsel %vm460, %v3119, 0
        %v3218 = vsel %vm460, %v3120, 0
        %v3221 = vsel %vm460, %v3121, 0
        %3223 = vmatprep.subr.mxu0 0.0
        %3224 = vmatpush1.msra.mxu0 %v3123
        %3225 = vmatprep.subr.mxu0 0.0
        %3226 = vmatpush1.msra.mxu0 %v3124
        %3227 = vmatprep.subr.mxu0 0.0
        %3228 = vmatpush1.msra.mxu0 %v3125
        %3229 = vmatprep.subr.mxu0 0.0
        %3230 = vmatpush1.msra.mxu0 %v3126
        %3231 = vmatprep.subr.mxu0 0.0
        %3232 = vmatpush1.msra.mxu0 0.0
        %3233 = vmatprep.subr.mxu0 0.0
        %3234 = vmatpush1.msra.mxu0 0.0
        %3235 = vmatprep.subr.mxu0 0.0
        %3236 = vmatpush1.msra.mxu0 0.0
        %3237 = vmatprep.subr.mxu0 0.0
        %3238 = vmatpush1.msra.mxu0 0.0
        %3239 = vmatprep.subr.mxu0 0.0
        %3240 = vmatpush1.msra.mxu0 0.0
        %3241 = vmatprep.subr.mxu0 0.0
        %3242 = vmatpush1.msra.mxu0 0.0
        %3243 = vmatprep.subr.mxu0 0.0
        %3244 = vmatpush1.msra.mxu0 0.0
        %3245 = vmatprep.subr.mxu0 0.0
        %3246 = vmatpush1.msra.mxu0 0.0
        %3247 = vmatprep.subr.mxu0 0.0
        %3248 = vmatpush1.msra.mxu0 0.0
        %3249 = vmatprep.subr.mxu0 0.0
        %3250 = vmatpush1.msra.mxu0 0.0
        %3251 = vmatprep.subr.mxu0 0.0
        %3252 = vmatpush1.msra.mxu0 0.0
        %3253 = vmatprep.subr.mxu0 0.0
        %3254 = vmatpush1.msra.mxu0 0.0
        %3255 = vmatprep.subr.mxu0 0.0
        %3256 = vmatpush1.msra.mxu0 0.0
        %3257 = vmatprep.subr.mxu0 0.0
        %3258 = vmatpush1.msra.mxu0 0.0
        %3259 = vmatprep.subr.mxu0 0.0
        %3260 = vmatpush1.msra.mxu0 0.0
        %3261 = vmatprep.subr.mxu0 0.0
        %3262 = vmatpush1.msra.mxu0 0.0
        %3263 = vmatprep.subr.mxu0 0.0
        %3264 = vmatpush1.msra.mxu0 0.0
        %3265 = vmatprep.subr.mxu0 0.0
        %3266 = vmatpush1.msra.mxu0 0.0
        %3267 = vmatprep.subr.mxu0 0.0
        %3268 = vmatpush1.msra.mxu0 0.0
        %3269 = vmatprep.subr.mxu0 0.0
        %3270 = vmatpush1.msra.mxu0 0.0
        %3271 = vmatprep.subr.mxu0 0.0
        %3272 = vmatpush1.msra.mxu0 0.0
        %3273 = vmatprep.subr.mxu0 0.0
        %3274 = vmatpush1.msra.mxu0 0.0
        %3275 = vmatprep.subr.mxu0 0.0
        %3276 = vmatpush1.msra.mxu0 0.0
        %3277 = vmatprep.subr.mxu0 0.0
        %3278 = vmatpush1.msra.mxu0 0.0
        %3279 = vmatprep.subr.mxu0 0.0
        %3280 = vmatpush1.msra.mxu0 0.0
        %3281 = vmatprep.subr.mxu0 0.0
        %3282 = vmatpush1.msra.mxu0 0.0
        %3283 = vmatprep.subr.mxu0 0.0
        %3284 = vmatpush1.msra.mxu0 0.0
        %3285 = vmatprep.subr.mxu0 0.0
        %3286 = vmatpush1.msra.mxu0 0.0
        %3287 = vmatprep.mubr.f32.mxu0 0.0
        %3288 = vmatmul.mubr.f32.gmra.mrb[0].mxu0 %v3128
        %v3289 = vpop.f32.mrb[0].mxu0
        %v3290 = vadd.f32 0.0, %v3289
        %v3291 = vpop.f32.mrb[0].mxu0
        %3292 = vmatprep.mubr.f32.mxu0 0.0
        %3293 = vmatmul.mubr.f32.gmra.mrb[0].mxu0 %v3131
        %v3294 = vpop.f32.mrb[0].mxu0
        %v3295 = vadd.f32 0.0, %v3294
        %v3296 = vpop.f32.mrb[0].mxu0
        %3297 = vmatprep.mubr.f32.mxu0 0.0
        %3298 = vmatmul.mubr.f32.gmra.mrb[0].mxu0 %v3134
        %v3299 = vpop.f32.mrb[0].mxu0
        %v3300 = vadd.f32 0.0, %v3299
        %v3301 = vpop.f32.mrb[0].mxu0
        %3302 = vmatprep.mubr.f32.mxu0 0.0
        %3303 = vmatmul.mubr.f32.gmra.mrb[0].mxu0 %v3137
        %v3304 = vpop.f32.mrb[0].mxu0
        %v3305 = vadd.f32 0.0, %v3304
        %v3306 = vpop.f32.mrb[0].mxu0
        %3307 = vmatprep.mubr.f32.mxu0 0.0
        %3308 = vmatmul.mubr.f32.gmra.mrb[0].mxu0 %v3140
        %v3309 = vpop.f32.mrb[0].mxu0
        %v3310 = vadd.f32 0.0, %v3309
        %v3311 = vpop.f32.mrb[0].mxu0
        %3312 = vmatprep.mubr.f32.mxu0 0.0
        %3313 = vmatmul.mubr.f32.gmra.mrb[0].mxu0 %v3143
        %v3314 = vpop.f32.mrb[0].mxu0
        %v3315 = vadd.f32 0.0, %v3314
        %v3316 = vpop.f32.mrb[0].mxu0
        %3317 = vmatprep.mubr.f32.mxu0 0.0
        %3318 = vmatmul.mubr.f32.gmra.mrb[0].mxu0 %v3146
        %v3319 = vpop.f32.mrb[0].mxu0
        %v3320 = vadd.f32 0.0, %v3319
        %v3321 = vpop.f32.mrb[0].mxu0
        %3322 = vmatprep.mubr.f32.mxu0 0.0
        %3323 = vmatmul.mubr.f32.gmra.mrb[0].mxu0 %v3149
        %v3324 = vpop.f32.mrb[0].mxu0
        %v3325 = vadd.f32 0.0, %v3324
        %v3326 = vpop.f32.mrb[0].mxu0
        %3327 = vmatprep.mubr.f32.mxu0 0.0
        %3328 = vmatmul.mubr.f32.gmra.mrb[0].mxu0 %v3152
        %v3329 = vpop.f32.mrb[0].mxu0
        %v3330 = vadd.f32 0.0, %v3329
        %v3331 = vpop.f32.mrb[0].mxu0
        %3332 = vmatprep.mubr.f32.mxu0 0.0
        %3333 = vmatmul.mubr.f32.gmra.mrb[0].mxu0 %v3155
        %v3334 = vpop.f32.mrb[0].mxu0
        %v3335 = vadd.f32 0.0, %v3334
        %v3336 = vpop.f32.mrb[0].mxu0
        %3337 = vmatprep.mubr.f32.mxu0 0.0
        %3338 = vmatmul.mubr.f32.gmra.mrb[0].mxu0 %v3158
        %v3339 = vpop.f32.mrb[0].mxu0
        %v3340 = vadd.f32 0.0, %v3339
        %v3341 = vpop.f32.mrb[0].mxu0
        %3342 = vmatprep.mubr.f32.mxu0 0.0
        %3343 = vmatmul.mubr.f32.gmra.mrb[0].mxu0 %v3161
        %v3344 = vpop.f32.mrb[0].mxu0
        %v3345 = vadd.f32 0.0, %v3344
        %v3346 = vpop.f32.mrb[0].mxu0
        %3347 = vmatprep.mubr.f32.mxu0 0.0
        %3348 = vmatmul.mubr.f32.gmra.mrb[0].mxu0 %v3164
        %v3349 = vpop.f32.mrb[0].mxu0
        %v3350 = vadd.f32 0.0, %v3349
        %v3351 = vpop.f32.mrb[0].mxu0
        %3352 = vmatprep.mubr.f32.mxu0 0.0
        %3353 = vmatmul.mubr.f32.gmra.mrb[0].mxu0 %v3167
        %v3354 = vpop.f32.mrb[0].mxu0
        %v3355 = vadd.f32 0.0, %v3354
        %v3356 = vpop.f32.mrb[0].mxu0
        %3357 = vmatprep.mubr.f32.mxu0 0.0
        %3358 = vmatmul.mubr.f32.gmra.mrb[0].mxu0 %v3170
        %v3359 = vpop.f32.mrb[0].mxu0
        %v3360 = vadd.f32 0.0, %v3359
        %v3361 = vpop.f32.mrb[0].mxu0
        %3362 = vmatprep.mubr.f32.mxu0 0.0
        %3363 = vmatmul.mubr.f32.gmra.mrb[0].mxu0 %v3173
        %v3364 = vpop.f32.mrb[0].mxu0
        %v3365 = vadd.f32 0.0, %v3364
        %v3366 = vpop.f32.mrb[0].mxu0
        %3367 = vmatprep.mubr.f32.mxu0 0.0
        %3368 = vmatmul.mubr.f32.gmra.mrb[0].mxu0 %v3176
        %v3369 = vpop.f32.mrb[0].mxu0
        %v3370 = vadd.f32 0.0, %v3369
        %v3371 = vpop.f32.mrb[0].mxu0
        %3372 = vmatprep.mubr.f32.mxu0 0.0
        %3373 = vmatmul.mubr.f32.gmra.mrb[0].mxu0 %v3179
        %v3374 = vpop.f32.mrb[0].mxu0
        %v3375 = vadd.f32 0.0, %v3374
        %v3376 = vpop.f32.mrb[0].mxu0
        %3377 = vmatprep.mubr.f32.mxu0 0.0
        %3378 = vmatmul.mubr.f32.gmra.mrb[0].mxu0 %v3182
        %v3379 = vpop.f32.mrb[0].mxu0
        %v3380 = vadd.f32 0.0, %v3379
        %v3381 = vpop.f32.mrb[0].mxu0
        %3382 = vmatprep.mubr.f32.mxu0 0.0
        %3383 = vmatmul.mubr.f32.gmra.mrb[0].mxu0 %v3185
        %v3384 = vpop.f32.mrb[0].mxu0
        %v3385 = vadd.f32 0.0, %v3384
        %v3386 = vpop.f32.mrb[0].mxu0
        %3387 = vmatprep.mubr.f32.mxu0 0.0
        %3388 = vmatmul.mubr.f32.gmra.mrb[0].mxu0 %v3188
        %v3389 = vpop.f32.mrb[0].mxu0
        %v3390 = vadd.f32 0.0, %v3389
        %v3391 = vpop.f32.mrb[0].mxu0
        %3392 = vmatprep.mubr.f32.mxu0 0.0
        %3393 = vmatmul.mubr.f32.gmra.mrb[0].mxu0 %v3191
        %v3394 = vpop.f32.mrb[0].mxu0
        %v3395 = vadd.f32 0.0, %v3394
        %v3396 = vpop.f32.mrb[0].mxu0
        %3397 = vmatprep.mubr.f32.mxu0 0.0
        %3398 = vmatmul.mubr.f32.gmra.mrb[0].mxu0 %v3194
        %v3399 = vpop.f32.mrb[0].mxu0
        %v3400 = vadd.f32 0.0, %v3399
        %v3401 = vpop.f32.mrb[0].mxu0
        %3402 = vmatprep.mubr.f32.mxu0 0.0
        %3403 = vmatmul.mubr.f32.gmra.mrb[0].mxu0 %v3197
        %v3404 = vpop.f32.mrb[0].mxu0
        %v3405 = vadd.f32 0.0, %v3404
        %v3406 = vpop.f32.mrb[0].mxu0
        %3407 = vmatprep.mubr.f32.mxu0 0.0
        %3408 = vmatmul.mubr.f32.gmra.mrb[0].mxu0 %v3200
        %v3409 = vpop.f32.mrb[0].mxu0
        %v3410 = vadd.f32 0.0, %v3409
        %v3411 = vpop.f32.mrb[0].mxu0
        %3412 = vmatprep.mubr.f32.mxu0 0.0
        %3413 = vmatmul.mubr.f32.gmra.mrb[0].mxu0 %v3203
        %v3414 = vpop.f32.mrb[0].mxu0
        %v3415 = vadd.f32 0.0, %v3414
        %v3416 = vpop.f32.mrb[0].mxu0
        %3417 = vmatprep.mubr.f32.mxu0 0.0
        %3418 = vmatmul.mubr.f32.gmra.mrb[0].mxu0 %v3206
        %v3419 = vpop.f32.mrb[0].mxu0
        %v3420 = vadd.f32 0.0, %v3419
        %v3421 = vpop.f32.mrb[0].mxu0
        %3422 = vmatprep.mubr.f32.mxu0 0.0
        %3423 = vmatmul.mubr.f32.gmra.mrb[0].mxu0 %v3209
        %v3424 = vpop.f32.mrb[0].mxu0
        %v3425 = vadd.f32 0.0, %v3424
        %v3426 = vpop.f32.mrb[0].mxu0
        %3427 = vmatprep.mubr.f32.mxu0 0.0
        %3428 = vmatmul.mubr.f32.gmra.mrb[0].mxu0 %v3212
        %v3429 = vpop.f32.mrb[0].mxu0
        %v3430 = vadd.f32 0.0, %v3429
        %v3431 = vpop.f32.mrb[0].mxu0
        %3432 = vmatprep.mubr.f32.mxu0 0.0
        %3433 = vmatmul.mubr.f32.gmra.mrb[0].mxu0 %v3215
        %v3434 = vpop.f32.mrb[0].mxu0
        %v3435 = vadd.f32 0.0, %v3434
        %v3436 = vpop.f32.mrb[0].mxu0
        %3437 = vmatprep.mubr.f32.mxu0 0.0
        %3438 = vmatmul.mubr.f32.gmra.mrb[0].mxu0 %v3218
        %v3439 = vpop.f32.mrb[0].mxu0
        %v3440 = vadd.f32 0.0, %v3439
        %v3441 = vpop.f32.mrb[0].mxu0
        %3442 = vmatprep.mubr.f32.mxu0 0.0
        %3443 = vmatmul.mubr.f32.gmra.mrb[0].mxu0 %v3221
        %v3444 = vpop.f32.mrb[0].mxu0
        %v3445 = vadd.f32 0.0, %v3444
        %v3446 = vpop.f32.mrb[0].mxu0
        %3447 = vdwg.mxu0
        %v3448 = vadd.f32 %v2932, %v3290
        %v3449 = vadd.f32 %v2937, %v3295
        %v3450 = vadd.f32 %v2942, %v3300
        %v3451 = vadd.f32 %v2947, %v3305
        %v3452 = vadd.f32 %v2952, %v3310
        %v3453 = vadd.f32 %v2957, %v3315
        %v3454 = vadd.f32 %v2962, %v3320
        %v3455 = vadd.f32 %v2967, %v3325
        %v3456 = vadd.f32 %v2972, %v3330
        %v3457 = vadd.f32 %v2977, %v3335
        %v3458 = vadd.f32 %v2982, %v3340
        %v3459 = vadd.f32 %v2987, %v3345
        %v3460 = vadd.f32 %v2992, %v3350
        %v3461 = vadd.f32 %v2997, %v3355
        %v3462 = vadd.f32 %v3002, %v3360
        %v3463 = vadd.f32 %v3007, %v3365
        %v3464 = vadd.f32 %v3012, %v3370
        %v3465 = vadd.f32 %v3017, %v3375
        %v3466 = vadd.f32 %v3022, %v3380
        %v3467 = vadd.f32 %v3027, %v3385
        %v3468 = vadd.f32 %v3032, %v3390
        %v3469 = vadd.f32 %v3037, %v3395
        %v3470 = vadd.f32 %v3042, %v3400
        %v3471 = vadd.f32 %v3047, %v3405
        %v3472 = vadd.f32 %v3052, %v3410
        %v3473 = vadd.f32 %v3057, %v3415
        %v3474 = vadd.f32 %v3062, %v3420
        %v3475 = vadd.f32 %v3067, %v3425
        %v3476 = vadd.f32 %v3072, %v3430
        %v3477 = vadd.f32 %v3077, %v3435
        %v3478 = vadd.f32 %v3082, %v3440
        %v3479 = vadd.f32 %v3087, %v3445
        %v3480 = vld [vmem:[%s385 + $0x3] sm:$0xff]
        %v3481 = vld [vmem:[%s385 + $0xb] sm:$0xff]
        %v3482 = vld [vmem:[%s385 + $0x13] sm:$0xff]
        %v3483 = vld [vmem:[%s385 + $0x1b] sm:$0xff]
        %v3484 = vld [vmem:[%s385 + $0x23] sm:$0xff]
        %v3485 = vld [vmem:[%s385 + $0x2b] sm:$0xff]
        %v3486 = vld [vmem:[%s385 + $0x33] sm:$0xff]
        %v3487 = vld [vmem:[%s385 + $0x3b] sm:$0xff]
        %v3488 = vld [vmem:[%s385 + $0x43] sm:$0xff]
        %v3489 = vld [vmem:[%s385 + $0x4b] sm:$0xff]
        %v3490 = vld [vmem:[%s385 + $0x53] sm:$0xff]
        %v3491 = vld [vmem:[%s385 + $0x5b] sm:$0xff]
        %v3492 = vld [vmem:[%s385 + $0x63] sm:$0xff]
        %v3493 = vld [vmem:[%s385 + $0x6b] sm:$0xff]
        %v3494 = vld [vmem:[%s385 + $0x73] sm:$0xff]
        %v3495 = vld [vmem:[%s385 + $0x7b] sm:$0xff]
        %v3496 = vld [vmem:[%s385 + $0x83] sm:$0xff]
        %v3497 = vld [vmem:[%s385 + $0x8b] sm:$0xff]
        %v3498 = vld [vmem:[%s385 + $0x93] sm:$0xff]
        %v3499 = vld [vmem:[%s385 + $0x9b] sm:$0xff]
        %v3500 = vld [vmem:[%s385 + $0xa3] sm:$0xff]
        %v3501 = vld [vmem:[%s385 + $0xab] sm:$0xff]
        %v3502 = vld [vmem:[%s385 + $0xb3] sm:$0xff]
        %v3503 = vld [vmem:[%s385 + $0xbb] sm:$0xff]
        %v3504 = vld [vmem:[%s385 + $0xc3] sm:$0xff]
        %v3505 = vld [vmem:[%s385 + $0xcb] sm:$0xff]
        %v3506 = vld [vmem:[%s385 + $0xd3] sm:$0xff]
        %v3507 = vld [vmem:[%s385 + $0xdb] sm:$0xff]
        %v3508 = vld [vmem:[%s385 + $0xe3] sm:$0xff]
        %v3509 = vld [vmem:[%s385 + $0xeb] sm:$0xff]
        %v3510 = vld [vmem:[%s385 + $0xf3] sm:$0xff]
        %v3511 = vld [vmem:[%s385 + $0xfb] sm:$0xff]
        %s3512 = scalar_lea.vmem %s1, 256
        %v3513 = vld [vmem:[%s3512] sm:$0xff]
        %v3514 = vld [vmem:[%s3512 + $0x8] sm:$0xff]
        %v3515 = vld [vmem:[%s3512 + $0x10] sm:$0xff]
        %v3516 = vld [vmem:[%s3512 + $0x18] sm:$0xff]
        %v3518 = vsel %vm460, %v3480, 0
        %v3521 = vsel %vm460, %v3481, 0
        %v3524 = vsel %vm460, %v3482, 0
        %v3527 = vsel %vm460, %v3483, 0
        %v3530 = vsel %vm460, %v3484, 0
        %v3533 = vsel %vm460, %v3485, 0
        %v3536 = vsel %vm460, %v3486, 0
        %v3539 = vsel %vm460, %v3487, 0
        %v3542 = vsel %vm460, %v3488, 0
        %v3545 = vsel %vm460, %v3489, 0
        %v3548 = vsel %vm460, %v3490, 0
        %v3551 = vsel %vm460, %v3491, 0
        %v3554 = vsel %vm460, %v3492, 0
        %v3557 = vsel %vm460, %v3493, 0
        %v3560 = vsel %vm460, %v3494, 0
        %v3563 = vsel %vm460, %v3495, 0
        %v3566 = vsel %vm460, %v3496, 0
        %v3569 = vsel %vm460, %v3497, 0
        %v3572 = vsel %vm460, %v3498, 0
        %v3575 = vsel %vm460, %v3499, 0
        %v3578 = vsel %vm460, %v3500, 0
        %v3581 = vsel %vm460, %v3501, 0
        %v3584 = vsel %vm460, %v3502, 0
        %v3587 = vsel %vm460, %v3503, 0
        %v3590 = vsel %vm460, %v3504, 0
        %v3593 = vsel %vm460, %v3505, 0
        %v3596 = vsel %vm460, %v3506, 0
        %v3599 = vsel %vm460, %v3507, 0
        %v3602 = vsel %vm460, %v3508, 0
        %v3605 = vsel %vm460, %v3509, 0
        %v3608 = vsel %vm460, %v3510, 0
        %v3611 = vsel %vm460, %v3511, 0
        %3613 = vmatprep.subr.mxu0 0.0
        %3614 = vmatpush1.msra.mxu0 %v3513
        %3615 = vmatprep.subr.mxu0 0.0
        %3616 = vmatpush1.msra.mxu0 %v3514
        %3617 = vmatprep.subr.mxu0 0.0
        %3618 = vmatpush1.msra.mxu0 %v3515
        %3619 = vmatprep.subr.mxu0 0.0
        %3620 = vmatpush1.msra.mxu0 %v3516
        %3621 = vmatprep.subr.mxu0 0.0
        %3622 = vmatpush1.msra.mxu0 0.0
        %3623 = vmatprep.subr.mxu0 0.0
        %3624 = vmatpush1.msra.mxu0 0.0
        %3625 = vmatprep.subr.mxu0 0.0
        %3626 = vmatpush1.msra.mxu0 0.0
        %3627 = vmatprep.subr.mxu0 0.0
        %3628 = vmatpush1.msra.mxu0 0.0
        %3629 = vmatprep.subr.mxu0 0.0
        %3630 = vmatpush1.msra.mxu0 0.0
        %3631 = vmatprep.subr.mxu0 0.0
        %3632 = vmatpush1.msra.mxu0 0.0
        %3633 = vmatprep.subr.mxu0 0.0
        %3634 = vmatpush1.msra.mxu0 0.0
        %3635 = vmatprep.subr.mxu0 0.0
        %3636 = vmatpush1.msra.mxu0 0.0
        %3637 = vmatprep.subr.mxu0 0.0
        %3638 = vmatpush1.msra.mxu0 0.0
        %3639 = vmatprep.subr.mxu0 0.0
        %3640 = vmatpush1.msra.mxu0 0.0
        %3641 = vmatprep.subr.mxu0 0.0
        %3642 = vmatpush1.msra.mxu0 0.0
        %3643 = vmatprep.subr.mxu0 0.0
        %3644 = vmatpush1.msra.mxu0 0.0
        %3645 = vmatprep.subr.mxu0 0.0
        %3646 = vmatpush1.msra.mxu0 0.0
        %3647 = vmatprep.subr.mxu0 0.0
        %3648 = vmatpush1.msra.mxu0 0.0
        %3649 = vmatprep.subr.mxu0 0.0
        %3650 = vmatpush1.msra.mxu0 0.0
        %3651 = vmatprep.subr.mxu0 0.0
        %3652 = vmatpush1.msra.mxu0 0.0
        %3653 = vmatprep.subr.mxu0 0.0
        %3654 = vmatpush1.msra.mxu0 0.0
        %3655 = vmatprep.subr.mxu0 0.0
        %3656 = vmatpush1.msra.mxu0 0.0
        %3657 = vmatprep.subr.mxu0 0.0
        %3658 = vmatpush1.msra.mxu0 0.0
        %3659 = vmatprep.subr.mxu0 0.0
        %3660 = vmatpush1.msra.mxu0 0.0
        %3661 = vmatprep.subr.mxu0 0.0
        %3662 = vmatpush1.msra.mxu0 0.0
        %3663 = vmatprep.subr.mxu0 0.0
        %3664 = vmatpush1.msra.mxu0 0.0
        %3665 = vmatprep.subr.mxu0 0.0
        %3666 = vmatpush1.msra.mxu0 0.0
        %3667 = vmatprep.subr.mxu0 0.0
        %3668 = vmatpush1.msra.mxu0 0.0
        %3669 = vmatprep.subr.mxu0 0.0
        %3670 = vmatpush1.msra.mxu0 0.0
        %3671 = vmatprep.subr.mxu0 0.0
        %3672 = vmatpush1.msra.mxu0 0.0
        %3673 = vmatprep.subr.mxu0 0.0
        %3674 = vmatpush1.msra.mxu0 0.0
        %3675 = vmatprep.subr.mxu0 0.0
        %3676 = vmatpush1.msra.mxu0 0.0
        %3677 = vmatprep.mubr.f32.mxu0 0.0
        %3678 = vmatmul.mubr.f32.gmra.mrb[0].mxu0 %v3518
        %v3679 = vpop.f32.mrb[0].mxu0
        %v3680 = vadd.f32 0.0, %v3679
        %v3681 = vpop.f32.mrb[0].mxu0
        %3682 = vmatprep.mubr.f32.mxu0 0.0
        %3683 = vmatmul.mubr.f32.gmra.mrb[0].mxu0 %v3521
        %v3684 = vpop.f32.mrb[0].mxu0
        %v3685 = vadd.f32 0.0, %v3684
        %v3686 = vpop.f32.mrb[0].mxu0
        %3687 = vmatprep.mubr.f32.mxu0 0.0
        %3688 = vmatmul.mubr.f32.gmra.mrb[0].mxu0 %v3524
        %v3689 = vpop.f32.mrb[0].mxu0
        %v3690 = vadd.f32 0.0, %v3689
        %v3691 = vpop.f32.mrb[0].mxu0
        %3692 = vmatprep.mubr.f32.mxu0 0.0
        %3693 = vmatmul.mubr.f32.gmra.mrb[0].mxu0 %v3527
        %v3694 = vpop.f32.mrb[0].mxu0
        %v3695 = vadd.f32 0.0, %v3694
        %v3696 = vpop.f32.mrb[0].mxu0
        %3697 = vmatprep.mubr.f32.mxu0 0.0
        %3698 = vmatmul.mubr.f32.gmra.mrb[0].mxu0 %v3530
        %v3699 = vpop.f32.mrb[0].mxu0
        %v3700 = vadd.f32 0.0, %v3699
        %v3701 = vpop.f32.mrb[0].mxu0
        %3702 = vmatprep.mubr.f32.mxu0 0.0
        %3703 = vmatmul.mubr.f32.gmra.mrb[0].mxu0 %v3533
        %v3704 = vpop.f32.mrb[0].mxu0
        %v3705 = vadd.f32 0.0, %v3704
        %v3706 = vpop.f32.mrb[0].mxu0
        %3707 = vmatprep.mubr.f32.mxu0 0.0
        %3708 = vmatmul.mubr.f32.gmra.mrb[0].mxu0 %v3536
        %v3709 = vpop.f32.mrb[0].mxu0
        %v3710 = vadd.f32 0.0, %v3709
        %v3711 = vpop.f32.mrb[0].mxu0
        %3712 = vmatprep.mubr.f32.mxu0 0.0
        %3713 = vmatmul.mubr.f32.gmra.mrb[0].mxu0 %v3539
        %v3714 = vpop.f32.mrb[0].mxu0
        %v3715 = vadd.f32 0.0, %v3714
        %v3716 = vpop.f32.mrb[0].mxu0
        %3717 = vmatprep.mubr.f32.mxu0 0.0
        %3718 = vmatmul.mubr.f32.gmra.mrb[0].mxu0 %v3542
        %v3719 = vpop.f32.mrb[0].mxu0
        %v3720 = vadd.f32 0.0, %v3719
        %v3721 = vpop.f32.mrb[0].mxu0
        %3722 = vmatprep.mubr.f32.mxu0 0.0
        %3723 = vmatmul.mubr.f32.gmra.mrb[0].mxu0 %v3545
        %v3724 = vpop.f32.mrb[0].mxu0
        %v3725 = vadd.f32 0.0, %v3724
        %v3726 = vpop.f32.mrb[0].mxu0
        %3727 = vmatprep.mubr.f32.mxu0 0.0
        %3728 = vmatmul.mubr.f32.gmra.mrb[0].mxu0 %v3548
        %v3729 = vpop.f32.mrb[0].mxu0
        %v3730 = vadd.f32 0.0, %v3729
        %v3731 = vpop.f32.mrb[0].mxu0
        %3732 = vmatprep.mubr.f32.mxu0 0.0
        %3733 = vmatmul.mubr.f32.gmra.mrb[0].mxu0 %v3551
        %v3734 = vpop.f32.mrb[0].mxu0
        %v3735 = vadd.f32 0.0, %v3734
        %v3736 = vpop.f32.mrb[0].mxu0
        %3737 = vmatprep.mubr.f32.mxu0 0.0
        %3738 = vmatmul.mubr.f32.gmra.mrb[0].mxu0 %v3554
        %v3739 = vpop.f32.mrb[0].mxu0
        %v3740 = vadd.f32 0.0, %v3739
        %v3741 = vpop.f32.mrb[0].mxu0
        %3742 = vmatprep.mubr.f32.mxu0 0.0
        %3743 = vmatmul.mubr.f32.gmra.mrb[0].mxu0 %v3557
        %v3744 = vpop.f32.mrb[0].mxu0
        %v3745 = vadd.f32 0.0, %v3744
        %v3746 = vpop.f32.mrb[0].mxu0
        %3747 = vmatprep.mubr.f32.mxu0 0.0
        %3748 = vmatmul.mubr.f32.gmra.mrb[0].mxu0 %v3560
        %v3749 = vpop.f32.mrb[0].mxu0
        %v3750 = vadd.f32 0.0, %v3749
        %v3751 = vpop.f32.mrb[0].mxu0
        %3752 = vmatprep.mubr.f32.mxu0 0.0
        %3753 = vmatmul.mubr.f32.gmra.mrb[0].mxu0 %v3563
        %v3754 = vpop.f32.mrb[0].mxu0
        %v3755 = vadd.f32 0.0, %v3754
        %v3756 = vpop.f32.mrb[0].mxu0
        %3757 = vmatprep.mubr.f32.mxu0 0.0
        %3758 = vmatmul.mubr.f32.gmra.mrb[0].mxu0 %v3566
        %v3759 = vpop.f32.mrb[0].mxu0
        %v3760 = vadd.f32 0.0, %v3759
        %v3761 = vpop.f32.mrb[0].mxu0
        %3762 = vmatprep.mubr.f32.mxu0 0.0
        %3763 = vmatmul.mubr.f32.gmra.mrb[0].mxu0 %v3569
        %v3764 = vpop.f32.mrb[0].mxu0
        %v3765 = vadd.f32 0.0, %v3764
        %v3766 = vpop.f32.mrb[0].mxu0
        %3767 = vmatprep.mubr.f32.mxu0 0.0
        %3768 = vmatmul.mubr.f32.gmra.mrb[0].mxu0 %v3572
        %v3769 = vpop.f32.mrb[0].mxu0
        %v3770 = vadd.f32 0.0, %v3769
        %v3771 = vpop.f32.mrb[0].mxu0
        %3772 = vmatprep.mubr.f32.mxu0 0.0
        %3773 = vmatmul.mubr.f32.gmra.mrb[0].mxu0 %v3575
        %v3774 = vpop.f32.mrb[0].mxu0
        %v3775 = vadd.f32 0.0, %v3774
        %v3776 = vpop.f32.mrb[0].mxu0
        %3777 = vmatprep.mubr.f32.mxu0 0.0
        %3778 = vmatmul.mubr.f32.gmra.mrb[0].mxu0 %v3578
        %v3779 = vpop.f32.mrb[0].mxu0
        %v3780 = vadd.f32 0.0, %v3779
        %v3781 = vpop.f32.mrb[0].mxu0
        %3782 = vmatprep.mubr.f32.mxu0 0.0
        %3783 = vmatmul.mubr.f32.gmra.mrb[0].mxu0 %v3581
        %v3784 = vpop.f32.mrb[0].mxu0
        %v3785 = vadd.f32 0.0, %v3784
        %v3786 = vpop.f32.mrb[0].mxu0
        %3787 = vmatprep.mubr.f32.mxu0 0.0
        %3788 = vmatmul.mubr.f32.gmra.mrb[0].mxu0 %v3584
        %v3789 = vpop.f32.mrb[0].mxu0
        %v3790 = vadd.f32 0.0, %v3789
        %v3791 = vpop.f32.mrb[0].mxu0
        %3792 = vmatprep.mubr.f32.mxu0 0.0
        %3793 = vmatmul.mubr.f32.gmra.mrb[0].mxu0 %v3587
        %v3794 = vpop.f32.mrb[0].mxu0
        %v3795 = vadd.f32 0.0, %v3794
        %v3796 = vpop.f32.mrb[0].mxu0
        %3797 = vmatprep.mubr.f32.mxu0 0.0
        %3798 = vmatmul.mubr.f32.gmra.mrb[0].mxu0 %v3590
        %v3799 = vpop.f32.mrb[0].mxu0
        %v3800 = vadd.f32 0.0, %v3799
        %v3801 = vpop.f32.mrb[0].mxu0
        %3802 = vmatprep.mubr.f32.mxu0 0.0
        %3803 = vmatmul.mubr.f32.gmra.mrb[0].mxu0 %v3593
        %v3804 = vpop.f32.mrb[0].mxu0
        %v3805 = vadd.f32 0.0, %v3804
        %v3806 = vpop.f32.mrb[0].mxu0
        %3807 = vmatprep.mubr.f32.mxu0 0.0
        %3808 = vmatmul.mubr.f32.gmra.mrb[0].mxu0 %v3596
        %v3809 = vpop.f32.mrb[0].mxu0
        %v3810 = vadd.f32 0.0, %v3809
        %v3811 = vpop.f32.mrb[0].mxu0
        %3812 = vmatprep.mubr.f32.mxu0 0.0
        %3813 = vmatmul.mubr.f32.gmra.mrb[0].mxu0 %v3599
        %v3814 = vpop.f32.mrb[0].mxu0
        %v3815 = vadd.f32 0.0, %v3814
        %v3816 = vpop.f32.mrb[0].mxu0
        %3817 = vmatprep.mubr.f32.mxu0 0.0
        %3818 = vmatmul.mubr.f32.gmra.mrb[0].mxu0 %v3602
        %v3819 = vpop.f32.mrb[0].mxu0
        %v3820 = vadd.f32 0.0, %v3819
        %v3821 = vpop.f32.mrb[0].mxu0
        %3822 = vmatprep.mubr.f32.mxu0 0.0
        %3823 = vmatmul.mubr.f32.gmra.mrb[0].mxu0 %v3605
        %v3824 = vpop.f32.mrb[0].mxu0
        %v3825 = vadd.f32 0.0, %v3824
        %v3826 = vpop.f32.mrb[0].mxu0
        %3827 = vmatprep.mubr.f32.mxu0 0.0
        %3828 = vmatmul.mubr.f32.gmra.mrb[0].mxu0 %v3608
        %v3829 = vpop.f32.mrb[0].mxu0
        %v3830 = vadd.f32 0.0, %v3829
        %v3831 = vpop.f32.mrb[0].mxu0
        %3832 = vmatprep.mubr.f32.mxu0 0.0
        %3833 = vmatmul.mubr.f32.gmra.mrb[0].mxu0 %v3611
        %v3834 = vpop.f32.mrb[0].mxu0
        %v3835 = vadd.f32 0.0, %v3834
        %v3836 = vpop.f32.mrb[0].mxu0
        %3837 = vdwg.mxu0
        %v3838 = vadd.f32 %v3448, %v3680
        %v3839 = vadd.f32 %v3449, %v3685
        %v3840 = vadd.f32 %v3450, %v3690
        %v3841 = vadd.f32 %v3451, %v3695
        %v3842 = vadd.f32 %v3452, %v3700
        %v3843 = vadd.f32 %v3453, %v3705
        %v3844 = vadd.f32 %v3454, %v3710
        %v3845 = vadd.f32 %v3455, %v3715
        %v3846 = vadd.f32 %v3456, %v3720
        %v3847 = vadd.f32 %v3457, %v3725
        %v3848 = vadd.f32 %v3458, %v3730
        %v3849 = vadd.f32 %v3459, %v3735
        %v3850 = vadd.f32 %v3460, %v3740
        %v3851 = vadd.f32 %v3461, %v3745
        %v3852 = vadd.f32 %v3462, %v3750
        %v3853 = vadd.f32 %v3463, %v3755
        %v3854 = vadd.f32 %v3464, %v3760
        %v3855 = vadd.f32 %v3465, %v3765
        %v3856 = vadd.f32 %v3466, %v3770
        %v3857 = vadd.f32 %v3467, %v3775
        %v3858 = vadd.f32 %v3468, %v3780
        %v3859 = vadd.f32 %v3469, %v3785
        %v3860 = vadd.f32 %v3470, %v3790
        %v3861 = vadd.f32 %v3471, %v3795
        %v3862 = vadd.f32 %v3472, %v3800
        %v3863 = vadd.f32 %v3473, %v3805
        %v3864 = vadd.f32 %v3474, %v3810
        %v3865 = vadd.f32 %v3475, %v3815
        %v3866 = vadd.f32 %v3476, %v3820
        %v3867 = vadd.f32 %v3477, %v3825
        %v3868 = vadd.f32 %v3478, %v3830
        %v3869 = vadd.f32 %v3479, %v3835
        %v3870 = vld [vmem:[%s385 + $0x4] sm:$0xff]
        %v3871 = vld [vmem:[%s385 + $0xc] sm:$0xff]
        %v3872 = vld [vmem:[%s385 + $0x14] sm:$0xff]
        %v3873 = vld [vmem:[%s385 + $0x1c] sm:$0xff]
        %v3874 = vld [vmem:[%s385 + $0x24] sm:$0xff]
        %v3875 = vld [vmem:[%s385 + $0x2c] sm:$0xff]
        %v3876 = vld [vmem:[%s385 + $0x34] sm:$0xff]
        %v3877 = vld [vmem:[%s385 + $0x3c] sm:$0xff]
        %v3878 = vld [vmem:[%s385 + $0x44] sm:$0xff]
        %v3879 = vld [vmem:[%s385 + $0x4c] sm:$0xff]
        %v3880 = vld [vmem:[%s385 + $0x54] sm:$0xff]
        %v3881 = vld [vmem:[%s385 + $0x5c] sm:$0xff]
        %v3882 = vld [vmem:[%s385 + $0x64] sm:$0xff]
        %v3883 = vld [vmem:[%s385 + $0x6c] sm:$0xff]
        %v3884 = vld [vmem:[%s385 + $0x74] sm:$0xff]
        %v3885 = vld [vmem:[%s385 + $0x7c] sm:$0xff]
        %v3886 = vld [vmem:[%s385 + $0x84] sm:$0xff]
        %v3887 = vld [vmem:[%s385 + $0x8c] sm:$0xff]
        %v3888 = vld [vmem:[%s385 + $0x94] sm:$0xff]
        %v3889 = vld [vmem:[%s385 + $0x9c] sm:$0xff]
        %v3890 = vld [vmem:[%s385 + $0xa4] sm:$0xff]
        %v3891 = vld [vmem:[%s385 + $0xac] sm:$0xff]
        %v3892 = vld [vmem:[%s385 + $0xb4] sm:$0xff]
        %v3893 = vld [vmem:[%s385 + $0xbc] sm:$0xff]
        %v3894 = vld [vmem:[%s385 + $0xc4] sm:$0xff]
        %v3895 = vld [vmem:[%s385 + $0xcc] sm:$0xff]
        %v3896 = vld [vmem:[%s385 + $0xd4] sm:$0xff]
        %v3897 = vld [vmem:[%s385 + $0xdc] sm:$0xff]
        %v3898 = vld [vmem:[%s385 + $0xe4] sm:$0xff]
        %v3899 = vld [vmem:[%s385 + $0xec] sm:$0xff]
        %v3900 = vld [vmem:[%s385 + $0xf4] sm:$0xff]
        %v3901 = vld [vmem:[%s385 + $0xfc] sm:$0xff]
        %s3902 = scalar_lea.vmem %s1, 288
        %v3903 = vld [vmem:[%s3902] sm:$0xff]
        %v3904 = vld [vmem:[%s3902 + $0x8] sm:$0xff]
        %v3905 = vld [vmem:[%s3902 + $0x10] sm:$0xff]
        %v3906 = vld [vmem:[%s3902 + $0x18] sm:$0xff]
        %v3908 = vsel %vm460, %v3870, 0
        %v3911 = vsel %vm460, %v3871, 0
        %v3914 = vsel %vm460, %v3872, 0
        %v3917 = vsel %vm460, %v3873, 0
        %v3920 = vsel %vm460, %v3874, 0
        %v3923 = vsel %vm460, %v3875, 0
        %v3926 = vsel %vm460, %v3876, 0
        %v3929 = vsel %vm460, %v3877, 0
        %v3932 = vsel %vm460, %v3878, 0
        %v3935 = vsel %vm460, %v3879, 0
        %v3938 = vsel %vm460, %v3880, 0
        %v3941 = vsel %vm460, %v3881, 0
        %v3944 = vsel %vm460, %v3882, 0
        %v3947 = vsel %vm460, %v3883, 0
        %v3950 = vsel %vm460, %v3884, 0
        %v3953 = vsel %vm460, %v3885, 0
        %v3956 = vsel %vm460, %v3886, 0
        %v3959 = vsel %vm460, %v3887, 0
        %v3962 = vsel %vm460, %v3888, 0
        %v3965 = vsel %vm460, %v3889, 0
        %v3968 = vsel %vm460, %v3890, 0
        %v3971 = vsel %vm460, %v3891, 0
        %v3974 = vsel %vm460, %v3892, 0
        %v3977 = vsel %vm460, %v3893, 0
        %v3980 = vsel %vm460, %v3894, 0
        %v3983 = vsel %vm460, %v3895, 0
        %v3986 = vsel %vm460, %v3896, 0
        %v3989 = vsel %vm460, %v3897, 0
        %v3992 = vsel %vm460, %v3898, 0
        %v3995 = vsel %vm460, %v3899, 0
        %v3998 = vsel %vm460, %v3900, 0
        %v4001 = vsel %vm460, %v3901, 0
        %4003 = vmatprep.subr.mxu0 0.0
        %4004 = vmatpush1.msra.mxu0 %v3903
        %4005 = vmatprep.subr.mxu0 0.0
        %4006 = vmatpush1.msra.mxu0 %v3904
        %4007 = vmatprep.subr.mxu0 0.0
        %4008 = vmatpush1.msra.mxu0 %v3905
        %4009 = vmatprep.subr.mxu0 0.0
        %4010 = vmatpush1.msra.mxu0 %v3906
        %4011 = vmatprep.subr.mxu0 0.0
        %4012 = vmatpush1.msra.mxu0 0.0
        %4013 = vmatprep.subr.mxu0 0.0
        %4014 = vmatpush1.msra.mxu0 0.0
        %4015 = vmatprep.subr.mxu0 0.0
        %4016 = vmatpush1.msra.mxu0 0.0
        %4017 = vmatprep.subr.mxu0 0.0
        %4018 = vmatpush1.msra.mxu0 0.0
        %4019 = vmatprep.subr.mxu0 0.0
        %4020 = vmatpush1.msra.mxu0 0.0
        %4021 = vmatprep.subr.mxu0 0.0
        %4022 = vmatpush1.msra.mxu0 0.0
        %4023 = vmatprep.subr.mxu0 0.0
        %4024 = vmatpush1.msra.mxu0 0.0
        %4025 = vmatprep.subr.mxu0 0.0
        %4026 = vmatpush1.msra.mxu0 0.0
        %4027 = vmatprep.subr.mxu0 0.0
        %4028 = vmatpush1.msra.mxu0 0.0
        %4029 = vmatprep.subr.mxu0 0.0
        %4030 = vmatpush1.msra.mxu0 0.0
        %4031 = vmatprep.subr.mxu0 0.0
        %4032 = vmatpush1.msra.mxu0 0.0
        %4033 = vmatprep.subr.mxu0 0.0
        %4034 = vmatpush1.msra.mxu0 0.0
        %4035 = vmatprep.subr.mxu0 0.0
        %4036 = vmatpush1.msra.mxu0 0.0
        %4037 = vmatprep.subr.mxu0 0.0
        %4038 = vmatpush1.msra.mxu0 0.0
        %4039 = vmatprep.subr.mxu0 0.0
        %4040 = vmatpush1.msra.mxu0 0.0
        %4041 = vmatprep.subr.mxu0 0.0
        %4042 = vmatpush1.msra.mxu0 0.0
        %4043 = vmatprep.subr.mxu0 0.0
        %4044 = vmatpush1.msra.mxu0 0.0
        %4045 = vmatprep.subr.mxu0 0.0
        %4046 = vmatpush1.msra.mxu0 0.0
        %4047 = vmatprep.subr.mxu0 0.0
        %4048 = vmatpush1.msra.mxu0 0.0
        %4049 = vmatprep.subr.mxu0 0.0
        %4050 = vmatpush1.msra.mxu0 0.0
        %4051 = vmatprep.subr.mxu0 0.0
        %4052 = vmatpush1.msra.mxu0 0.0
        %4053 = vmatprep.subr.mxu0 0.0
        %4054 = vmatpush1.msra.mxu0 0.0
        %4055 = vmatprep.subr.mxu0 0.0
        %4056 = vmatpush1.msra.mxu0 0.0
        %4057 = vmatprep.subr.mxu0 0.0
        %4058 = vmatpush1.msra.mxu0 0.0
        %4059 = vmatprep.subr.mxu0 0.0
        %4060 = vmatpush1.msra.mxu0 0.0
        %4061 = vmatprep.subr.mxu0 0.0
        %4062 = vmatpush1.msra.mxu0 0.0
        %4063 = vmatprep.subr.mxu0 0.0
        %4064 = vmatpush1.msra.mxu0 0.0
        %4065 = vmatprep.subr.mxu0 0.0
        %4066 = vmatpush1.msra.mxu0 0.0
        %4067 = vmatprep.mubr.f32.mxu0 0.0
        %4068 = vmatmul.mubr.f32.gmra.mrb[0].mxu0 %v3908
        %v4069 = vpop.f32.mrb[0].mxu0
        %v4070 = vadd.f32 0.0, %v4069
        %v4071 = vpop.f32.mrb[0].mxu0
        %4072 = vmatprep.mubr.f32.mxu0 0.0
        %4073 = vmatmul.mubr.f32.gmra.mrb[0].mxu0 %v3911
        %v4074 = vpop.f32.mrb[0].mxu0
        %v4075 = vadd.f32 0.0, %v4074
        %v4076 = vpop.f32.mrb[0].mxu0
        %4077 = vmatprep.mubr.f32.mxu0 0.0
        %4078 = vmatmul.mubr.f32.gmra.mrb[0].mxu0 %v3914
        %v4079 = vpop.f32.mrb[0].mxu0
        %v4080 = vadd.f32 0.0, %v4079
        %v4081 = vpop.f32.mrb[0].mxu0
        %4082 = vmatprep.mubr.f32.mxu0 0.0
        %4083 = vmatmul.mubr.f32.gmra.mrb[0].mxu0 %v3917
        %v4084 = vpop.f32.mrb[0].mxu0
        %v4085 = vadd.f32 0.0, %v4084
        %v4086 = vpop.f32.mrb[0].mxu0
        %4087 = vmatprep.mubr.f32.mxu0 0.0
        %4088 = vmatmul.mubr.f32.gmra.mrb[0].mxu0 %v3920
        %v4089 = vpop.f32.mrb[0].mxu0
        %v4090 = vadd.f32 0.0, %v4089
        %v4091 = vpop.f32.mrb[0].mxu0
        %4092 = vmatprep.mubr.f32.mxu0 0.0
        %4093 = vmatmul.mubr.f32.gmra.mrb[0].mxu0 %v3923
        %v4094 = vpop.f32.mrb[0].mxu0
        %v4095 = vadd.f32 0.0, %v4094
        %v4096 = vpop.f32.mrb[0].mxu0
        %4097 = vmatprep.mubr.f32.mxu0 0.0
        %4098 = vmatmul.mubr.f32.gmra.mrb[0].mxu0 %v3926
        %v4099 = vpop.f32.mrb[0].mxu0
        %v4100 = vadd.f32 0.0, %v4099
        %v4101 = vpop.f32.mrb[0].mxu0
        %4102 = vmatprep.mubr.f32.mxu0 0.0
        %4103 = vmatmul.mubr.f32.gmra.mrb[0].mxu0 %v3929
        %v4104 = vpop.f32.mrb[0].mxu0
        %v4105 = vadd.f32 0.0, %v4104
        %v4106 = vpop.f32.mrb[0].mxu0
        %4107 = vmatprep.mubr.f32.mxu0 0.0
        %4108 = vmatmul.mubr.f32.gmra.mrb[0].mxu0 %v3932
        %v4109 = vpop.f32.mrb[0].mxu0
        %v4110 = vadd.f32 0.0, %v4109
        %v4111 = vpop.f32.mrb[0].mxu0
        %4112 = vmatprep.mubr.f32.mxu0 0.0
        %4113 = vmatmul.mubr.f32.gmra.mrb[0].mxu0 %v3935
        %v4114 = vpop.f32.mrb[0].mxu0
        %v4115 = vadd.f32 0.0, %v4114
        %v4116 = vpop.f32.mrb[0].mxu0
        %4117 = vmatprep.mubr.f32.mxu0 0.0
        %4118 = vmatmul.mubr.f32.gmra.mrb[0].mxu0 %v3938
        %v4119 = vpop.f32.mrb[0].mxu0
        %v4120 = vadd.f32 0.0, %v4119
        %v4121 = vpop.f32.mrb[0].mxu0
        %4122 = vmatprep.mubr.f32.mxu0 0.0
        %4123 = vmatmul.mubr.f32.gmra.mrb[0].mxu0 %v3941
        %v4124 = vpop.f32.mrb[0].mxu0
        %v4125 = vadd.f32 0.0, %v4124
        %v4126 = vpop.f32.mrb[0].mxu0
        %4127 = vmatprep.mubr.f32.mxu0 0.0
        %4128 = vmatmul.mubr.f32.gmra.mrb[0].mxu0 %v3944
        %v4129 = vpop.f32.mrb[0].mxu0
        %v4130 = vadd.f32 0.0, %v4129
        %v4131 = vpop.f32.mrb[0].mxu0
        %4132 = vmatprep.mubr.f32.mxu0 0.0
        %4133 = vmatmul.mubr.f32.gmra.mrb[0].mxu0 %v3947
        %v4134 = vpop.f32.mrb[0].mxu0
        %v4135 = vadd.f32 0.0, %v4134
        %v4136 = vpop.f32.mrb[0].mxu0
        %4137 = vmatprep.mubr.f32.mxu0 0.0
        %4138 = vmatmul.mubr.f32.gmra.mrb[0].mxu0 %v3950
        %v4139 = vpop.f32.mrb[0].mxu0
        %v4140 = vadd.f32 0.0, %v4139
        %v4141 = vpop.f32.mrb[0].mxu0
        %4142 = vmatprep.mubr.f32.mxu0 0.0
        %4143 = vmatmul.mubr.f32.gmra.mrb[0].mxu0 %v3953
        %v4144 = vpop.f32.mrb[0].mxu0
        %v4145 = vadd.f32 0.0, %v4144
        %v4146 = vpop.f32.mrb[0].mxu0
        %4147 = vmatprep.mubr.f32.mxu0 0.0
        %4148 = vmatmul.mubr.f32.gmra.mrb[0].mxu0 %v3956
        %v4149 = vpop.f32.mrb[0].mxu0
        %v4150 = vadd.f32 0.0, %v4149
        %v4151 = vpop.f32.mrb[0].mxu0
        %4152 = vmatprep.mubr.f32.mxu0 0.0
        %4153 = vmatmul.mubr.f32.gmra.mrb[0].mxu0 %v3959
        %v4154 = vpop.f32.mrb[0].mxu0
        %v4155 = vadd.f32 0.0, %v4154
        %v4156 = vpop.f32.mrb[0].mxu0
        %4157 = vmatprep.mubr.f32.mxu0 0.0
        %4158 = vmatmul.mubr.f32.gmra.mrb[0].mxu0 %v3962
        %v4159 = vpop.f32.mrb[0].mxu0
        %v4160 = vadd.f32 0.0, %v4159
        %v4161 = vpop.f32.mrb[0].mxu0
        %4162 = vmatprep.mubr.f32.mxu0 0.0
        %4163 = vmatmul.mubr.f32.gmra.mrb[0].mxu0 %v3965
        %v4164 = vpop.f32.mrb[0].mxu0
        %v4165 = vadd.f32 0.0, %v4164
        %v4166 = vpop.f32.mrb[0].mxu0
        %4167 = vmatprep.mubr.f32.mxu0 0.0
        %4168 = vmatmul.mubr.f32.gmra.mrb[0].mxu0 %v3968
        %v4169 = vpop.f32.mrb[0].mxu0
        %v4170 = vadd.f32 0.0, %v4169
        %v4171 = vpop.f32.mrb[0].mxu0
        %4172 = vmatprep.mubr.f32.mxu0 0.0
        %4173 = vmatmul.mubr.f32.gmra.mrb[0].mxu0 %v3971
        %v4174 = vpop.f32.mrb[0].mxu0
        %v4175 = vadd.f32 0.0, %v4174
        %v4176 = vpop.f32.mrb[0].mxu0
        %4177 = vmatprep.mubr.f32.mxu0 0.0
        %4178 = vmatmul.mubr.f32.gmra.mrb[0].mxu0 %v3974
        %v4179 = vpop.f32.mrb[0].mxu0
        %v4180 = vadd.f32 0.0, %v4179
        %v4181 = vpop.f32.mrb[0].mxu0
        %4182 = vmatprep.mubr.f32.mxu0 0.0
        %4183 = vmatmul.mubr.f32.gmra.mrb[0].mxu0 %v3977
        %v4184 = vpop.f32.mrb[0].mxu0
        %v4185 = vadd.f32 0.0, %v4184
        %v4186 = vpop.f32.mrb[0].mxu0
        %4187 = vmatprep.mubr.f32.mxu0 0.0
        %4188 = vmatmul.mubr.f32.gmra.mrb[0].mxu0 %v3980
        %v4189 = vpop.f32.mrb[0].mxu0
        %v4190 = vadd.f32 0.0, %v4189
        %v4191 = vpop.f32.mrb[0].mxu0
        %4192 = vmatprep.mubr.f32.mxu0 0.0
        %4193 = vmatmul.mubr.f32.gmra.mrb[0].mxu0 %v3983
        %v4194 = vpop.f32.mrb[0].mxu0
        %v4195 = vadd.f32 0.0, %v4194
        %v4196 = vpop.f32.mrb[0].mxu0
        %4197 = vmatprep.mubr.f32.mxu0 0.0
        %4198 = vmatmul.mubr.f32.gmra.mrb[0].mxu0 %v3986
        %v4199 = vpop.f32.mrb[0].mxu0
        %v4200 = vadd.f32 0.0, %v4199
        %v4201 = vpop.f32.mrb[0].mxu0
        %4202 = vmatprep.mubr.f32.mxu0 0.0
        %4203 = vmatmul.mubr.f32.gmra.mrb[0].mxu0 %v3989
        %v4204 = vpop.f32.mrb[0].mxu0
        %v4205 = vadd.f32 0.0, %v4204
        %v4206 = vpop.f32.mrb[0].mxu0
        %4207 = vmatprep.mubr.f32.mxu0 0.0
        %4208 = vmatmul.mubr.f32.gmra.mrb[0].mxu0 %v3992
        %v4209 = vpop.f32.mrb[0].mxu0
        %v4210 = vadd.f32 0.0, %v4209
        %v4211 = vpop.f32.mrb[0].mxu0
        %4212 = vmatprep.mubr.f32.mxu0 0.0
        %4213 = vmatmul.mubr.f32.gmra.mrb[0].mxu0 %v3995
        %v4214 = vpop.f32.mrb[0].mxu0
        %v4215 = vadd.f32 0.0, %v4214
        %v4216 = vpop.f32.mrb[0].mxu0
        %4217 = vmatprep.mubr.f32.mxu0 0.0
        %4218 = vmatmul.mubr.f32.gmra.mrb[0].mxu0 %v3998
        %v4219 = vpop.f32.mrb[0].mxu0
        %v4220 = vadd.f32 0.0, %v4219
        %v4221 = vpop.f32.mrb[0].mxu0
        %4222 = vmatprep.mubr.f32.mxu0 0.0
        %4223 = vmatmul.mubr.f32.gmra.mrb[0].mxu0 %v4001
        %v4224 = vpop.f32.mrb[0].mxu0
        %v4225 = vadd.f32 0.0, %v4224
        %v4226 = vpop.f32.mrb[0].mxu0
        %4227 = vdwg.mxu0
        %v4228 = vadd.f32 %v3838, %v4070
        %v4229 = vadd.f32 %v3839, %v4075
        %v4230 = vadd.f32 %v3840, %v4080
        %v4231 = vadd.f32 %v3841, %v4085
        %v4232 = vadd.f32 %v3842, %v4090
        %v4233 = vadd.f32 %v3843, %v4095
        %v4234 = vadd.f32 %v3844, %v4100
        %v4235 = vadd.f32 %v3845, %v4105
        %v4236 = vadd.f32 %v3846, %v4110
        %v4237 = vadd.f32 %v3847, %v4115
        %v4238 = vadd.f32 %v3848, %v4120
        %v4239 = vadd.f32 %v3849, %v4125
        %v4240 = vadd.f32 %v3850, %v4130
        %v4241 = vadd.f32 %v3851, %v4135
        %v4242 = vadd.f32 %v3852, %v4140
        %v4243 = vadd.f32 %v3853, %v4145
        %v4244 = vadd.f32 %v3854, %v4150
        %v4245 = vadd.f32 %v3855, %v4155
        %v4246 = vadd.f32 %v3856, %v4160
        %v4247 = vadd.f32 %v3857, %v4165
        %v4248 = vadd.f32 %v3858, %v4170
        %v4249 = vadd.f32 %v3859, %v4175
        %v4250 = vadd.f32 %v3860, %v4180
        %v4251 = vadd.f32 %v3861, %v4185
        %v4252 = vadd.f32 %v3862, %v4190
        %v4253 = vadd.f32 %v3863, %v4195
        %v4254 = vadd.f32 %v3864, %v4200
        %v4255 = vadd.f32 %v3865, %v4205
        %v4256 = vadd.f32 %v3866, %v4210
        %v4257 = vadd.f32 %v3867, %v4215
        %v4258 = vadd.f32 %v3868, %v4220
        %v4259 = vadd.f32 %v3869, %v4225
        %v4260 = vld [vmem:[%s2 + $0x1] sm:$0x1]
        %v4261 = vlaneseq
        %v4262 = vshrl.u32 %v4261, 7
        %v4263 = vsub.s32 0, %v4262
        %v4264 = vrot.slane %v4260, %v4263
        %v4265 = vadd.f32 %v4228, %v4264
        %v4266 = vadd.f32 %v4229, %v4264
        %v4267 = vadd.f32 %v4230, %v4264
        %v4268 = vadd.f32 %v4231, %v4264
        %v4269 = vadd.f32 %v4232, %v4264
        %v4270 = vadd.f32 %v4233, %v4264
        %v4271 = vadd.f32 %v4234, %v4264
        %v4272 = vadd.f32 %v4235, %v4264
        %v4273 = vadd.f32 %v4236, %v4264
        %v4274 = vadd.f32 %v4237, %v4264
        %v4275 = vadd.f32 %v4238, %v4264
        %v4276 = vadd.f32 %v4239, %v4264
        %v4277 = vadd.f32 %v4240, %v4264
        %v4278 = vadd.f32 %v4241, %v4264
        %v4279 = vadd.f32 %v4242, %v4264
        %v4280 = vadd.f32 %v4243, %v4264
        %v4281 = vadd.f32 %v4244, %v4264
        %v4282 = vadd.f32 %v4245, %v4264
        %v4283 = vadd.f32 %v4246, %v4264
        %v4284 = vadd.f32 %v4247, %v4264
        %v4285 = vadd.f32 %v4248, %v4264
        %v4286 = vadd.f32 %v4249, %v4264
        %v4287 = vadd.f32 %v4250, %v4264
        %v4288 = vadd.f32 %v4251, %v4264
        %v4289 = vadd.f32 %v4252, %v4264
        %v4290 = vadd.f32 %v4253, %v4264
        %v4291 = vadd.f32 %v4254, %v4264
        %v4292 = vadd.f32 %v4255, %v4264
        %v4293 = vadd.f32 %v4256, %v4264
        %v4294 = vadd.f32 %v4257, %v4264
        %v4295 = vadd.f32 %v4258, %v4264
        %v4296 = vadd.f32 %v4259, %v4264
        %v4297 = vmax.f32 %v4265, 0.0
        %v4298 = vmax.f32 %v4266, 0.0
        %v4299 = vmax.f32 %v4267, 0.0
        %v4300 = vmax.f32 %v4268, 0.0
        %v4301 = vmax.f32 %v4269, 0.0
        %v4302 = vmax.f32 %v4270, 0.0
        %v4303 = vmax.f32 %v4271, 0.0
        %v4304 = vmax.f32 %v4272, 0.0
        %v4305 = vmax.f32 %v4273, 0.0
        %v4306 = vmax.f32 %v4274, 0.0
        %v4307 = vmax.f32 %v4275, 0.0
        %v4308 = vmax.f32 %v4276, 0.0
        %v4309 = vmax.f32 %v4277, 0.0
        %v4310 = vmax.f32 %v4278, 0.0
        %v4311 = vmax.f32 %v4279, 0.0
        %v4312 = vmax.f32 %v4280, 0.0
        %v4313 = vmax.f32 %v4281, 0.0
        %v4314 = vmax.f32 %v4282, 0.0
        %v4315 = vmax.f32 %v4283, 0.0
        %v4316 = vmax.f32 %v4284, 0.0
        %v4317 = vmax.f32 %v4285, 0.0
        %v4318 = vmax.f32 %v4286, 0.0
        %v4319 = vmax.f32 %v4287, 0.0
        %v4320 = vmax.f32 %v4288, 0.0
        %v4321 = vmax.f32 %v4289, 0.0
        %v4322 = vmax.f32 %v4290, 0.0
        %v4323 = vmax.f32 %v4291, 0.0
        %v4324 = vmax.f32 %v4292, 0.0
        %v4325 = vmax.f32 %v4293, 0.0
        %v4326 = vmax.f32 %v4294, 0.0
        %v4327 = vmax.f32 %v4295, 0.0
        %v4328 = vmax.f32 %v4296, 0.0
        %v4329 = vld [vmem:[#allocation2] sm:$0xff]
        %v4330 = vld [vmem:[#allocation2 + $0x8] sm:$0xff]
        %v4331 = vld [vmem:[#allocation2 + $0x10] sm:$0xff]
        %v4332 = vld [vmem:[#allocation2 + $0x18] sm:$0xff]
        %v4333 = vld [vmem:[#allocation2 + $0x20] sm:$0xff]
        %v4334 = vld [vmem:[#allocation2 + $0x28] sm:$0xff]
        %v4335 = vld [vmem:[#allocation2 + $0x30] sm:$0xff]
        %v4336 = vld [vmem:[#allocation2 + $0x38] sm:$0xff]
        %v4337 = vld [vmem:[#allocation2 + $0x40] sm:$0xff]
        %v4338 = vld [vmem:[#allocation2 + $0x48] sm:$0xff]
        %v4339 = vld [vmem:[#allocation2 + $0x50] sm:$0xff]
        %v4340 = vld [vmem:[#allocation2 + $0x58] sm:$0xff]
        %v4341 = vld [vmem:[#allocation2 + $0x60] sm:$0xff]
        %v4342 = vld [vmem:[#allocation2 + $0x68] sm:$0xff]
        %v4343 = vld [vmem:[#allocation2 + $0x70] sm:$0xff]
        %v4344 = vld [vmem:[#allocation2 + $0x78] sm:$0xff]
        %v4345 = vld [vmem:[#allocation2 + $0x80] sm:$0xff]
        %v4346 = vld [vmem:[#allocation2 + $0x88] sm:$0xff]
        %v4347 = vld [vmem:[#allocation2 + $0x90] sm:$0xff]
        %v4348 = vld [vmem:[#allocation2 + $0x98] sm:$0xff]
        %v4349 = vld [vmem:[#allocation2 + $0xa0] sm:$0xff]
        %v4350 = vld [vmem:[#allocation2 + $0xa8] sm:$0xff]
        %v4351 = vld [vmem:[#allocation2 + $0xb0] sm:$0xff]
        %v4352 = vld [vmem:[#allocation2 + $0xb8] sm:$0xff]
        %v4353 = vld [vmem:[#allocation2 + $0xc0] sm:$0xff]
        %v4354 = vld [vmem:[#allocation2 + $0xc8] sm:$0xff]
        %v4355 = vld [vmem:[#allocation2 + $0xd0] sm:$0xff]
        %v4356 = vld [vmem:[#allocation2 + $0xd8] sm:$0xff]
        %v4357 = vld [vmem:[#allocation2 + $0xe0] sm:$0xff]
        %v4358 = vld [vmem:[#allocation2 + $0xe8] sm:$0xff]
        %v4359 = vld [vmem:[#allocation2 + $0xf0] sm:$0xff]
        %v4360 = vld [vmem:[#allocation2 + $0xf8] sm:$0xff]
        %v4361 = vmax.f32 %v4329, %v4297
        %v4362 = vmax.f32 %v4330, %v4298
        %v4363 = vmax.f32 %v4331, %v4299
        %v4364 = vmax.f32 %v4332, %v4300
        %v4365 = vmax.f32 %v4333, %v4301
        %v4366 = vmax.f32 %v4334, %v4302
        %v4367 = vmax.f32 %v4335, %v4303
        %v4368 = vmax.f32 %v4336, %v4304
        %v4369 = vmax.f32 %v4337, %v4305
        %v4370 = vmax.f32 %v4338, %v4306
        %v4371 = vmax.f32 %v4339, %v4307
        %v4372 = vmax.f32 %v4340, %v4308
        %v4373 = vmax.f32 %v4341, %v4309
        %v4374 = vmax.f32 %v4342, %v4310
        %v4375 = vmax.f32 %v4343, %v4311
        %v4376 = vmax.f32 %v4344, %v4312
        %v4377 = vmax.f32 %v4345, %v4313
        %v4378 = vmax.f32 %v4346, %v4314
        %v4379 = vmax.f32 %v4347, %v4315
        %v4380 = vmax.f32 %v4348, %v4316
        %v4381 = vmax.f32 %v4349, %v4317
        %v4382 = vmax.f32 %v4350, %v4318
        %v4383 = vmax.f32 %v4351, %v4319
        %v4384 = vmax.f32 %v4352, %v4320
        %v4385 = vmax.f32 %v4353, %v4321
        %v4386 = vmax.f32 %v4354, %v4322
        %v4387 = vmax.f32 %v4355, %v4323
        %v4388 = vmax.f32 %v4356, %v4324
        %v4389 = vmax.f32 %v4357, %v4325
        %v4390 = vmax.f32 %v4358, %v4326
        %v4391 = vmax.f32 %v4359, %v4327
        %v4392 = vmax.f32 %v4360, %v4328
        %4393 = vst [vmem:[#allocation2] sm:$0xff] %v4361
        %4394 = vst [vmem:[#allocation2 + $0x8] sm:$0xff] %v4362
        %4395 = vst [vmem:[#allocation2 + $0x10] sm:$0xff] %v4363
        %4396 = vst [vmem:[#allocation2 + $0x18] sm:$0xff] %v4364
        %4397 = vst [vmem:[#allocation2 + $0x20] sm:$0xff] %v4365
        %4398 = vst [vmem:[#allocation2 + $0x28] sm:$0xff] %v4366
        %4399 = vst [vmem:[#allocation2 + $0x30] sm:$0xff] %v4367
        %4400 = vst [vmem:[#allocation2 + $0x38] sm:$0xff] %v4368
        %4401 = vst [vmem:[#allocation2 + $0x40] sm:$0xff] %v4369
        %4402 = vst [vmem:[#allocation2 + $0x48] sm:$0xff] %v4370
        %4403 = vst [vmem:[#allocation2 + $0x50] sm:$0xff] %v4371
        %4404 = vst [vmem:[#allocation2 + $0x58] sm:$0xff] %v4372
        %4405 = vst [vmem:[#allocation2 + $0x60] sm:$0xff] %v4373
        %4406 = vst [vmem:[#allocation2 + $0x68] sm:$0xff] %v4374
        %4407 = vst [vmem:[#allocation2 + $0x70] sm:$0xff] %v4375
        %4408 = vst [vmem:[#allocation2 + $0x78] sm:$0xff] %v4376
        %4409 = vst [vmem:[#allocation2 + $0x80] sm:$0xff] %v4377
        %4410 = vst [vmem:[#allocation2 + $0x88] sm:$0xff] %v4378
        %4411 = vst [vmem:[#allocation2 + $0x90] sm:$0xff] %v4379
        %4412 = vst [vmem:[#allocation2 + $0x98] sm:$0xff] %v4380
        %4413 = vst [vmem:[#allocation2 + $0xa0] sm:$0xff] %v4381
        %4414 = vst [vmem:[#allocation2 + $0xa8] sm:$0xff] %v4382
        %4415 = vst [vmem:[#allocation2 + $0xb0] sm:$0xff] %v4383
        %4416 = vst [vmem:[#allocation2 + $0xb8] sm:$0xff] %v4384
        %4417 = vst [vmem:[#allocation2 + $0xc0] sm:$0xff] %v4385
        %4418 = vst [vmem:[#allocation2 + $0xc8] sm:$0xff] %v4386
        %4419 = vst [vmem:[#allocation2 + $0xd0] sm:$0xff] %v4387
        %4420 = vst [vmem:[#allocation2 + $0xd8] sm:$0xff] %v4388
        %4421 = vst [vmem:[#allocation2 + $0xe0] sm:$0xff] %v4389
        %4422 = vst [vmem:[#allocation2 + $0xe8] sm:$0xff] %v4390
        %4423 = vst [vmem:[#allocation2 + $0xf0] sm:$0xff] %v4391
        %4424 = vst [vmem:[#allocation2 + $0xf8] sm:$0xff] %v4392
        %v4425 = vld [vmem:[#allocation2] ss:$2 sm:$0xff]
        %s4426 = scalar_lea.vmem [#allocation2], 16
        %v4427 = vld [vmem:[%s4426] ss:$2 sm:$0xff]
        %s4428 = scalar_lea.vmem [#allocation2], 32
        %v4429 = vld [vmem:[%s4428] ss:$2 sm:$0xff]
        %s4430 = scalar_lea.vmem [#allocation2], 48
        %v4431 = vld [vmem:[%s4430] ss:$2 sm:$0xff]
        %s4432 = scalar_lea.vmem [#allocation2], 64
        %v4433 = vld [vmem:[%s4432] ss:$2 sm:$0xff]
        %s4434 = scalar_lea.vmem [#allocation2], 80
        %v4435 = vld [vmem:[%s4434] ss:$2 sm:$0xff]
        %s4436 = scalar_lea.vmem [#allocation2], 96
        %v4437 = vld [vmem:[%s4436] ss:$2 sm:$0xff]
        %s4438 = scalar_lea.vmem [#allocation2], 112
        %v4439 = vld [vmem:[%s4438] ss:$2 sm:$0xff]
        %s4440 = scalar_lea.vmem [#allocation2], 128
        %v4441 = vld [vmem:[%s4440] ss:$2 sm:$0xff]
        %s4442 = scalar_lea.vmem [#allocation2], 144
        %v4443 = vld [vmem:[%s4442] ss:$2 sm:$0xff]
        %s4444 = scalar_lea.vmem [#allocation2], 160
        %v4445 = vld [vmem:[%s4444] ss:$2 sm:$0xff]
        %s4446 = scalar_lea.vmem [#allocation2], 176
        %v4447 = vld [vmem:[%s4446] ss:$2 sm:$0xff]
        %s4448 = scalar_lea.vmem [#allocation2], 192
        %v4449 = vld [vmem:[%s4448] ss:$2 sm:$0xff]
        %s4450 = scalar_lea.vmem [#allocation2], 208
        %v4451 = vld [vmem:[%s4450] ss:$2 sm:$0xff]
        %s4452 = scalar_lea.vmem [#allocation2], 224
        %v4453 = vld [vmem:[%s4452] ss:$2 sm:$0xff]
        %s4454 = scalar_lea.vmem [#allocation2], 240
        %v4455 = vld [vmem:[%s4454] ss:$2 sm:$0xff]
        %s4456 = scalar_lea.vmem [#allocation2], 1
        %v4457 = vld [vmem:[%s4456] ss:$2 sm:$0xff]
        %s4458 = scalar_lea.vmem [#allocation2], 17
        %v4459 = vld [vmem:[%s4458] ss:$2 sm:$0xff]
        %s4460 = scalar_lea.vmem [#allocation2], 33
        %v4461 = vld [vmem:[%s4460] ss:$2 sm:$0xff]
        %s4462 = scalar_lea.vmem [#allocation2], 49
        %v4463 = vld [vmem:[%s4462] ss:$2 sm:$0xff]
        %s4464 = scalar_lea.vmem [#allocation2], 65
        %v4465 = vld [vmem:[%s4464] ss:$2 sm:$0xff]
        %s4466 = scalar_lea.vmem [#allocation2], 81
        %v4467 = vld [vmem:[%s4466] ss:$2 sm:$0xff]
        %s4468 = scalar_lea.vmem [#allocation2], 97
        %v4469 = vld [vmem:[%s4468] ss:$2 sm:$0xff]
        %s4470 = scalar_lea.vmem [#allocation2], 113
        %v4471 = vld [vmem:[%s4470] ss:$2 sm:$0xff]
        %s4472 = scalar_lea.vmem [#allocation2], 129
        %v4473 = vld [vmem:[%s4472] ss:$2 sm:$0xff]
        %s4474 = scalar_lea.vmem [#allocation2], 145
        %v4475 = vld [vmem:[%s4474] ss:$2 sm:$0xff]
        %s4476 = scalar_lea.vmem [#allocation2], 161
        %v4477 = vld [vmem:[%s4476] ss:$2 sm:$0xff]
        %s4478 = scalar_lea.vmem [#allocation2], 177
        %v4479 = vld [vmem:[%s4478] ss:$2 sm:$0xff]
        %s4480 = scalar_lea.vmem [#allocation2], 193
        %v4481 = vld [vmem:[%s4480] ss:$2 sm:$0xff]
        %s4482 = scalar_lea.vmem [#allocation2], 209
        %v4483 = vld [vmem:[%s4482] ss:$2 sm:$0xff]
        %s4484 = scalar_lea.vmem [#allocation2], 225
        %v4485 = vld [vmem:[%s4484] ss:$2 sm:$0xff]
        %s4486 = scalar_lea.vmem [#allocation2], 241
        %v4487 = vld [vmem:[%s4486] ss:$2 sm:$0xff]
        %v4488 = vmax.f32 %v4425, %v4457
        %v4489 = vmax.f32 %v4427, %v4459
        %v4490 = vmax.f32 %v4429, %v4461
        %v4491 = vmax.f32 %v4431, %v4463
        %v4492 = vmax.f32 %v4433, %v4465
        %v4493 = vmax.f32 %v4435, %v4467
        %v4494 = vmax.f32 %v4437, %v4469
        %v4495 = vmax.f32 %v4439, %v4471
        %v4496 = vmax.f32 %v4441, %v4473
        %v4497 = vmax.f32 %v4443, %v4475
        %v4498 = vmax.f32 %v4445, %v4477
        %v4499 = vmax.f32 %v4447, %v4479
        %v4500 = vmax.f32 %v4449, %v4481
        %v4501 = vmax.f32 %v4451, %v4483
        %v4502 = vmax.f32 %v4453, %v4485
        %v4503 = vmax.f32 %v4455, %v4487
        %v4504 = vld [vmem:[%s3] sm:$0xff]
        %v4505 = vld [vmem:[%s3 + $0x8] sm:$0xff]
        %v4506 = vld [vmem:[%s3 + $0x10] sm:$0xff]
        %v4507 = vld [vmem:[%s3 + $0x18] sm:$0xff]
        %v4508 = vld [vmem:[%s3 + $0x20] sm:$0xff]
        %v4509 = vld [vmem:[%s3 + $0x28] sm:$0xff]
        %v4510 = vld [vmem:[%s3 + $0x30] sm:$0xff]
        %v4511 = vld [vmem:[%s3 + $0x38] sm:$0xff]
        %v4512 = vld [vmem:[%s3 + $0x40] sm:$0xff]
        %v4513 = vld [vmem:[%s3 + $0x48] sm:$0xff]
        %v4514 = vld [vmem:[%s3 + $0x50] sm:$0xff]
        %v4515 = vld [vmem:[%s3 + $0x58] sm:$0xff]
        %v4516 = vld [vmem:[%s3 + $0x60] sm:$0xff]
        %v4517 = vld [vmem:[%s3 + $0x68] sm:$0xff]
        %v4518 = vld [vmem:[%s3 + $0x70] sm:$0xff]
        %v4519 = vld [vmem:[%s3 + $0x78] sm:$0xff]
        %s4520 = scalar_lea.vmem %s3, 128
        %v4521 = vld [vmem:[%s4520] sm:$0xff]
        %v4522 = vld [vmem:[%s4520 + $0x8] sm:$0xff]
        %v4523 = vld [vmem:[%s4520 + $0x10] sm:$0xff]
        %v4524 = vld [vmem:[%s4520 + $0x18] sm:$0xff]
        %v4525 = vld [vmem:[%s4520 + $0x20] sm:$0xff]
        %v4526 = vld [vmem:[%s4520 + $0x28] sm:$0xff]
        %v4527 = vld [vmem:[%s4520 + $0x30] sm:$0xff]
        %v4528 = vld [vmem:[%s4520 + $0x38] sm:$0xff]
        %v4529 = vld [vmem:[%s4520 + $0x40] sm:$0xff]
        %v4530 = vld [vmem:[%s4520 + $0x48] sm:$0xff]
        %v4531 = vld [vmem:[%s4520 + $0x50] sm:$0xff]
        %v4532 = vld [vmem:[%s4520 + $0x58] sm:$0xff]
        %v4533 = vld [vmem:[%s4520 + $0x60] sm:$0xff]
        %v4534 = vld [vmem:[%s4520 + $0x68] sm:$0xff]
        %v4535 = vld [vmem:[%s4520 + $0x70] sm:$0xff]
        %v4536 = vld [vmem:[%s4520 + $0x78] sm:$0xff]
        %vm4553 = vcmask 1046528
        %v4554 = vrot.slane %v4488, 1
        %v4555 = vrot.slane %v4489, 1
        %v4556 = vsel %vm4553, %v4554, %v4555
        %v4557 = vrot.slane %v4490, 1
        %v4558 = vsel %vm4553, %v4555, %v4557
        %v4559 = vrot.slane %v4491, 1
        %v4560 = vsel %vm4553, %v4557, %v4559
        %v4561 = vrot.slane %v4492, 1
        %v4562 = vsel %vm4553, %v4559, %v4561
        %v4563 = vrot.slane %v4493, 1
        %v4564 = vsel %vm4553, %v4561, %v4563
        %v4565 = vrot.slane %v4494, 1
        %v4566 = vsel %vm4553, %v4563, %v4565
        %v4567 = vrot.slane %v4495, 1
        %v4568 = vsel %vm4553, %v4565, %v4567
        %v4569 = vrot.slane %v4496, 1
        %v4570 = vsel %vm4553, %v4567, %v4569
        %v4571 = vrot.slane %v4497, 1
        %v4572 = vsel %vm4553, %v4569, %v4571
        %v4573 = vrot.slane %v4498, 1
        %v4574 = vsel %vm4553, %v4571, %v4573
        %v4575 = vrot.slane %v4499, 1
        %v4576 = vsel %vm4553, %v4573, %v4575
        %v4577 = vrot.slane %v4500, 1
        %v4578 = vsel %vm4553, %v4575, %v4577
        %v4579 = vrot.slane %v4501, 1
        %v4580 = vsel %vm4553, %v4577, %v4579
        %v4581 = vrot.slane %v4502, 1
        %v4582 = vsel %vm4553, %v4579, %v4581
        %v4583 = vrot.slane %v4503, 1
        %v4584 = vsel %vm4553, %v4581, %v4583
        %4601 = vmatprep.subr.mxu0 0.0
        %4602 = vmatpush1.msra.mxu0 %v4521
        %4603 = vmatprep.subr.mxu0 0.0
        %4604 = vmatpush1.msra.mxu0 %v4522
        %4605 = vmatprep.subr.mxu0 0.0
        %4606 = vmatpush1.msra.mxu0 %v4523
        %4607 = vmatprep.subr.mxu0 0.0
        %4608 = vmatpush1.msra.mxu0 %v4524
        %4609 = vmatprep.subr.mxu0 0.0
        %4610 = vmatpush1.msra.mxu0 %v4525
        %4611 = vmatprep.subr.mxu0 0.0
        %4612 = vmatpush1.msra.mxu0 %v4526
        %4613 = vmatprep.subr.mxu0 0.0
        %4614 = vmatpush1.msra.mxu0 %v4527
        %4615 = vmatprep.subr.mxu0 0.0
        %4616 = vmatpush1.msra.mxu0 %v4528
        %4617 = vmatprep.subr.mxu0 0.0
        %4618 = vmatpush1.msra.mxu0 %v4529
        %4619 = vmatprep.subr.mxu0 0.0
        %4620 = vmatpush1.msra.mxu0 %v4530
        %4621 = vmatprep.subr.mxu0 0.0
        %4622 = vmatpush1.msra.mxu0 %v4531
        %4623 = vmatprep.subr.mxu0 0.0
        %4624 = vmatpush1.msra.mxu0 %v4532
        %4625 = vmatprep.subr.mxu0 0.0
        %4626 = vmatpush1.msra.mxu0 %v4533
        %4627 = vmatprep.subr.mxu0 0.0
        %4628 = vmatpush1.msra.mxu0 %v4534
        %4629 = vmatprep.subr.mxu0 0.0
        %4630 = vmatpush1.msra.mxu0 %v4535
        %4631 = vmatprep.subr.mxu0 0.0
        %4632 = vmatpush1.msra.mxu0 %v4536
        %4633 = vmatprep.subr.mxu0 0.0
        %4634 = vmatpush1.msra.mxu0 0.0
        %4635 = vmatprep.subr.mxu0 0.0
        %4636 = vmatpush1.msra.mxu0 0.0
        %4637 = vmatprep.subr.mxu0 0.0
        %4638 = vmatpush1.msra.mxu0 0.0
        %4639 = vmatprep.subr.mxu0 0.0
        %4640 = vmatpush1.msra.mxu0 0.0
        %4641 = vmatprep.subr.mxu0 0.0
        %4642 = vmatpush1.msra.mxu0 0.0
        %4643 = vmatprep.subr.mxu0 0.0
        %4644 = vmatpush1.msra.mxu0 0.0
        %4645 = vmatprep.subr.mxu0 0.0
        %4646 = vmatpush1.msra.mxu0 0.0
        %4647 = vmatprep.subr.mxu0 0.0
        %4648 = vmatpush1.msra.mxu0 0.0
        %4649 = vmatprep.subr.mxu0 0.0
        %4650 = vmatpush1.msra.mxu0 0.0
        %4651 = vmatprep.subr.mxu0 0.0
        %4652 = vmatpush1.msra.mxu0 0.0
        %4653 = vmatprep.subr.mxu0 0.0
        %4654 = vmatpush1.msra.mxu0 0.0
        %4655 = vmatprep.subr.mxu0 0.0
        %4656 = vmatpush1.msra.mxu0 0.0
        %4657 = vmatprep.subr.mxu0 0.0
        %4658 = vmatpush1.msra.mxu0 0.0
        %4659 = vmatprep.subr.mxu0 0.0
        %4660 = vmatpush1.msra.mxu0 0.0
        %4661 = vmatprep.subr.mxu0 0.0
        %4662 = vmatpush1.msra.mxu0 0.0
        %4663 = vmatprep.subr.mxu0 0.0
        %4664 = vmatpush1.msra.mxu0 0.0
        %4665 = vmatprep.mubr.f32.mxu0 0.0
        %4666 = vmatmul.mubr.f32.gmra.mrb[0].mxu0 %v4556
        %v4667 = vpop.f32.mrb[0].mxu0
        %v4668 = vadd.f32 0.0, %v4667
        %v4669 = vpop.f32.mrb[0].mxu0
        %4670 = vmatprep.mubr.f32.mxu0 0.0
        %4671 = vmatmul.mubr.f32.gmra.mrb[0].mxu0 %v4558
        %v4672 = vpop.f32.mrb[0].mxu0
        %v4673 = vadd.f32 0.0, %v4672
        %v4674 = vpop.f32.mrb[0].mxu0
        %4675 = vmatprep.mubr.f32.mxu0 0.0
        %4676 = vmatmul.mubr.f32.gmra.mrb[0].mxu0 %v4560
        %v4677 = vpop.f32.mrb[0].mxu0
        %v4678 = vadd.f32 0.0, %v4677
        %v4679 = vpop.f32.mrb[0].mxu0
        %4680 = vmatprep.mubr.f32.mxu0 0.0
        %4681 = vmatmul.mubr.f32.gmra.mrb[0].mxu0 %v4562
        %v4682 = vpop.f32.mrb[0].mxu0
        %v4683 = vadd.f32 0.0, %v4682
        %v4684 = vpop.f32.mrb[0].mxu0
        %4685 = vmatprep.mubr.f32.mxu0 0.0
        %4686 = vmatmul.mubr.f32.gmra.mrb[0].mxu0 %v4564
        %v4687 = vpop.f32.mrb[0].mxu0
        %v4688 = vadd.f32 0.0, %v4687
        %v4689 = vpop.f32.mrb[0].mxu0
        %4690 = vmatprep.mubr.f32.mxu0 0.0
        %4691 = vmatmul.mubr.f32.gmra.mrb[0].mxu0 %v4566
        %v4692 = vpop.f32.mrb[0].mxu0
        %v4693 = vadd.f32 0.0, %v4692
        %v4694 = vpop.f32.mrb[0].mxu0
        %4695 = vmatprep.mubr.f32.mxu0 0.0
        %4696 = vmatmul.mubr.f32.gmra.mrb[0].mxu0 %v4568
        %v4697 = vpop.f32.mrb[0].mxu0
        %v4698 = vadd.f32 0.0, %v4697
        %v4699 = vpop.f32.mrb[0].mxu0
        %4700 = vmatprep.mubr.f32.mxu0 0.0
        %4701 = vmatmul.mubr.f32.gmra.mrb[0].mxu0 %v4570
        %v4702 = vpop.f32.mrb[0].mxu0
        %v4703 = vadd.f32 0.0, %v4702
        %v4704 = vpop.f32.mrb[0].mxu0
        %4705 = vmatprep.mubr.f32.mxu0 0.0
        %4706 = vmatmul.mubr.f32.gmra.mrb[0].mxu0 %v4572
        %v4707 = vpop.f32.mrb[0].mxu0
        %v4708 = vadd.f32 0.0, %v4707
        %v4709 = vpop.f32.mrb[0].mxu0
        %4710 = vmatprep.mubr.f32.mxu0 0.0
        %4711 = vmatmul.mubr.f32.gmra.mrb[0].mxu0 %v4574
        %v4712 = vpop.f32.mrb[0].mxu0
        %v4713 = vadd.f32 0.0, %v4712
        %v4714 = vpop.f32.mrb[0].mxu0
        %4715 = vmatprep.mubr.f32.mxu0 0.0
        %4716 = vmatmul.mubr.f32.gmra.mrb[0].mxu0 %v4576
        %v4717 = vpop.f32.mrb[0].mxu0
        %v4718 = vadd.f32 0.0, %v4717
        %v4719 = vpop.f32.mrb[0].mxu0
        %4720 = vmatprep.mubr.f32.mxu0 0.0
        %4721 = vmatmul.mubr.f32.gmra.mrb[0].mxu0 %v4578
        %v4722 = vpop.f32.mrb[0].mxu0
        %v4723 = vadd.f32 0.0, %v4722
        %v4724 = vpop.f32.mrb[0].mxu0
        %4725 = vmatprep.mubr.f32.mxu0 0.0
        %4726 = vmatmul.mubr.f32.gmra.mrb[0].mxu0 %v4580
        %v4727 = vpop.f32.mrb[0].mxu0
        %v4728 = vadd.f32 0.0, %v4727
        %v4729 = vpop.f32.mrb[0].mxu0
        %4730 = vmatprep.mubr.f32.mxu0 0.0
        %4731 = vmatmul.mubr.f32.gmra.mrb[0].mxu0 %v4582
        %v4732 = vpop.f32.mrb[0].mxu0
        %v4733 = vadd.f32 0.0, %v4732
        %v4734 = vpop.f32.mrb[0].mxu0
        %4735 = vmatprep.mubr.f32.mxu0 0.0
        %4736 = vmatmul.mubr.f32.gmra.mrb[0].mxu0 %v4584
        %v4737 = vpop.f32.mrb[0].mxu0
        %v4738 = vadd.f32 0.0, %v4737
        %v4739 = vpop.f32.mrb[0].mxu0
        %4740 = vmatprep.mubr.f32.mxu0 0.0
        %4741 = vmatmul.mubr.f32.gmra.mrb[0].mxu0 %v4583
        %v4742 = vpop.f32.mrb[0].mxu0
        %v4743 = vadd.f32 0.0, %v4742
        %v4744 = vpop.f32.mrb[0].mxu0
        %4745 = vdwg.mxu0
        %4746 = vmatprep.subr.mxu0 0.0
        %4747 = vmatpush1.msra.mxu0 %v4504
        %4748 = vmatprep.subr.mxu0 0.0
        %4749 = vmatpush1.msra.mxu0 %v4505
        %4750 = vmatprep.subr.mxu0 0.0
        %4751 = vmatpush1.msra.mxu0 %v4506
        %4752 = vmatprep.subr.mxu0 0.0
        %4753 = vmatpush1.msra.mxu0 %v4507
        %4754 = vmatprep.subr.mxu0 0.0
        %4755 = vmatpush1.msra.mxu0 %v4508
        %4756 = vmatprep.subr.mxu0 0.0
        %4757 = vmatpush1.msra.mxu0 %v4509
        %4758 = vmatprep.subr.mxu0 0.0
        %4759 = vmatpush1.msra.mxu0 %v4510
        %4760 = vmatprep.subr.mxu0 0.0
        %4761 = vmatpush1.msra.mxu0 %v4511
        %4762 = vmatprep.subr.mxu0 0.0
        %4763 = vmatpush1.msra.mxu0 %v4512
        %4764 = vmatprep.subr.mxu0 0.0
        %4765 = vmatpush1.msra.mxu0 %v4513
        %4766 = vmatprep.subr.mxu0 0.0
        %4767 = vmatpush1.msra.mxu0 %v4514
        %4768 = vmatprep.subr.mxu0 0.0
        %4769 = vmatpush1.msra.mxu0 %v4515
        %4770 = vmatprep.subr.mxu0 0.0
        %4771 = vmatpush1.msra.mxu0 %v4516
        %4772 = vmatprep.subr.mxu0 0.0
        %4773 = vmatpush1.msra.mxu0 %v4517
        %4774 = vmatprep.subr.mxu0 0.0
        %4775 = vmatpush1.msra.mxu0 %v4518
        %4776 = vmatprep.subr.mxu0 0.0
        %4777 = vmatpush1.msra.mxu0 %v4519
        %4778 = vmatprep.subr.mxu0 0.0
        %4779 = vmatpush1.msra.mxu0 0.0
        %4780 = vmatprep.subr.mxu0 0.0
        %4781 = vmatpush1.msra.mxu0 0.0
        %4782 = vmatprep.subr.mxu0 0.0
        %4783 = vmatpush1.msra.mxu0 0.0
        %4784 = vmatprep.subr.mxu0 0.0
        %4785 = vmatpush1.msra.mxu0 0.0
        %4786 = vmatprep.subr.mxu0 0.0
        %4787 = vmatpush1.msra.mxu0 0.0
        %4788 = vmatprep.subr.mxu0 0.0
        %4789 = vmatpush1.msra.mxu0 0.0
        %4790 = vmatprep.subr.mxu0 0.0
        %4791 = vmatpush1.msra.mxu0 0.0
        %4792 = vmatprep.subr.mxu0 0.0
        %4793 = vmatpush1.msra.mxu0 0.0
        %4794 = vmatprep.subr.mxu0 0.0
        %4795 = vmatpush1.msra.mxu0 0.0
        %4796 = vmatprep.subr.mxu0 0.0
        %4797 = vmatpush1.msra.mxu0 0.0
        %4798 = vmatprep.subr.mxu0 0.0
        %4799 = vmatpush1.msra.mxu0 0.0
        %4800 = vmatprep.subr.mxu0 0.0
        %4801 = vmatpush1.msra.mxu0 0.0
        %4802 = vmatprep.subr.mxu0 0.0
        %4803 = vmatpush1.msra.mxu0 0.0
        %4804 = vmatprep.subr.mxu0 0.0
        %4805 = vmatpush1.msra.mxu0 0.0
        %4806 = vmatprep.subr.mxu0 0.0
        %4807 = vmatpush1.msra.mxu0 0.0
        %4808 = vmatprep.subr.mxu0 0.0
        %4809 = vmatpush1.msra.mxu0 0.0
        %4810 = vmatprep.mubr.f32.mxu0 0.0
        %4811 = vmatmul.mubr.f32.gmra.mrb[0].mxu0 %v4488
        %v4812 = vpop.f32.mrb[0].mxu0
        %v4813 = vadd.f32 %v4668, %v4812
        %v4814 = vpop.f32.mrb[0].mxu0
        %4815 = vmatprep.mubr.f32.mxu0 0.0
        %4816 = vmatmul.mubr.f32.gmra.mrb[0].mxu0 %v4489
        %v4817 = vpop.f32.mrb[0].mxu0
        %v4818 = vadd.f32 %v4673, %v4817
        %v4819 = vpop.f32.mrb[0].mxu0
        %4820 = vmatprep.mubr.f32.mxu0 0.0
        %4821 = vmatmul.mubr.f32.gmra.mrb[0].mxu0 %v4490
        %v4822 = vpop.f32.mrb[0].mxu0
        %v4823 = vadd.f32 %v4678, %v4822
        %v4824 = vpop.f32.mrb[0].mxu0
        %4825 = vmatprep.mubr.f32.mxu0 0.0
        %4826 = vmatmul.mubr.f32.gmra.mrb[0].mxu0 %v4491
        %v4827 = vpop.f32.mrb[0].mxu0
        %v4828 = vadd.f32 %v4683, %v4827
        %v4829 = vpop.f32.mrb[0].mxu0
        %4830 = vmatprep.mubr.f32.mxu0 0.0
        %4831 = vmatmul.mubr.f32.gmra.mrb[0].mxu0 %v4492
        %v4832 = vpop.f32.mrb[0].mxu0
        %v4833 = vadd.f32 %v4688, %v4832
        %v4834 = vpop.f32.mrb[0].mxu0
        %4835 = vmatprep.mubr.f32.mxu0 0.0
        %4836 = vmatmul.mubr.f32.gmra.mrb[0].mxu0 %v4493
        %v4837 = vpop.f32.mrb[0].mxu0
        %v4838 = vadd.f32 %v4693, %v4837
        %v4839 = vpop.f32.mrb[0].mxu0
        %4840 = vmatprep.mubr.f32.mxu0 0.0
        %4841 = vmatmul.mubr.f32.gmra.mrb[0].mxu0 %v4494
        %v4842 = vpop.f32.mrb[0].mxu0
        %v4843 = vadd.f32 %v4698, %v4842
        %v4844 = vpop.f32.mrb[0].mxu0
        %4845 = vmatprep.mubr.f32.mxu0 0.0
        %4846 = vmatmul.mubr.f32.gmra.mrb[0].mxu0 %v4495
        %v4847 = vpop.f32.mrb[0].mxu0
        %v4848 = vadd.f32 %v4703, %v4847
        %v4849 = vpop.f32.mrb[0].mxu0
        %4850 = vmatprep.mubr.f32.mxu0 0.0
        %4851 = vmatmul.mubr.f32.gmra.mrb[0].mxu0 %v4496
        %v4852 = vpop.f32.mrb[0].mxu0
        %v4853 = vadd.f32 %v4708, %v4852
        %v4854 = vpop.f32.mrb[0].mxu0
        %4855 = vmatprep.mubr.f32.mxu0 0.0
        %4856 = vmatmul.mubr.f32.gmra.mrb[0].mxu0 %v4497
        %v4857 = vpop.f32.mrb[0].mxu0
        %v4858 = vadd.f32 %v4713, %v4857
        %v4859 = vpop.f32.mrb[0].mxu0
        %4860 = vmatprep.mubr.f32.mxu0 0.0
        %4861 = vmatmul.mubr.f32.gmra.mrb[0].mxu0 %v4498
        %v4862 = vpop.f32.mrb[0].mxu0
        %v4863 = vadd.f32 %v4718, %v4862
        %v4864 = vpop.f32.mrb[0].mxu0
        %4865 = vmatprep.mubr.f32.mxu0 0.0
        %4866 = vmatmul.mubr.f32.gmra.mrb[0].mxu0 %v4499
        %v4867 = vpop.f32.mrb[0].mxu0
        %v4868 = vadd.f32 %v4723, %v4867
        %v4869 = vpop.f32.mrb[0].mxu0
        %4870 = vmatprep.mubr.f32.mxu0 0.0
        %4871 = vmatmul.mubr.f32.gmra.mrb[0].mxu0 %v4500
        %v4872 = vpop.f32.mrb[0].mxu0
        %v4873 = vadd.f32 %v4728, %v4872
        %v4874 = vpop.f32.mrb[0].mxu0
        %4875 = vmatprep.mubr.f32.mxu0 0.0
        %4876 = vmatmul.mubr.f32.gmra.mrb[0].mxu0 %v4501
        %v4877 = vpop.f32.mrb[0].mxu0
        %v4878 = vadd.f32 %v4733, %v4877
        %v4879 = vpop.f32.mrb[0].mxu0
        %4880 = vmatprep.mubr.f32.mxu0 0.0
        %4881 = vmatmul.mubr.f32.gmra.mrb[0].mxu0 %v4502
        %v4882 = vpop.f32.mrb[0].mxu0
        %v4883 = vadd.f32 %v4738, %v4882
        %v4884 = vpop.f32.mrb[0].mxu0
        %4885 = vmatprep.mubr.f32.mxu0 0.0
        %4886 = vmatmul.mubr.f32.gmra.mrb[0].mxu0 %v4503
        %v4887 = vpop.f32.mrb[0].mxu0
        %v4888 = vadd.f32 %v4743, %v4887
        %v4889 = vpop.f32.mrb[0].mxu0
        %4890 = vdwg.mxu0
        %s4891 = scalar_lea.vmem %s3, 256
        %v4892 = vld [vmem:[%s4891] sm:$0xff]
        %v4893 = vld [vmem:[%s4891 + $0x8] sm:$0xff]
        %v4894 = vld [vmem:[%s4891 + $0x10] sm:$0xff]
        %v4895 = vld [vmem:[%s4891 + $0x18] sm:$0xff]
        %v4896 = vld [vmem:[%s4891 + $0x20] sm:$0xff]
        %v4897 = vld [vmem:[%s4891 + $0x28] sm:$0xff]
        %v4898 = vld [vmem:[%s4891 + $0x30] sm:$0xff]
        %v4899 = vld [vmem:[%s4891 + $0x38] sm:$0xff]
        %v4900 = vld [vmem:[%s4891 + $0x40] sm:$0xff]
        %v4901 = vld [vmem:[%s4891 + $0x48] sm:$0xff]
        %v4902 = vld [vmem:[%s4891 + $0x50] sm:$0xff]
        %v4903 = vld [vmem:[%s4891 + $0x58] sm:$0xff]
        %v4904 = vld [vmem:[%s4891 + $0x60] sm:$0xff]
        %v4905 = vld [vmem:[%s4891 + $0x68] sm:$0xff]
        %v4906 = vld [vmem:[%s4891 + $0x70] sm:$0xff]
        %v4907 = vld [vmem:[%s4891 + $0x78] sm:$0xff]
        %vm4908 = vcmask 1045504
        %v4909 = vrot.slane %v4488, 2
        %v4910 = vrot.slane %v4489, 2
        %v4911 = vsel %vm4908, %v4909, %v4910
        %v4912 = vrot.slane %v4490, 2
        %v4913 = vsel %vm4908, %v4910, %v4912
        %v4914 = vrot.slane %v4491, 2
        %v4915 = vsel %vm4908, %v4912, %v4914
        %v4916 = vrot.slane %v4492, 2
        %v4917 = vsel %vm4908, %v4914, %v4916
        %v4918 = vrot.slane %v4493, 2
        %v4919 = vsel %vm4908, %v4916, %v4918
        %v4920 = vrot.slane %v4494, 2
        %v4921 = vsel %vm4908, %v4918, %v4920
        %v4922 = vrot.slane %v4495, 2
        %v4923 = vsel %vm4908, %v4920, %v4922
        %v4924 = vrot.slane %v4496, 2
        %v4925 = vsel %vm4908, %v4922, %v4924
        %v4926 = vrot.slane %v4497, 2
        %v4927 = vsel %vm4908, %v4924, %v4926
        %v4928 = vrot.slane %v4498, 2
        %v4929 = vsel %vm4908, %v4926, %v4928
        %v4930 = vrot.slane %v4499, 2
        %v4931 = vsel %vm4908, %v4928, %v4930
        %v4932 = vrot.slane %v4500, 2
        %v4933 = vsel %vm4908, %v4930, %v4932
        %v4934 = vrot.slane %v4501, 2
        %v4935 = vsel %vm4908, %v4932, %v4934
        %v4936 = vrot.slane %v4502, 2
        %v4937 = vsel %vm4908, %v4934, %v4936
        %v4938 = vrot.slane %v4503, 2
        %v4939 = vsel %vm4908, %v4936, %v4938
        %4956 = vmatprep.subr.mxu0 0.0
        %4957 = vmatpush1.msra.mxu0 %v4892
        %4958 = vmatprep.subr.mxu0 0.0
        %4959 = vmatpush1.msra.mxu0 %v4893
        %4960 = vmatprep.subr.mxu0 0.0
        %4961 = vmatpush1.msra.mxu0 %v4894
        %4962 = vmatprep.subr.mxu0 0.0
        %4963 = vmatpush1.msra.mxu0 %v4895
        %4964 = vmatprep.subr.mxu0 0.0
        %4965 = vmatpush1.msra.mxu0 %v4896
        %4966 = vmatprep.subr.mxu0 0.0
        %4967 = vmatpush1.msra.mxu0 %v4897
        %4968 = vmatprep.subr.mxu0 0.0
        %4969 = vmatpush1.msra.mxu0 %v4898
        %4970 = vmatprep.subr.mxu0 0.0
        %4971 = vmatpush1.msra.mxu0 %v4899
        %4972 = vmatprep.subr.mxu0 0.0
        %4973 = vmatpush1.msra.mxu0 %v4900
        %4974 = vmatprep.subr.mxu0 0.0
        %4975 = vmatpush1.msra.mxu0 %v4901
        %4976 = vmatprep.subr.mxu0 0.0
        %4977 = vmatpush1.msra.mxu0 %v4902
        %4978 = vmatprep.subr.mxu0 0.0
        %4979 = vmatpush1.msra.mxu0 %v4903
        %4980 = vmatprep.subr.mxu0 0.0
        %4981 = vmatpush1.msra.mxu0 %v4904
        %4982 = vmatprep.subr.mxu0 0.0
        %4983 = vmatpush1.msra.mxu0 %v4905
        %4984 = vmatprep.subr.mxu0 0.0
        %4985 = vmatpush1.msra.mxu0 %v4906
        %4986 = vmatprep.subr.mxu0 0.0
        %4987 = vmatpush1.msra.mxu0 %v4907
        %4988 = vmatprep.subr.mxu0 0.0
        %4989 = vmatpush1.msra.mxu0 0.0
        %4990 = vmatprep.subr.mxu0 0.0
        %4991 = vmatpush1.msra.mxu0 0.0
        %4992 = vmatprep.subr.mxu0 0.0
        %4993 = vmatpush1.msra.mxu0 0.0
        %4994 = vmatprep.subr.mxu0 0.0
        %4995 = vmatpush1.msra.mxu0 0.0
        %4996 = vmatprep.subr.mxu0 0.0
        %4997 = vmatpush1.msra.mxu0 0.0
        %4998 = vmatprep.subr.mxu0 0.0
        %4999 = vmatpush1.msra.mxu0 0.0
        %5000 = vmatprep.subr.mxu0 0.0
        %5001 = vmatpush1.msra.mxu0 0.0
        %5002 = vmatprep.subr.mxu0 0.0
        %5003 = vmatpush1.msra.mxu0 0.0
        %5004 = vmatprep.subr.mxu0 0.0
        %5005 = vmatpush1.msra.mxu0 0.0
        %5006 = vmatprep.subr.mxu0 0.0
        %5007 = vmatpush1.msra.mxu0 0.0
        %5008 = vmatprep.subr.mxu0 0.0
        %5009 = vmatpush1.msra.mxu0 0.0
        %5010 = vmatprep.subr.mxu0 0.0
        %5011 = vmatpush1.msra.mxu0 0.0
        %5012 = vmatprep.subr.mxu0 0.0
        %5013 = vmatpush1.msra.mxu0 0.0
        %5014 = vmatprep.subr.mxu0 0.0
        %5015 = vmatpush1.msra.mxu0 0.0
        %5016 = vmatprep.subr.mxu0 0.0
        %5017 = vmatpush1.msra.mxu0 0.0
        %5018 = vmatprep.subr.mxu0 0.0
        %5019 = vmatpush1.msra.mxu0 0.0
        %5020 = vmatprep.mubr.f32.mxu0 0.0
        %5021 = vmatmul.mubr.f32.gmra.mrb[0].mxu0 %v4911
        %v5022 = vpop.f32.mrb[0].mxu0
        %v5023 = vadd.f32 0.0, %v5022
        %v5024 = vpop.f32.mrb[0].mxu0
        %5025 = vmatprep.mubr.f32.mxu0 0.0
        %5026 = vmatmul.mubr.f32.gmra.mrb[0].mxu0 %v4913
        %v5027 = vpop.f32.mrb[0].mxu0
        %v5028 = vadd.f32 0.0, %v5027
        %v5029 = vpop.f32.mrb[0].mxu0
        %5030 = vmatprep.mubr.f32.mxu0 0.0
        %5031 = vmatmul.mubr.f32.gmra.mrb[0].mxu0 %v4915
        %v5032 = vpop.f32.mrb[0].mxu0
        %v5033 = vadd.f32 0.0, %v5032
        %v5034 = vpop.f32.mrb[0].mxu0
        %5035 = vmatprep.mubr.f32.mxu0 0.0
        %5036 = vmatmul.mubr.f32.gmra.mrb[0].mxu0 %v4917
        %v5037 = vpop.f32.mrb[0].mxu0
        %v5038 = vadd.f32 0.0, %v5037
        %v5039 = vpop.f32.mrb[0].mxu0
        %5040 = vmatprep.mubr.f32.mxu0 0.0
        %5041 = vmatmul.mubr.f32.gmra.mrb[0].mxu0 %v4919
        %v5042 = vpop.f32.mrb[0].mxu0
        %v5043 = vadd.f32 0.0, %v5042
        %v5044 = vpop.f32.mrb[0].mxu0
        %5045 = vmatprep.mubr.f32.mxu0 0.0
        %5046 = vmatmul.mubr.f32.gmra.mrb[0].mxu0 %v4921
        %v5047 = vpop.f32.mrb[0].mxu0
        %v5048 = vadd.f32 0.0, %v5047
        %v5049 = vpop.f32.mrb[0].mxu0
        %5050 = vmatprep.mubr.f32.mxu0 0.0
        %5051 = vmatmul.mubr.f32.gmra.mrb[0].mxu0 %v4923
        %v5052 = vpop.f32.mrb[0].mxu0
        %v5053 = vadd.f32 0.0, %v5052
        %v5054 = vpop.f32.mrb[0].mxu0
        %5055 = vmatprep.mubr.f32.mxu0 0.0
        %5056 = vmatmul.mubr.f32.gmra.mrb[0].mxu0 %v4925
        %v5057 = vpop.f32.mrb[0].mxu0
        %v5058 = vadd.f32 0.0, %v5057
        %v5059 = vpop.f32.mrb[0].mxu0
        %5060 = vmatprep.mubr.f32.mxu0 0.0
        %5061 = vmatmul.mubr.f32.gmra.mrb[0].mxu0 %v4927
        %v5062 = vpop.f32.mrb[0].mxu0
        %v5063 = vadd.f32 0.0, %v5062
        %v5064 = vpop.f32.mrb[0].mxu0
        %5065 = vmatprep.mubr.f32.mxu0 0.0
        %5066 = vmatmul.mubr.f32.gmra.mrb[0].mxu0 %v4929
        %v5067 = vpop.f32.mrb[0].mxu0
        %v5068 = vadd.f32 0.0, %v5067
        %v5069 = vpop.f32.mrb[0].mxu0
        %5070 = vmatprep.mubr.f32.mxu0 0.0
        %5071 = vmatmul.mubr.f32.gmra.mrb[0].mxu0 %v4931
        %v5072 = vpop.f32.mrb[0].mxu0
        %v5073 = vadd.f32 0.0, %v5072
        %v5074 = vpop.f32.mrb[0].mxu0
        %5075 = vmatprep.mubr.f32.mxu0 0.0
        %5076 = vmatmul.mubr.f32.gmra.mrb[0].mxu0 %v4933
        %v5077 = vpop.f32.mrb[0].mxu0
        %v5078 = vadd.f32 0.0, %v5077
        %v5079 = vpop.f32.mrb[0].mxu0
        %5080 = vmatprep.mubr.f32.mxu0 0.0
        %5081 = vmatmul.mubr.f32.gmra.mrb[0].mxu0 %v4935
        %v5082 = vpop.f32.mrb[0].mxu0
        %v5083 = vadd.f32 0.0, %v5082
        %v5084 = vpop.f32.mrb[0].mxu0
        %5085 = vmatprep.mubr.f32.mxu0 0.0
        %5086 = vmatmul.mubr.f32.gmra.mrb[0].mxu0 %v4937
        %v5087 = vpop.f32.mrb[0].mxu0
        %v5088 = vadd.f32 0.0, %v5087
        %v5089 = vpop.f32.mrb[0].mxu0
        %5090 = vmatprep.mubr.f32.mxu0 0.0
        %5091 = vmatmul.mubr.f32.gmra.mrb[0].mxu0 %v4939
        %v5092 = vpop.f32.mrb[0].mxu0
        %v5093 = vadd.f32 0.0, %v5092
        %v5094 = vpop.f32.mrb[0].mxu0
        %5095 = vmatprep.mubr.f32.mxu0 0.0
        %5096 = vmatmul.mubr.f32.gmra.mrb[0].mxu0 %v4938
        %v5097 = vpop.f32.mrb[0].mxu0
        %v5098 = vadd.f32 0.0, %v5097
        %v5099 = vpop.f32.mrb[0].mxu0
        %5100 = vdwg.mxu0
        %v5101 = vadd.f32 %v4813, %v5023
        %v5102 = vadd.f32 %v4818, %v5028
        %v5103 = vadd.f32 %v4823, %v5033
        %v5104 = vadd.f32 %v4828, %v5038
        %v5105 = vadd.f32 %v4833, %v5043
        %v5106 = vadd.f32 %v4838, %v5048
        %v5107 = vadd.f32 %v4843, %v5053
        %v5108 = vadd.f32 %v4848, %v5058
        %v5109 = vadd.f32 %v4853, %v5063
        %v5110 = vadd.f32 %v4858, %v5068
        %v5111 = vadd.f32 %v4863, %v5073
        %v5112 = vadd.f32 %v4868, %v5078
        %v5113 = vadd.f32 %v4873, %v5083
        %v5114 = vadd.f32 %v4878, %v5088
        %v5115 = vadd.f32 %v4883, %v5093
        %v5116 = vadd.f32 %v4888, %v5098
        %s5117 = scalar_lea.vmem %s3, 384
        %v5118 = vld [vmem:[%s5117] sm:$0xff]
        %v5119 = vld [vmem:[%s5117 + $0x8] sm:$0xff]
        %v5120 = vld [vmem:[%s5117 + $0x10] sm:$0xff]
        %v5121 = vld [vmem:[%s5117 + $0x18] sm:$0xff]
        %v5122 = vld [vmem:[%s5117 + $0x20] sm:$0xff]
        %v5123 = vld [vmem:[%s5117 + $0x28] sm:$0xff]
        %v5124 = vld [vmem:[%s5117 + $0x30] sm:$0xff]
        %v5125 = vld [vmem:[%s5117 + $0x38] sm:$0xff]
        %v5126 = vld [vmem:[%s5117 + $0x40] sm:$0xff]
        %v5127 = vld [vmem:[%s5117 + $0x48] sm:$0xff]
        %v5128 = vld [vmem:[%s5117 + $0x50] sm:$0xff]
        %v5129 = vld [vmem:[%s5117 + $0x58] sm:$0xff]
        %v5130 = vld [vmem:[%s5117 + $0x60] sm:$0xff]
        %v5131 = vld [vmem:[%s5117 + $0x68] sm:$0xff]
        %v5132 = vld [vmem:[%s5117 + $0x70] sm:$0xff]
        %v5133 = vld [vmem:[%s5117 + $0x78] sm:$0xff]
        %vm5134 = vcmask 1044480
        %v5135 = vrot.slane %v4488, 3
        %v5136 = vrot.slane %v4489, 3
        %v5137 = vsel %vm5134, %v5135, %v5136
        %v5138 = vrot.slane %v4490, 3
        %v5139 = vsel %vm5134, %v5136, %v5138
        %v5140 = vrot.slane %v4491, 3
        %v5141 = vsel %vm5134, %v5138, %v5140
        %v5142 = vrot.slane %v4492, 3
        %v5143 = vsel %vm5134, %v5140, %v5142
        %v5144 = vrot.slane %v4493, 3
        %v5145 = vsel %vm5134, %v5142, %v5144
        %v5146 = vrot.slane %v4494, 3
        %v5147 = vsel %vm5134, %v5144, %v5146
        %v5148 = vrot.slane %v4495, 3
        %v5149 = vsel %vm5134, %v5146, %v5148
        %v5150 = vrot.slane %v4496, 3
        %v5151 = vsel %vm5134, %v5148, %v5150
        %v5152 = vrot.slane %v4497, 3
        %v5153 = vsel %vm5134, %v5150, %v5152
        %v5154 = vrot.slane %v4498, 3
        %v5155 = vsel %vm5134, %v5152, %v5154
        %v5156 = vrot.slane %v4499, 3
        %v5157 = vsel %vm5134, %v5154, %v5156
        %v5158 = vrot.slane %v4500, 3
        %v5159 = vsel %vm5134, %v5156, %v5158
        %v5160 = vrot.slane %v4501, 3
        %v5161 = vsel %vm5134, %v5158, %v5160
        %v5162 = vrot.slane %v4502, 3
        %v5163 = vsel %vm5134, %v5160, %v5162
        %v5164 = vrot.slane %v4503, 3
        %v5165 = vsel %vm5134, %v5162, %v5164
        %5182 = vmatprep.subr.mxu0 0.0
        %5183 = vmatpush1.msra.mxu0 %v5118
        %5184 = vmatprep.subr.mxu0 0.0
        %5185 = vmatpush1.msra.mxu0 %v5119
        %5186 = vmatprep.subr.mxu0 0.0
        %5187 = vmatpush1.msra.mxu0 %v5120
        %5188 = vmatprep.subr.mxu0 0.0
        %5189 = vmatpush1.msra.mxu0 %v5121
        %5190 = vmatprep.subr.mxu0 0.0
        %5191 = vmatpush1.msra.mxu0 %v5122
        %5192 = vmatprep.subr.mxu0 0.0
        %5193 = vmatpush1.msra.mxu0 %v5123
        %5194 = vmatprep.subr.mxu0 0.0
        %5195 = vmatpush1.msra.mxu0 %v5124
        %5196 = vmatprep.subr.mxu0 0.0
        %5197 = vmatpush1.msra.mxu0 %v5125
        %5198 = vmatprep.subr.mxu0 0.0
        %5199 = vmatpush1.msra.mxu0 %v5126
        %5200 = vmatprep.subr.mxu0 0.0
        %5201 = vmatpush1.msra.mxu0 %v5127
        %5202 = vmatprep.subr.mxu0 0.0
        %5203 = vmatpush1.msra.mxu0 %v5128
        %5204 = vmatprep.subr.mxu0 0.0
        %5205 = vmatpush1.msra.mxu0 %v5129
        %5206 = vmatprep.subr.mxu0 0.0
        %5207 = vmatpush1.msra.mxu0 %v5130
        %5208 = vmatprep.subr.mxu0 0.0
        %5209 = vmatpush1.msra.mxu0 %v5131
        %5210 = vmatprep.subr.mxu0 0.0
        %5211 = vmatpush1.msra.mxu0 %v5132
        %5212 = vmatprep.subr.mxu0 0.0
        %5213 = vmatpush1.msra.mxu0 %v5133
        %5214 = vmatprep.subr.mxu0 0.0
        %5215 = vmatpush1.msra.mxu0 0.0
        %5216 = vmatprep.subr.mxu0 0.0
        %5217 = vmatpush1.msra.mxu0 0.0
        %5218 = vmatprep.subr.mxu0 0.0
        %5219 = vmatpush1.msra.mxu0 0.0
        %5220 = vmatprep.subr.mxu0 0.0
        %5221 = vmatpush1.msra.mxu0 0.0
        %5222 = vmatprep.subr.mxu0 0.0
        %5223 = vmatpush1.msra.mxu0 0.0
        %5224 = vmatprep.subr.mxu0 0.0
        %5225 = vmatpush1.msra.mxu0 0.0
        %5226 = vmatprep.subr.mxu0 0.0
        %5227 = vmatpush1.msra.mxu0 0.0
        %5228 = vmatprep.subr.mxu0 0.0
        %5229 = vmatpush1.msra.mxu0 0.0
        %5230 = vmatprep.subr.mxu0 0.0
        %5231 = vmatpush1.msra.mxu0 0.0
        %5232 = vmatprep.subr.mxu0 0.0
        %5233 = vmatpush1.msra.mxu0 0.0
        %5234 = vmatprep.subr.mxu0 0.0
        %5235 = vmatpush1.msra.mxu0 0.0
        %5236 = vmatprep.subr.mxu0 0.0
        %5237 = vmatpush1.msra.mxu0 0.0
        %5238 = vmatprep.subr.mxu0 0.0
        %5239 = vmatpush1.msra.mxu0 0.0
        %5240 = vmatprep.subr.mxu0 0.0
        %5241 = vmatpush1.msra.mxu0 0.0
        %5242 = vmatprep.subr.mxu0 0.0
        %5243 = vmatpush1.msra.mxu0 0.0
        %5244 = vmatprep.subr.mxu0 0.0
        %5245 = vmatpush1.msra.mxu0 0.0
        %5246 = vmatprep.mubr.f32.mxu0 0.0
        %5247 = vmatmul.mubr.f32.gmra.mrb[0].mxu0 %v5137
        %v5248 = vpop.f32.mrb[0].mxu0
        %v5249 = vadd.f32 0.0, %v5248
        %v5250 = vpop.f32.mrb[0].mxu0
        %5251 = vmatprep.mubr.f32.mxu0 0.0
        %5252 = vmatmul.mubr.f32.gmra.mrb[0].mxu0 %v5139
        %v5253 = vpop.f32.mrb[0].mxu0
        %v5254 = vadd.f32 0.0, %v5253
        %v5255 = vpop.f32.mrb[0].mxu0
        %5256 = vmatprep.mubr.f32.mxu0 0.0
        %5257 = vmatmul.mubr.f32.gmra.mrb[0].mxu0 %v5141
        %v5258 = vpop.f32.mrb[0].mxu0
        %v5259 = vadd.f32 0.0, %v5258
        %v5260 = vpop.f32.mrb[0].mxu0
        %5261 = vmatprep.mubr.f32.mxu0 0.0
        %5262 = vmatmul.mubr.f32.gmra.mrb[0].mxu0 %v5143
        %v5263 = vpop.f32.mrb[0].mxu0
        %v5264 = vadd.f32 0.0, %v5263
        %v5265 = vpop.f32.mrb[0].mxu0
        %5266 = vmatprep.mubr.f32.mxu0 0.0
        %5267 = vmatmul.mubr.f32.gmra.mrb[0].mxu0 %v5145
        %v5268 = vpop.f32.mrb[0].mxu0
        %v5269 = vadd.f32 0.0, %v5268
        %v5270 = vpop.f32.mrb[0].mxu0
        %5271 = vmatprep.mubr.f32.mxu0 0.0
        %5272 = vmatmul.mubr.f32.gmra.mrb[0].mxu0 %v5147
        %v5273 = vpop.f32.mrb[0].mxu0
        %v5274 = vadd.f32 0.0, %v5273
        %v5275 = vpop.f32.mrb[0].mxu0
        %5276 = vmatprep.mubr.f32.mxu0 0.0
        %5277 = vmatmul.mubr.f32.gmra.mrb[0].mxu0 %v5149
        %v5278 = vpop.f32.mrb[0].mxu0
        %v5279 = vadd.f32 0.0, %v5278
        %v5280 = vpop.f32.mrb[0].mxu0
        %5281 = vmatprep.mubr.f32.mxu0 0.0
        %5282 = vmatmul.mubr.f32.gmra.mrb[0].mxu0 %v5151
        %v5283 = vpop.f32.mrb[0].mxu0
        %v5284 = vadd.f32 0.0, %v5283
        %v5285 = vpop.f32.mrb[0].mxu0
        %5286 = vmatprep.mubr.f32.mxu0 0.0
        %5287 = vmatmul.mubr.f32.gmra.mrb[0].mxu0 %v5153
        %v5288 = vpop.f32.mrb[0].mxu0
        %v5289 = vadd.f32 0.0, %v5288
        %v5290 = vpop.f32.mrb[0].mxu0
        %5291 = vmatprep.mubr.f32.mxu0 0.0
        %5292 = vmatmul.mubr.f32.gmra.mrb[0].mxu0 %v5155
        %v5293 = vpop.f32.mrb[0].mxu0
        %v5294 = vadd.f32 0.0, %v5293
        %v5295 = vpop.f32.mrb[0].mxu0
        %5296 = vmatprep.mubr.f32.mxu0 0.0
        %5297 = vmatmul.mubr.f32.gmra.mrb[0].mxu0 %v5157
        %v5298 = vpop.f32.mrb[0].mxu0
        %v5299 = vadd.f32 0.0, %v5298
        %v5300 = vpop.f32.mrb[0].mxu0
        %5301 = vmatprep.mubr.f32.mxu0 0.0
        %5302 = vmatmul.mubr.f32.gmra.mrb[0].mxu0 %v5159
        %v5303 = vpop.f32.mrb[0].mxu0
        %v5304 = vadd.f32 0.0, %v5303
        %v5305 = vpop.f32.mrb[0].mxu0
        %5306 = vmatprep.mubr.f32.mxu0 0.0
        %5307 = vmatmul.mubr.f32.gmra.mrb[0].mxu0 %v5161
        %v5308 = vpop.f32.mrb[0].mxu0
        %v5309 = vadd.f32 0.0, %v5308
        %v5310 = vpop.f32.mrb[0].mxu0
        %5311 = vmatprep.mubr.f32.mxu0 0.0
        %5312 = vmatmul.mubr.f32.gmra.mrb[0].mxu0 %v5163
        %v5313 = vpop.f32.mrb[0].mxu0
        %v5314 = vadd.f32 0.0, %v5313
        %v5315 = vpop.f32.mrb[0].mxu0
        %5316 = vmatprep.mubr.f32.mxu0 0.0
        %5317 = vmatmul.mubr.f32.gmra.mrb[0].mxu0 %v5165
        %v5318 = vpop.f32.mrb[0].mxu0
        %v5319 = vadd.f32 0.0, %v5318
        %v5320 = vpop.f32.mrb[0].mxu0
        %5321 = vmatprep.mubr.f32.mxu0 0.0
        %5322 = vmatmul.mubr.f32.gmra.mrb[0].mxu0 %v5164
        %v5323 = vpop.f32.mrb[0].mxu0
        %v5324 = vadd.f32 0.0, %v5323
        %v5325 = vpop.f32.mrb[0].mxu0
        %5326 = vdwg.mxu0
        %v5327 = vadd.f32 %v5101, %v5249
        %v5328 = vadd.f32 %v5102, %v5254
        %v5329 = vadd.f32 %v5103, %v5259
        %v5330 = vadd.f32 %v5104, %v5264
        %v5331 = vadd.f32 %v5105, %v5269
        %v5332 = vadd.f32 %v5106, %v5274
        %v5333 = vadd.f32 %v5107, %v5279
        %v5334 = vadd.f32 %v5108, %v5284
        %v5335 = vadd.f32 %v5109, %v5289
        %v5336 = vadd.f32 %v5110, %v5294
        %v5337 = vadd.f32 %v5111, %v5299
        %v5338 = vadd.f32 %v5112, %v5304
        %v5339 = vadd.f32 %v5113, %v5309
        %v5340 = vadd.f32 %v5114, %v5314
        %v5341 = vadd.f32 %v5115, %v5319
        %v5342 = vadd.f32 %v5116, %v5324
        %s5343 = scalar_lea.vmem %s3, 512
        %v5344 = vld [vmem:[%s5343] sm:$0xff]
        %v5345 = vld [vmem:[%s5343 + $0x8] sm:$0xff]
        %v5346 = vld [vmem:[%s5343 + $0x10] sm:$0xff]
        %v5347 = vld [vmem:[%s5343 + $0x18] sm:$0xff]
        %v5348 = vld [vmem:[%s5343 + $0x20] sm:$0xff]
        %v5349 = vld [vmem:[%s5343 + $0x28] sm:$0xff]
        %v5350 = vld [vmem:[%s5343 + $0x30] sm:$0xff]
        %v5351 = vld [vmem:[%s5343 + $0x38] sm:$0xff]
        %v5352 = vld [vmem:[%s5343 + $0x40] sm:$0xff]
        %v5353 = vld [vmem:[%s5343 + $0x48] sm:$0xff]
        %v5354 = vld [vmem:[%s5343 + $0x50] sm:$0xff]
        %v5355 = vld [vmem:[%s5343 + $0x58] sm:$0xff]
        %v5356 = vld [vmem:[%s5343 + $0x60] sm:$0xff]
        %v5357 = vld [vmem:[%s5343 + $0x68] sm:$0xff]
        %v5358 = vld [vmem:[%s5343 + $0x70] sm:$0xff]
        %v5359 = vld [vmem:[%s5343 + $0x78] sm:$0xff]
        %vm5360 = vcmask 1043456
        %v5361 = vrot.slane %v4488, 4
        %v5362 = vrot.slane %v4489, 4
        %v5363 = vsel %vm5360, %v5361, %v5362
        %v5364 = vrot.slane %v4490, 4
        %v5365 = vsel %vm5360, %v5362, %v5364
        %v5366 = vrot.slane %v4491, 4
        %v5367 = vsel %vm5360, %v5364, %v5366
        %v5368 = vrot.slane %v4492, 4
        %v5369 = vsel %vm5360, %v5366, %v5368
        %v5370 = vrot.slane %v4493, 4
        %v5371 = vsel %vm5360, %v5368, %v5370
        %v5372 = vrot.slane %v4494, 4
        %v5373 = vsel %vm5360, %v5370, %v5372
        %v5374 = vrot.slane %v4495, 4
        %v5375 = vsel %vm5360, %v5372, %v5374
        %v5376 = vrot.slane %v4496, 4
        %v5377 = vsel %vm5360, %v5374, %v5376
        %v5378 = vrot.slane %v4497, 4
        %v5379 = vsel %vm5360, %v5376, %v5378
        %v5380 = vrot.slane %v4498, 4
        %v5381 = vsel %vm5360, %v5378, %v5380
        %v5382 = vrot.slane %v4499, 4
        %v5383 = vsel %vm5360, %v5380, %v5382
        %v5384 = vrot.slane %v4500, 4
        %v5385 = vsel %vm5360, %v5382, %v5384
        %v5386 = vrot.slane %v4501, 4
        %v5387 = vsel %vm5360, %v5384, %v5386
        %v5388 = vrot.slane %v4502, 4
        %v5389 = vsel %vm5360, %v5386, %v5388
        %v5390 = vrot.slane %v4503, 4
        %v5391 = vsel %vm5360, %v5388, %v5390
        %5408 = vmatprep.subr.mxu0 0.0
        %5409 = vmatpush1.msra.mxu0 %v5344
        %5410 = vmatprep.subr.mxu0 0.0
        %5411 = vmatpush1.msra.mxu0 %v5345
        %5412 = vmatprep.subr.mxu0 0.0
        %5413 = vmatpush1.msra.mxu0 %v5346
        %5414 = vmatprep.subr.mxu0 0.0
        %5415 = vmatpush1.msra.mxu0 %v5347
        %5416 = vmatprep.subr.mxu0 0.0
        %5417 = vmatpush1.msra.mxu0 %v5348
        %5418 = vmatprep.subr.mxu0 0.0
        %5419 = vmatpush1.msra.mxu0 %v5349
        %5420 = vmatprep.subr.mxu0 0.0
        %5421 = vmatpush1.msra.mxu0 %v5350
        %5422 = vmatprep.subr.mxu0 0.0
        %5423 = vmatpush1.msra.mxu0 %v5351
        %5424 = vmatprep.subr.mxu0 0.0
        %5425 = vmatpush1.msra.mxu0 %v5352
        %5426 = vmatprep.subr.mxu0 0.0
        %5427 = vmatpush1.msra.mxu0 %v5353
        %5428 = vmatprep.subr.mxu0 0.0
        %5429 = vmatpush1.msra.mxu0 %v5354
        %5430 = vmatprep.subr.mxu0 0.0
        %5431 = vmatpush1.msra.mxu0 %v5355
        %5432 = vmatprep.subr.mxu0 0.0
        %5433 = vmatpush1.msra.mxu0 %v5356
        %5434 = vmatprep.subr.mxu0 0.0
        %5435 = vmatpush1.msra.mxu0 %v5357
        %5436 = vmatprep.subr.mxu0 0.0
        %5437 = vmatpush1.msra.mxu0 %v5358
        %5438 = vmatprep.subr.mxu0 0.0
        %5439 = vmatpush1.msra.mxu0 %v5359
        %5440 = vmatprep.subr.mxu0 0.0
        %5441 = vmatpush1.msra.mxu0 0.0
        %5442 = vmatprep.subr.mxu0 0.0
        %5443 = vmatpush1.msra.mxu0 0.0
        %5444 = vmatprep.subr.mxu0 0.0
        %5445 = vmatpush1.msra.mxu0 0.0
        %5446 = vmatprep.subr.mxu0 0.0
        %5447 = vmatpush1.msra.mxu0 0.0
        %5448 = vmatprep.subr.mxu0 0.0
        %5449 = vmatpush1.msra.mxu0 0.0
        %5450 = vmatprep.subr.mxu0 0.0
        %5451 = vmatpush1.msra.mxu0 0.0
        %5452 = vmatprep.subr.mxu0 0.0
        %5453 = vmatpush1.msra.mxu0 0.0
        %5454 = vmatprep.subr.mxu0 0.0
        %5455 = vmatpush1.msra.mxu0 0.0
        %5456 = vmatprep.subr.mxu0 0.0
        %5457 = vmatpush1.msra.mxu0 0.0
        %5458 = vmatprep.subr.mxu0 0.0
        %5459 = vmatpush1.msra.mxu0 0.0
        %5460 = vmatprep.subr.mxu0 0.0
        %5461 = vmatpush1.msra.mxu0 0.0
        %5462 = vmatprep.subr.mxu0 0.0
        %5463 = vmatpush1.msra.mxu0 0.0
        %5464 = vmatprep.subr.mxu0 0.0
        %5465 = vmatpush1.msra.mxu0 0.0
        %5466 = vmatprep.subr.mxu0 0.0
        %5467 = vmatpush1.msra.mxu0 0.0
        %5468 = vmatprep.subr.mxu0 0.0
        %5469 = vmatpush1.msra.mxu0 0.0
        %5470 = vmatprep.subr.mxu0 0.0
        %5471 = vmatpush1.msra.mxu0 0.0
        %5472 = vmatprep.mubr.f32.mxu0 0.0
        %5473 = vmatmul.mubr.f32.gmra.mrb[0].mxu0 %v5363
        %v5474 = vpop.f32.mrb[0].mxu0
        %v5475 = vadd.f32 0.0, %v5474
        %v5476 = vpop.f32.mrb[0].mxu0
        %5477 = vmatprep.mubr.f32.mxu0 0.0
        %5478 = vmatmul.mubr.f32.gmra.mrb[0].mxu0 %v5365
        %v5479 = vpop.f32.mrb[0].mxu0
        %v5480 = vadd.f32 0.0, %v5479
        %v5481 = vpop.f32.mrb[0].mxu0
        %5482 = vmatprep.mubr.f32.mxu0 0.0
        %5483 = vmatmul.mubr.f32.gmra.mrb[0].mxu0 %v5367
        %v5484 = vpop.f32.mrb[0].mxu0
        %v5485 = vadd.f32 0.0, %v5484
        %v5486 = vpop.f32.mrb[0].mxu0
        %5487 = vmatprep.mubr.f32.mxu0 0.0
        %5488 = vmatmul.mubr.f32.gmra.mrb[0].mxu0 %v5369
        %v5489 = vpop.f32.mrb[0].mxu0
        %v5490 = vadd.f32 0.0, %v5489
        %v5491 = vpop.f32.mrb[0].mxu0
        %5492 = vmatprep.mubr.f32.mxu0 0.0
        %5493 = vmatmul.mubr.f32.gmra.mrb[0].mxu0 %v5371
        %v5494 = vpop.f32.mrb[0].mxu0
        %v5495 = vadd.f32 0.0, %v5494
        %v5496 = vpop.f32.mrb[0].mxu0
        %5497 = vmatprep.mubr.f32.mxu0 0.0
        %5498 = vmatmul.mubr.f32.gmra.mrb[0].mxu0 %v5373
        %v5499 = vpop.f32.mrb[0].mxu0
        %v5500 = vadd.f32 0.0, %v5499
        %v5501 = vpop.f32.mrb[0].mxu0
        %5502 = vmatprep.mubr.f32.mxu0 0.0
        %5503 = vmatmul.mubr.f32.gmra.mrb[0].mxu0 %v5375
        %v5504 = vpop.f32.mrb[0].mxu0
        %v5505 = vadd.f32 0.0, %v5504
        %v5506 = vpop.f32.mrb[0].mxu0
        %5507 = vmatprep.mubr.f32.mxu0 0.0
        %5508 = vmatmul.mubr.f32.gmra.mrb[0].mxu0 %v5377
        %v5509 = vpop.f32.mrb[0].mxu0
        %v5510 = vadd.f32 0.0, %v5509
        %v5511 = vpop.f32.mrb[0].mxu0
        %5512 = vmatprep.mubr.f32.mxu0 0.0
        %5513 = vmatmul.mubr.f32.gmra.mrb[0].mxu0 %v5379
        %v5514 = vpop.f32.mrb[0].mxu0
        %v5515 = vadd.f32 0.0, %v5514
        %v5516 = vpop.f32.mrb[0].mxu0
        %5517 = vmatprep.mubr.f32.mxu0 0.0
        %5518 = vmatmul.mubr.f32.gmra.mrb[0].mxu0 %v5381
        %v5519 = vpop.f32.mrb[0].mxu0
        %v5520 = vadd.f32 0.0, %v5519
        %v5521 = vpop.f32.mrb[0].mxu0
        %5522 = vmatprep.mubr.f32.mxu0 0.0
        %5523 = vmatmul.mubr.f32.gmra.mrb[0].mxu0 %v5383
        %v5524 = vpop.f32.mrb[0].mxu0
        %v5525 = vadd.f32 0.0, %v5524
        %v5526 = vpop.f32.mrb[0].mxu0
        %5527 = vmatprep.mubr.f32.mxu0 0.0
        %5528 = vmatmul.mubr.f32.gmra.mrb[0].mxu0 %v5385
        %v5529 = vpop.f32.mrb[0].mxu0
        %v5530 = vadd.f32 0.0, %v5529
        %v5531 = vpop.f32.mrb[0].mxu0
        %5532 = vmatprep.mubr.f32.mxu0 0.0
        %5533 = vmatmul.mubr.f32.gmra.mrb[0].mxu0 %v5387
        %v5534 = vpop.f32.mrb[0].mxu0
        %v5535 = vadd.f32 0.0, %v5534
        %v5536 = vpop.f32.mrb[0].mxu0
        %5537 = vmatprep.mubr.f32.mxu0 0.0
        %5538 = vmatmul.mubr.f32.gmra.mrb[0].mxu0 %v5389
        %v5539 = vpop.f32.mrb[0].mxu0
        %v5540 = vadd.f32 0.0, %v5539
        %v5541 = vpop.f32.mrb[0].mxu0
        %5542 = vmatprep.mubr.f32.mxu0 0.0
        %5543 = vmatmul.mubr.f32.gmra.mrb[0].mxu0 %v5391
        %v5544 = vpop.f32.mrb[0].mxu0
        %v5545 = vadd.f32 0.0, %v5544
        %v5546 = vpop.f32.mrb[0].mxu0
        %5547 = vmatprep.mubr.f32.mxu0 0.0
        %5548 = vmatmul.mubr.f32.gmra.mrb[0].mxu0 %v5390
        %v5549 = vpop.f32.mrb[0].mxu0
        %v5550 = vadd.f32 0.0, %v5549
        %v5551 = vpop.f32.mrb[0].mxu0
        %5552 = vdwg.mxu0
        %v5553 = vadd.f32 %v5327, %v5475
        %v5554 = vadd.f32 %v5328, %v5480
        %v5555 = vadd.f32 %v5329, %v5485
        %v5556 = vadd.f32 %v5330, %v5490
        %v5557 = vadd.f32 %v5331, %v5495
        %v5558 = vadd.f32 %v5332, %v5500
        %v5559 = vadd.f32 %v5333, %v5505
        %v5560 = vadd.f32 %v5334, %v5510
        %v5561 = vadd.f32 %v5335, %v5515
        %v5562 = vadd.f32 %v5336, %v5520
        %v5563 = vadd.f32 %v5337, %v5525
        %v5564 = vadd.f32 %v5338, %v5530
        %v5565 = vadd.f32 %v5339, %v5535
        %v5566 = vadd.f32 %v5340, %v5540
        %v5567 = vadd.f32 %v5341, %v5545
        %v5568 = vadd.f32 %v5342, %v5550
        %v5569 = vld [vmem:[%s4] sm:$0x1]
        %v5570 = vlaneseq
        %v5571 = vshrl.u32 %v5570, 7
        %v5572 = vsub.s32 0, %v5571
        %v5573 = vrot.slane %v5569, %v5572
        %v5574 = vadd.f32 %v5553, %v5573
        %v5575 = vadd.f32 %v5554, %v5573
        %v5576 = vadd.f32 %v5555, %v5573
        %v5577 = vadd.f32 %v5556, %v5573
        %v5578 = vadd.f32 %v5557, %v5573
        %v5579 = vadd.f32 %v5558, %v5573
        %v5580 = vadd.f32 %v5559, %v5573
        %v5581 = vadd.f32 %v5560, %v5573
        %v5582 = vadd.f32 %v5561, %v5573
        %v5583 = vadd.f32 %v5562, %v5573
        %v5584 = vadd.f32 %v5563, %v5573
        %v5585 = vadd.f32 %v5564, %v5573
        %v5586 = vadd.f32 %v5565, %v5573
        %v5587 = vadd.f32 %v5566, %v5573
        %v5588 = vadd.f32 %v5567, %v5573
        %v5589 = vadd.f32 %v5568, %v5573
        %v5590 = vmax.f32 %v5574, 0.0
        %v5591 = vmax.f32 %v5575, 0.0
        %v5592 = vmax.f32 %v5576, 0.0
        %v5593 = vmax.f32 %v5577, 0.0
        %v5594 = vmax.f32 %v5578, 0.0
        %v5595 = vmax.f32 %v5579, 0.0
        %v5596 = vmax.f32 %v5580, 0.0
        %v5597 = vmax.f32 %v5581, 0.0
        %v5598 = vmax.f32 %v5582, 0.0
        %v5599 = vmax.f32 %v5583, 0.0
        %v5600 = vmax.f32 %v5584, 0.0
        %v5601 = vmax.f32 %v5585, 0.0
        %v5602 = vmax.f32 %v5586, 0.0
        %v5603 = vmax.f32 %v5587, 0.0
        %v5604 = vmax.f32 %v5588, 0.0
        %v5605 = vmax.f32 %v5589, 0.0
        %5606 = vst [vmem:[#allocation3] sm:$0xff] %v5590
        %5607 = vst [vmem:[#allocation3 + $0x8] sm:$0xff] %v5591
        %5608 = vst [vmem:[#allocation3 + $0x10] sm:$0xff] %v5592
        %5609 = vst [vmem:[#allocation3 + $0x18] sm:$0xff] %v5593
        %5610 = vst [vmem:[#allocation3 + $0x20] sm:$0xff] %v5594
        %5611 = vst [vmem:[#allocation3 + $0x28] sm:$0xff] %v5595
        %5612 = vst [vmem:[#allocation3 + $0x30] sm:$0xff] %v5596
        %5613 = vst [vmem:[#allocation3 + $0x38] sm:$0xff] %v5597
        %5614 = vst [vmem:[#allocation3 + $0x40] sm:$0xff] %v5598
        %5615 = vst [vmem:[#allocation3 + $0x48] sm:$0xff] %v5599
        %5616 = vst [vmem:[#allocation3 + $0x50] sm:$0xff] %v5600
        %5617 = vst [vmem:[#allocation3 + $0x58] sm:$0xff] %v5601
        %5618 = vst [vmem:[#allocation3 + $0x60] sm:$0xff] %v5602
        %5619 = vst [vmem:[#allocation3 + $0x68] sm:$0xff] %v5603
        %5620 = vst [vmem:[#allocation3 + $0x70] sm:$0xff] %v5604
        %5621 = vst [vmem:[#allocation3 + $0x78] sm:$0xf] %v5605
        %s5622 = scalar_lea.vmem %s3, 640
        %v5623 = vld [vmem:[%s5622] sm:$0xff]
        %v5624 = vld [vmem:[%s5622 + $0x8] sm:$0xff]
        %v5625 = vld [vmem:[%s5622 + $0x10] sm:$0xff]
        %v5626 = vld [vmem:[%s5622 + $0x18] sm:$0xff]
        %v5627 = vld [vmem:[%s5622 + $0x20] sm:$0xff]
        %v5628 = vld [vmem:[%s5622 + $0x28] sm:$0xff]
        %v5629 = vld [vmem:[%s5622 + $0x30] sm:$0xff]
        %v5630 = vld [vmem:[%s5622 + $0x38] sm:$0xff]
        %v5631 = vld [vmem:[%s5622 + $0x40] sm:$0xff]
        %v5632 = vld [vmem:[%s5622 + $0x48] sm:$0xff]
        %v5633 = vld [vmem:[%s5622 + $0x50] sm:$0xff]
        %v5634 = vld [vmem:[%s5622 + $0x58] sm:$0xff]
        %v5635 = vld [vmem:[%s5622 + $0x60] sm:$0xff]
        %v5636 = vld [vmem:[%s5622 + $0x68] sm:$0xff]
        %v5637 = vld [vmem:[%s5622 + $0x70] sm:$0xff]
        %v5638 = vld [vmem:[%s5622 + $0x78] sm:$0xff]
        %s5639 = scalar_lea.vmem %s3, 768
        %v5640 = vld [vmem:[%s5639] sm:$0xff]
        %v5641 = vld [vmem:[%s5639 + $0x8] sm:$0xff]
        %v5642 = vld [vmem:[%s5639 + $0x10] sm:$0xff]
        %v5643 = vld [vmem:[%s5639 + $0x18] sm:$0xff]
        %v5644 = vld [vmem:[%s5639 + $0x20] sm:$0xff]
        %v5645 = vld [vmem:[%s5639 + $0x28] sm:$0xff]
        %v5646 = vld [vmem:[%s5639 + $0x30] sm:$0xff]
        %v5647 = vld [vmem:[%s5639 + $0x38] sm:$0xff]
        %v5648 = vld [vmem:[%s5639 + $0x40] sm:$0xff]
        %v5649 = vld [vmem:[%s5639 + $0x48] sm:$0xff]
        %v5650 = vld [vmem:[%s5639 + $0x50] sm:$0xff]
        %v5651 = vld [vmem:[%s5639 + $0x58] sm:$0xff]
        %v5652 = vld [vmem:[%s5639 + $0x60] sm:$0xff]
        %v5653 = vld [vmem:[%s5639 + $0x68] sm:$0xff]
        %v5654 = vld [vmem:[%s5639 + $0x70] sm:$0xff]
        %v5655 = vld [vmem:[%s5639 + $0x78] sm:$0xff]
        %5656 = vmatprep.subr.mxu0 0.0
        %5657 = vmatpush1.msra.mxu0 %v5640
        %5658 = vmatprep.subr.mxu0 0.0
        %5659 = vmatpush1.msra.mxu0 %v5641
        %5660 = vmatprep.subr.mxu0 0.0
        %5661 = vmatpush1.msra.mxu0 %v5642
        %5662 = vmatprep.subr.mxu0 0.0
        %5663 = vmatpush1.msra.mxu0 %v5643
        %5664 = vmatprep.subr.mxu0 0.0
        %5665 = vmatpush1.msra.mxu0 %v5644
        %5666 = vmatprep.subr.mxu0 0.0
        %5667 = vmatpush1.msra.mxu0 %v5645
        %5668 = vmatprep.subr.mxu0 0.0
        %5669 = vmatpush1.msra.mxu0 %v5646
        %5670 = vmatprep.subr.mxu0 0.0
        %5671 = vmatpush1.msra.mxu0 %v5647
        %5672 = vmatprep.subr.mxu0 0.0
        %5673 = vmatpush1.msra.mxu0 %v5648
        %5674 = vmatprep.subr.mxu0 0.0
        %5675 = vmatpush1.msra.mxu0 %v5649
        %5676 = vmatprep.subr.mxu0 0.0
        %5677 = vmatpush1.msra.mxu0 %v5650
        %5678 = vmatprep.subr.mxu0 0.0
        %5679 = vmatpush1.msra.mxu0 %v5651
        %5680 = vmatprep.subr.mxu0 0.0
        %5681 = vmatpush1.msra.mxu0 %v5652
        %5682 = vmatprep.subr.mxu0 0.0
        %5683 = vmatpush1.msra.mxu0 %v5653
        %5684 = vmatprep.subr.mxu0 0.0
        %5685 = vmatpush1.msra.mxu0 %v5654
        %5686 = vmatprep.subr.mxu0 0.0
        %5687 = vmatpush1.msra.mxu0 %v5655
        %5688 = vmatprep.subr.mxu0 0.0
        %5689 = vmatpush1.msra.mxu0 0.0
        %5690 = vmatprep.subr.mxu0 0.0
        %5691 = vmatpush1.msra.mxu0 0.0
        %5692 = vmatprep.subr.mxu0 0.0
        %5693 = vmatpush1.msra.mxu0 0.0
        %5694 = vmatprep.subr.mxu0 0.0
        %5695 = vmatpush1.msra.mxu0 0.0
        %5696 = vmatprep.subr.mxu0 0.0
        %5697 = vmatpush1.msra.mxu0 0.0
        %5698 = vmatprep.subr.mxu0 0.0
        %5699 = vmatpush1.msra.mxu0 0.0
        %5700 = vmatprep.subr.mxu0 0.0
        %5701 = vmatpush1.msra.mxu0 0.0
        %5702 = vmatprep.subr.mxu0 0.0
        %5703 = vmatpush1.msra.mxu0 0.0
        %5704 = vmatprep.subr.mxu0 0.0
        %5705 = vmatpush1.msra.mxu0 0.0
        %5706 = vmatprep.subr.mxu0 0.0
        %5707 = vmatpush1.msra.mxu0 0.0
        %5708 = vmatprep.subr.mxu0 0.0
        %5709 = vmatpush1.msra.mxu0 0.0
        %5710 = vmatprep.subr.mxu0 0.0
        %5711 = vmatpush1.msra.mxu0 0.0
        %5712 = vmatprep.subr.mxu0 0.0
        %5713 = vmatpush1.msra.mxu0 0.0
        %5714 = vmatprep.subr.mxu0 0.0
        %5715 = vmatpush1.msra.mxu0 0.0
        %5716 = vmatprep.subr.mxu0 0.0
        %5717 = vmatpush1.msra.mxu0 0.0
        %5718 = vmatprep.subr.mxu0 0.0
        %5719 = vmatpush1.msra.mxu0 0.0
        %5720 = vmatprep.mubr.f32.mxu0 0.0
        %5721 = vmatmul.mubr.f32.gmra.mrb[0].mxu0 %v4556
        %v5722 = vpop.f32.mrb[0].mxu0
        %v5723 = vadd.f32 0.0, %v5722
        %v5724 = vpop.f32.mrb[0].mxu0
        %5725 = vmatprep.mubr.f32.mxu0 0.0
        %5726 = vmatmul.mubr.f32.gmra.mrb[0].mxu0 %v4558
        %v5727 = vpop.f32.mrb[0].mxu0
        %v5728 = vadd.f32 0.0, %v5727
        %v5729 = vpop.f32.mrb[0].mxu0
        %5730 = vmatprep.mubr.f32.mxu0 0.0
        %5731 = vmatmul.mubr.f32.gmra.mrb[0].mxu0 %v4560
        %v5732 = vpop.f32.mrb[0].mxu0
        %v5733 = vadd.f32 0.0, %v5732
        %v5734 = vpop.f32.mrb[0].mxu0
        %5735 = vmatprep.mubr.f32.mxu0 0.0
        %5736 = vmatmul.mubr.f32.gmra.mrb[0].mxu0 %v4562
        %v5737 = vpop.f32.mrb[0].mxu0
        %v5738 = vadd.f32 0.0, %v5737
        %v5739 = vpop.f32.mrb[0].mxu0
        %5740 = vmatprep.mubr.f32.mxu0 0.0
        %5741 = vmatmul.mubr.f32.gmra.mrb[0].mxu0 %v4564
        %v5742 = vpop.f32.mrb[0].mxu0
        %v5743 = vadd.f32 0.0, %v5742
        %v5744 = vpop.f32.mrb[0].mxu0
        %5745 = vmatprep.mubr.f32.mxu0 0.0
        %5746 = vmatmul.mubr.f32.gmra.mrb[0].mxu0 %v4566
        %v5747 = vpop.f32.mrb[0].mxu0
        %v5748 = vadd.f32 0.0, %v5747
        %v5749 = vpop.f32.mrb[0].mxu0
        %5750 = vmatprep.mubr.f32.mxu0 0.0
        %5751 = vmatmul.mubr.f32.gmra.mrb[0].mxu0 %v4568
        %v5752 = vpop.f32.mrb[0].mxu0
        %v5753 = vadd.f32 0.0, %v5752
        %v5754 = vpop.f32.mrb[0].mxu0
        %5755 = vmatprep.mubr.f32.mxu0 0.0
        %5756 = vmatmul.mubr.f32.gmra.mrb[0].mxu0 %v4570
        %v5757 = vpop.f32.mrb[0].mxu0
        %v5758 = vadd.f32 0.0, %v5757
        %v5759 = vpop.f32.mrb[0].mxu0
        %5760 = vmatprep.mubr.f32.mxu0 0.0
        %5761 = vmatmul.mubr.f32.gmra.mrb[0].mxu0 %v4572
        %v5762 = vpop.f32.mrb[0].mxu0
        %v5763 = vadd.f32 0.0, %v5762
        %v5764 = vpop.f32.mrb[0].mxu0
        %5765 = vmatprep.mubr.f32.mxu0 0.0
        %5766 = vmatmul.mubr.f32.gmra.mrb[0].mxu0 %v4574
        %v5767 = vpop.f32.mrb[0].mxu0
        %v5768 = vadd.f32 0.0, %v5767
        %v5769 = vpop.f32.mrb[0].mxu0
        %5770 = vmatprep.mubr.f32.mxu0 0.0
        %5771 = vmatmul.mubr.f32.gmra.mrb[0].mxu0 %v4576
        %v5772 = vpop.f32.mrb[0].mxu0
        %v5773 = vadd.f32 0.0, %v5772
        %v5774 = vpop.f32.mrb[0].mxu0
        %5775 = vmatprep.mubr.f32.mxu0 0.0
        %5776 = vmatmul.mubr.f32.gmra.mrb[0].mxu0 %v4578
        %v5777 = vpop.f32.mrb[0].mxu0
        %v5778 = vadd.f32 0.0, %v5777
        %v5779 = vpop.f32.mrb[0].mxu0
        %5780 = vmatprep.mubr.f32.mxu0 0.0
        %5781 = vmatmul.mubr.f32.gmra.mrb[0].mxu0 %v4580
        %v5782 = vpop.f32.mrb[0].mxu0
        %v5783 = vadd.f32 0.0, %v5782
        %v5784 = vpop.f32.mrb[0].mxu0
        %5785 = vmatprep.mubr.f32.mxu0 0.0
        %5786 = vmatmul.mubr.f32.gmra.mrb[0].mxu0 %v4582
        %v5787 = vpop.f32.mrb[0].mxu0
        %v5788 = vadd.f32 0.0, %v5787
        %v5789 = vpop.f32.mrb[0].mxu0
        %5790 = vmatprep.mubr.f32.mxu0 0.0
        %5791 = vmatmul.mubr.f32.gmra.mrb[0].mxu0 %v4584
        %v5792 = vpop.f32.mrb[0].mxu0
        %v5793 = vadd.f32 0.0, %v5792
        %v5794 = vpop.f32.mrb[0].mxu0
        %5795 = vmatprep.mubr.f32.mxu0 0.0
        %5796 = vmatmul.mubr.f32.gmra.mrb[0].mxu0 %v4583
        %v5797 = vpop.f32.mrb[0].mxu0
        %v5798 = vadd.f32 0.0, %v5797
        %v5799 = vpop.f32.mrb[0].mxu0
        %5800 = vdwg.mxu0
        %5801 = vmatprep.subr.mxu0 0.0
        %5802 = vmatpush1.msra.mxu0 %v5623
        %5803 = vmatprep.subr.mxu0 0.0
        %5804 = vmatpush1.msra.mxu0 %v5624
        %5805 = vmatprep.subr.mxu0 0.0
        %5806 = vmatpush1.msra.mxu0 %v5625
        %5807 = vmatprep.subr.mxu0 0.0
        %5808 = vmatpush1.msra.mxu0 %v5626
        %5809 = vmatprep.subr.mxu0 0.0
        %5810 = vmatpush1.msra.mxu0 %v5627
        %5811 = vmatprep.subr.mxu0 0.0
        %5812 = vmatpush1.msra.mxu0 %v5628
        %5813 = vmatprep.subr.mxu0 0.0
        %5814 = vmatpush1.msra.mxu0 %v5629
        %5815 = vmatprep.subr.mxu0 0.0
        %5816 = vmatpush1.msra.mxu0 %v5630
        %5817 = vmatprep.subr.mxu0 0.0
        %5818 = vmatpush1.msra.mxu0 %v5631
        %5819 = vmatprep.subr.mxu0 0.0
        %5820 = vmatpush1.msra.mxu0 %v5632
        %5821 = vmatprep.subr.mxu0 0.0
        %5822 = vmatpush1.msra.mxu0 %v5633
        %5823 = vmatprep.subr.mxu0 0.0
        %5824 = vmatpush1.msra.mxu0 %v5634
        %5825 = vmatprep.subr.mxu0 0.0
        %5826 = vmatpush1.msra.mxu0 %v5635
        %5827 = vmatprep.subr.mxu0 0.0
        %5828 = vmatpush1.msra.mxu0 %v5636
        %5829 = vmatprep.subr.mxu0 0.0
        %5830 = vmatpush1.msra.mxu0 %v5637
        %5831 = vmatprep.subr.mxu0 0.0
        %5832 = vmatpush1.msra.mxu0 %v5638
        %5833 = vmatprep.subr.mxu0 0.0
        %5834 = vmatpush1.msra.mxu0 0.0
        %5835 = vmatprep.subr.mxu0 0.0
        %5836 = vmatpush1.msra.mxu0 0.0
        %5837 = vmatprep.subr.mxu0 0.0
        %5838 = vmatpush1.msra.mxu0 0.0
        %5839 = vmatprep.subr.mxu0 0.0
        %5840 = vmatpush1.msra.mxu0 0.0
        %5841 = vmatprep.subr.mxu0 0.0
        %5842 = vmatpush1.msra.mxu0 0.0
        %5843 = vmatprep.subr.mxu0 0.0
        %5844 = vmatpush1.msra.mxu0 0.0
        %5845 = vmatprep.subr.mxu0 0.0
        %5846 = vmatpush1.msra.mxu0 0.0
        %5847 = vmatprep.subr.mxu0 0.0
        %5848 = vmatpush1.msra.mxu0 0.0
        %5849 = vmatprep.subr.mxu0 0.0
        %5850 = vmatpush1.msra.mxu0 0.0
        %5851 = vmatprep.subr.mxu0 0.0
        %5852 = vmatpush1.msra.mxu0 0.0
        %5853 = vmatprep.subr.mxu0 0.0
        %5854 = vmatpush1.msra.mxu0 0.0
        %5855 = vmatprep.subr.mxu0 0.0
        %5856 = vmatpush1.msra.mxu0 0.0
        %5857 = vmatprep.subr.mxu0 0.0
        %5858 = vmatpush1.msra.mxu0 0.0
        %5859 = vmatprep.subr.mxu0 0.0
        %5860 = vmatpush1.msra.mxu0 0.0
        %5861 = vmatprep.subr.mxu0 0.0
        %5862 = vmatpush1.msra.mxu0 0.0
        %5863 = vmatprep.subr.mxu0 0.0
        %5864 = vmatpush1.msra.mxu0 0.0
        %5865 = vmatprep.mubr.f32.mxu0 0.0
        %5866 = vmatmul.mubr.f32.gmra.mrb[0].mxu0 %v4488
        %v5867 = vpop.f32.mrb[0].mxu0
        %v5868 = vadd.f32 %v5723, %v5867
        %v5869 = vpop.f32.mrb[0].mxu0
        %5870 = vmatprep.mubr.f32.mxu0 0.0
        %5871 = vmatmul.mubr.f32.gmra.mrb[0].mxu0 %v4489
        %v5872 = vpop.f32.mrb[0].mxu0
        %v5873 = vadd.f32 %v5728, %v5872
        %v5874 = vpop.f32.mrb[0].mxu0
        %5875 = vmatprep.mubr.f32.mxu0 0.0
        %5876 = vmatmul.mubr.f32.gmra.mrb[0].mxu0 %v4490
        %v5877 = vpop.f32.mrb[0].mxu0
        %v5878 = vadd.f32 %v5733, %v5877
        %v5879 = vpop.f32.mrb[0].mxu0
        %5880 = vmatprep.mubr.f32.mxu0 0.0
        %5881 = vmatmul.mubr.f32.gmra.mrb[0].mxu0 %v4491
        %v5882 = vpop.f32.mrb[0].mxu0
        %v5883 = vadd.f32 %v5738, %v5882
        %v5884 = vpop.f32.mrb[0].mxu0
        %5885 = vmatprep.mubr.f32.mxu0 0.0
        %5886 = vmatmul.mubr.f32.gmra.mrb[0].mxu0 %v4492
        %v5887 = vpop.f32.mrb[0].mxu0
        %v5888 = vadd.f32 %v5743, %v5887
        %v5889 = vpop.f32.mrb[0].mxu0
        %5890 = vmatprep.mubr.f32.mxu0 0.0
        %5891 = vmatmul.mubr.f32.gmra.mrb[0].mxu0 %v4493
        %v5892 = vpop.f32.mrb[0].mxu0
        %v5893 = vadd.f32 %v5748, %v5892
        %v5894 = vpop.f32.mrb[0].mxu0
        %5895 = vmatprep.mubr.f32.mxu0 0.0
        %5896 = vmatmul.mubr.f32.gmra.mrb[0].mxu0 %v4494
        %v5897 = vpop.f32.mrb[0].mxu0
        %v5898 = vadd.f32 %v5753, %v5897
        %v5899 = vpop.f32.mrb[0].mxu0
        %5900 = vmatprep.mubr.f32.mxu0 0.0
        %5901 = vmatmul.mubr.f32.gmra.mrb[0].mxu0 %v4495
        %v5902 = vpop.f32.mrb[0].mxu0
        %v5903 = vadd.f32 %v5758, %v5902
        %v5904 = vpop.f32.mrb[0].mxu0
        %5905 = vmatprep.mubr.f32.mxu0 0.0
        %5906 = vmatmul.mubr.f32.gmra.mrb[0].mxu0 %v4496
        %v5907 = vpop.f32.mrb[0].mxu0
        %v5908 = vadd.f32 %v5763, %v5907
        %v5909 = vpop.f32.mrb[0].mxu0
        %5910 = vmatprep.mubr.f32.mxu0 0.0
        %5911 = vmatmul.mubr.f32.gmra.mrb[0].mxu0 %v4497
        %v5912 = vpop.f32.mrb[0].mxu0
        %v5913 = vadd.f32 %v5768, %v5912
        %v5914 = vpop.f32.mrb[0].mxu0
        %5915 = vmatprep.mubr.f32.mxu0 0.0
        %5916 = vmatmul.mubr.f32.gmra.mrb[0].mxu0 %v4498
        %v5917 = vpop.f32.mrb[0].mxu0
        %v5918 = vadd.f32 %v5773, %v5917
        %v5919 = vpop.f32.mrb[0].mxu0
        %5920 = vmatprep.mubr.f32.mxu0 0.0
        %5921 = vmatmul.mubr.f32.gmra.mrb[0].mxu0 %v4499
        %v5922 = vpop.f32.mrb[0].mxu0
        %v5923 = vadd.f32 %v5778, %v5922
        %v5924 = vpop.f32.mrb[0].mxu0
        %5925 = vmatprep.mubr.f32.mxu0 0.0
        %5926 = vmatmul.mubr.f32.gmra.mrb[0].mxu0 %v4500
        %v5927 = vpop.f32.mrb[0].mxu0
        %v5928 = vadd.f32 %v5783, %v5927
        %v5929 = vpop.f32.mrb[0].mxu0
        %5930 = vmatprep.mubr.f32.mxu0 0.0
        %5931 = vmatmul.mubr.f32.gmra.mrb[0].mxu0 %v4501
        %v5932 = vpop.f32.mrb[0].mxu0
        %v5933 = vadd.f32 %v5788, %v5932
        %v5934 = vpop.f32.mrb[0].mxu0
        %5935 = vmatprep.mubr.f32.mxu0 0.0
        %5936 = vmatmul.mubr.f32.gmra.mrb[0].mxu0 %v4502
        %v5937 = vpop.f32.mrb[0].mxu0
        %v5938 = vadd.f32 %v5793, %v5937
        %v5939 = vpop.f32.mrb[0].mxu0
        %5940 = vmatprep.mubr.f32.mxu0 0.0
        %5941 = vmatmul.mubr.f32.gmra.mrb[0].mxu0 %v4503
        %v5942 = vpop.f32.mrb[0].mxu0
        %v5943 = vadd.f32 %v5798, %v5942
        %v5944 = vpop.f32.mrb[0].mxu0
        %5945 = vdwg.mxu0
        %s5946 = scalar_lea.vmem %s3, 896
        %v5947 = vld [vmem:[%s5946] sm:$0xff]
        %v5948 = vld [vmem:[%s5946 + $0x8] sm:$0xff]
        %v5949 = vld [vmem:[%s5946 + $0x10] sm:$0xff]
        %v5950 = vld [vmem:[%s5946 + $0x18] sm:$0xff]
        %v5951 = vld [vmem:[%s5946 + $0x20] sm:$0xff]
        %v5952 = vld [vmem:[%s5946 + $0x28] sm:$0xff]
        %v5953 = vld [vmem:[%s5946 + $0x30] sm:$0xff]
        %v5954 = vld [vmem:[%s5946 + $0x38] sm:$0xff]
        %v5955 = vld [vmem:[%s5946 + $0x40] sm:$0xff]
        %v5956 = vld [vmem:[%s5946 + $0x48] sm:$0xff]
        %v5957 = vld [vmem:[%s5946 + $0x50] sm:$0xff]
        %v5958 = vld [vmem:[%s5946 + $0x58] sm:$0xff]
        %v5959 = vld [vmem:[%s5946 + $0x60] sm:$0xff]
        %v5960 = vld [vmem:[%s5946 + $0x68] sm:$0xff]
        %v5961 = vld [vmem:[%s5946 + $0x70] sm:$0xff]
        %v5962 = vld [vmem:[%s5946 + $0x78] sm:$0xff]
        %5963 = vmatprep.subr.mxu0 0.0
        %5964 = vmatpush1.msra.mxu0 %v5947
        %5965 = vmatprep.subr.mxu0 0.0
        %5966 = vmatpush1.msra.mxu0 %v5948
        %5967 = vmatprep.subr.mxu0 0.0
        %5968 = vmatpush1.msra.mxu0 %v5949
        %5969 = vmatprep.subr.mxu0 0.0
        %5970 = vmatpush1.msra.mxu0 %v5950
        %5971 = vmatprep.subr.mxu0 0.0
        %5972 = vmatpush1.msra.mxu0 %v5951
        %5973 = vmatprep.subr.mxu0 0.0
        %5974 = vmatpush1.msra.mxu0 %v5952
        %5975 = vmatprep.subr.mxu0 0.0
        %5976 = vmatpush1.msra.mxu0 %v5953
        %5977 = vmatprep.subr.mxu0 0.0
        %5978 = vmatpush1.msra.mxu0 %v5954
        %5979 = vmatprep.subr.mxu0 0.0
        %5980 = vmatpush1.msra.mxu0 %v5955
        %5981 = vmatprep.subr.mxu0 0.0
        %5982 = vmatpush1.msra.mxu0 %v5956
        %5983 = vmatprep.subr.mxu0 0.0
        %5984 = vmatpush1.msra.mxu0 %v5957
        %5985 = vmatprep.subr.mxu0 0.0
        %5986 = vmatpush1.msra.mxu0 %v5958
        %5987 = vmatprep.subr.mxu0 0.0
        %5988 = vmatpush1.msra.mxu0 %v5959
        %5989 = vmatprep.subr.mxu0 0.0
        %5990 = vmatpush1.msra.mxu0 %v5960
        %5991 = vmatprep.subr.mxu0 0.0
        %5992 = vmatpush1.msra.mxu0 %v5961
        %5993 = vmatprep.subr.mxu0 0.0
        %5994 = vmatpush1.msra.mxu0 %v5962
        %5995 = vmatprep.subr.mxu0 0.0
        %5996 = vmatpush1.msra.mxu0 0.0
        %5997 = vmatprep.subr.mxu0 0.0
        %5998 = vmatpush1.msra.mxu0 0.0
        %5999 = vmatprep.subr.mxu0 0.0
        %6000 = vmatpush1.msra.mxu0 0.0
        %6001 = vmatprep.subr.mxu0 0.0
        %6002 = vmatpush1.msra.mxu0 0.0
        %6003 = vmatprep.subr.mxu0 0.0
        %6004 = vmatpush1.msra.mxu0 0.0
        %6005 = vmatprep.subr.mxu0 0.0
        %6006 = vmatpush1.msra.mxu0 0.0
        %6007 = vmatprep.subr.mxu0 0.0
        %6008 = vmatpush1.msra.mxu0 0.0
        %6009 = vmatprep.subr.mxu0 0.0
        %6010 = vmatpush1.msra.mxu0 0.0
        %6011 = vmatprep.subr.mxu0 0.0
        %6012 = vmatpush1.msra.mxu0 0.0
        %6013 = vmatprep.subr.mxu0 0.0
        %6014 = vmatpush1.msra.mxu0 0.0
        %6015 = vmatprep.subr.mxu0 0.0
        %6016 = vmatpush1.msra.mxu0 0.0
        %6017 = vmatprep.subr.mxu0 0.0
        %6018 = vmatpush1.msra.mxu0 0.0
        %6019 = vmatprep.subr.mxu0 0.0
        %6020 = vmatpush1.msra.mxu0 0.0
        %6021 = vmatprep.subr.mxu0 0.0
        %6022 = vmatpush1.msra.mxu0 0.0
        %6023 = vmatprep.subr.mxu0 0.0
        %6024 = vmatpush1.msra.mxu0 0.0
        %6025 = vmatprep.subr.mxu0 0.0
        %6026 = vmatpush1.msra.mxu0 0.0
        %6027 = vmatprep.mubr.f32.mxu0 0.0
        %6028 = vmatmul.mubr.f32.gmra.mrb[0].mxu0 %v4911
        %v6029 = vpop.f32.mrb[0].mxu0
        %v6030 = vadd.f32 0.0, %v6029
        %v6031 = vpop.f32.mrb[0].mxu0
        %6032 = vmatprep.mubr.f32.mxu0 0.0
        %6033 = vmatmul.mubr.f32.gmra.mrb[0].mxu0 %v4913
        %v6034 = vpop.f32.mrb[0].mxu0
        %v6035 = vadd.f32 0.0, %v6034
        %v6036 = vpop.f32.mrb[0].mxu0
        %6037 = vmatprep.mubr.f32.mxu0 0.0
        %6038 = vmatmul.mubr.f32.gmra.mrb[0].mxu0 %v4915
        %v6039 = vpop.f32.mrb[0].mxu0
        %v6040 = vadd.f32 0.0, %v6039
        %v6041 = vpop.f32.mrb[0].mxu0
        %6042 = vmatprep.mubr.f32.mxu0 0.0
        %6043 = vmatmul.mubr.f32.gmra.mrb[0].mxu0 %v4917
        %v6044 = vpop.f32.mrb[0].mxu0
        %v6045 = vadd.f32 0.0, %v6044
        %v6046 = vpop.f32.mrb[0].mxu0
        %6047 = vmatprep.mubr.f32.mxu0 0.0
        %6048 = vmatmul.mubr.f32.gmra.mrb[0].mxu0 %v4919
        %v6049 = vpop.f32.mrb[0].mxu0
        %v6050 = vadd.f32 0.0, %v6049
        %v6051 = vpop.f32.mrb[0].mxu0
        %6052 = vmatprep.mubr.f32.mxu0 0.0
        %6053 = vmatmul.mubr.f32.gmra.mrb[0].mxu0 %v4921
        %v6054 = vpop.f32.mrb[0].mxu0
        %v6055 = vadd.f32 0.0, %v6054
        %v6056 = vpop.f32.mrb[0].mxu0
        %6057 = vmatprep.mubr.f32.mxu0 0.0
        %6058 = vmatmul.mubr.f32.gmra.mrb[0].mxu0 %v4923
        %v6059 = vpop.f32.mrb[0].mxu0
        %v6060 = vadd.f32 0.0, %v6059
        %v6061 = vpop.f32.mrb[0].mxu0
        %6062 = vmatprep.mubr.f32.mxu0 0.0
        %6063 = vmatmul.mubr.f32.gmra.mrb[0].mxu0 %v4925
        %v6064 = vpop.f32.mrb[0].mxu0
        %v6065 = vadd.f32 0.0, %v6064
        %v6066 = vpop.f32.mrb[0].mxu0
        %6067 = vmatprep.mubr.f32.mxu0 0.0
        %6068 = vmatmul.mubr.f32.gmra.mrb[0].mxu0 %v4927
        %v6069 = vpop.f32.mrb[0].mxu0
        %v6070 = vadd.f32 0.0, %v6069
        %v6071 = vpop.f32.mrb[0].mxu0
        %6072 = vmatprep.mubr.f32.mxu0 0.0
        %6073 = vmatmul.mubr.f32.gmra.mrb[0].mxu0 %v4929
        %v6074 = vpop.f32.mrb[0].mxu0
        %v6075 = vadd.f32 0.0, %v6074
        %v6076 = vpop.f32.mrb[0].mxu0
        %6077 = vmatprep.mubr.f32.mxu0 0.0
        %6078 = vmatmul.mubr.f32.gmra.mrb[0].mxu0 %v4931
        %v6079 = vpop.f32.mrb[0].mxu0
        %v6080 = vadd.f32 0.0, %v6079
        %v6081 = vpop.f32.mrb[0].mxu0
        %6082 = vmatprep.mubr.f32.mxu0 0.0
        %6083 = vmatmul.mubr.f32.gmra.mrb[0].mxu0 %v4933
        %v6084 = vpop.f32.mrb[0].mxu0
        %v6085 = vadd.f32 0.0, %v6084
        %v6086 = vpop.f32.mrb[0].mxu0
        %6087 = vmatprep.mubr.f32.mxu0 0.0
        %6088 = vmatmul.mubr.f32.gmra.mrb[0].mxu0 %v4935
        %v6089 = vpop.f32.mrb[0].mxu0
        %v6090 = vadd.f32 0.0, %v6089
        %v6091 = vpop.f32.mrb[0].mxu0
        %6092 = vmatprep.mubr.f32.mxu0 0.0
        %6093 = vmatmul.mubr.f32.gmra.mrb[0].mxu0 %v4937
        %v6094 = vpop.f32.mrb[0].mxu0
        %v6095 = vadd.f32 0.0, %v6094
        %v6096 = vpop.f32.mrb[0].mxu0
        %6097 = vmatprep.mubr.f32.mxu0 0.0
        %6098 = vmatmul.mubr.f32.gmra.mrb[0].mxu0 %v4939
        %v6099 = vpop.f32.mrb[0].mxu0
        %v6100 = vadd.f32 0.0, %v6099
        %v6101 = vpop.f32.mrb[0].mxu0
        %6102 = vmatprep.mubr.f32.mxu0 0.0
        %6103 = vmatmul.mubr.f32.gmra.mrb[0].mxu0 %v4938
        %v6104 = vpop.f32.mrb[0].mxu0
        %v6105 = vadd.f32 0.0, %v6104
        %v6106 = vpop.f32.mrb[0].mxu0
        %6107 = vdwg.mxu0
        %v6108 = vadd.f32 %v5868, %v6030
        %v6109 = vadd.f32 %v5873, %v6035
        %v6110 = vadd.f32 %v5878, %v6040
        %v6111 = vadd.f32 %v5883, %v6045
        %v6112 = vadd.f32 %v5888, %v6050
        %v6113 = vadd.f32 %v5893, %v6055
        %v6114 = vadd.f32 %v5898, %v6060
        %v6115 = vadd.f32 %v5903, %v6065
        %v6116 = vadd.f32 %v5908, %v6070
        %v6117 = vadd.f32 %v5913, %v6075
        %v6118 = vadd.f32 %v5918, %v6080
        %v6119 = vadd.f32 %v5923, %v6085
        %v6120 = vadd.f32 %v5928, %v6090
        %v6121 = vadd.f32 %v5933, %v6095
        %v6122 = vadd.f32 %v5938, %v6100
        %v6123 = vadd.f32 %v5943, %v6105
        %s6124 = scalar_lea.vmem %s3, 1024
        %v6125 = vld [vmem:[%s6124] sm:$0xff]
        %v6126 = vld [vmem:[%s6124 + $0x8] sm:$0xff]
        %v6127 = vld [vmem:[%s6124 + $0x10] sm:$0xff]
        %v6128 = vld [vmem:[%s6124 + $0x18] sm:$0xff]
        %v6129 = vld [vmem:[%s6124 + $0x20] sm:$0xff]
        %v6130 = vld [vmem:[%s6124 + $0x28] sm:$0xff]
        %v6131 = vld [vmem:[%s6124 + $0x30] sm:$0xff]
        %v6132 = vld [vmem:[%s6124 + $0x38] sm:$0xff]
        %v6133 = vld [vmem:[%s6124 + $0x40] sm:$0xff]
        %v6134 = vld [vmem:[%s6124 + $0x48] sm:$0xff]
        %v6135 = vld [vmem:[%s6124 + $0x50] sm:$0xff]
        %v6136 = vld [vmem:[%s6124 + $0x58] sm:$0xff]
        %v6137 = vld [vmem:[%s6124 + $0x60] sm:$0xff]
        %v6138 = vld [vmem:[%s6124 + $0x68] sm:$0xff]
        %v6139 = vld [vmem:[%s6124 + $0x70] sm:$0xff]
        %v6140 = vld [vmem:[%s6124 + $0x78] sm:$0xff]
        %6141 = vmatprep.subr.mxu0 0.0
        %6142 = vmatpush1.msra.mxu0 %v6125
        %6143 = vmatprep.subr.mxu0 0.0
        %6144 = vmatpush1.msra.mxu0 %v6126
        %6145 = vmatprep.subr.mxu0 0.0
        %6146 = vmatpush1.msra.mxu0 %v6127
        %6147 = vmatprep.subr.mxu0 0.0
        %6148 = vmatpush1.msra.mxu0 %v6128
        %6149 = vmatprep.subr.mxu0 0.0
        %6150 = vmatpush1.msra.mxu0 %v6129
        %6151 = vmatprep.subr.mxu0 0.0
        %6152 = vmatpush1.msra.mxu0 %v6130
        %6153 = vmatprep.subr.mxu0 0.0
        %6154 = vmatpush1.msra.mxu0 %v6131
        %6155 = vmatprep.subr.mxu0 0.0
        %6156 = vmatpush1.msra.mxu0 %v6132
        %6157 = vmatprep.subr.mxu0 0.0
        %6158 = vmatpush1.msra.mxu0 %v6133
        %6159 = vmatprep.subr.mxu0 0.0
        %6160 = vmatpush1.msra.mxu0 %v6134
        %6161 = vmatprep.subr.mxu0 0.0
        %6162 = vmatpush1.msra.mxu0 %v6135
        %6163 = vmatprep.subr.mxu0 0.0
        %6164 = vmatpush1.msra.mxu0 %v6136
        %6165 = vmatprep.subr.mxu0 0.0
        %6166 = vmatpush1.msra.mxu0 %v6137
        %6167 = vmatprep.subr.mxu0 0.0
        %6168 = vmatpush1.msra.mxu0 %v6138
        %6169 = vmatprep.subr.mxu0 0.0
        %6170 = vmatpush1.msra.mxu0 %v6139
        %6171 = vmatprep.subr.mxu0 0.0
        %6172 = vmatpush1.msra.mxu0 %v6140
        %6173 = vmatprep.subr.mxu0 0.0
        %6174 = vmatpush1.msra.mxu0 0.0
        %6175 = vmatprep.subr.mxu0 0.0
        %6176 = vmatpush1.msra.mxu0 0.0
        %6177 = vmatprep.subr.mxu0 0.0
        %6178 = vmatpush1.msra.mxu0 0.0
        %6179 = vmatprep.subr.mxu0 0.0
        %6180 = vmatpush1.msra.mxu0 0.0
        %6181 = vmatprep.subr.mxu0 0.0
        %6182 = vmatpush1.msra.mxu0 0.0
        %6183 = vmatprep.subr.mxu0 0.0
        %6184 = vmatpush1.msra.mxu0 0.0
        %6185 = vmatprep.subr.mxu0 0.0
        %6186 = vmatpush1.msra.mxu0 0.0
        %6187 = vmatprep.subr.mxu0 0.0
        %6188 = vmatpush1.msra.mxu0 0.0
        %6189 = vmatprep.subr.mxu0 0.0
        %6190 = vmatpush1.msra.mxu0 0.0
        %6191 = vmatprep.subr.mxu0 0.0
        %6192 = vmatpush1.msra.mxu0 0.0
        %6193 = vmatprep.subr.mxu0 0.0
        %6194 = vmatpush1.msra.mxu0 0.0
        %6195 = vmatprep.subr.mxu0 0.0
        %6196 = vmatpush1.msra.mxu0 0.0
        %6197 = vmatprep.subr.mxu0 0.0
        %6198 = vmatpush1.msra.mxu0 0.0
        %6199 = vmatprep.subr.mxu0 0.0
        %6200 = vmatpush1.msra.mxu0 0.0
        %6201 = vmatprep.subr.mxu0 0.0
        %6202 = vmatpush1.msra.mxu0 0.0
        %6203 = vmatprep.subr.mxu0 0.0
        %6204 = vmatpush1.msra.mxu0 0.0
        %6205 = vmatprep.mubr.f32.mxu0 0.0
        %6206 = vmatmul.mubr.f32.gmra.mrb[0].mxu0 %v5137
        %v6207 = vpop.f32.mrb[0].mxu0
        %v6208 = vadd.f32 0.0, %v6207
        %v6209 = vpop.f32.mrb[0].mxu0
        %6210 = vmatprep.mubr.f32.mxu0 0.0
        %6211 = vmatmul.mubr.f32.gmra.mrb[0].mxu0 %v5139
        %v6212 = vpop.f32.mrb[0].mxu0
        %v6213 = vadd.f32 0.0, %v6212
        %v6214 = vpop.f32.mrb[0].mxu0
        %6215 = vmatprep.mubr.f32.mxu0 0.0
        %6216 = vmatmul.mubr.f32.gmra.mrb[0].mxu0 %v5141
        %v6217 = vpop.f32.mrb[0].mxu0
        %v6218 = vadd.f32 0.0, %v6217
        %v6219 = vpop.f32.mrb[0].mxu0
        %6220 = vmatprep.mubr.f32.mxu0 0.0
        %6221 = vmatmul.mubr.f32.gmra.mrb[0].mxu0 %v5143
        %v6222 = vpop.f32.mrb[0].mxu0
        %v6223 = vadd.f32 0.0, %v6222
        %v6224 = vpop.f32.mrb[0].mxu0
        %6225 = vmatprep.mubr.f32.mxu0 0.0
        %6226 = vmatmul.mubr.f32.gmra.mrb[0].mxu0 %v5145
        %v6227 = vpop.f32.mrb[0].mxu0
        %v6228 = vadd.f32 0.0, %v6227
        %v6229 = vpop.f32.mrb[0].mxu0
        %6230 = vmatprep.mubr.f32.mxu0 0.0
        %6231 = vmatmul.mubr.f32.gmra.mrb[0].mxu0 %v5147
        %v6232 = vpop.f32.mrb[0].mxu0
        %v6233 = vadd.f32 0.0, %v6232
        %v6234 = vpop.f32.mrb[0].mxu0
        %6235 = vmatprep.mubr.f32.mxu0 0.0
        %6236 = vmatmul.mubr.f32.gmra.mrb[0].mxu0 %v5149
        %v6237 = vpop.f32.mrb[0].mxu0
        %v6238 = vadd.f32 0.0, %v6237
        %v6239 = vpop.f32.mrb[0].mxu0
        %6240 = vmatprep.mubr.f32.mxu0 0.0
        %6241 = vmatmul.mubr.f32.gmra.mrb[0].mxu0 %v5151
        %v6242 = vpop.f32.mrb[0].mxu0
        %v6243 = vadd.f32 0.0, %v6242
        %v6244 = vpop.f32.mrb[0].mxu0
        %6245 = vmatprep.mubr.f32.mxu0 0.0
        %6246 = vmatmul.mubr.f32.gmra.mrb[0].mxu0 %v5153
        %v6247 = vpop.f32.mrb[0].mxu0
        %v6248 = vadd.f32 0.0, %v6247
        %v6249 = vpop.f32.mrb[0].mxu0
        %6250 = vmatprep.mubr.f32.mxu0 0.0
        %6251 = vmatmul.mubr.f32.gmra.mrb[0].mxu0 %v5155
        %v6252 = vpop.f32.mrb[0].mxu0
        %v6253 = vadd.f32 0.0, %v6252
        %v6254 = vpop.f32.mrb[0].mxu0
        %6255 = vmatprep.mubr.f32.mxu0 0.0
        %6256 = vmatmul.mubr.f32.gmra.mrb[0].mxu0 %v5157
        %v6257 = vpop.f32.mrb[0].mxu0
        %v6258 = vadd.f32 0.0, %v6257
        %v6259 = vpop.f32.mrb[0].mxu0
        %6260 = vmatprep.mubr.f32.mxu0 0.0
        %6261 = vmatmul.mubr.f32.gmra.mrb[0].mxu0 %v5159
        %v6262 = vpop.f32.mrb[0].mxu0
        %v6263 = vadd.f32 0.0, %v6262
        %v6264 = vpop.f32.mrb[0].mxu0
        %6265 = vmatprep.mubr.f32.mxu0 0.0
        %6266 = vmatmul.mubr.f32.gmra.mrb[0].mxu0 %v5161
        %v6267 = vpop.f32.mrb[0].mxu0
        %v6268 = vadd.f32 0.0, %v6267
        %v6269 = vpop.f32.mrb[0].mxu0
        %6270 = vmatprep.mubr.f32.mxu0 0.0
        %6271 = vmatmul.mubr.f32.gmra.mrb[0].mxu0 %v5163
        %v6272 = vpop.f32.mrb[0].mxu0
        %v6273 = vadd.f32 0.0, %v6272
        %v6274 = vpop.f32.mrb[0].mxu0
        %6275 = vmatprep.mubr.f32.mxu0 0.0
        %6276 = vmatmul.mubr.f32.gmra.mrb[0].mxu0 %v5165
        %v6277 = vpop.f32.mrb[0].mxu0
        %v6278 = vadd.f32 0.0, %v6277
        %v6279 = vpop.f32.mrb[0].mxu0
        %6280 = vmatprep.mubr.f32.mxu0 0.0
        %6281 = vmatmul.mubr.f32.gmra.mrb[0].mxu0 %v5164
        %v6282 = vpop.f32.mrb[0].mxu0
        %v6283 = vadd.f32 0.0, %v6282
        %v6284 = vpop.f32.mrb[0].mxu0
        %6285 = vdwg.mxu0
        %v6286 = vadd.f32 %v6108, %v6208
        %v6287 = vadd.f32 %v6109, %v6213
        %v6288 = vadd.f32 %v6110, %v6218
        %v6289 = vadd.f32 %v6111, %v6223
        %v6290 = vadd.f32 %v6112, %v6228
        %v6291 = vadd.f32 %v6113, %v6233
        %v6292 = vadd.f32 %v6114, %v6238
        %v6293 = vadd.f32 %v6115, %v6243
        %v6294 = vadd.f32 %v6116, %v6248
        %v6295 = vadd.f32 %v6117, %v6253
        %v6296 = vadd.f32 %v6118, %v6258
        %v6297 = vadd.f32 %v6119, %v6263
        %v6298 = vadd.f32 %v6120, %v6268
        %v6299 = vadd.f32 %v6121, %v6273
        %v6300 = vadd.f32 %v6122, %v6278
        %v6301 = vadd.f32 %v6123, %v6283
        %s6302 = scalar_lea.vmem %s3, 1152
        %v6303 = vld [vmem:[%s6302] sm:$0xff]
        %v6304 = vld [vmem:[%s6302 + $0x8] sm:$0xff]
        %v6305 = vld [vmem:[%s6302 + $0x10] sm:$0xff]
        %v6306 = vld [vmem:[%s6302 + $0x18] sm:$0xff]
        %v6307 = vld [vmem:[%s6302 + $0x20] sm:$0xff]
        %v6308 = vld [vmem:[%s6302 + $0x28] sm:$0xff]
        %v6309 = vld [vmem:[%s6302 + $0x30] sm:$0xff]
        %v6310 = vld [vmem:[%s6302 + $0x38] sm:$0xff]
        %v6311 = vld [vmem:[%s6302 + $0x40] sm:$0xff]
        %v6312 = vld [vmem:[%s6302 + $0x48] sm:$0xff]
        %v6313 = vld [vmem:[%s6302 + $0x50] sm:$0xff]
        %v6314 = vld [vmem:[%s6302 + $0x58] sm:$0xff]
        %v6315 = vld [vmem:[%s6302 + $0x60] sm:$0xff]
        %v6316 = vld [vmem:[%s6302 + $0x68] sm:$0xff]
        %v6317 = vld [vmem:[%s6302 + $0x70] sm:$0xff]
        %v6318 = vld [vmem:[%s6302 + $0x78] sm:$0xff]
        %6319 = vmatprep.subr.mxu0 0.0
        %6320 = vmatpush1.msra.mxu0 %v6303
        %6321 = vmatprep.subr.mxu0 0.0
        %6322 = vmatpush1.msra.mxu0 %v6304
        %6323 = vmatprep.subr.mxu0 0.0
        %6324 = vmatpush1.msra.mxu0 %v6305
        %6325 = vmatprep.subr.mxu0 0.0
        %6326 = vmatpush1.msra.mxu0 %v6306
        %6327 = vmatprep.subr.mxu0 0.0
        %6328 = vmatpush1.msra.mxu0 %v6307
        %6329 = vmatprep.subr.mxu0 0.0
        %6330 = vmatpush1.msra.mxu0 %v6308
        %6331 = vmatprep.subr.mxu0 0.0
        %6332 = vmatpush1.msra.mxu0 %v6309
        %6333 = vmatprep.subr.mxu0 0.0
        %6334 = vmatpush1.msra.mxu0 %v6310
        %6335 = vmatprep.subr.mxu0 0.0
        %6336 = vmatpush1.msra.mxu0 %v6311
        %6337 = vmatprep.subr.mxu0 0.0
        %6338 = vmatpush1.msra.mxu0 %v6312
        %6339 = vmatprep.subr.mxu0 0.0
        %6340 = vmatpush1.msra.mxu0 %v6313
        %6341 = vmatprep.subr.mxu0 0.0
        %6342 = vmatpush1.msra.mxu0 %v6314
        %6343 = vmatprep.subr.mxu0 0.0
        %6344 = vmatpush1.msra.mxu0 %v6315
        %6345 = vmatprep.subr.mxu0 0.0
        %6346 = vmatpush1.msra.mxu0 %v6316
        %6347 = vmatprep.subr.mxu0 0.0
        %6348 = vmatpush1.msra.mxu0 %v6317
        %6349 = vmatprep.subr.mxu0 0.0
        %6350 = vmatpush1.msra.mxu0 %v6318
        %6351 = vmatprep.subr.mxu0 0.0
        %6352 = vmatpush1.msra.mxu0 0.0
        %6353 = vmatprep.subr.mxu0 0.0
        %6354 = vmatpush1.msra.mxu0 0.0
        %6355 = vmatprep.subr.mxu0 0.0
        %6356 = vmatpush1.msra.mxu0 0.0
        %6357 = vmatprep.subr.mxu0 0.0
        %6358 = vmatpush1.msra.mxu0 0.0
        %6359 = vmatprep.subr.mxu0 0.0
        %6360 = vmatpush1.msra.mxu0 0.0
        %6361 = vmatprep.subr.mxu0 0.0
        %6362 = vmatpush1.msra.mxu0 0.0
        %6363 = vmatprep.subr.mxu0 0.0
        %6364 = vmatpush1.msra.mxu0 0.0
        %6365 = vmatprep.subr.mxu0 0.0
        %6366 = vmatpush1.msra.mxu0 0.0
        %6367 = vmatprep.subr.mxu0 0.0
        %6368 = vmatpush1.msra.mxu0 0.0
        %6369 = vmatprep.subr.mxu0 0.0
        %6370 = vmatpush1.msra.mxu0 0.0
        %6371 = vmatprep.subr.mxu0 0.0
        %6372 = vmatpush1.msra.mxu0 0.0
        %6373 = vmatprep.subr.mxu0 0.0
        %6374 = vmatpush1.msra.mxu0 0.0
        %6375 = vmatprep.subr.mxu0 0.0
        %6376 = vmatpush1.msra.mxu0 0.0
        %6377 = vmatprep.subr.mxu0 0.0
        %6378 = vmatpush1.msra.mxu0 0.0
        %6379 = vmatprep.subr.mxu0 0.0
        %6380 = vmatpush1.msra.mxu0 0.0
        %6381 = vmatprep.subr.mxu0 0.0
        %6382 = vmatpush1.msra.mxu0 0.0
        %6383 = vmatprep.mubr.f32.mxu0 0.0
        %6384 = vmatmul.mubr.f32.gmra.mrb[0].mxu0 %v5363
        %v6385 = vpop.f32.mrb[0].mxu0
        %v6386 = vadd.f32 0.0, %v6385
        %v6387 = vpop.f32.mrb[0].mxu0
        %6388 = vmatprep.mubr.f32.mxu0 0.0
        %6389 = vmatmul.mubr.f32.gmra.mrb[0].mxu0 %v5365
        %v6390 = vpop.f32.mrb[0].mxu0
        %v6391 = vadd.f32 0.0, %v6390
        %v6392 = vpop.f32.mrb[0].mxu0
        %6393 = vmatprep.mubr.f32.mxu0 0.0
        %6394 = vmatmul.mubr.f32.gmra.mrb[0].mxu0 %v5367
        %v6395 = vpop.f32.mrb[0].mxu0
        %v6396 = vadd.f32 0.0, %v6395
        %v6397 = vpop.f32.mrb[0].mxu0
        %6398 = vmatprep.mubr.f32.mxu0 0.0
        %6399 = vmatmul.mubr.f32.gmra.mrb[0].mxu0 %v5369
        %v6400 = vpop.f32.mrb[0].mxu0
        %v6401 = vadd.f32 0.0, %v6400
        %v6402 = vpop.f32.mrb[0].mxu0
        %6403 = vmatprep.mubr.f32.mxu0 0.0
        %6404 = vmatmul.mubr.f32.gmra.mrb[0].mxu0 %v5371
        %v6405 = vpop.f32.mrb[0].mxu0
        %v6406 = vadd.f32 0.0, %v6405
        %v6407 = vpop.f32.mrb[0].mxu0
        %6408 = vmatprep.mubr.f32.mxu0 0.0
        %6409 = vmatmul.mubr.f32.gmra.mrb[0].mxu0 %v5373
        %v6410 = vpop.f32.mrb[0].mxu0
        %v6411 = vadd.f32 0.0, %v6410
        %v6412 = vpop.f32.mrb[0].mxu0
        %6413 = vmatprep.mubr.f32.mxu0 0.0
        %6414 = vmatmul.mubr.f32.gmra.mrb[0].mxu0 %v5375
        %v6415 = vpop.f32.mrb[0].mxu0
        %v6416 = vadd.f32 0.0, %v6415
        %v6417 = vpop.f32.mrb[0].mxu0
        %6418 = vmatprep.mubr.f32.mxu0 0.0
        %6419 = vmatmul.mubr.f32.gmra.mrb[0].mxu0 %v5377
        %v6420 = vpop.f32.mrb[0].mxu0
        %v6421 = vadd.f32 0.0, %v6420
        %v6422 = vpop.f32.mrb[0].mxu0
        %6423 = vmatprep.mubr.f32.mxu0 0.0
        %6424 = vmatmul.mubr.f32.gmra.mrb[0].mxu0 %v5379
        %v6425 = vpop.f32.mrb[0].mxu0
        %v6426 = vadd.f32 0.0, %v6425
        %v6427 = vpop.f32.mrb[0].mxu0
        %6428 = vmatprep.mubr.f32.mxu0 0.0
        %6429 = vmatmul.mubr.f32.gmra.mrb[0].mxu0 %v5381
        %v6430 = vpop.f32.mrb[0].mxu0
        %v6431 = vadd.f32 0.0, %v6430
        %v6432 = vpop.f32.mrb[0].mxu0
        %6433 = vmatprep.mubr.f32.mxu0 0.0
        %6434 = vmatmul.mubr.f32.gmra.mrb[0].mxu0 %v5383
        %v6435 = vpop.f32.mrb[0].mxu0
        %v6436 = vadd.f32 0.0, %v6435
        %v6437 = vpop.f32.mrb[0].mxu0
        %6438 = vmatprep.mubr.f32.mxu0 0.0
        %6439 = vmatmul.mubr.f32.gmra.mrb[0].mxu0 %v5385
        %v6440 = vpop.f32.mrb[0].mxu0
        %v6441 = vadd.f32 0.0, %v6440
        %v6442 = vpop.f32.mrb[0].mxu0
        %6443 = vmatprep.mubr.f32.mxu0 0.0
        %6444 = vmatmul.mubr.f32.gmra.mrb[0].mxu0 %v5387
        %v6445 = vpop.f32.mrb[0].mxu0
        %v6446 = vadd.f32 0.0, %v6445
        %v6447 = vpop.f32.mrb[0].mxu0
        %6448 = vmatprep.mubr.f32.mxu0 0.0
        %6449 = vmatmul.mubr.f32.gmra.mrb[0].mxu0 %v5389
        %v6450 = vpop.f32.mrb[0].mxu0
        %v6451 = vadd.f32 0.0, %v6450
        %v6452 = vpop.f32.mrb[0].mxu0
        %6453 = vmatprep.mubr.f32.mxu0 0.0
        %6454 = vmatmul.mubr.f32.gmra.mrb[0].mxu0 %v5391
        %v6455 = vpop.f32.mrb[0].mxu0
        %v6456 = vadd.f32 0.0, %v6455
        %v6457 = vpop.f32.mrb[0].mxu0
        %6458 = vmatprep.mubr.f32.mxu0 0.0
        %6459 = vmatmul.mubr.f32.gmra.mrb[0].mxu0 %v5390
        %v6460 = vpop.f32.mrb[0].mxu0
        %v6461 = vadd.f32 0.0, %v6460
        %v6462 = vpop.f32.mrb[0].mxu0
        %6463 = vdwg.mxu0
        %v6464 = vadd.f32 %v6286, %v6386
        %v6465 = vadd.f32 %v6287, %v6391
        %v6466 = vadd.f32 %v6288, %v6396
        %v6467 = vadd.f32 %v6289, %v6401
        %v6468 = vadd.f32 %v6290, %v6406
        %v6469 = vadd.f32 %v6291, %v6411
        %v6470 = vadd.f32 %v6292, %v6416
        %v6471 = vadd.f32 %v6293, %v6421
        %v6472 = vadd.f32 %v6294, %v6426
        %v6473 = vadd.f32 %v6295, %v6431
        %v6474 = vadd.f32 %v6296, %v6436
        %v6475 = vadd.f32 %v6297, %v6441
        %v6476 = vadd.f32 %v6298, %v6446
        %v6477 = vadd.f32 %v6299, %v6451
        %v6478 = vadd.f32 %v6300, %v6456
        %v6479 = vadd.f32 %v6301, %v6461
        %v6480 = vld [vmem:[%s4 + $0x1] sm:$0x1]
        %v6481 = vlaneseq
        %v6482 = vshrl.u32 %v6481, 7
        %v6483 = vsub.s32 0, %v6482
        %v6484 = vrot.slane %v6480, %v6483
        %v6485 = vadd.f32 %v6464, %v6484
        %v6486 = vadd.f32 %v6465, %v6484
        %v6487 = vadd.f32 %v6466, %v6484
        %v6488 = vadd.f32 %v6467, %v6484
        %v6489 = vadd.f32 %v6468, %v6484
        %v6490 = vadd.f32 %v6469, %v6484
        %v6491 = vadd.f32 %v6470, %v6484
        %v6492 = vadd.f32 %v6471, %v6484
        %v6493 = vadd.f32 %v6472, %v6484
        %v6494 = vadd.f32 %v6473, %v6484
        %v6495 = vadd.f32 %v6474, %v6484
        %v6496 = vadd.f32 %v6475, %v6484
        %v6497 = vadd.f32 %v6476, %v6484
        %v6498 = vadd.f32 %v6477, %v6484
        %v6499 = vadd.f32 %v6478, %v6484
        %v6500 = vadd.f32 %v6479, %v6484
        %v6501 = vmax.f32 %v6485, 0.0
        %v6502 = vmax.f32 %v6486, 0.0
        %v6503 = vmax.f32 %v6487, 0.0
        %v6504 = vmax.f32 %v6488, 0.0
        %v6505 = vmax.f32 %v6489, 0.0
        %v6506 = vmax.f32 %v6490, 0.0
        %v6507 = vmax.f32 %v6491, 0.0
        %v6508 = vmax.f32 %v6492, 0.0
        %v6509 = vmax.f32 %v6493, 0.0
        %v6510 = vmax.f32 %v6494, 0.0
        %v6511 = vmax.f32 %v6495, 0.0
        %v6512 = vmax.f32 %v6496, 0.0
        %v6513 = vmax.f32 %v6497, 0.0
        %v6514 = vmax.f32 %v6498, 0.0
        %v6515 = vmax.f32 %v6499, 0.0
        %v6516 = vmax.f32 %v6500, 0.0
        %v6517 = vld [vmem:[#allocation3] sm:$0xff]
        %v6518 = vld [vmem:[#allocation3 + $0x8] sm:$0xff]
        %v6519 = vld [vmem:[#allocation3 + $0x10] sm:$0xff]
        %v6520 = vld [vmem:[#allocation3 + $0x18] sm:$0xff]
        %v6521 = vld [vmem:[#allocation3 + $0x20] sm:$0xff]
        %v6522 = vld [vmem:[#allocation3 + $0x28] sm:$0xff]
        %v6523 = vld [vmem:[#allocation3 + $0x30] sm:$0xff]
        %v6524 = vld [vmem:[#allocation3 + $0x38] sm:$0xff]
        %v6525 = vld [vmem:[#allocation3 + $0x40] sm:$0xff]
        %v6526 = vld [vmem:[#allocation3 + $0x48] sm:$0xff]
        %v6527 = vld [vmem:[#allocation3 + $0x50] sm:$0xff]
        %v6528 = vld [vmem:[#allocation3 + $0x58] sm:$0xff]
        %v6529 = vld [vmem:[#allocation3 + $0x60] sm:$0xff]
        %v6530 = vld [vmem:[#allocation3 + $0x68] sm:$0xff]
        %v6531 = vld [vmem:[#allocation3 + $0x70] sm:$0xff]
        %v6532 = vld [vmem:[#allocation3 + $0x78] sm:$0xf]
        %v6533 = vmax.f32 %v6517, %v6501
        %v6534 = vmax.f32 %v6518, %v6502
        %v6535 = vmax.f32 %v6519, %v6503
        %v6536 = vmax.f32 %v6520, %v6504
        %v6537 = vmax.f32 %v6521, %v6505
        %v6538 = vmax.f32 %v6522, %v6506
        %v6539 = vmax.f32 %v6523, %v6507
        %v6540 = vmax.f32 %v6524, %v6508
        %v6541 = vmax.f32 %v6525, %v6509
        %v6542 = vmax.f32 %v6526, %v6510
        %v6543 = vmax.f32 %v6527, %v6511
        %v6544 = vmax.f32 %v6528, %v6512
        %v6545 = vmax.f32 %v6529, %v6513
        %v6546 = vmax.f32 %v6530, %v6514
        %v6547 = vmax.f32 %v6531, %v6515
        %v6548 = vmax.f32 %v6532, %v6516
        %6549 = vst [vmem:[#allocation3] sm:$0xff] %v6533
        %6550 = vst [vmem:[#allocation3 + $0x8] sm:$0xff] %v6534
        %6551 = vst [vmem:[#allocation3 + $0x10] sm:$0xff] %v6535
        %6552 = vst [vmem:[#allocation3 + $0x18] sm:$0xff] %v6536
        %6553 = vst [vmem:[#allocation3 + $0x20] sm:$0xff] %v6537
        %6554 = vst [vmem:[#allocation3 + $0x28] sm:$0xff] %v6538
        %6555 = vst [vmem:[#allocation3 + $0x30] sm:$0xff] %v6539
        %6556 = vst [vmem:[#allocation3 + $0x38] sm:$0xff] %v6540
        %6557 = vst [vmem:[#allocation3 + $0x40] sm:$0xff] %v6541
        %6558 = vst [vmem:[#allocation3 + $0x48] sm:$0xff] %v6542
        %6559 = vst [vmem:[#allocation3 + $0x50] sm:$0xff] %v6543
        %6560 = vst [vmem:[#allocation3 + $0x58] sm:$0xff] %v6544
        %6561 = vst [vmem:[#allocation3 + $0x60] sm:$0xff] %v6545
        %6562 = vst [vmem:[#allocation3 + $0x68] sm:$0xff] %v6546
        %6563 = vst [vmem:[#allocation3 + $0x70] sm:$0xff] %v6547
        %6564 = vst [vmem:[#allocation3 + $0x78] sm:$0xf] %v6548
        %v6565 = vld [vmem:[#allocation3] ss:$16 sm:$0x3]
        %v6566 = vld [vmem:[#allocation3] ss:$16 sm:$0xc]
        %v6567 = vor.u32 %v6565, %v6566
        %v6568 = vld [vmem:[#allocation3] ss:$16 sm:$0x30]
        %v6569 = vor.u32 %v6567, %v6568
        %v6570 = vld [vmem:[#allocation3] ss:$16 sm:$0xc0]
        %v6571 = vor.u32 %v6569, %v6570
        %s6572 = scalar_lea.vmem [#allocation3], 1
        %v6573 = vld [vmem:[%s6572] ss:$16 sm:$0x3]
        %v6574 = vld [vmem:[%s6572] ss:$16 sm:$0xc]
        %v6575 = vor.u32 %v6573, %v6574
        %v6576 = vld [vmem:[%s6572] ss:$16 sm:$0x30]
        %v6577 = vor.u32 %v6575, %v6576
        %v6578 = vld [vmem:[%s6572] ss:$16 sm:$0xc0]
        %v6579 = vor.u32 %v6577, %v6578
        %v6580 = vmax.f32 %v6571, %v6579
        %v6581 = vld [vmem:[%s5] sm:$0xff]
        %v6582 = vld [vmem:[%s5 + $0x8] sm:$0xff]
        %v6583 = vld [vmem:[%s5 + $0x10] sm:$0xff]
        %v6584 = vld [vmem:[%s5 + $0x18] sm:$0xff]
        %v6585 = vld [vmem:[%s5 + $0x20] sm:$0xff]
        %v6586 = vld [vmem:[%s5 + $0x28] sm:$0xff]
        %v6587 = vld [vmem:[%s5 + $0x30] sm:$0xff]
        %v6588 = vld [vmem:[%s5 + $0x38] sm:$0xff]
        %v6589 = vld [vmem:[%s5 + $0x40] sm:$0xff]
        %v6590 = vld [vmem:[%s5 + $0x48] sm:$0xff]
        %v6591 = vld [vmem:[%s5 + $0x50] sm:$0xff]
        %v6592 = vld [vmem:[%s5 + $0x58] sm:$0xff]
        %v6593 = vld [vmem:[%s5 + $0x60] sm:$0xff]
        %v6594 = vld [vmem:[%s5 + $0x68] sm:$0xff]
        %v6595 = vld [vmem:[%s5 + $0x70] sm:$0xff]
        %v6596 = vld [vmem:[%s5 + $0x78] sm:$0xff]
        %s6597 = scalar_lea.vmem [#allocation3], 2
        %v6598 = vld [vmem:[%s6597] ss:$16 sm:$0x3]
        %v6599 = vld [vmem:[%s6597] ss:$16 sm:$0xc]
        %v6600 = vor.u32 %v6598, %v6599
        %v6601 = vld [vmem:[%s6597] ss:$16 sm:$0x30]
        %v6602 = vor.u32 %v6600, %v6601
        %v6603 = vld [vmem:[%s6597] ss:$16 sm:$0xc0]
        %v6604 = vor.u32 %v6602, %v6603
        %s6605 = scalar_lea.vmem [#allocation3], 3
        %v6606 = vld [vmem:[%s6605] ss:$16 sm:$0x3]
        %v6607 = vld [vmem:[%s6605] ss:$16 sm:$0xc]
        %v6608 = vor.u32 %v6606, %v6607
        %v6609 = vld [vmem:[%s6605] ss:$16 sm:$0x30]
        %v6610 = vor.u32 %v6608, %v6609
        %v6611 = vld [vmem:[%s6605] ss:$16 sm:$0xc0]
        %v6612 = vor.u32 %v6610, %v6611
        %v6613 = vmax.f32 %v6604, %v6612
        %s6614 = scalar_lea.vmem %s5, 128
        %v6615 = vld [vmem:[%s6614] sm:$0xff]
        %v6616 = vld [vmem:[%s6614 + $0x8] sm:$0xff]
        %v6617 = vld [vmem:[%s6614 + $0x10] sm:$0xff]
        %v6618 = vld [vmem:[%s6614 + $0x18] sm:$0xff]
        %v6619 = vld [vmem:[%s6614 + $0x20] sm:$0xff]
        %v6620 = vld [vmem:[%s6614 + $0x28] sm:$0xff]
        %v6621 = vld [vmem:[%s6614 + $0x30] sm:$0xff]
        %v6622 = vld [vmem:[%s6614 + $0x38] sm:$0xff]
        %v6623 = vld [vmem:[%s6614 + $0x40] sm:$0xff]
        %v6624 = vld [vmem:[%s6614 + $0x48] sm:$0xff]
        %v6625 = vld [vmem:[%s6614 + $0x50] sm:$0xff]
        %v6626 = vld [vmem:[%s6614 + $0x58] sm:$0xff]
        %v6627 = vld [vmem:[%s6614 + $0x60] sm:$0xff]
        %v6628 = vld [vmem:[%s6614 + $0x68] sm:$0xff]
        %v6629 = vld [vmem:[%s6614 + $0x70] sm:$0xff]
        %v6630 = vld [vmem:[%s6614 + $0x78] sm:$0xff]
        %6631 = vmatprep.subr.mxu0 0.0
        %6632 = vmatpush1.msra.mxu0 %v6615
        %6633 = vmatprep.subr.mxu0 0.0
        %6634 = vmatpush1.msra.mxu0 %v6616
        %6635 = vmatprep.subr.mxu0 0.0
        %6636 = vmatpush1.msra.mxu0 %v6617
        %6637 = vmatprep.subr.mxu0 0.0
        %6638 = vmatpush1.msra.mxu0 %v6618
        %6639 = vmatprep.subr.mxu0 0.0
        %6640 = vmatpush1.msra.mxu0 %v6619
        %6641 = vmatprep.subr.mxu0 0.0
        %6642 = vmatpush1.msra.mxu0 %v6620
        %6643 = vmatprep.subr.mxu0 0.0
        %6644 = vmatpush1.msra.mxu0 %v6621
        %6645 = vmatprep.subr.mxu0 0.0
        %6646 = vmatpush1.msra.mxu0 %v6622
        %6647 = vmatprep.subr.mxu0 0.0
        %6648 = vmatpush1.msra.mxu0 %v6623
        %6649 = vmatprep.subr.mxu0 0.0
        %6650 = vmatpush1.msra.mxu0 %v6624
        %6651 = vmatprep.subr.mxu0 0.0
        %6652 = vmatpush1.msra.mxu0 %v6625
        %6653 = vmatprep.subr.mxu0 0.0
        %6654 = vmatpush1.msra.mxu0 %v6626
        %6655 = vmatprep.subr.mxu0 0.0
        %6656 = vmatpush1.msra.mxu0 %v6627
        %6657 = vmatprep.subr.mxu0 0.0
        %6658 = vmatpush1.msra.mxu0 %v6628
        %6659 = vmatprep.subr.mxu0 0.0
        %6660 = vmatpush1.msra.mxu0 %v6629
        %6661 = vmatprep.subr.mxu0 0.0
        %6662 = vmatpush1.msra.mxu0 %v6630
        %6663 = vmatprep.subr.mxu0 0.0
        %6664 = vmatpush1.msra.mxu0 0.0
        %6665 = vmatprep.subr.mxu0 0.0
        %6666 = vmatpush1.msra.mxu0 0.0
        %6667 = vmatprep.subr.mxu0 0.0
        %6668 = vmatpush1.msra.mxu0 0.0
        %6669 = vmatprep.subr.mxu0 0.0
        %6670 = vmatpush1.msra.mxu0 0.0
        %6671 = vmatprep.subr.mxu0 0.0
        %6672 = vmatpush1.msra.mxu0 0.0
        %6673 = vmatprep.subr.mxu0 0.0
        %6674 = vmatpush1.msra.mxu0 0.0
        %6675 = vmatprep.subr.mxu0 0.0
        %6676 = vmatpush1.msra.mxu0 0.0
        %6677 = vmatprep.subr.mxu0 0.0
        %6678 = vmatpush1.msra.mxu0 0.0
        %6679 = vmatprep.subr.mxu0 0.0
        %6680 = vmatpush1.msra.mxu0 0.0
        %6681 = vmatprep.subr.mxu0 0.0
        %6682 = vmatpush1.msra.mxu0 0.0
        %6683 = vmatprep.subr.mxu0 0.0
        %6684 = vmatpush1.msra.mxu0 0.0
        %6685 = vmatprep.subr.mxu0 0.0
        %6686 = vmatpush1.msra.mxu0 0.0
        %6687 = vmatprep.subr.mxu0 0.0
        %6688 = vmatpush1.msra.mxu0 0.0
        %6689 = vmatprep.subr.mxu0 0.0
        %6690 = vmatpush1.msra.mxu0 0.0
        %6691 = vmatprep.subr.mxu0 0.0
        %6692 = vmatpush1.msra.mxu0 0.0
        %6693 = vmatprep.subr.mxu0 0.0
        %6694 = vmatpush1.msra.mxu0 0.0
        %6695 = vmatprep.mubr.f32.mxu0 0.0
        %6696 = vmatmul.mubr.f32.gmra.mrb[0].mxu0 %v6613
        %v6697 = vpop.f32.mrb[0].mxu0
        %v6698 = vadd.f32 0.0, %v6697
        %v6699 = vpop.f32.mrb[0].mxu0
        %6700 = vdwg.mxu0
        %6701 = vmatprep.subr.mxu0 0.0
        %6702 = vmatpush1.msra.mxu0 %v6581
        %6703 = vmatprep.subr.mxu0 0.0
        %6704 = vmatpush1.msra.mxu0 %v6582
        %6705 = vmatprep.subr.mxu0 0.0
        %6706 = vmatpush1.msra.mxu0 %v6583
        %6707 = vmatprep.subr.mxu0 0.0
        %6708 = vmatpush1.msra.mxu0 %v6584
        %6709 = vmatprep.subr.mxu0 0.0
        %6710 = vmatpush1.msra.mxu0 %v6585
        %6711 = vmatprep.subr.mxu0 0.0
        %6712 = vmatpush1.msra.mxu0 %v6586
        %6713 = vmatprep.subr.mxu0 0.0
        %6714 = vmatpush1.msra.mxu0 %v6587
        %6715 = vmatprep.subr.mxu0 0.0
        %6716 = vmatpush1.msra.mxu0 %v6588
        %6717 = vmatprep.subr.mxu0 0.0
        %6718 = vmatpush1.msra.mxu0 %v6589
        %6719 = vmatprep.subr.mxu0 0.0
        %6720 = vmatpush1.msra.mxu0 %v6590
        %6721 = vmatprep.subr.mxu0 0.0
        %6722 = vmatpush1.msra.mxu0 %v6591
        %6723 = vmatprep.subr.mxu0 0.0
        %6724 = vmatpush1.msra.mxu0 %v6592
        %6725 = vmatprep.subr.mxu0 0.0
        %6726 = vmatpush1.msra.mxu0 %v6593
        %6727 = vmatprep.subr.mxu0 0.0
        %6728 = vmatpush1.msra.mxu0 %v6594
        %6729 = vmatprep.subr.mxu0 0.0
        %6730 = vmatpush1.msra.mxu0 %v6595
        %6731 = vmatprep.subr.mxu0 0.0
        %6732 = vmatpush1.msra.mxu0 %v6596
        %6733 = vmatprep.subr.mxu0 0.0
        %6734 = vmatpush1.msra.mxu0 0.0
        %6735 = vmatprep.subr.mxu0 0.0
        %6736 = vmatpush1.msra.mxu0 0.0
        %6737 = vmatprep.subr.mxu0 0.0
        %6738 = vmatpush1.msra.mxu0 0.0
        %6739 = vmatprep.subr.mxu0 0.0
        %6740 = vmatpush1.msra.mxu0 0.0
        %6741 = vmatprep.subr.mxu0 0.0
        %6742 = vmatpush1.msra.mxu0 0.0
        %6743 = vmatprep.subr.mxu0 0.0
        %6744 = vmatpush1.msra.mxu0 0.0
        %6745 = vmatprep.subr.mxu0 0.0
        %6746 = vmatpush1.msra.mxu0 0.0
        %6747 = vmatprep.subr.mxu0 0.0
        %6748 = vmatpush1.msra.mxu0 0.0
        %6749 = vmatprep.subr.mxu0 0.0
        %6750 = vmatpush1.msra.mxu0 0.0
        %6751 = vmatprep.subr.mxu0 0.0
        %6752 = vmatpush1.msra.mxu0 0.0
        %6753 = vmatprep.subr.mxu0 0.0
        %6754 = vmatpush1.msra.mxu0 0.0
        %6755 = vmatprep.subr.mxu0 0.0
        %6756 = vmatpush1.msra.mxu0 0.0
        %6757 = vmatprep.subr.mxu0 0.0
        %6758 = vmatpush1.msra.mxu0 0.0
        %6759 = vmatprep.subr.mxu0 0.0
        %6760 = vmatpush1.msra.mxu0 0.0
        %6761 = vmatprep.subr.mxu0 0.0
        %6762 = vmatpush1.msra.mxu0 0.0
        %6763 = vmatprep.subr.mxu0 0.0
        %6764 = vmatpush1.msra.mxu0 0.0
        %6765 = vmatprep.mubr.f32.mxu0 0.0
        %6766 = vmatmul.mubr.f32.gmra.mrb[0].mxu0 %v6580
        %v6767 = vpop.f32.mrb[0].mxu0
        %v6768 = vadd.f32 %v6698, %v6767
        %v6769 = vpop.f32.mrb[0].mxu0
        %6770 = vdwg.mxu0
        %s6771 = scalar_lea.vmem [#allocation3], 4
        %v6772 = vld [vmem:[%s6771] ss:$16 sm:$0x3]
        %v6773 = vld [vmem:[%s6771] ss:$16 sm:$0xc]
        %v6774 = vor.u32 %v6772, %v6773
        %v6775 = vld [vmem:[%s6771] ss:$16 sm:$0x30]
        %v6776 = vor.u32 %v6774, %v6775
        %v6777 = vld [vmem:[%s6771] ss:$16 sm:$0xc0]
        %v6778 = vor.u32 %v6776, %v6777
        %s6779 = scalar_lea.vmem [#allocation3], 5
        %v6780 = vld [vmem:[%s6779] ss:$16 sm:$0x3]
        %v6781 = vld [vmem:[%s6779] ss:$16 sm:$0xc]
        %v6782 = vor.u32 %v6780, %v6781
        %v6783 = vld [vmem:[%s6779] ss:$16 sm:$0x30]
        %v6784 = vor.u32 %v6782, %v6783
        %v6785 = vld [vmem:[%s6779] ss:$16 sm:$0xc0]
        %v6786 = vor.u32 %v6784, %v6785
        %v6787 = vmax.f32 %v6778, %v6786
        %s6788 = scalar_lea.vmem %s5, 256
        %v6789 = vld [vmem:[%s6788] sm:$0xff]
        %v6790 = vld [vmem:[%s6788 + $0x8] sm:$0xff]
        %v6791 = vld [vmem:[%s6788 + $0x10] sm:$0xff]
        %v6792 = vld [vmem:[%s6788 + $0x18] sm:$0xff]
        %v6793 = vld [vmem:[%s6788 + $0x20] sm:$0xff]
        %v6794 = vld [vmem:[%s6788 + $0x28] sm:$0xff]
        %v6795 = vld [vmem:[%s6788 + $0x30] sm:$0xff]
        %v6796 = vld [vmem:[%s6788 + $0x38] sm:$0xff]
        %v6797 = vld [vmem:[%s6788 + $0x40] sm:$0xff]
        %v6798 = vld [vmem:[%s6788 + $0x48] sm:$0xff]
        %v6799 = vld [vmem:[%s6788 + $0x50] sm:$0xff]
        %v6800 = vld [vmem:[%s6788 + $0x58] sm:$0xff]
        %v6801 = vld [vmem:[%s6788 + $0x60] sm:$0xff]
        %v6802 = vld [vmem:[%s6788 + $0x68] sm:$0xff]
        %v6803 = vld [vmem:[%s6788 + $0x70] sm:$0xff]
        %v6804 = vld [vmem:[%s6788 + $0x78] sm:$0xff]
        %6805 = vmatprep.subr.mxu0 0.0
        %6806 = vmatpush1.msra.mxu0 %v6789
        %6807 = vmatprep.subr.mxu0 0.0
        %6808 = vmatpush1.msra.mxu0 %v6790
        %6809 = vmatprep.subr.mxu0 0.0
        %6810 = vmatpush1.msra.mxu0 %v6791
        %6811 = vmatprep.subr.mxu0 0.0
        %6812 = vmatpush1.msra.mxu0 %v6792
        %6813 = vmatprep.subr.mxu0 0.0
        %6814 = vmatpush1.msra.mxu0 %v6793
        %6815 = vmatprep.subr.mxu0 0.0
        %6816 = vmatpush1.msra.mxu0 %v6794
        %6817 = vmatprep.subr.mxu0 0.0
        %6818 = vmatpush1.msra.mxu0 %v6795
        %6819 = vmatprep.subr.mxu0 0.0
        %6820 = vmatpush1.msra.mxu0 %v6796
        %6821 = vmatprep.subr.mxu0 0.0
        %6822 = vmatpush1.msra.mxu0 %v6797
        %6823 = vmatprep.subr.mxu0 0.0
        %6824 = vmatpush1.msra.mxu0 %v6798
        %6825 = vmatprep.subr.mxu0 0.0
        %6826 = vmatpush1.msra.mxu0 %v6799
        %6827 = vmatprep.subr.mxu0 0.0
        %6828 = vmatpush1.msra.mxu0 %v6800
        %6829 = vmatprep.subr.mxu0 0.0
        %6830 = vmatpush1.msra.mxu0 %v6801
        %6831 = vmatprep.subr.mxu0 0.0
        %6832 = vmatpush1.msra.mxu0 %v6802
        %6833 = vmatprep.subr.mxu0 0.0
        %6834 = vmatpush1.msra.mxu0 %v6803
        %6835 = vmatprep.subr.mxu0 0.0
        %6836 = vmatpush1.msra.mxu0 %v6804
        %6837 = vmatprep.subr.mxu0 0.0
        %6838 = vmatpush1.msra.mxu0 0.0
        %6839 = vmatprep.subr.mxu0 0.0
        %6840 = vmatpush1.msra.mxu0 0.0
        %6841 = vmatprep.subr.mxu0 0.0
        %6842 = vmatpush1.msra.mxu0 0.0
        %6843 = vmatprep.subr.mxu0 0.0
        %6844 = vmatpush1.msra.mxu0 0.0
        %6845 = vmatprep.subr.mxu0 0.0
        %6846 = vmatpush1.msra.mxu0 0.0
        %6847 = vmatprep.subr.mxu0 0.0
        %6848 = vmatpush1.msra.mxu0 0.0
        %6849 = vmatprep.subr.mxu0 0.0
        %6850 = vmatpush1.msra.mxu0 0.0
        %6851 = vmatprep.subr.mxu0 0.0
        %6852 = vmatpush1.msra.mxu0 0.0
        %6853 = vmatprep.subr.mxu0 0.0
        %6854 = vmatpush1.msra.mxu0 0.0
        %6855 = vmatprep.subr.mxu0 0.0
        %6856 = vmatpush1.msra.mxu0 0.0
        %6857 = vmatprep.subr.mxu0 0.0
        %6858 = vmatpush1.msra.mxu0 0.0
        %6859 = vmatprep.subr.mxu0 0.0
        %6860 = vmatpush1.msra.mxu0 0.0
        %6861 = vmatprep.subr.mxu0 0.0
        %6862 = vmatpush1.msra.mxu0 0.0
        %6863 = vmatprep.subr.mxu0 0.0
        %6864 = vmatpush1.msra.mxu0 0.0
        %6865 = vmatprep.subr.mxu0 0.0
        %6866 = vmatpush1.msra.mxu0 0.0
        %6867 = vmatprep.subr.mxu0 0.0
        %6868 = vmatpush1.msra.mxu0 0.0
        %6869 = vmatprep.mubr.f32.mxu0 0.0
        %6870 = vmatmul.mubr.f32.gmra.mrb[0].mxu0 %v6787
        %v6871 = vpop.f32.mrb[0].mxu0
        %v6872 = vadd.f32 0.0, %v6871
        %v6873 = vpop.f32.mrb[0].mxu0
        %6874 = vdwg.mxu0
        %v6875 = vadd.f32 %v6768, %v6872
        %s6876 = scalar_lea.vmem [#allocation3], 6
        %v6877 = vld [vmem:[%s6876] ss:$16 sm:$0x3]
        %v6878 = vld [vmem:[%s6876] ss:$16 sm:$0xc]
        %v6879 = vor.u32 %v6877, %v6878
        %v6880 = vld [vmem:[%s6876] ss:$16 sm:$0x30]
        %v6881 = vor.u32 %v6879, %v6880
        %v6882 = vld [vmem:[%s6876] ss:$16 sm:$0xc0]
        %v6883 = vor.u32 %v6881, %v6882
        %s6884 = scalar_lea.vmem [#allocation3], 7
        %v6885 = vld [vmem:[%s6884] ss:$16 sm:$0x3]
        %v6886 = vld [vmem:[%s6884] ss:$16 sm:$0xc]
        %v6887 = vor.u32 %v6885, %v6886
        %v6888 = vld [vmem:[%s6884] ss:$16 sm:$0x30]
        %v6889 = vor.u32 %v6887, %v6888
        %v6890 = vld [vmem:[%s6884] ss:$16 sm:$0xc0]
        %v6891 = vor.u32 %v6889, %v6890
        %v6892 = vmax.f32 %v6883, %v6891
        %s6893 = scalar_lea.vmem %s5, 384
        %v6894 = vld [vmem:[%s6893] sm:$0xff]
        %v6895 = vld [vmem:[%s6893 + $0x8] sm:$0xff]
        %v6896 = vld [vmem:[%s6893 + $0x10] sm:$0xff]
        %v6897 = vld [vmem:[%s6893 + $0x18] sm:$0xff]
        %v6898 = vld [vmem:[%s6893 + $0x20] sm:$0xff]
        %v6899 = vld [vmem:[%s6893 + $0x28] sm:$0xff]
        %v6900 = vld [vmem:[%s6893 + $0x30] sm:$0xff]
        %v6901 = vld [vmem:[%s6893 + $0x38] sm:$0xff]
        %v6902 = vld [vmem:[%s6893 + $0x40] sm:$0xff]
        %v6903 = vld [vmem:[%s6893 + $0x48] sm:$0xff]
        %v6904 = vld [vmem:[%s6893 + $0x50] sm:$0xff]
        %v6905 = vld [vmem:[%s6893 + $0x58] sm:$0xff]
        %v6906 = vld [vmem:[%s6893 + $0x60] sm:$0xff]
        %v6907 = vld [vmem:[%s6893 + $0x68] sm:$0xff]
        %v6908 = vld [vmem:[%s6893 + $0x70] sm:$0xff]
        %v6909 = vld [vmem:[%s6893 + $0x78] sm:$0xff]
        %6910 = vmatprep.subr.mxu0 0.0
        %6911 = vmatpush1.msra.mxu0 %v6894
        %6912 = vmatprep.subr.mxu0 0.0
        %6913 = vmatpush1.msra.mxu0 %v6895
        %6914 = vmatprep.subr.mxu0 0.0
        %6915 = vmatpush1.msra.mxu0 %v6896
        %6916 = vmatprep.subr.mxu0 0.0
        %6917 = vmatpush1.msra.mxu0 %v6897
        %6918 = vmatprep.subr.mxu0 0.0
        %6919 = vmatpush1.msra.mxu0 %v6898
        %6920 = vmatprep.subr.mxu0 0.0
        %6921 = vmatpush1.msra.mxu0 %v6899
        %6922 = vmatprep.subr.mxu0 0.0
        %6923 = vmatpush1.msra.mxu0 %v6900
        %6924 = vmatprep.subr.mxu0 0.0
        %6925 = vmatpush1.msra.mxu0 %v6901
        %6926 = vmatprep.subr.mxu0 0.0
        %6927 = vmatpush1.msra.mxu0 %v6902
        %6928 = vmatprep.subr.mxu0 0.0
        %6929 = vmatpush1.msra.mxu0 %v6903
        %6930 = vmatprep.subr.mxu0 0.0
        %6931 = vmatpush1.msra.mxu0 %v6904
        %6932 = vmatprep.subr.mxu0 0.0
        %6933 = vmatpush1.msra.mxu0 %v6905
        %6934 = vmatprep.subr.mxu0 0.0
        %6935 = vmatpush1.msra.mxu0 %v6906
        %6936 = vmatprep.subr.mxu0 0.0
        %6937 = vmatpush1.msra.mxu0 %v6907
        %6938 = vmatprep.subr.mxu0 0.0
        %6939 = vmatpush1.msra.mxu0 %v6908
        %6940 = vmatprep.subr.mxu0 0.0
        %6941 = vmatpush1.msra.mxu0 %v6909
        %6942 = vmatprep.subr.mxu0 0.0
        %6943 = vmatpush1.msra.mxu0 0.0
        %6944 = vmatprep.subr.mxu0 0.0
        %6945 = vmatpush1.msra.mxu0 0.0
        %6946 = vmatprep.subr.mxu0 0.0
        %6947 = vmatpush1.msra.mxu0 0.0
        %6948 = vmatprep.subr.mxu0 0.0
        %6949 = vmatpush1.msra.mxu0 0.0
        %6950 = vmatprep.subr.mxu0 0.0
        %6951 = vmatpush1.msra.mxu0 0.0
        %6952 = vmatprep.subr.mxu0 0.0
        %6953 = vmatpush1.msra.mxu0 0.0
        %6954 = vmatprep.subr.mxu0 0.0
        %6955 = vmatpush1.msra.mxu0 0.0
        %6956 = vmatprep.subr.mxu0 0.0
        %6957 = vmatpush1.msra.mxu0 0.0
        %6958 = vmatprep.subr.mxu0 0.0
        %6959 = vmatpush1.msra.mxu0 0.0
        %6960 = vmatprep.subr.mxu0 0.0
        %6961 = vmatpush1.msra.mxu0 0.0
        %6962 = vmatprep.subr.mxu0 0.0
        %6963 = vmatpush1.msra.mxu0 0.0
        %6964 = vmatprep.subr.mxu0 0.0
        %6965 = vmatpush1.msra.mxu0 0.0
        %6966 = vmatprep.subr.mxu0 0.0
        %6967 = vmatpush1.msra.mxu0 0.0
        %6968 = vmatprep.subr.mxu0 0.0
        %6969 = vmatpush1.msra.mxu0 0.0
        %6970 = vmatprep.subr.mxu0 0.0
        %6971 = vmatpush1.msra.mxu0 0.0
        %6972 = vmatprep.subr.mxu0 0.0
        %6973 = vmatpush1.msra.mxu0 0.0
        %6974 = vmatprep.mubr.f32.mxu0 0.0
        %6975 = vmatmul.mubr.f32.gmra.mrb[0].mxu0 %v6892
        %v6976 = vpop.f32.mrb[0].mxu0
        %v6977 = vadd.f32 0.0, %v6976
        %v6978 = vpop.f32.mrb[0].mxu0
        %6979 = vdwg.mxu0
        %v6980 = vadd.f32 %v6875, %v6977
        %s6981 = scalar_lea.vmem [#allocation3], 8
        %v6982 = vld [vmem:[%s6981] ss:$16 sm:$0x3]
        %v6983 = vld [vmem:[%s6981] ss:$16 sm:$0xc]
        %v6984 = vor.u32 %v6982, %v6983
        %v6985 = vld [vmem:[%s6981] ss:$16 sm:$0x30]
        %v6986 = vor.u32 %v6984, %v6985
        %v6987 = vld [vmem:[%s6981] ss:$16 sm:$0xc0]
        %v6988 = vor.u32 %v6986, %v6987
        %s6989 = scalar_lea.vmem [#allocation3], 9
        %v6990 = vld [vmem:[%s6989] ss:$16 sm:$0x3]
        %v6991 = vld [vmem:[%s6989] ss:$16 sm:$0xc]
        %v6992 = vor.u32 %v6990, %v6991
        %v6993 = vld [vmem:[%s6989] ss:$16 sm:$0x30]
        %v6994 = vor.u32 %v6992, %v6993
        %v6995 = vld [vmem:[%s6989] ss:$16 sm:$0xc0]
        %v6996 = vor.u32 %v6994, %v6995
        %v6997 = vmax.f32 %v6988, %v6996
        %s6998 = scalar_lea.vmem %s5, 512
        %v6999 = vld [vmem:[%s6998] sm:$0xff]
        %v7000 = vld [vmem:[%s6998 + $0x8] sm:$0xff]
        %v7001 = vld [vmem:[%s6998 + $0x10] sm:$0xff]
        %v7002 = vld [vmem:[%s6998 + $0x18] sm:$0xff]
        %v7003 = vld [vmem:[%s6998 + $0x20] sm:$0xff]
        %v7004 = vld [vmem:[%s6998 + $0x28] sm:$0xff]
        %v7005 = vld [vmem:[%s6998 + $0x30] sm:$0xff]
        %v7006 = vld [vmem:[%s6998 + $0x38] sm:$0xff]
        %v7007 = vld [vmem:[%s6998 + $0x40] sm:$0xff]
        %v7008 = vld [vmem:[%s6998 + $0x48] sm:$0xff]
        %v7009 = vld [vmem:[%s6998 + $0x50] sm:$0xff]
        %v7010 = vld [vmem:[%s6998 + $0x58] sm:$0xff]
        %v7011 = vld [vmem:[%s6998 + $0x60] sm:$0xff]
        %v7012 = vld [vmem:[%s6998 + $0x68] sm:$0xff]
        %v7013 = vld [vmem:[%s6998 + $0x70] sm:$0xff]
        %v7014 = vld [vmem:[%s6998 + $0x78] sm:$0xff]
        %7015 = vmatprep.subr.mxu0 0.0
        %7016 = vmatpush1.msra.mxu0 %v6999
        %7017 = vmatprep.subr.mxu0 0.0
        %7018 = vmatpush1.msra.mxu0 %v7000
        %7019 = vmatprep.subr.mxu0 0.0
        %7020 = vmatpush1.msra.mxu0 %v7001
        %7021 = vmatprep.subr.mxu0 0.0
        %7022 = vmatpush1.msra.mxu0 %v7002
        %7023 = vmatprep.subr.mxu0 0.0
        %7024 = vmatpush1.msra.mxu0 %v7003
        %7025 = vmatprep.subr.mxu0 0.0
        %7026 = vmatpush1.msra.mxu0 %v7004
        %7027 = vmatprep.subr.mxu0 0.0
        %7028 = vmatpush1.msra.mxu0 %v7005
        %7029 = vmatprep.subr.mxu0 0.0
        %7030 = vmatpush1.msra.mxu0 %v7006
        %7031 = vmatprep.subr.mxu0 0.0
        %7032 = vmatpush1.msra.mxu0 %v7007
        %7033 = vmatprep.subr.mxu0 0.0
        %7034 = vmatpush1.msra.mxu0 %v7008
        %7035 = vmatprep.subr.mxu0 0.0
        %7036 = vmatpush1.msra.mxu0 %v7009
        %7037 = vmatprep.subr.mxu0 0.0
        %7038 = vmatpush1.msra.mxu0 %v7010
        %7039 = vmatprep.subr.mxu0 0.0
        %7040 = vmatpush1.msra.mxu0 %v7011
        %7041 = vmatprep.subr.mxu0 0.0
        %7042 = vmatpush1.msra.mxu0 %v7012
        %7043 = vmatprep.subr.mxu0 0.0
        %7044 = vmatpush1.msra.mxu0 %v7013
        %7045 = vmatprep.subr.mxu0 0.0
        %7046 = vmatpush1.msra.mxu0 %v7014
        %7047 = vmatprep.subr.mxu0 0.0
        %7048 = vmatpush1.msra.mxu0 0.0
        %7049 = vmatprep.subr.mxu0 0.0
        %7050 = vmatpush1.msra.mxu0 0.0
        %7051 = vmatprep.subr.mxu0 0.0
        %7052 = vmatpush1.msra.mxu0 0.0
        %7053 = vmatprep.subr.mxu0 0.0
        %7054 = vmatpush1.msra.mxu0 0.0
        %7055 = vmatprep.subr.mxu0 0.0
        %7056 = vmatpush1.msra.mxu0 0.0
        %7057 = vmatprep.subr.mxu0 0.0
        %7058 = vmatpush1.msra.mxu0 0.0
        %7059 = vmatprep.subr.mxu0 0.0
        %7060 = vmatpush1.msra.mxu0 0.0
        %7061 = vmatprep.subr.mxu0 0.0
        %7062 = vmatpush1.msra.mxu0 0.0
        %7063 = vmatprep.subr.mxu0 0.0
        %7064 = vmatpush1.msra.mxu0 0.0
        %7065 = vmatprep.subr.mxu0 0.0
        %7066 = vmatpush1.msra.mxu0 0.0
        %7067 = vmatprep.subr.mxu0 0.0
        %7068 = vmatpush1.msra.mxu0 0.0
        %7069 = vmatprep.subr.mxu0 0.0
        %7070 = vmatpush1.msra.mxu0 0.0
        %7071 = vmatprep.subr.mxu0 0.0
        %7072 = vmatpush1.msra.mxu0 0.0
        %7073 = vmatprep.subr.mxu0 0.0
        %7074 = vmatpush1.msra.mxu0 0.0
        %7075 = vmatprep.subr.mxu0 0.0
        %7076 = vmatpush1.msra.mxu0 0.0
        %7077 = vmatprep.subr.mxu0 0.0
        %7078 = vmatpush1.msra.mxu0 0.0
        %7079 = vmatprep.mubr.f32.mxu0 0.0
        %7080 = vmatmul.mubr.f32.gmra.mrb[0].mxu0 %v6997
        %v7081 = vpop.f32.mrb[0].mxu0
        %v7082 = vadd.f32 0.0, %v7081
        %v7083 = vpop.f32.mrb[0].mxu0
        %7084 = vdwg.mxu0
        %v7085 = vadd.f32 %v6980, %v7082
        %v7086 = vld [vmem:[%s6] sm:$0x1]
        %v7088 = vlaneseq
        %v7089 = vshrl.u32 %v7088, 7
        %v7090 = vsub.s32 0, %v7089
        %v7091 = vrot.slane %v7086, %v7090
        %v7093 = vadd.f32 %v7085, %v7091
        %v7094 = vmax.f32 %v7093, 0.0
        %v7095 = vld [vmem:[%s7] sm:$0xff]
        %v7096 = vld [vmem:[%s7 + $0x8] sm:$0xff]
        %v7097 = vld [vmem:[%s7 + $0x10] sm:$0xff]
        %v7098 = vld [vmem:[%s7 + $0x18] sm:$0xff]
        %v7099 = vld [vmem:[%s7 + $0x20] sm:$0xff]
        %v7100 = vld [vmem:[%s7 + $0x28] sm:$0xff]
        %v7101 = vld [vmem:[%s7 + $0x30] sm:$0xff]
        %v7102 = vld [vmem:[%s7 + $0x38] sm:$0xff]
        %v7103 = vld [vmem:[%s7 + $0x40] sm:$0xff]
        %v7104 = vld [vmem:[%s7 + $0x48] sm:$0xff]
        %v7105 = vld [vmem:[%s7 + $0x50] sm:$0xff]
        %v7106 = vld [vmem:[%s7 + $0x58] sm:$0xff]
        %v7107 = vld [vmem:[%s7 + $0x60] sm:$0xff]
        %v7108 = vld [vmem:[%s7 + $0x68] sm:$0xff]
        %v7109 = vld [vmem:[%s7 + $0x70] sm:$0xff]
        %v7110 = vld [vmem:[%s8] sm:$0x1]
        %v7112 = vlaneseq
        %v7113 = vshrl.u32 %v7112, 7
        %v7114 = vsub.s32 0, %v7113
        %v7115 = vrot.slane %v7110, %v7114
        %vm7117 = vcmask 982016
        %v7119 = vsel %vm7117, %v7094, 0
        %7121 = vmatprep.subr.mxu0 0.0
        %7122 = vmatpush1.msra.mxu0 %v7095
        %7123 = vmatprep.subr.mxu0 0.0
        %7124 = vmatpush1.msra.mxu0 %v7096
        %7125 = vmatprep.subr.mxu0 0.0
        %7126 = vmatpush1.msra.mxu0 %v7097
        %7127 = vmatprep.subr.mxu0 0.0
        %7128 = vmatpush1.msra.mxu0 %v7098
        %7129 = vmatprep.subr.mxu0 0.0
        %7130 = vmatpush1.msra.mxu0 %v7099
        %7131 = vmatprep.subr.mxu0 0.0
        %7132 = vmatpush1.msra.mxu0 %v7100
        %7133 = vmatprep.subr.mxu0 0.0
        %7134 = vmatpush1.msra.mxu0 %v7101
        %7135 = vmatprep.subr.mxu0 0.0
        %7136 = vmatpush1.msra.mxu0 %v7102
        %7137 = vmatprep.subr.mxu0 0.0
        %7138 = vmatpush1.msra.mxu0 %v7103
        %7139 = vmatprep.subr.mxu0 0.0
        %7140 = vmatpush1.msra.mxu0 %v7104
        %7141 = vmatprep.subr.mxu0 0.0
        %7142 = vmatpush1.msra.mxu0 %v7105
        %7143 = vmatprep.subr.mxu0 0.0
        %7144 = vmatpush1.msra.mxu0 %v7106
        %7145 = vmatprep.subr.mxu0 0.0
        %7146 = vmatpush1.msra.mxu0 %v7107
        %7147 = vmatprep.subr.mxu0 0.0
        %7148 = vmatpush1.msra.mxu0 %v7108
        %7149 = vmatprep.subr.mxu0 0.0
        %7150 = vmatpush1.msra.mxu0 %v7109
        %7151 = vmatprep.subr.mxu0 0.0
        %7152 = vmatpush1.msra.mxu0 0.0
        %7153 = vmatprep.subr.mxu0 0.0
        %7154 = vmatpush1.msra.mxu0 0.0
        %7155 = vmatprep.subr.mxu0 0.0
        %7156 = vmatpush1.msra.mxu0 0.0
        %7157 = vmatprep.subr.mxu0 0.0
        %7158 = vmatpush1.msra.mxu0 0.0
        %7159 = vmatprep.subr.mxu0 0.0
        %7160 = vmatpush1.msra.mxu0 0.0
        %7161 = vmatprep.subr.mxu0 0.0
        %7162 = vmatpush1.msra.mxu0 0.0
        %7163 = vmatprep.subr.mxu0 0.0
        %7164 = vmatpush1.msra.mxu0 0.0
        %7165 = vmatprep.subr.mxu0 0.0
        %7166 = vmatpush1.msra.mxu0 0.0
        %7167 = vmatprep.subr.mxu0 0.0
        %7168 = vmatpush1.msra.mxu0 0.0
        %7169 = vmatprep.subr.mxu0 0.0
        %7170 = vmatpush1.msra.mxu0 0.0
        %7171 = vmatprep.subr.mxu0 0.0
        %7172 = vmatpush1.msra.mxu0 0.0
        %7173 = vmatprep.subr.mxu0 0.0
        %7174 = vmatpush1.msra.mxu0 0.0
        %7175 = vmatprep.subr.mxu0 0.0
        %7176 = vmatpush1.msra.mxu0 0.0
        %7177 = vmatprep.subr.mxu0 0.0
        %7178 = vmatpush1.msra.mxu0 0.0
        %7179 = vmatprep.subr.mxu0 0.0
        %7180 = vmatpush1.msra.mxu0 0.0
        %7181 = vmatprep.subr.mxu0 0.0
        %7182 = vmatpush1.msra.mxu0 0.0
        %7183 = vmatprep.subr.mxu0 0.0
        %7184 = vmatpush1.msra.mxu0 0.0
        %7185 = vmatprep.mubr.f32.mxu0 0.0
        %7186 = vmatmul.mubr.f32.gmra.mrb[0].mxu0 %v7119
        %v7187 = vpop.f32.mrb[0].mxu0
        %v7188 = vadd.f32 %v7115, %v7187
        %v7189 = vpop.f32.mrb[0].mxu0
        %7190 = vdwg.mxu0
        %v7191 = vmax.f32 %v7188, 0.0
        %v7192 = vld [vmem:[%s9] sm:$0xff]
        %v7193 = vld [vmem:[%s9 + $0x8] sm:$0xff]
        %v7194 = vld [vmem:[%s9 + $0x10] sm:$0xff]
        %v7195 = vld [vmem:[%s9 + $0x18] sm:$0xff]
        %v7196 = vld [vmem:[%s9 + $0x20] sm:$0xff]
        %v7197 = vld [vmem:[%s9 + $0x28] sm:$0xff]
        %v7198 = vld [vmem:[%s9 + $0x30] sm:$0xff]
        %v7199 = vld [vmem:[%s9 + $0x38] sm:$0xff]
        %v7200 = vld [vmem:[%s9 + $0x40] sm:$0xff]
        %v7201 = vld [vmem:[%s9 + $0x48] sm:$0xff]
        %v7202 = vld [vmem:[%s9 + $0x50] sm:$0xf]
        %v7203 = vld [vmem:[%s10] sm:$0x1]
        %v7205 = vlaneseq
        %v7206 = vshrl.u32 %v7205, 7
        %v7207 = vsub.s32 0, %v7206
        %v7208 = vrot.slane %v7203, %v7207
        %vm7210 = vcmask 687104
        %v7212 = vsel %vm7210, %v7191, 0
        %v7215 = vsel %vm5360, %v7202, 0
        %7217 = vmatprep.subr.mxu0 0.0
        %7218 = vmatpush1.msra.mxu0 %v7192
        %7219 = vmatprep.subr.mxu0 0.0
        %7220 = vmatpush1.msra.mxu0 %v7193
        %7221 = vmatprep.subr.mxu0 0.0
        %7222 = vmatpush1.msra.mxu0 %v7194
        %7223 = vmatprep.subr.mxu0 0.0
        %7224 = vmatpush1.msra.mxu0 %v7195
        %7225 = vmatprep.subr.mxu0 0.0
        %7226 = vmatpush1.msra.mxu0 %v7196
        %7227 = vmatprep.subr.mxu0 0.0
        %7228 = vmatpush1.msra.mxu0 %v7197
        %7229 = vmatprep.subr.mxu0 0.0
        %7230 = vmatpush1.msra.mxu0 %v7198
        %7231 = vmatprep.subr.mxu0 0.0
        %7232 = vmatpush1.msra.mxu0 %v7199
        %7233 = vmatprep.subr.mxu0 0.0
        %7234 = vmatpush1.msra.mxu0 %v7200
        %7235 = vmatprep.subr.mxu0 0.0
        %7236 = vmatpush1.msra.mxu0 %v7201
        %7237 = vmatprep.subr.mxu0 0.0
        %7238 = vmatpush1.msra.mxu0 %v7215
        %7239 = vmatprep.subr.mxu0 0.0
        %7240 = vmatpush1.msra.mxu0 0.0
        %7241 = vmatprep.subr.mxu0 0.0
        %7242 = vmatpush1.msra.mxu0 0.0
        %7243 = vmatprep.subr.mxu0 0.0
        %7244 = vmatpush1.msra.mxu0 0.0
        %7245 = vmatprep.subr.mxu0 0.0
        %7246 = vmatpush1.msra.mxu0 0.0
        %7247 = vmatprep.subr.mxu0 0.0
        %7248 = vmatpush1.msra.mxu0 0.0
        %7249 = vmatprep.subr.mxu0 0.0
        %7250 = vmatpush1.msra.mxu0 0.0
        %7251 = vmatprep.subr.mxu0 0.0
        %7252 = vmatpush1.msra.mxu0 0.0
        %7253 = vmatprep.subr.mxu0 0.0
        %7254 = vmatpush1.msra.mxu0 0.0
        %7255 = vmatprep.subr.mxu0 0.0
        %7256 = vmatpush1.msra.mxu0 0.0
        %7257 = vmatprep.subr.mxu0 0.0
        %7258 = vmatpush1.msra.mxu0 0.0
        %7259 = vmatprep.subr.mxu0 0.0
        %7260 = vmatpush1.msra.mxu0 0.0
        %7261 = vmatprep.subr.mxu0 0.0
        %7262 = vmatpush1.msra.mxu0 0.0
        %7263 = vmatprep.subr.mxu0 0.0
        %7264 = vmatpush1.msra.mxu0 0.0
        %7265 = vmatprep.subr.mxu0 0.0
        %7266 = vmatpush1.msra.mxu0 0.0
        %7267 = vmatprep.subr.mxu0 0.0
        %7268 = vmatpush1.msra.mxu0 0.0
        %7269 = vmatprep.subr.mxu0 0.0
        %7270 = vmatpush1.msra.mxu0 0.0
        %7271 = vmatprep.subr.mxu0 0.0
        %7272 = vmatpush1.msra.mxu0 0.0
        %7273 = vmatprep.subr.mxu0 0.0
        %7274 = vmatpush1.msra.mxu0 0.0
        %7275 = vmatprep.subr.mxu0 0.0
        %7276 = vmatpush1.msra.mxu0 0.0
        %7277 = vmatprep.subr.mxu0 0.0
        %7278 = vmatpush1.msra.mxu0 0.0
        %7279 = vmatprep.subr.mxu0 0.0
        %7280 = vmatpush1.msra.mxu0 0.0
        %7281 = vmatprep.mubr.f32.mxu0 0.0
        %7282 = vmatmul.mubr.f32.gmra.mrb[0].mxu0 %v7212
        %v7283 = vpop.f32.mrb[0].mxu0
        %v7284 = vadd.f32 %v7208, %v7283
        %v7285 = vpop.f32.mrb[0].mxu0
        %7286 = vdwg.mxu0
        %vm7287 = vcmask 80896
        %7288 = vst.msk [vmem:[%s380] sm:$0xff] %vm7287, %v7284
        %s7289 = sand.u32 %s269, 1
        %s7290 = scalar_lea.sflag [#allocation5], %s7289
        %s7291 = sand.u32 %s269, 1
        %s7292 = smul.addr %s7291, 8
        %s7293 = scalar_lea.vmem [#allocation4], %s7292
        // Predicated region
        $region65: #{net_forward.1} parent=63 // pred_check
          %p7294 = pneg %p279
        $region66: #{net_forward.1} parent=63 // pred_check_branch
          %7296 = sbr.rel (%p7294) target = $region68
        $region67: #{net_forward.1} parent=63 // pred_region
          %s7298 = ssub.s32 128, 128
          %7299 = vsyncadd %s7290, %s7298
          %s7300 = smul.addr %s25, 128
          %s7301 = scalar_lea.hbm %s11, %s7300
          %s7303 = sshll.u32 %s7293, 4
          %s7304 = int_to_ptr.vmem [resolvable:$true] %s7303
          %7306 = dma.vmem_to_hbm [thread:$0]  %s7304, 128, %s7301, %s7290
        $region68: #{net_forward.1} parent=63 // pred_fallthru
          _
      $region64: #{net_forward.1} parent=5 // pred_fallthru
        _
      %p7307 = scmp.le.s32.totalorder 2, %s20
      // Predicated region
      $region69: #{net_forward.1} parent=5 // pred_check
        %p7308 = pneg %p7307
      $region70: #{net_forward.1} parent=5 // pred_check_branch
        %7310 = sbr.rel (%p7308) target = $region72
      $region71: #{net_forward.1} parent=5 // pred_region
        %s7311 = ssub.s32 %s20, 2
        // Predicated region
        $region73: #{net_forward.1} parent=71 // pred_check
          %p7312 = pneg %p285
        $region74: #{net_forward.1} parent=71 // pred_check_branch
          %7314 = sbr.rel (%p7312) target = $region76
        $region75: #{net_forward.1} parent=71 // pred_region
          %s7315 = sand.u32 %s270, 1
          %s7316 = scalar_lea.sflag [#allocation5], %s7315
          %s7317 = sand.u32 %s270, 1
          %s7318 = smul.addr %s7317, 8
          %s7319 = scalar_lea.vmem [#allocation4], %s7318
          %7320 = dma.done %s7316, 128
        $region76: #{net_forward.1} parent=71 // pred_fallthru
          _
      $region72: #{net_forward.1} parent=5 // pred_fallthru
        _
    $region6: #{net_forward.1} parent=1 // loop_footer
      %s24 = sadd.s32 1, %s20
    $region7: #{net_forward.1} parent=1 // loop_footer_branch
      %19 = sbr.rel target = $region3
    $region8: #{net_forward.1} parent=1 // loop_exit
      _
    %7321 = vsyncpa [#allocation5], 1
    %s7322 = scalar_lea.sflag [#allocation5], 1
    %7323 = vsyncpa %s7322, 1

</llo_original>
